<compile_context>
chip_gen: v6e
topology: v6e:2x2x1
jax: 0.10.0
libtpu: 0.0.40
codegen_flags: <defaults>
</compile_context>

<pallas_src>
import jax
import jax.numpy as jnp
from jax.experimental import pallas as pl
from jax.experimental.pallas import tpu as pltpu


# ----------------------------------------------------------------- fused kernel
def _fused_forward_kernel(h0_ref, w1_ref, b1_ref, w2_ref, b2_ref,
                          w3_ref, b3_ref, w4_ref, b4_ref,
                          out_ref, xp1_ref, xp2_ref, y2_ref):
    # h0_ref : (Bb, 32, 50)  embedding in NLC (length=32 on sublanes, 50 channels on lanes)
    # w1_ref : (3, 50, 256)  conv1 per-tap matrices (bf16)      b1_ref: (1, 256)
    # w2_ref : (3, 256, 50)  conv2 per-tap matrices (bf16)      b2_ref: (1, 50)
    # w3_ref : (11, 50, 256) BN-folded, row-permuted lin1 (bf16) b3_ref: (1, 256)
    # w4_ref : (256, 10)     lin2 (bf16)                         b4_ref: (1, 10)
    # out_ref: (1, Bb, 10)
    # xp1_ref: (Bb, 34, 50)  zero-padded conv1 input scratch (f32)
    # xp2_ref: (Bb, 13, 256) zero-padded conv2 input scratch (f32) = maxpool output
    # y2_ref : (Bb, 11, 50)  conv2 output scratch (f32)
    f32 = jnp.float32
    bf16 = jnp.bfloat16

    Bb, L1, Cin = h0_ref.shape          # (Bb, 32, 50)
    LP = xp2_ref.shape[1] - 2           # pooled length (11)

    def mm(x_f32, w_bf16):
        # bf16 x bf16 MXU matmul with f32 accumulation
        return jnp.dot(x_f32.astype(bf16), w_bf16, preferred_element_type=f32)

    # ---- conv1 input: zero-pad length 32 -> 34 inside VMEM scratch ------------
    xp1_ref[:, 0:1, :] = jnp.zeros((Bb, 1, Cin), f32)
    xp1_ref[:, L1 + 1:L1 + 2, :] = jnp.zeros((Bb, 1, Cin), f32)
    xp1_ref[:, 1:L1 + 1, :] = h0_ref[...]

    # zero only the two padding rows of the conv2 input scratch
    xp2_ref[:, 0:1, :] = jnp.zeros((Bb, 1, 256), f32)
    xp2_ref[:, LP + 1:LP + 2, :] = jnp.zeros((Bb, 1, 256), f32)

    b1 = b1_ref[...]                    # (1, 256)
    b2 = b2_ref[...]                    # (1, 50)

    # ---- Conv1d(50,256,3,pad=1) + ReLU + MaxPool1d(3,3,1) ---------------------
    for b in range(Bb):
        x1 = xp1_ref[b]                                        # (34, 50) f32
        acc = mm(x1[0:L1, :], w1_ref[0])
        acc = acc + mm(x1[1:L1 + 1, :], w1_ref[1])
        acc = acc + mm(x1[2:L1 + 2, :], w1_ref[2])
        y1 = jnp.maximum(acc + b1, 0.0)                        # (32, 256) ReLU

        # maxpool windows (stride 3, left pad 1) written directly into the
        # padded conv2 input scratch rows 1..11 (no concatenate, full-lane stores)
        xp2_ref[b, 1, :] = jnp.maximum(y1[0], y1[1])           # clipped first window
        for i in range(1, LP):
            m = jnp.maximum(jnp.maximum(y1[3 * i - 1], y1[3 * i]), y1[3 * i + 1])
            xp2_ref[b, 1 + i, :] = m

    # ---- Conv1d(256,50,3,pad=1) + ReLU ----------------------------------------
    for b in range(Bb):
        x2 = xp2_ref[b]                                        # (13, 256) f32
        acc = mm(x2[0:LP, :], w2_ref[0])
        acc = acc + mm(x2[1:LP + 1, :], w2_ref[1])
        acc = acc + mm(x2[2:LP + 2, :], w2_ref[2])
        y2_ref[b] = jnp.maximum(acc + b2, 0.0)                 # (11, 50) ReLU

    # ---- Dropout(0.3)/Dropout(0.2): identity (eval). ---------------------------
    # ---- Flatten + BatchNorm1d(550) + Linear(550,256) --------------------------
    # BN folded into w3/b3 offline; w3 rows pre-permuted to (l, c) order so the
    # NLC activation needs no transpose: h1 = sum_l y2[:, l, :] @ w3[l]
    h1 = jnp.zeros((Bb, 256), f32)
    for l in range(LP):
        h1 = h1 + mm(y2_ref[:, l, :], w3_ref[l])
    h1 = h1 + b3_ref[...]

    # ---- Linear(256,10) + Softmax ----------------------------------------------
    logits = mm(h1, w4_ref[...]) + b4_ref[...]                 # (Bb, 10) f32
    z = logits - jnp.max(logits, axis=-1, keepdims=True)
    e = jnp.exp(z)
    probs = e / jnp.sum(e, axis=-1, keepdims=True)
    out_ref[0] = probs


# ----------------------------------------------------------------- forward glue
def recruitment2_forward(params, x_idx):
    B = x_idx.shape[0]
    f32 = jnp.float32
    bf16 = jnp.bfloat16

    # TODO(synk): embedding row gather stays in XLA (arbitrary-index gather has no
    # clean Mosaic lowering); it produces a single small (B, 32, 50) intermediate.
    h0 = jnp.transpose(params["embedding"][x_idx], (0, 2, 1)).astype(f32)   # (B,32,50) NLC

    # Conv weights -> per-tap (K, Cin, Cout) matrices, bf16 MXU operands.
    w1 = jnp.transpose(params["conv1_w"], (2, 1, 0)).astype(bf16)           # (3, 50, 256)
    b1 = params["conv1_b"].reshape(1, 256).astype(f32)
    w2 = jnp.transpose(params["conv2_w"], (2, 1, 0)).astype(bf16)           # (3, 256, 50)
    b2 = params["conv2_b"].reshape(1, 50).astype(f32)

    # BatchNorm1d(550) (eval) folded into Linear(550, 256); rows then permuted from
    # PyTorch flatten order (c*11 + l) to the kernel's NLC order (l*50 + c).
    eps = 1e-5
    scale = params["bn_gamma"] / jnp.sqrt(params["bn_var"] + eps)           # (550,)
    shift = params["bn_beta"] - params["bn_mean"] * scale                   # (550,)
    w3 = params["lin1_w"] * scale[:, None]                                  # (550, 256)
    b3 = (params["lin1_b"] + shift @ params["lin1_w"]).reshape(1, 256).astype(f32)
    w3 = jnp.transpose(w3.reshape(50, 11, 256), (1, 0, 2)).astype(bf16)     # (11, 50, 256)

    w4 = params["lin2_w"].astype(bf16)                                      # (256, 10)
    b4 = params["lin2_b"].reshape(1, 10).astype(f32)

    # Batch blocking: split the batch over a "parallel" grid axis (v7x megacore;
    # neutral on v5e/v6e). Keeps every block's trailing dims equal to full dims.
    bb = B // 2 if (B % 2 == 0 and B > 1) else B
    g = B // bb

    out3 = pl.pallas_call(
        _fused_forward_kernel,
        out_shape=jax.ShapeDtypeStruct((g, bb, 10), f32),
        grid=(g,),
        in_specs=[
            pl.BlockSpec((bb, 32, 50), lambda i: (i, 0, 0)),   # h0 (batch-blocked)
            pl.BlockSpec((3, 50, 256), lambda i: (0, 0, 0)),   # w1
            pl.BlockSpec((1, 256), lambda i: (0, 0)),          # b1
            pl.BlockSpec((3, 256, 50), lambda i: (0, 0, 0)),   # w2
            pl.BlockSpec((1, 50), lambda i: (0, 0)),           # b2
            pl.BlockSpec((11, 50, 256), lambda i: (0, 0, 0)),  # w3 (BN-folded, permuted)
            pl.BlockSpec((1, 256), lambda i: (0, 0)),          # b3
            pl.BlockSpec((256, 10), lambda i: (0, 0)),         # w4
            pl.BlockSpec((1, 10), lambda i: (0, 0)),           # b4
        ],
        out_specs=pl.BlockSpec((1, bb, 10), lambda i: (i, 0, 0)),
        scratch_shapes=[
            pltpu.VMEM((bb, 34, 50), f32),    # padded conv1 input
            pltpu.VMEM((bb, 13, 256), f32),   # padded conv2 input (= maxpool output)
            pltpu.VMEM((bb, 11, 50), f32),    # conv2 output
        ],
        compiler_params=pltpu.CompilerParams(
            dimension_semantics=("parallel",)),
    )(h0, w1, b1, w2, b2, w3, b3, w4, b4)

    return out3.reshape(B, 10)


# ----------------------------------------------------------------- parameters
def init_params(key):
    ks = jax.random.split(key, 10)

    def u(k, shape, fan_in):
        bound = 1.0 / jnp.sqrt(float(fan_in))
        return jax.random.uniform(k, shape, jnp.float32, -bound, bound)

    return dict(
        embedding=jax.random.normal(ks[0], (2000, 32), jnp.float32),
        conv1_w=u(ks[1], (256, 50, 3), 50 * 3),   # (Cout, Cin, K)
        conv1_b=u(ks[2], (256,), 50 * 3),
        conv2_w=u(ks[3], (50, 256, 3), 256 * 3),
        conv2_b=u(ks[4], (50,), 256 * 3),
        bn_gamma=jnp.ones((550,), jnp.float32),
        bn_beta=jnp.zeros((550,), jnp.float32),
        bn_mean=jnp.zeros((550,), jnp.float32),
        bn_var=jnp.ones((550,), jnp.float32),
        lin1_w=u(ks[5], (550, 256), 550),         # stored transposed: (in, out)
        lin1_b=u(ks[6], (256,), 550),
        lin2_w=u(ks[7], (256, 10), 256),
        lin2_b=u(ks[8], (10,), 256),
    )


# ----------------------------------------------------------------- main
if __name__ == "__main__":
    key = jax.random.PRNGKey(0)
    pkey, xkey = jax.random.split(key)
    params = init_params(pkey)

    # module implies: batch of token-index rows of length 50, vocab 2000
    x = jax.random.randint(xkey, (8, 50), 0, 2000, dtype=jnp.int32)

    fwd = jax.jit(recruitment2_forward)
    out = jax.block_until_ready(fwd(params, x))

    assert out.shape == (8, 10), out.shape
    assert bool(jnp.all(jnp.isfinite(out)))
    assert bool(jnp.all(jnp.abs(jnp.sum(out, axis=-1) - 1.0) < 1e-4))
    print("KERNEL_OK")
</pallas_src>

<mosaic_0001>
module attributes {stable_mosaic.version = 11 : i64} {
  func.func @_fused_forward_kernel(%arg0: i32, %arg1: memref<4x32x50xf32, #tpu.memory_space<vmem>>, %arg2: memref<3x50x256xbf16, #tpu.memory_space<vmem>>, %arg3: memref<1x256xf32, #tpu.memory_space<vmem>>, %arg4: memref<3x256x50xbf16, #tpu.memory_space<vmem>>, %arg5: memref<1x50xf32, #tpu.memory_space<vmem>>, %arg6: memref<11x50x256xbf16, #tpu.memory_space<vmem>>, %arg7: memref<1x256xf32, #tpu.memory_space<vmem>>, %arg8: memref<256x10xbf16, #tpu.memory_space<vmem>>, %arg9: memref<1x10xf32, #tpu.memory_space<vmem>>, %arg10: memref<1x4x10xf32, #tpu.memory_space<vmem>>, %arg11: memref<4x34x50xf32, #tpu.memory_space<vmem>>, %arg12: memref<4x13x256xf32, #tpu.memory_space<vmem>>, %arg13: memref<4x11x50xf32, #tpu.memory_space<vmem>>) attributes {dimension_semantics = [#tpu.dimension_semantics<parallel>], iteration_bounds = array<i64: 2>, scalar_prefetch = 0 : i64, scratch_operands = 3 : i64, tpu.core_type = #tpu.core_type<tc>, window_params = [{transform_indices = @transform_0, window_bounds = array<i64: 4, 32, 50>}, {pipeline_mode = #tpu.pipeline_mode<synchronous>, transform_indices = @transform_1, window_bounds = array<i64: 3, 50, 256>}, {pipeline_mode = #tpu.pipeline_mode<synchronous>, transform_indices = @transform_2, window_bounds = array<i64: 1, 256>}, {pipeline_mode = #tpu.pipeline_mode<synchronous>, transform_indices = @transform_3, window_bounds = array<i64: 3, 256, 50>}, {pipeline_mode = #tpu.pipeline_mode<synchronous>, transform_indices = @transform_4, window_bounds = array<i64: 1, 50>}, {pipeline_mode = #tpu.pipeline_mode<synchronous>, transform_indices = @transform_5, window_bounds = array<i64: 11, 50, 256>}, {pipeline_mode = #tpu.pipeline_mode<synchronous>, transform_indices = @transform_6, window_bounds = array<i64: 1, 256>}, {pipeline_mode = #tpu.pipeline_mode<synchronous>, transform_indices = @transform_7, window_bounds = array<i64: 256, 10>}, {pipeline_mode = #tpu.pipeline_mode<synchronous>, transform_indices = @transform_8, window_bounds = array<i64: 1, 10>}, {transform_indices = @transform_9, window_bounds = array<i64: 1, 4, 10>}]} {
    %cst = arith.constant 0.000000e+00 : f32
    %0 = vector.broadcast %cst : f32 to vector<4x1x50xf32>
    %c0 = arith.constant 0 : index
    %c0_0 = arith.constant 0 : index
    %c0_1 = arith.constant 0 : index
    %1 = vector.load %arg11[%c0, %c0_0, %c0_1] : memref<4x34x50xf32, #tpu.memory_space<vmem>>, vector<4x1x50xf32>
    tpu.vector_store %arg11[%c0, %c0_0, %c0_1], %0 {strides = array<i32>} : memref<4x34x50xf32, #tpu.memory_space<vmem>>, vector<4x1x50xf32>,
    %cst_2 = arith.constant 0.000000e+00 : f32
    %2 = vector.broadcast %cst_2 : f32 to vector<4x1x50xf32>
    %c0_3 = arith.constant 0 : index
    %c33 = arith.constant 33 : index
    %c0_4 = arith.constant 0 : index
    %3 = vector.load %arg11[%c0_3, %c33, %c0_4] : memref<4x34x50xf32, #tpu.memory_space<vmem>>, vector<4x1x50xf32>
    tpu.vector_store %arg11[%c0_3, %c33, %c0_4], %2 {strides = array<i32>} : memref<4x34x50xf32, #tpu.memory_space<vmem>>, vector<4x1x50xf32>,
    %c0_5 = arith.constant 0 : index
    %c0_6 = arith.constant 0 : index
    %c0_7 = arith.constant 0 : index
    %4 = vector.load %arg1[%c0_5, %c0_6, %c0_7] : memref<4x32x50xf32, #tpu.memory_space<vmem>>, vector<4x32x50xf32>
    %c0_8 = arith.constant 0 : index
    %c1 = arith.constant 1 : index
    %c0_9 = arith.constant 0 : index
    %5 = vector.load %arg11[%c0_8, %c1, %c0_9] : memref<4x34x50xf32, #tpu.memory_space<vmem>>, vector<4x32x50xf32>
    tpu.vector_store %arg11[%c0_8, %c1, %c0_9], %4 {strides = array<i32>} : memref<4x34x50xf32, #tpu.memory_space<vmem>>, vector<4x32x50xf32>,
    %cst_10 = arith.constant 0.000000e+00 : f32
    %6 = vector.broadcast %cst_10 : f32 to vector<4x1x256xf32>
    %c0_11 = arith.constant 0 : index
    %c0_12 = arith.constant 0 : index
    %c0_13 = arith.constant 0 : index
    %7 = vector.load %arg12[%c0_11, %c0_12, %c0_13] : memref<4x13x256xf32, #tpu.memory_space<vmem>>, vector<4x1x256xf32>
    tpu.vector_store %arg12[%c0_11, %c0_12, %c0_13], %6 {strides = array<i32>} : memref<4x13x256xf32, #tpu.memory_space<vmem>>, vector<4x1x256xf32>,
    %cst_14 = arith.constant 0.000000e+00 : f32
    %8 = vector.broadcast %cst_14 : f32 to vector<4x1x256xf32>
    %c0_15 = arith.constant 0 : index
    %c12 = arith.constant 12 : index
    %c0_16 = arith.constant 0 : index
    %9 = vector.load %arg12[%c0_15, %c12, %c0_16] : memref<4x13x256xf32, #tpu.memory_space<vmem>>, vector<4x1x256xf32>
    tpu.vector_store %arg12[%c0_15, %c12, %c0_16], %8 {strides = array<i32>} : memref<4x13x256xf32, #tpu.memory_space<vmem>>, vector<4x1x256xf32>,
    %c0_17 = arith.constant 0 : index
    %c0_18 = arith.constant 0 : index
    %10 = vector.load %arg3[%c0_17, %c0_18] : memref<1x256xf32, #tpu.memory_space<vmem>>, vector<1x256xf32>
    %c0_19 = arith.constant 0 : index
    %c0_20 = arith.constant 0 : index
    %11 = vector.load %arg5[%c0_19, %c0_20] : memref<1x50xf32, #tpu.memory_space<vmem>>, vector<1x50xf32>
    %c0_21 = arith.constant 0 : index
    %c0_22 = arith.constant 0 : index
    %c0_23 = arith.constant 0 : index
    %12 = vector.load %arg11[%c0_21, %c0_22, %c0_23] : memref<4x34x50xf32, #tpu.memory_space<vmem>>, vector<1x34x50xf32>
    %13 = vector.shape_cast %12 : vector<1x34x50xf32> to vector<34x50xf32>
    %14 = vector.extract_strided_slice %13 {offsets = [0, 0], sizes = [32, 50], strides = [1, 1]} : vector<34x50xf32> to vector<32x50xf32>
    %c0_24 = arith.constant 0 : index
    %c0_25 = arith.constant 0 : index
    %c0_26 = arith.constant 0 : index
    %15 = vector.load %arg2[%c0_24, %c0_25, %c0_26] : memref<3x50x256xbf16, #tpu.memory_space<vmem>>, vector<1x50x256xbf16>
    %16 = vector.shape_cast %15 : vector<1x50x256xbf16> to vector<50x256xbf16>
    %17 = arith.truncf %14 : vector<32x50xf32> to vector<32x50xbf16>
    %cst_27 = arith.constant dense<0.000000e+00> : vector<32x256xf32>
    %18 = tpu.matmul %17, %16, %cst_27 {dimension_numbers = #tpu.dot_dimension_numbers<[1], [0], [0], [1], [0, 0, 1, 1], [], []>} : vector<32x50xbf16>, vector<50x256xbf16>, vector<32x256xf32> -> vector<32x256xf32>
    %19 = vector.extract_strided_slice %13 {offsets = [1, 0], sizes = [32, 50], strides = [1, 1]} : vector<34x50xf32> to vector<32x50xf32>
    %c1_28 = arith.constant 1 : index
    %c0_29 = arith.constant 0 : index
    %c0_30 = arith.constant 0 : index
    %20 = vector.load %arg2[%c1_28, %c0_29, %c0_30] : memref<3x50x256xbf16, #tpu.memory_space<vmem>>, vector<1x50x256xbf16>
    %21 = vector.shape_cast %20 : vector<1x50x256xbf16> to vector<50x256xbf16>
    %22 = arith.truncf %19 : vector<32x50xf32> to vector<32x50xbf16>
    %cst_31 = arith.constant dense<0.000000e+00> : vector<32x256xf32>
    %23 = tpu.matmul %22, %21, %cst_31 {dimension_numbers = #tpu.dot_dimension_numbers<[1], [0], [0], [1], [0, 0, 1, 1], [], []>} : vector<32x50xbf16>, vector<50x256xbf16>, vector<32x256xf32> -> vector<32x256xf32>
    %24 = arith.addf %18, %23 : vector<32x256xf32>
    %25 = vector.extract_strided_slice %13 {offsets = [2, 0], sizes = [32, 50], strides = [1, 1]} : vector<34x50xf32> to vector<32x50xf32>
    %c2 = arith.constant 2 : index
    %c0_32 = arith.constant 0 : index
    %c0_33 = arith.constant 0 : index
    %26 = vector.load %arg2[%c2, %c0_32, %c0_33] : memref<3x50x256xbf16, #tpu.memory_space<vmem>>, vector<1x50x256xbf16>
    %27 = vector.shape_cast %26 : vector<1x50x256xbf16> to vector<50x256xbf16>
    %28 = arith.truncf %25 : vector<32x50xf32> to vector<32x50xbf16>
    %cst_34 = arith.constant dense<0.000000e+00> : vector<32x256xf32>
    %29 = tpu.matmul %28, %27, %cst_34 {dimension_numbers = #tpu.dot_dimension_numbers<[1], [0], [0], [1], [0, 0, 1, 1], [], []>} : vector<32x50xbf16>, vector<50x256xbf16>, vector<32x256xf32> -> vector<32x256xf32>
    %30 = arith.addf %24, %29 : vector<32x256xf32>
    %31 = vector.broadcast %10 : vector<1x256xf32> to vector<32x256xf32>
    %32 = arith.addf %30, %31 : vector<32x256xf32>
    %cst_35 = arith.constant 0.000000e+00 : f32
    %33 = vector.broadcast %cst_35 : f32 to vector<32x256xf32>
    %34 = arith.maximumf %32, %33 : vector<32x256xf32>
    %35 = vector.extract_strided_slice %34 {offsets = [0, 0], sizes = [1, 256], strides = [1, 1]} : vector<32x256xf32> to vector<1x256xf32>
    %36 = vector.shape_cast %35 : vector<1x256xf32> to vector<256xf32>
    %37 = vector.extract_strided_slice %34 {offsets = [1, 0], sizes = [1, 256], strides = [1, 1]} : vector<32x256xf32> to vector<1x256xf32>
    %38 = vector.shape_cast %37 : vector<1x256xf32> to vector<256xf32>
    %39 = arith.maximumf %36, %38 : vector<256xf32>
    %c0_36 = arith.constant 0 : index
    %c1_37 = arith.constant 1 : index
    %c0_38 = arith.constant 0 : index
    %40 = vector.load %arg12[%c0_36, %c1_37, %c0_38] : memref<4x13x256xf32, #tpu.memory_space<vmem>>, vector<1x1x256xf32>
    %41 = vector.shape_cast %40 : vector<1x1x256xf32> to vector<256xf32>
    %42 = vector.shape_cast %39 : vector<256xf32> to vector<1x1x256xf32>
    tpu.vector_store %arg12[%c0_36, %c1_37, %c0_38], %42 {strides = array<i32>} : memref<4x13x256xf32, #tpu.memory_space<vmem>>, vector<1x1x256xf32>,
    %43 = vector.extract_strided_slice %34 {offsets = [2, 0], sizes = [1, 256], strides = [1, 1]} : vector<32x256xf32> to vector<1x256xf32>
    %44 = vector.shape_cast %43 : vector<1x256xf32> to vector<256xf32>
    %45 = vector.extract_strided_slice %34 {offsets = [3, 0], sizes = [1, 256], strides = [1, 1]} : vector<32x256xf32> to vector<1x256xf32>
    %46 = vector.shape_cast %45 : vector<1x256xf32> to vector<256xf32>
    %47 = arith.maximumf %44, %46 : vector<256xf32>
    %48 = vector.extract_strided_slice %34 {offsets = [4, 0], sizes = [1, 256], strides = [1, 1]} : vector<32x256xf32> to vector<1x256xf32>
    %49 = vector.shape_cast %48 : vector<1x256xf32> to vector<256xf32>
    %50 = arith.maximumf %47, %49 : vector<256xf32>
    %c0_39 = arith.constant 0 : index
    %c2_40 = arith.constant 2 : index
    %c0_41 = arith.constant 0 : index
    %51 = vector.load %arg12[%c0_39, %c2_40, %c0_41] : memref<4x13x256xf32, #tpu.memory_space<vmem>>, vector<1x1x256xf32>
    %52 = vector.shape_cast %51 : vector<1x1x256xf32> to vector<256xf32>
    %53 = vector.shape_cast %50 : vector<256xf32> to vector<1x1x256xf32>
    tpu.vector_store %arg12[%c0_39, %c2_40, %c0_41], %53 {strides = array<i32>} : memref<4x13x256xf32, #tpu.memory_space<vmem>>, vector<1x1x256xf32>,
    %54 = vector.extract_strided_slice %34 {offsets = [5, 0], sizes = [1, 256], strides = [1, 1]} : vector<32x256xf32> to vector<1x256xf32>
    %55 = vector.shape_cast %54 : vector<1x256xf32> to vector<256xf32>
    %56 = vector.extract_strided_slice %34 {offsets = [6, 0], sizes = [1, 256], strides = [1, 1]} : vector<32x256xf32> to vector<1x256xf32>
    %57 = vector.shape_cast %56 : vector<1x256xf32> to vector<256xf32>
    %58 = arith.maximumf %55, %57 : vector<256xf32>
    %59 = vector.extract_strided_slice %34 {offsets = [7, 0], sizes = [1, 256], strides = [1, 1]} : vector<32x256xf32> to vector<1x256xf32>
    %60 = vector.shape_cast %59 : vector<1x256xf32> to vector<256xf32>
    %61 = arith.maximumf %58, %60 : vector<256xf32>
    %c0_42 = arith.constant 0 : index
    %c3 = arith.constant 3 : index
    %c0_43 = arith.constant 0 : index
    %62 = vector.load %arg12[%c0_42, %c3, %c0_43] : memref<4x13x256xf32, #tpu.memory_space<vmem>>, vector<1x1x256xf32>
    %63 = vector.shape_cast %62 : vector<1x1x256xf32> to vector<256xf32>
    %64 = vector.shape_cast %61 : vector<256xf32> to vector<1x1x256xf32>
    tpu.vector_store %arg12[%c0_42, %c3, %c0_43], %64 {strides = array<i32>} : memref<4x13x256xf32, #tpu.memory_space<vmem>>, vector<1x1x256xf32>,
    %65 = vector.extract_strided_slice %34 {offsets = [8, 0], sizes = [1, 256], strides = [1, 1]} : vector<32x256xf32> to vector<1x256xf32>
    %66 = vector.shape_cast %65 : vector<1x256xf32> to vector<256xf32>
    %67 = vector.extract_strided_slice %34 {offsets = [9, 0], sizes = [1, 256], strides = [1, 1]} : vector<32x256xf32> to vector<1x256xf32>
    %68 = vector.shape_cast %67 : vector<1x256xf32> to vector<256xf32>
    %69 = arith.maximumf %66, %68 : vector<256xf32>
    %70 = vector.extract_strided_slice %34 {offsets = [10, 0], sizes = [1, 256], strides = [1, 1]} : vector<32x256xf32> to vector<1x256xf32>
    %71 = vector.shape_cast %70 : vector<1x256xf32> to vector<256xf32>
    %72 = arith.maximumf %69, %71 : vector<256xf32>
    %c0_44 = arith.constant 0 : index
    %c4 = arith.constant 4 : index
    %c0_45 = arith.constant 0 : index
    %73 = vector.load %arg12[%c0_44, %c4, %c0_45] : memref<4x13x256xf32, #tpu.memory_space<vmem>>, vector<1x1x256xf32>
    %74 = vector.shape_cast %73 : vector<1x1x256xf32> to vector<256xf32>
    %75 = vector.shape_cast %72 : vector<256xf32> to vector<1x1x256xf32>
    tpu.vector_store %arg12[%c0_44, %c4, %c0_45], %75 {strides = array<i32>} : memref<4x13x256xf32, #tpu.memory_space<vmem>>, vector<1x1x256xf32>,
    %76 = vector.extract_strided_slice %34 {offsets = [11, 0], sizes = [1, 256], strides = [1, 1]} : vector<32x256xf32> to vector<1x256xf32>
    %77 = vector.shape_cast %76 : vector<1x256xf32> to vector<256xf32>
    %78 = vector.extract_strided_slice %34 {offsets = [12, 0], sizes = [1, 256], strides = [1, 1]} : vector<32x256xf32> to vector<1x256xf32>
    %79 = vector.shape_cast %78 : vector<1x256xf32> to vector<256xf32>
    %80 = arith.maximumf %77, %79 : vector<256xf32>
    %81 = vector.extract_strided_slice %34 {offsets = [13, 0], sizes = [1, 256], strides = [1, 1]} : vector<32x256xf32> to vector<1x256xf32>
    %82 = vector.shape_cast %81 : vector<1x256xf32> to vector<256xf32>
    %83 = arith.maximumf %80, %82 : vector<256xf32>
    %c0_46 = arith.constant 0 : index
    %c5 = arith.constant 5 : index
    %c0_47 = arith.constant 0 : index
    %84 = vector.load %arg12[%c0_46, %c5, %c0_47] : memref<4x13x256xf32, #tpu.memory_space<vmem>>, vector<1x1x256xf32>
    %85 = vector.shape_cast %84 : vector<1x1x256xf32> to vector<256xf32>
    %86 = vector.shape_cast %83 : vector<256xf32> to vector<1x1x256xf32>
    tpu.vector_store %arg12[%c0_46, %c5, %c0_47], %86 {strides = array<i32>} : memref<4x13x256xf32, #tpu.memory_space<vmem>>, vector<1x1x256xf32>,
    %87 = vector.extract_strided_slice %34 {offsets = [14, 0], sizes = [1, 256], strides = [1, 1]} : vector<32x256xf32> to vector<1x256xf32>
    %88 = vector.shape_cast %87 : vector<1x256xf32> to vector<256xf32>
    %89 = vector.extract_strided_slice %34 {offsets = [15, 0], sizes = [1, 256], strides = [1, 1]} : vector<32x256xf32> to vector<1x256xf32>
    %90 = vector.shape_cast %89 : vector<1x256xf32> to vector<256xf32>
    %91 = arith.maximumf %88, %90 : vector<256xf32>
    %92 = vector.extract_strided_slice %34 {offsets = [16, 0], sizes = [1, 256], strides = [1, 1]} : vector<32x256xf32> to vector<1x256xf32>
    %93 = vector.shape_cast %92 : vector<1x256xf32> to vector<256xf32>
    %94 = arith.maximumf %91, %93 : vector<256xf32>
    %c0_48 = arith.constant 0 : index
    %c6 = arith.constant 6 : index
    %c0_49 = arith.constant 0 : index
    %95 = vector.load %arg12[%c0_48, %c6, %c0_49] : memref<4x13x256xf32, #tpu.memory_space<vmem>>, vector<1x1x256xf32>
    %96 = vector.shape_cast %95 : vector<1x1x256xf32> to vector<256xf32>
    %97 = vector.shape_cast %94 : vector<256xf32> to vector<1x1x256xf32>
    tpu.vector_store %arg12[%c0_48, %c6, %c0_49], %97 {strides = array<i32>} : memref<4x13x256xf32, #tpu.memory_space<vmem>>, vector<1x1x256xf32>,
    %98 = vector.extract_strided_slice %34 {offsets = [17, 0], sizes = [1, 256], strides = [1, 1]} : vector<32x256xf32> to vector<1x256xf32>
    %99 = vector.shape_cast %98 : vector<1x256xf32> to vector<256xf32>
    %100 = vector.extract_strided_slice %34 {offsets = [18, 0], sizes = [1, 256], strides = [1, 1]} : vector<32x256xf32> to vector<1x256xf32>
    %101 = vector.shape_cast %100 : vector<1x256xf32> to vector<256xf32>
    %102 = arith.maximumf %99, %101 : vector<256xf32>
    %103 = vector.extract_strided_slice %34 {offsets = [19, 0], sizes = [1, 256], strides = [1, 1]} : vector<32x256xf32> to vector<1x256xf32>
    %104 = vector.shape_cast %103 : vector<1x256xf32> to vector<256xf32>
    %105 = arith.maximumf %102, %104 : vector<256xf32>
    %c0_50 = arith.constant 0 : index
    %c7 = arith.constant 7 : index
    %c0_51 = arith.constant 0 : index
    %106 = vector.load %arg12[%c0_50, %c7, %c0_51] : memref<4x13x256xf32, #tpu.memory_space<vmem>>, vector<1x1x256xf32>
    %107 = vector.shape_cast %106 : vector<1x1x256xf32> to vector<256xf32>
    %108 = vector.shape_cast %105 : vector<256xf32> to vector<1x1x256xf32>
    tpu.vector_store %arg12[%c0_50, %c7, %c0_51], %108 {strides = array<i32>} : memref<4x13x256xf32, #tpu.memory_space<vmem>>, vector<1x1x256xf32>,
    %109 = vector.extract_strided_slice %34 {offsets = [20, 0], sizes = [1, 256], strides = [1, 1]} : vector<32x256xf32> to vector<1x256xf32>
    %110 = vector.shape_cast %109 : vector<1x256xf32> to vector<256xf32>
    %111 = vector.extract_strided_slice %34 {offsets = [21, 0], sizes = [1, 256], strides = [1, 1]} : vector<32x256xf32> to vector<1x256xf32>
    %112 = vector.shape_cast %111 : vector<1x256xf32> to vector<256xf32>
    %113 = arith.maximumf %110, %112 : vector<256xf32>
    %114 = vector.extract_strided_slice %34 {offsets = [22, 0], sizes = [1, 256], strides = [1, 1]} : vector<32x256xf32> to vector<1x256xf32>
    %115 = vector.shape_cast %114 : vector<1x256xf32> to vector<256xf32>
    %116 = arith.maximumf %113, %115 : vector<256xf32>
    %c0_52 = arith.constant 0 : index
    %c8 = arith.constant 8 : index
    %c0_53 = arith.constant 0 : index
    %117 = vector.load %arg12[%c0_52, %c8, %c0_53] : memref<4x13x256xf32, #tpu.memory_space<vmem>>, vector<1x1x256xf32>
    %118 = vector.shape_cast %117 : vector<1x1x256xf32> to vector<256xf32>
    %119 = vector.shape_cast %116 : vector<256xf32> to vector<1x1x256xf32>
    tpu.vector_store %arg12[%c0_52, %c8, %c0_53], %119 {strides = array<i32>} : memref<4x13x256xf32, #tpu.memory_space<vmem>>, vector<1x1x256xf32>,
    %120 = vector.extract_strided_slice %34 {offsets = [23, 0], sizes = [1, 256], strides = [1, 1]} : vector<32x256xf32> to vector<1x256xf32>
    %121 = vector.shape_cast %120 : vector<1x256xf32> to vector<256xf32>
    %122 = vector.extract_strided_slice %34 {offsets = [24, 0], sizes = [1, 256], strides = [1, 1]} : vector<32x256xf32> to vector<1x256xf32>
    %123 = vector.shape_cast %122 : vector<1x256xf32> to vector<256xf32>
    %124 = arith.maximumf %121, %123 : vector<256xf32>
    %125 = vector.extract_strided_slice %34 {offsets = [25, 0], sizes = [1, 256], strides = [1, 1]} : vector<32x256xf32> to vector<1x256xf32>
    %126 = vector.shape_cast %125 : vector<1x256xf32> to vector<256xf32>
    %127 = arith.maximumf %124, %126 : vector<256xf32>
    %c0_54 = arith.constant 0 : index
    %c9 = arith.constant 9 : index
    %c0_55 = arith.constant 0 : index
    %128 = vector.load %arg12[%c0_54, %c9, %c0_55] : memref<4x13x256xf32, #tpu.memory_space<vmem>>, vector<1x1x256xf32>
    %129 = vector.shape_cast %128 : vector<1x1x256xf32> to vector<256xf32>
    %130 = vector.shape_cast %127 : vector<256xf32> to vector<1x1x256xf32>
    tpu.vector_store %arg12[%c0_54, %c9, %c0_55], %130 {strides = array<i32>} : memref<4x13x256xf32, #tpu.memory_space<vmem>>, vector<1x1x256xf32>,
    %131 = vector.extract_strided_slice %34 {offsets = [26, 0], sizes = [1, 256], strides = [1, 1]} : vector<32x256xf32> to vector<1x256xf32>
    %132 = vector.shape_cast %131 : vector<1x256xf32> to vector<256xf32>
    %133 = vector.extract_strided_slice %34 {offsets = [27, 0], sizes = [1, 256], strides = [1, 1]} : vector<32x256xf32> to vector<1x256xf32>
    %134 = vector.shape_cast %133 : vector<1x256xf32> to vector<256xf32>
    %135 = arith.maximumf %132, %134 : vector<256xf32>
    %136 = vector.extract_strided_slice %34 {offsets = [28, 0], sizes = [1, 256], strides = [1, 1]} : vector<32x256xf32> to vector<1x256xf32>
    %137 = vector.shape_cast %136 : vector<1x256xf32> to vector<256xf32>
    %138 = arith.maximumf %135, %137 : vector<256xf32>
    %c0_56 = arith.constant 0 : index
    %c10 = arith.constant 10 : index
    %c0_57 = arith.constant 0 : index
    %139 = vector.load %arg12[%c0_56, %c10, %c0_57] : memref<4x13x256xf32, #tpu.memory_space<vmem>>, vector<1x1x256xf32>
    %140 = vector.shape_cast %139 : vector<1x1x256xf32> to vector<256xf32>
    %141 = vector.shape_cast %138 : vector<256xf32> to vector<1x1x256xf32>
    tpu.vector_store %arg12[%c0_56, %c10, %c0_57], %141 {strides = array<i32>} : memref<4x13x256xf32, #tpu.memory_space<vmem>>, vector<1x1x256xf32>,
    %142 = vector.extract_strided_slice %34 {offsets = [29, 0], sizes = [1, 256], strides = [1, 1]} : vector<32x256xf32> to vector<1x256xf32>
    %143 = vector.shape_cast %142 : vector<1x256xf32> to vector<256xf32>
    %144 = vector.extract_strided_slice %34 {offsets = [30, 0], sizes = [1, 256], strides = [1, 1]} : vector<32x256xf32> to vector<1x256xf32>
    %145 = vector.shape_cast %144 : vector<1x256xf32> to vector<256xf32>
    %146 = arith.maximumf %143, %145 : vector<256xf32>
    %147 = vector.extract_strided_slice %34 {offsets = [31, 0], sizes = [1, 256], strides = [1, 1]} : vector<32x256xf32> to vector<1x256xf32>
    %148 = vector.shape_cast %147 : vector<1x256xf32> to vector<256xf32>
    %149 = arith.maximumf %146, %148 : vector<256xf32>
    %c0_58 = arith.constant 0 : index
    %c11 = arith.constant 11 : index
    %c0_59 = arith.constant 0 : index
    %150 = vector.load %arg12[%c0_58, %c11, %c0_59] : memref<4x13x256xf32, #tpu.memory_space<vmem>>, vector<1x1x256xf32>
    %151 = vector.shape_cast %150 : vector<1x1x256xf32> to vector<256xf32>
    %152 = vector.shape_cast %149 : vector<256xf32> to vector<1x1x256xf32>
    tpu.vector_store %arg12[%c0_58, %c11, %c0_59], %152 {strides = array<i32>} : memref<4x13x256xf32, #tpu.memory_space<vmem>>, vector<1x1x256xf32>,
    %c1_60 = arith.constant 1 : index
    %c0_61 = arith.constant 0 : index
    %c0_62 = arith.constant 0 : index
    %153 = vector.load %arg11[%c1_60, %c0_61, %c0_62] : memref<4x34x50xf32, #tpu.memory_space<vmem>>, vector<1x34x50xf32>
    %154 = vector.shape_cast %153 : vector<1x34x50xf32> to vector<34x50xf32>
    %155 = vector.extract_strided_slice %154 {offsets = [0, 0], sizes = [32, 50], strides = [1, 1]} : vector<34x50xf32> to vector<32x50xf32>
    %c0_63 = arith.constant 0 : index
    %c0_64 = arith.constant 0 : index
    %c0_65 = arith.constant 0 : index
    %156 = vector.load %arg2[%c0_63, %c0_64, %c0_65] : memref<3x50x256xbf16, #tpu.memory_space<vmem>>, vector<1x50x256xbf16>
    %157 = vector.shape_cast %156 : vector<1x50x256xbf16> to vector<50x256xbf16>
    %158 = arith.truncf %155 : vector<32x50xf32> to vector<32x50xbf16>
    %cst_66 = arith.constant dense<0.000000e+00> : vector<32x256xf32>
    %159 = tpu.matmul %158, %157, %cst_66 {dimension_numbers = #tpu.dot_dimension_numbers<[1], [0], [0], [1], [0, 0, 1, 1], [], []>} : vector<32x50xbf16>, vector<50x256xbf16>, vector<32x256xf32> -> vector<32x256xf32>
    %160 = vector.extract_strided_slice %154 {offsets = [1, 0], sizes = [32, 50], strides = [1, 1]} : vector<34x50xf32> to vector<32x50xf32>
    %c1_67 = arith.constant 1 : index
    %c0_68 = arith.constant 0 : index
    %c0_69 = arith.constant 0 : index
    %161 = vector.load %arg2[%c1_67, %c0_68, %c0_69] : memref<3x50x256xbf16, #tpu.memory_space<vmem>>, vector<1x50x256xbf16>
    %162 = vector.shape_cast %161 : vector<1x50x256xbf16> to vector<50x256xbf16>
    %163 = arith.truncf %160 : vector<32x50xf32> to vector<32x50xbf16>
    %cst_70 = arith.constant dense<0.000000e+00> : vector<32x256xf32>
    %164 = tpu.matmul %163, %162, %cst_70 {dimension_numbers = #tpu.dot_dimension_numbers<[1], [0], [0], [1], [0, 0, 1, 1], [], []>} : vector<32x50xbf16>, vector<50x256xbf16>, vector<32x256xf32> -> vector<32x256xf32>
    %165 = arith.addf %159, %164 : vector<32x256xf32>
    %166 = vector.extract_strided_slice %154 {offsets = [2, 0], sizes = [32, 50], strides = [1, 1]} : vector<34x50xf32> to vector<32x50xf32>
    %c2_71 = arith.constant 2 : index
    %c0_72 = arith.constant 0 : index
    %c0_73 = arith.constant 0 : index
    %167 = vector.load %arg2[%c2_71, %c0_72, %c0_73] : memref<3x50x256xbf16, #tpu.memory_space<vmem>>, vector<1x50x256xbf16>
    %168 = vector.shape_cast %167 : vector<1x50x256xbf16> to vector<50x256xbf16>
    %169 = arith.truncf %166 : vector<32x50xf32> to vector<32x50xbf16>
    %cst_74 = arith.constant dense<0.000000e+00> : vector<32x256xf32>
    %170 = tpu.matmul %169, %168, %cst_74 {dimension_numbers = #tpu.dot_dimension_numbers<[1], [0], [0], [1], [0, 0, 1, 1], [], []>} : vector<32x50xbf16>, vector<50x256xbf16>, vector<32x256xf32> -> vector<32x256xf32>
    %171 = arith.addf %165, %170 : vector<32x256xf32>
    %172 = vector.broadcast %10 : vector<1x256xf32> to vector<32x256xf32>
    %173 = arith.addf %171, %172 : vector<32x256xf32>
    %cst_75 = arith.constant 0.000000e+00 : f32
    %174 = vector.broadcast %cst_75 : f32 to vector<32x256xf32>
    %175 = arith.maximumf %173, %174 : vector<32x256xf32>
    %176 = vector.extract_strided_slice %175 {offsets = [0, 0], sizes = [1, 256], strides = [1, 1]} : vector<32x256xf32> to vector<1x256xf32>
    %177 = vector.shape_cast %176 : vector<1x256xf32> to vector<256xf32>
    %178 = vector.extract_strided_slice %175 {offsets = [1, 0], sizes = [1, 256], strides = [1, 1]} : vector<32x256xf32> to vector<1x256xf32>
    %179 = vector.shape_cast %178 : vector<1x256xf32> to vector<256xf32>
    %180 = arith.maximumf %177, %179 : vector<256xf32>
    %c1_76 = arith.constant 1 : index
    %c1_77 = arith.constant 1 : index
    %c0_78 = arith.constant 0 : index
    %181 = vector.load %arg12[%c1_76, %c1_77, %c0_78] : memref<4x13x256xf32, #tpu.memory_space<vmem>>, vector<1x1x256xf32>
    %182 = vector.shape_cast %181 : vector<1x1x256xf32> to vector<256xf32>
    %183 = vector.shape_cast %180 : vector<256xf32> to vector<1x1x256xf32>
    tpu.vector_store %arg12[%c1_76, %c1_77, %c0_78], %183 {strides = array<i32>} : memref<4x13x256xf32, #tpu.memory_space<vmem>>, vector<1x1x256xf32>,
    %184 = vector.extract_strided_slice %175 {offsets = [2, 0], sizes = [1, 256], strides = [1, 1]} : vector<32x256xf32> to vector<1x256xf32>
    %185 = vector.shape_cast %184 : vector<1x256xf32> to vector<256xf32>
    %186 = vector.extract_strided_slice %175 {offsets = [3, 0], sizes = [1, 256], strides = [1, 1]} : vector<32x256xf32> to vector<1x256xf32>
    %187 = vector.shape_cast %186 : vector<1x256xf32> to vector<256xf32>
    %188 = arith.maximumf %185, %187 : vector<256xf32>
    %189 = vector.extract_strided_slice %175 {offsets = [4, 0], sizes = [1, 256], strides = [1, 1]} : vector<32x256xf32> to vector<1x256xf32>
    %190 = vector.shape_cast %189 : vector<1x256xf32> to vector<256xf32>
    %191 = arith.maximumf %188, %190 : vector<256xf32>
    %c1_79 = arith.constant 1 : index
    %c2_80 = arith.constant 2 : index
    %c0_81 = arith.constant 0 : index
    %192 = vector.load %arg12[%c1_79, %c2_80, %c0_81] : memref<4x13x256xf32, #tpu.memory_space<vmem>>, vector<1x1x256xf32>
    %193 = vector.shape_cast %192 : vector<1x1x256xf32> to vector<256xf32>
    %194 = vector.shape_cast %191 : vector<256xf32> to vector<1x1x256xf32>
    tpu.vector_store %arg12[%c1_79, %c2_80, %c0_81], %194 {strides = array<i32>} : memref<4x13x256xf32, #tpu.memory_space<vmem>>, vector<1x1x256xf32>,
    %195 = vector.extract_strided_slice %175 {offsets = [5, 0], sizes = [1, 256], strides = [1, 1]} : vector<32x256xf32> to vector<1x256xf32>
    %196 = vector.shape_cast %195 : vector<1x256xf32> to vector<256xf32>
    %197 = vector.extract_strided_slice %175 {offsets = [6, 0], sizes = [1, 256], strides = [1, 1]} : vector<32x256xf32> to vector<1x256xf32>
    %198 = vector.shape_cast %197 : vector<1x256xf32> to vector<256xf32>
    %199 = arith.maximumf %196, %198 : vector<256xf32>
    %200 = vector.extract_strided_slice %175 {offsets = [7, 0], sizes = [1, 256], strides = [1, 1]} : vector<32x256xf32> to vector<1x256xf32>
    %201 = vector.shape_cast %200 : vector<1x256xf32> to vector<256xf32>
    %202 = arith.maximumf %199, %201 : vector<256xf32>
    %c1_82 = arith.constant 1 : index
    %c3_83 = arith.constant 3 : index
    %c0_84 = arith.constant 0 : index
    %203 = vector.load %arg12[%c1_82, %c3_83, %c0_84] : memref<4x13x256xf32, #tpu.memory_space<vmem>>, vector<1x1x256xf32>
    %204 = vector.shape_cast %203 : vector<1x1x256xf32> to vector<256xf32>
    %205 = vector.shape_cast %202 : vector<256xf32> to vector<1x1x256xf32>
    tpu.vector_store %arg12[%c1_82, %c3_83, %c0_84], %205 {strides = array<i32>} : memref<4x13x256xf32, #tpu.memory_space<vmem>>, vector<1x1x256xf32>,
    %206 = vector.extract_strided_slice %175 {offsets = [8, 0], sizes = [1, 256], strides = [1, 1]} : vector<32x256xf32> to vector<1x256xf32>
    %207 = vector.shape_cast %206 : vector<1x256xf32> to vector<256xf32>
    %208 = vector.extract_strided_slice %175 {offsets = [9, 0], sizes = [1, 256], strides = [1, 1]} : vector<32x256xf32> to vector<1x256xf32>
    %209 = vector.shape_cast %208 : vector<1x256xf32> to vector<256xf32>
    %210 = arith.maximumf %207, %209 : vector<256xf32>
    %211 = vector.extract_strided_slice %175 {offsets = [10, 0], sizes = [1, 256], strides = [1, 1]} : vector<32x256xf32> to vector<1x256xf32>
    %212 = vector.shape_cast %211 : vector<1x256xf32> to vector<256xf32>
    %213 = arith.maximumf %210, %212 : vector<256xf32>
    %c1_85 = arith.constant 1 : index
    %c4_86 = arith.constant 4 : index
    %c0_87 = arith.constant 0 : index
    %214 = vector.load %arg12[%c1_85, %c4_86, %c0_87] : memref<4x13x256xf32, #tpu.memory_space<vmem>>, vector<1x1x256xf32>
    %215 = vector.shape_cast %214 : vector<1x1x256xf32> to vector<256xf32>
    %216 = vector.shape_cast %213 : vector<256xf32> to vector<1x1x256xf32>
    tpu.vector_store %arg12[%c1_85, %c4_86, %c0_87], %216 {strides = array<i32>} : memref<4x13x256xf32, #tpu.memory_space<vmem>>, vector<1x1x256xf32>,
    %217 = vector.extract_strided_slice %175 {offsets = [11, 0], sizes = [1, 256], strides = [1, 1]} : vector<32x256xf32> to vector<1x256xf32>
    %218 = vector.shape_cast %217 : vector<1x256xf32> to vector<256xf32>
    %219 = vector.extract_strided_slice %175 {offsets = [12, 0], sizes = [1, 256], strides = [1, 1]} : vector<32x256xf32> to vector<1x256xf32>
    %220 = vector.shape_cast %219 : vector<1x256xf32> to vector<256xf32>
    %221 = arith.maximumf %218, %220 : vector<256xf32>
    %222 = vector.extract_strided_slice %175 {offsets = [13, 0], sizes = [1, 256], strides = [1, 1]} : vector<32x256xf32> to vector<1x256xf32>
    %223 = vector.shape_cast %222 : vector<1x256xf32> to vector<256xf32>
    %224 = arith.maximumf %221, %223 : vector<256xf32>
    %c1_88 = arith.constant 1 : index
    %c5_89 = arith.constant 5 : index
    %c0_90 = arith.constant 0 : index
    %225 = vector.load %arg12[%c1_88, %c5_89, %c0_90] : memref<4x13x256xf32, #tpu.memory_space<vmem>>, vector<1x1x256xf32>
    %226 = vector.shape_cast %225 : vector<1x1x256xf32> to vector<256xf32>
    %227 = vector.shape_cast %224 : vector<256xf32> to vector<1x1x256xf32>
    tpu.vector_store %arg12[%c1_88, %c5_89, %c0_90], %227 {strides = array<i32>} : memref<4x13x256xf32, #tpu.memory_space<vmem>>, vector<1x1x256xf32>,
    %228 = vector.extract_strided_slice %175 {offsets = [14, 0], sizes = [1, 256], strides = [1, 1]} : vector<32x256xf32> to vector<1x256xf32>
    %229 = vector.shape_cast %228 : vector<1x256xf32> to vector<256xf32>
    %230 = vector.extract_strided_slice %175 {offsets = [15, 0], sizes = [1, 256], strides = [1, 1]} : vector<32x256xf32> to vector<1x256xf32>
    %231 = vector.shape_cast %230 : vector<1x256xf32> to vector<256xf32>
    %232 = arith.maximumf %229, %231 : vector<256xf32>
    %233 = vector.extract_strided_slice %175 {offsets = [16, 0], sizes = [1, 256], strides = [1, 1]} : vector<32x256xf32> to vector<1x256xf32>
    %234 = vector.shape_cast %233 : vector<1x256xf32> to vector<256xf32>
    %235 = arith.maximumf %232, %234 : vector<256xf32>
    %c1_91 = arith.constant 1 : index
    %c6_92 = arith.constant 6 : index
    %c0_93 = arith.constant 0 : index
    %236 = vector.load %arg12[%c1_91, %c6_92, %c0_93] : memref<4x13x256xf32, #tpu.memory_space<vmem>>, vector<1x1x256xf32>
    %237 = vector.shape_cast %236 : vector<1x1x256xf32> to vector<256xf32>
    %238 = vector.shape_cast %235 : vector<256xf32> to vector<1x1x256xf32>
    tpu.vector_store %arg12[%c1_91, %c6_92, %c0_93], %238 {strides = array<i32>} : memref<4x13x256xf32, #tpu.memory_space<vmem>>, vector<1x1x256xf32>,
    %239 = vector.extract_strided_slice %175 {offsets = [17, 0], sizes = [1, 256], strides = [1, 1]} : vector<32x256xf32> to vector<1x256xf32>
    %240 = vector.shape_cast %239 : vector<1x256xf32> to vector<256xf32>
    %241 = vector.extract_strided_slice %175 {offsets = [18, 0], sizes = [1, 256], strides = [1, 1]} : vector<32x256xf32> to vector<1x256xf32>
    %242 = vector.shape_cast %241 : vector<1x256xf32> to vector<256xf32>
    %243 = arith.maximumf %240, %242 : vector<256xf32>
    %244 = vector.extract_strided_slice %175 {offsets = [19, 0], sizes = [1, 256], strides = [1, 1]} : vector<32x256xf32> to vector<1x256xf32>
    %245 = vector.shape_cast %244 : vector<1x256xf32> to vector<256xf32>
    %246 = arith.maximumf %243, %245 : vector<256xf32>
    %c1_94 = arith.constant 1 : index
    %c7_95 = arith.constant 7 : index
    %c0_96 = arith.constant 0 : index
    %247 = vector.load %arg12[%c1_94, %c7_95, %c0_96] : memref<4x13x256xf32, #tpu.memory_space<vmem>>, vector<1x1x256xf32>
    %248 = vector.shape_cast %247 : vector<1x1x256xf32> to vector<256xf32>
    %249 = vector.shape_cast %246 : vector<256xf32> to vector<1x1x256xf32>
    tpu.vector_store %arg12[%c1_94, %c7_95, %c0_96], %249 {strides = array<i32>} : memref<4x13x256xf32, #tpu.memory_space<vmem>>, vector<1x1x256xf32>,
    %250 = vector.extract_strided_slice %175 {offsets = [20, 0], sizes = [1, 256], strides = [1, 1]} : vector<32x256xf32> to vector<1x256xf32>
    %251 = vector.shape_cast %250 : vector<1x256xf32> to vector<256xf32>
    %252 = vector.extract_strided_slice %175 {offsets = [21, 0], sizes = [1, 256], strides = [1, 1]} : vector<32x256xf32> to vector<1x256xf32>
    %253 = vector.shape_cast %252 : vector<1x256xf32> to vector<256xf32>
    %254 = arith.maximumf %251, %253 : vector<256xf32>
    %255 = vector.extract_strided_slice %175 {offsets = [22, 0], sizes = [1, 256], strides = [1, 1]} : vector<32x256xf32> to vector<1x256xf32>
    %256 = vector.shape_cast %255 : vector<1x256xf32> to vector<256xf32>
    %257 = arith.maximumf %254, %256 : vector<256xf32>
    %c1_97 = arith.constant 1 : index
    %c8_98 = arith.constant 8 : index
    %c0_99 = arith.constant 0 : index
    %258 = vector.load %arg12[%c1_97, %c8_98, %c0_99] : memref<4x13x256xf32, #tpu.memory_space<vmem>>, vector<1x1x256xf32>
    %259 = vector.shape_cast %258 : vector<1x1x256xf32> to vector<256xf32>
    %260 = vector.shape_cast %257 : vector<256xf32> to vector<1x1x256xf32>
    tpu.vector_store %arg12[%c1_97, %c8_98, %c0_99], %260 {strides = array<i32>} : memref<4x13x256xf32, #tpu.memory_space<vmem>>, vector<1x1x256xf32>,
    %261 = vector.extract_strided_slice %175 {offsets = [23, 0], sizes = [1, 256], strides = [1, 1]} : vector<32x256xf32> to vector<1x256xf32>
    %262 = vector.shape_cast %261 : vector<1x256xf32> to vector<256xf32>
    %263 = vector.extract_strided_slice %175 {offsets = [24, 0], sizes = [1, 256], strides = [1, 1]} : vector<32x256xf32> to vector<1x256xf32>
    %264 = vector.shape_cast %263 : vector<1x256xf32> to vector<256xf32>
    %265 = arith.maximumf %262, %264 : vector<256xf32>
    %266 = vector.extract_strided_slice %175 {offsets = [25, 0], sizes = [1, 256], strides = [1, 1]} : vector<32x256xf32> to vector<1x256xf32>
    %267 = vector.shape_cast %266 : vector<1x256xf32> to vector<256xf32>
    %268 = arith.maximumf %265, %267 : vector<256xf32>
    %c1_100 = arith.constant 1 : index
    %c9_101 = arith.constant 9 : index
    %c0_102 = arith.constant 0 : index
    %269 = vector.load %arg12[%c1_100, %c9_101, %c0_102] : memref<4x13x256xf32, #tpu.memory_space<vmem>>, vector<1x1x256xf32>
    %270 = vector.shape_cast %269 : vector<1x1x256xf32> to vector<256xf32>
    %271 = vector.shape_cast %268 : vector<256xf32> to vector<1x1x256xf32>
    tpu.vector_store %arg12[%c1_100, %c9_101, %c0_102], %271 {strides = array<i32>} : memref<4x13x256xf32, #tpu.memory_space<vmem>>, vector<1x1x256xf32>,
    %272 = vector.extract_strided_slice %175 {offsets = [26, 0], sizes = [1, 256], strides = [1, 1]} : vector<32x256xf32> to vector<1x256xf32>
    %273 = vector.shape_cast %272 : vector<1x256xf32> to vector<256xf32>
    %274 = vector.extract_strided_slice %175 {offsets = [27, 0], sizes = [1, 256], strides = [1, 1]} : vector<32x256xf32> to vector<1x256xf32>
    %275 = vector.shape_cast %274 : vector<1x256xf32> to vector<256xf32>
    %276 = arith.maximumf %273, %275 : vector<256xf32>
    %277 = vector.extract_strided_slice %175 {offsets = [28, 0], sizes = [1, 256], strides = [1, 1]} : vector<32x256xf32> to vector<1x256xf32>
    %278 = vector.shape_cast %277 : vector<1x256xf32> to vector<256xf32>
    %279 = arith.maximumf %276, %278 : vector<256xf32>
    %c1_103 = arith.constant 1 : index
    %c10_104 = arith.constant 10 : index
    %c0_105 = arith.constant 0 : index
    %280 = vector.load %arg12[%c1_103, %c10_104, %c0_105] : memref<4x13x256xf32, #tpu.memory_space<vmem>>, vector<1x1x256xf32>
    %281 = vector.shape_cast %280 : vector<1x1x256xf32> to vector<256xf32>
    %282 = vector.shape_cast %279 : vector<256xf32> to vector<1x1x256xf32>
    tpu.vector_store %arg12[%c1_103, %c10_104, %c0_105], %282 {strides = array<i32>} : memref<4x13x256xf32, #tpu.memory_space<vmem>>, vector<1x1x256xf32>,
    %283 = vector.extract_strided_slice %175 {offsets = [29, 0], sizes = [1, 256], strides = [1, 1]} : vector<32x256xf32> to vector<1x256xf32>
    %284 = vector.shape_cast %283 : vector<1x256xf32> to vector<256xf32>
    %285 = vector.extract_strided_slice %175 {offsets = [30, 0], sizes = [1, 256], strides = [1, 1]} : vector<32x256xf32> to vector<1x256xf32>
    %286 = vector.shape_cast %285 : vector<1x256xf32> to vector<256xf32>
    %287 = arith.maximumf %284, %286 : vector<256xf32>
    %288 = vector.extract_strided_slice %175 {offsets = [31, 0], sizes = [1, 256], strides = [1, 1]} : vector<32x256xf32> to vector<1x256xf32>
    %289 = vector.shape_cast %288 : vector<1x256xf32> to vector<256xf32>
    %290 = arith.maximumf %287, %289 : vector<256xf32>
    %c1_106 = arith.constant 1 : index
    %c11_107 = arith.constant 11 : index
    %c0_108 = arith.constant 0 : index
    %291 = vector.load %arg12[%c1_106, %c11_107, %c0_108] : memref<4x13x256xf32, #tpu.memory_space<vmem>>, vector<1x1x256xf32>
    %292 = vector.shape_cast %291 : vector<1x1x256xf32> to vector<256xf32>
    %293 = vector.shape_cast %290 : vector<256xf32> to vector<1x1x256xf32>
    tpu.vector_store %arg12[%c1_106, %c11_107, %c0_108], %293 {strides = array<i32>} : memref<4x13x256xf32, #tpu.memory_space<vmem>>, vector<1x1x256xf32>,
    %c2_109 = arith.constant 2 : index
    %c0_110 = arith.constant 0 : index
    %c0_111 = arith.constant 0 : index
    %294 = vector.load %arg11[%c2_109, %c0_110, %c0_111] : memref<4x34x50xf32, #tpu.memory_space<vmem>>, vector<1x34x50xf32>
    %295 = vector.shape_cast %294 : vector<1x34x50xf32> to vector<34x50xf32>
    %296 = vector.extract_strided_slice %295 {offsets = [0, 0], sizes = [32, 50], strides = [1, 1]} : vector<34x50xf32> to vector<32x50xf32>
    %c0_112 = arith.constant 0 : index
    %c0_113 = arith.constant 0 : index
    %c0_114 = arith.constant 0 : index
    %297 = vector.load %arg2[%c0_112, %c0_113, %c0_114] : memref<3x50x256xbf16, #tpu.memory_space<vmem>>, vector<1x50x256xbf16>
    %298 = vector.shape_cast %297 : vector<1x50x256xbf16> to vector<50x256xbf16>
    %299 = arith.truncf %296 : vector<32x50xf32> to vector<32x50xbf16>
    %cst_115 = arith.constant dense<0.000000e+00> : vector<32x256xf32>
    %300 = tpu.matmul %299, %298, %cst_115 {dimension_numbers = #tpu.dot_dimension_numbers<[1], [0], [0], [1], [0, 0, 1, 1], [], []>} : vector<32x50xbf16>, vector<50x256xbf16>, vector<32x256xf32> -> vector<32x256xf32>
    %301 = vector.extract_strided_slice %295 {offsets = [1, 0], sizes = [32, 50], strides = [1, 1]} : vector<34x50xf32> to vector<32x50xf32>
    %c1_116 = arith.constant 1 : index
    %c0_117 = arith.constant 0 : index
    %c0_118 = arith.constant 0 : index
    %302 = vector.load %arg2[%c1_116, %c0_117, %c0_118] : memref<3x50x256xbf16, #tpu.memory_space<vmem>>, vector<1x50x256xbf16>
    %303 = vector.shape_cast %302 : vector<1x50x256xbf16> to vector<50x256xbf16>
    %304 = arith.truncf %301 : vector<32x50xf32> to vector<32x50xbf16>
    %cst_119 = arith.constant dense<0.000000e+00> : vector<32x256xf32>
    %305 = tpu.matmul %304, %303, %cst_119 {dimension_numbers = #tpu.dot_dimension_numbers<[1], [0], [0], [1], [0, 0, 1, 1], [], []>} : vector<32x50xbf16>, vector<50x256xbf16>, vector<32x256xf32> -> vector<32x256xf32>
    %306 = arith.addf %300, %305 : vector<32x256xf32>
    %307 = vector.extract_strided_slice %295 {offsets = [2, 0], sizes = [32, 50], strides = [1, 1]} : vector<34x50xf32> to vector<32x50xf32>
    %c2_120 = arith.constant 2 : index
    %c0_121 = arith.constant 0 : index
    %c0_122 = arith.constant 0 : index
    %308 = vector.load %arg2[%c2_120, %c0_121, %c0_122] : memref<3x50x256xbf16, #tpu.memory_space<vmem>>, vector<1x50x256xbf16>
    %309 = vector.shape_cast %308 : vector<1x50x256xbf16> to vector<50x256xbf16>
    %310 = arith.truncf %307 : vector<32x50xf32> to vector<32x50xbf16>
    %cst_123 = arith.constant dense<0.000000e+00> : vector<32x256xf32>
    %311 = tpu.matmul %310, %309, %cst_123 {dimension_numbers = #tpu.dot_dimension_numbers<[1], [0], [0], [1], [0, 0, 1, 1], [], []>} : vector<32x50xbf16>, vector<50x256xbf16>, vector<32x256xf32> -> vector<32x256xf32>
    %312 = arith.addf %306, %311 : vector<32x256xf32>
    %313 = vector.broadcast %10 : vector<1x256xf32> to vector<32x256xf32>
    %314 = arith.addf %312, %313 : vector<32x256xf32>
    %cst_124 = arith.constant 0.000000e+00 : f32
    %315 = vector.broadcast %cst_124 : f32 to vector<32x256xf32>
    %316 = arith.maximumf %314, %315 : vector<32x256xf32>
    %317 = vector.extract_strided_slice %316 {offsets = [0, 0], sizes = [1, 256], strides = [1, 1]} : vector<32x256xf32> to vector<1x256xf32>
    %318 = vector.shape_cast %317 : vector<1x256xf32> to vector<256xf32>
    %319 = vector.extract_strided_slice %316 {offsets = [1, 0], sizes = [1, 256], strides = [1, 1]} : vector<32x256xf32> to vector<1x256xf32>
    %320 = vector.shape_cast %319 : vector<1x256xf32> to vector<256xf32>
    %321 = arith.maximumf %318, %320 : vector<256xf32>
    %c2_125 = arith.constant 2 : index
    %c1_126 = arith.constant 1 : index
    %c0_127 = arith.constant 0 : index
    %322 = vector.load %arg12[%c2_125, %c1_126, %c0_127] : memref<4x13x256xf32, #tpu.memory_space<vmem>>, vector<1x1x256xf32>
    %323 = vector.shape_cast %322 : vector<1x1x256xf32> to vector<256xf32>
    %324 = vector.shape_cast %321 : vector<256xf32> to vector<1x1x256xf32>
    tpu.vector_store %arg12[%c2_125, %c1_126, %c0_127], %324 {strides = array<i32>} : memref<4x13x256xf32, #tpu.memory_space<vmem>>, vector<1x1x256xf32>,
    %325 = vector.extract_strided_slice %316 {offsets = [2, 0], sizes = [1, 256], strides = [1, 1]} : vector<32x256xf32> to vector<1x256xf32>
    %326 = vector.shape_cast %325 : vector<1x256xf32> to vector<256xf32>
    %327 = vector.extract_strided_slice %316 {offsets = [3, 0], sizes = [1, 256], strides = [1, 1]} : vector<32x256xf32> to vector<1x256xf32>
    %328 = vector.shape_cast %327 : vector<1x256xf32> to vector<256xf32>
    %329 = arith.maximumf %326, %328 : vector<256xf32>
    %330 = vector.extract_strided_slice %316 {offsets = [4, 0], sizes = [1, 256], strides = [1, 1]} : vector<32x256xf32> to vector<1x256xf32>
    %331 = vector.shape_cast %330 : vector<1x256xf32> to vector<256xf32>
    %332 = arith.maximumf %329, %331 : vector<256xf32>
    %c2_128 = arith.constant 2 : index
    %c2_129 = arith.constant 2 : index
    %c0_130 = arith.constant 0 : index
    %333 = vector.load %arg12[%c2_128, %c2_129, %c0_130] : memref<4x13x256xf32, #tpu.memory_space<vmem>>, vector<1x1x256xf32>
    %334 = vector.shape_cast %333 : vector<1x1x256xf32> to vector<256xf32>
    %335 = vector.shape_cast %332 : vector<256xf32> to vector<1x1x256xf32>
    tpu.vector_store %arg12[%c2_128, %c2_129, %c0_130], %335 {strides = array<i32>} : memref<4x13x256xf32, #tpu.memory_space<vmem>>, vector<1x1x256xf32>,
    %336 = vector.extract_strided_slice %316 {offsets = [5, 0], sizes = [1, 256], strides = [1, 1]} : vector<32x256xf32> to vector<1x256xf32>
    %337 = vector.shape_cast %336 : vector<1x256xf32> to vector<256xf32>
    %338 = vector.extract_strided_slice %316 {offsets = [6, 0], sizes = [1, 256], strides = [1, 1]} : vector<32x256xf32> to vector<1x256xf32>
    %339 = vector.shape_cast %338 : vector<1x256xf32> to vector<256xf32>
    %340 = arith.maximumf %337, %339 : vector<256xf32>
    %341 = vector.extract_strided_slice %316 {offsets = [7, 0], sizes = [1, 256], strides = [1, 1]} : vector<32x256xf32> to vector<1x256xf32>
    %342 = vector.shape_cast %341 : vector<1x256xf32> to vector<256xf32>
    %343 = arith.maximumf %340, %342 : vector<256xf32>
    %c2_131 = arith.constant 2 : index
    %c3_132 = arith.constant 3 : index
    %c0_133 = arith.constant 0 : index
    %344 = vector.load %arg12[%c2_131, %c3_132, %c0_133] : memref<4x13x256xf32, #tpu.memory_space<vmem>>, vector<1x1x256xf32>
    %345 = vector.shape_cast %344 : vector<1x1x256xf32> to vector<256xf32>
    %346 = vector.shape_cast %343 : vector<256xf32> to vector<1x1x256xf32>
    tpu.vector_store %arg12[%c2_131, %c3_132, %c0_133], %346 {strides = array<i32>} : memref<4x13x256xf32, #tpu.memory_space<vmem>>, vector<1x1x256xf32>,
    %347 = vector.extract_strided_slice %316 {offsets = [8, 0], sizes = [1, 256], strides = [1, 1]} : vector<32x256xf32> to vector<1x256xf32>
    %348 = vector.shape_cast %347 : vector<1x256xf32> to vector<256xf32>
    %349 = vector.extract_strided_slice %316 {offsets = [9, 0], sizes = [1, 256], strides = [1, 1]} : vector<32x256xf32> to vector<1x256xf32>
    %350 = vector.shape_cast %349 : vector<1x256xf32> to vector<256xf32>
    %351 = arith.maximumf %348, %350 : vector<256xf32>
    %352 = vector.extract_strided_slice %316 {offsets = [10, 0], sizes = [1, 256], strides = [1, 1]} : vector<32x256xf32> to vector<1x256xf32>
    %353 = vector.shape_cast %352 : vector<1x256xf32> to vector<256xf32>
    %354 = arith.maximumf %351, %353 : vector<256xf32>
    %c2_134 = arith.constant 2 : index
    %c4_135 = arith.constant 4 : index
    %c0_136 = arith.constant 0 : index
    %355 = vector.load %arg12[%c2_134, %c4_135, %c0_136] : memref<4x13x256xf32, #tpu.memory_space<vmem>>, vector<1x1x256xf32>
    %356 = vector.shape_cast %355 : vector<1x1x256xf32> to vector<256xf32>
    %357 = vector.shape_cast %354 : vector<256xf32> to vector<1x1x256xf32>
    tpu.vector_store %arg12[%c2_134, %c4_135, %c0_136], %357 {strides = array<i32>} : memref<4x13x256xf32, #tpu.memory_space<vmem>>, vector<1x1x256xf32>,
    %358 = vector.extract_strided_slice %316 {offsets = [11, 0], sizes = [1, 256], strides = [1, 1]} : vector<32x256xf32> to vector<1x256xf32>
    %359 = vector.shape_cast %358 : vector<1x256xf32> to vector<256xf32>
    %360 = vector.extract_strided_slice %316 {offsets = [12, 0], sizes = [1, 256], strides = [1, 1]} : vector<32x256xf32> to vector<1x256xf32>
    %361 = vector.shape_cast %360 : vector<1x256xf32> to vector<256xf32>
    %362 = arith.maximumf %359, %361 : vector<256xf32>
    %363 = vector.extract_strided_slice %316 {offsets = [13, 0], sizes = [1, 256], strides = [1, 1]} : vector<32x256xf32> to vector<1x256xf32>
    %364 = vector.shape_cast %363 : vector<1x256xf32> to vector<256xf32>
    %365 = arith.maximumf %362, %364 : vector<256xf32>
    %c2_137 = arith.constant 2 : index
    %c5_138 = arith.constant 5 : index
    %c0_139 = arith.constant 0 : index
    %366 = vector.load %arg12[%c2_137, %c5_138, %c0_139] : memref<4x13x256xf32, #tpu.memory_space<vmem>>, vector<1x1x256xf32>
    %367 = vector.shape_cast %366 : vector<1x1x256xf32> to vector<256xf32>
    %368 = vector.shape_cast %365 : vector<256xf32> to vector<1x1x256xf32>
    tpu.vector_store %arg12[%c2_137, %c5_138, %c0_139], %368 {strides = array<i32>} : memref<4x13x256xf32, #tpu.memory_space<vmem>>, vector<1x1x256xf32>,
    %369 = vector.extract_strided_slice %316 {offsets = [14, 0], sizes = [1, 256], strides = [1, 1]} : vector<32x256xf32> to vector<1x256xf32>
    %370 = vector.shape_cast %369 : vector<1x256xf32> to vector<256xf32>
    %371 = vector.extract_strided_slice %316 {offsets = [15, 0], sizes = [1, 256], strides = [1, 1]} : vector<32x256xf32> to vector<1x256xf32>
    %372 = vector.shape_cast %371 : vector<1x256xf32> to vector<256xf32>
    %373 = arith.maximumf %370, %372 : vector<256xf32>
    %374 = vector.extract_strided_slice %316 {offsets = [16, 0], sizes = [1, 256], strides = [1, 1]} : vector<32x256xf32> to vector<1x256xf32>
    %375 = vector.shape_cast %374 : vector<1x256xf32> to vector<256xf32>
    %376 = arith.maximumf %373, %375 : vector<256xf32>
    %c2_140 = arith.constant 2 : index
    %c6_141 = arith.constant 6 : index
    %c0_142 = arith.constant 0 : index
    %377 = vector.load %arg12[%c2_140, %c6_141, %c0_142] : memref<4x13x256xf32, #tpu.memory_space<vmem>>, vector<1x1x256xf32>
    %378 = vector.shape_cast %377 : vector<1x1x256xf32> to vector<256xf32>
    %379 = vector.shape_cast %376 : vector<256xf32> to vector<1x1x256xf32>
    tpu.vector_store %arg12[%c2_140, %c6_141, %c0_142], %379 {strides = array<i32>} : memref<4x13x256xf32, #tpu.memory_space<vmem>>, vector<1x1x256xf32>,
    %380 = vector.extract_strided_slice %316 {offsets = [17, 0], sizes = [1, 256], strides = [1, 1]} : vector<32x256xf32> to vector<1x256xf32>
    %381 = vector.shape_cast %380 : vector<1x256xf32> to vector<256xf32>
    %382 = vector.extract_strided_slice %316 {offsets = [18, 0], sizes = [1, 256], strides = [1, 1]} : vector<32x256xf32> to vector<1x256xf32>
    %383 = vector.shape_cast %382 : vector<1x256xf32> to vector<256xf32>
    %384 = arith.maximumf %381, %383 : vector<256xf32>
    %385 = vector.extract_strided_slice %316 {offsets = [19, 0], sizes = [1, 256], strides = [1, 1]} : vector<32x256xf32> to vector<1x256xf32>
    %386 = vector.shape_cast %385 : vector<1x256xf32> to vector<256xf32>
    %387 = arith.maximumf %384, %386 : vector<256xf32>
    %c2_143 = arith.constant 2 : index
    %c7_144 = arith.constant 7 : index
    %c0_145 = arith.constant 0 : index
    %388 = vector.load %arg12[%c2_143, %c7_144, %c0_145] : memref<4x13x256xf32, #tpu.memory_space<vmem>>, vector<1x1x256xf32>
    %389 = vector.shape_cast %388 : vector<1x1x256xf32> to vector<256xf32>
    %390 = vector.shape_cast %387 : vector<256xf32> to vector<1x1x256xf32>
    tpu.vector_store %arg12[%c2_143, %c7_144, %c0_145], %390 {strides = array<i32>} : memref<4x13x256xf32, #tpu.memory_space<vmem>>, vector<1x1x256xf32>,
    %391 = vector.extract_strided_slice %316 {offsets = [20, 0], sizes = [1, 256], strides = [1, 1]} : vector<32x256xf32> to vector<1x256xf32>
    %392 = vector.shape_cast %391 : vector<1x256xf32> to vector<256xf32>
    %393 = vector.extract_strided_slice %316 {offsets = [21, 0], sizes = [1, 256], strides = [1, 1]} : vector<32x256xf32> to vector<1x256xf32>
    %394 = vector.shape_cast %393 : vector<1x256xf32> to vector<256xf32>
    %395 = arith.maximumf %392, %394 : vector<256xf32>
    %396 = vector.extract_strided_slice %316 {offsets = [22, 0], sizes = [1, 256], strides = [1, 1]} : vector<32x256xf32> to vector<1x256xf32>
    %397 = vector.shape_cast %396 : vector<1x256xf32> to vector<256xf32>
    %398 = arith.maximumf %395, %397 : vector<256xf32>
    %c2_146 = arith.constant 2 : index
    %c8_147 = arith.constant 8 : index
    %c0_148 = arith.constant 0 : index
    %399 = vector.load %arg12[%c2_146, %c8_147, %c0_148] : memref<4x13x256xf32, #tpu.memory_space<vmem>>, vector<1x1x256xf32>
    %400 = vector.shape_cast %399 : vector<1x1x256xf32> to vector<256xf32>
    %401 = vector.shape_cast %398 : vector<256xf32> to vector<1x1x256xf32>
    tpu.vector_store %arg12[%c2_146, %c8_147, %c0_148], %401 {strides = array<i32>} : memref<4x13x256xf32, #tpu.memory_space<vmem>>, vector<1x1x256xf32>,
    %402 = vector.extract_strided_slice %316 {offsets = [23, 0], sizes = [1, 256], strides = [1, 1]} : vector<32x256xf32> to vector<1x256xf32>
    %403 = vector.shape_cast %402 : vector<1x256xf32> to vector<256xf32>
    %404 = vector.extract_strided_slice %316 {offsets = [24, 0], sizes = [1, 256], strides = [1, 1]} : vector<32x256xf32> to vector<1x256xf32>
    %405 = vector.shape_cast %404 : vector<1x256xf32> to vector<256xf32>
    %406 = arith.maximumf %403, %405 : vector<256xf32>
    %407 = vector.extract_strided_slice %316 {offsets = [25, 0], sizes = [1, 256], strides = [1, 1]} : vector<32x256xf32> to vector<1x256xf32>
    %408 = vector.shape_cast %407 : vector<1x256xf32> to vector<256xf32>
    %409 = arith.maximumf %406, %408 : vector<256xf32>
    %c2_149 = arith.constant 2 : index
    %c9_150 = arith.constant 9 : index
    %c0_151 = arith.constant 0 : index
    %410 = vector.load %arg12[%c2_149, %c9_150, %c0_151] : memref<4x13x256xf32, #tpu.memory_space<vmem>>, vector<1x1x256xf32>
    %411 = vector.shape_cast %410 : vector<1x1x256xf32> to vector<256xf32>
    %412 = vector.shape_cast %409 : vector<256xf32> to vector<1x1x256xf32>
    tpu.vector_store %arg12[%c2_149, %c9_150, %c0_151], %412 {strides = array<i32>} : memref<4x13x256xf32, #tpu.memory_space<vmem>>, vector<1x1x256xf32>,
    %413 = vector.extract_strided_slice %316 {offsets = [26, 0], sizes = [1, 256], strides = [1, 1]} : vector<32x256xf32> to vector<1x256xf32>
    %414 = vector.shape_cast %413 : vector<1x256xf32> to vector<256xf32>
    %415 = vector.extract_strided_slice %316 {offsets = [27, 0], sizes = [1, 256], strides = [1, 1]} : vector<32x256xf32> to vector<1x256xf32>
    %416 = vector.shape_cast %415 : vector<1x256xf32> to vector<256xf32>
    %417 = arith.maximumf %414, %416 : vector<256xf32>
    %418 = vector.extract_strided_slice %316 {offsets = [28, 0], sizes = [1, 256], strides = [1, 1]} : vector<32x256xf32> to vector<1x256xf32>
    %419 = vector.shape_cast %418 : vector<1x256xf32> to vector<256xf32>
    %420 = arith.maximumf %417, %419 : vector<256xf32>
    %c2_152 = arith.constant 2 : index
    %c10_153 = arith.constant 10 : index
    %c0_154 = arith.constant 0 : index
    %421 = vector.load %arg12[%c2_152, %c10_153, %c0_154] : memref<4x13x256xf32, #tpu.memory_space<vmem>>, vector<1x1x256xf32>
    %422 = vector.shape_cast %421 : vector<1x1x256xf32> to vector<256xf32>
    %423 = vector.shape_cast %420 : vector<256xf32> to vector<1x1x256xf32>
    tpu.vector_store %arg12[%c2_152, %c10_153, %c0_154], %423 {strides = array<i32>} : memref<4x13x256xf32, #tpu.memory_space<vmem>>, vector<1x1x256xf32>,
    %424 = vector.extract_strided_slice %316 {offsets = [29, 0], sizes = [1, 256], strides = [1, 1]} : vector<32x256xf32> to vector<1x256xf32>
    %425 = vector.shape_cast %424 : vector<1x256xf32> to vector<256xf32>
    %426 = vector.extract_strided_slice %316 {offsets = [30, 0], sizes = [1, 256], strides = [1, 1]} : vector<32x256xf32> to vector<1x256xf32>
    %427 = vector.shape_cast %426 : vector<1x256xf32> to vector<256xf32>
    %428 = arith.maximumf %425, %427 : vector<256xf32>
    %429 = vector.extract_strided_slice %316 {offsets = [31, 0], sizes = [1, 256], strides = [1, 1]} : vector<32x256xf32> to vector<1x256xf32>
    %430 = vector.shape_cast %429 : vector<1x256xf32> to vector<256xf32>
    %431 = arith.maximumf %428, %430 : vector<256xf32>
    %c2_155 = arith.constant 2 : index
    %c11_156 = arith.constant 11 : index
    %c0_157 = arith.constant 0 : index
    %432 = vector.load %arg12[%c2_155, %c11_156, %c0_157] : memref<4x13x256xf32, #tpu.memory_space<vmem>>, vector<1x1x256xf32>
    %433 = vector.shape_cast %432 : vector<1x1x256xf32> to vector<256xf32>
    %434 = vector.shape_cast %431 : vector<256xf32> to vector<1x1x256xf32>
    tpu.vector_store %arg12[%c2_155, %c11_156, %c0_157], %434 {strides = array<i32>} : memref<4x13x256xf32, #tpu.memory_space<vmem>>, vector<1x1x256xf32>,
    %c3_158 = arith.constant 3 : index
    %c0_159 = arith.constant 0 : index
    %c0_160 = arith.constant 0 : index
    %435 = vector.load %arg11[%c3_158, %c0_159, %c0_160] : memref<4x34x50xf32, #tpu.memory_space<vmem>>, vector<1x34x50xf32>
    %436 = vector.shape_cast %435 : vector<1x34x50xf32> to vector<34x50xf32>
    %437 = vector.extract_strided_slice %436 {offsets = [0, 0], sizes = [32, 50], strides = [1, 1]} : vector<34x50xf32> to vector<32x50xf32>
    %c0_161 = arith.constant 0 : index
    %c0_162 = arith.constant 0 : index
    %c0_163 = arith.constant 0 : index
    %438 = vector.load %arg2[%c0_161, %c0_162, %c0_163] : memref<3x50x256xbf16, #tpu.memory_space<vmem>>, vector<1x50x256xbf16>
    %439 = vector.shape_cast %438 : vector<1x50x256xbf16> to vector<50x256xbf16>
    %440 = arith.truncf %437 : vector<32x50xf32> to vector<32x50xbf16>
    %cst_164 = arith.constant dense<0.000000e+00> : vector<32x256xf32>
    %441 = tpu.matmul %440, %439, %cst_164 {dimension_numbers = #tpu.dot_dimension_numbers<[1], [0], [0], [1], [0, 0, 1, 1], [], []>} : vector<32x50xbf16>, vector<50x256xbf16>, vector<32x256xf32> -> vector<32x256xf32>
    %442 = vector.extract_strided_slice %436 {offsets = [1, 0], sizes = [32, 50], strides = [1, 1]} : vector<34x50xf32> to vector<32x50xf32>
    %c1_165 = arith.constant 1 : index
    %c0_166 = arith.constant 0 : index
    %c0_167 = arith.constant 0 : index
    %443 = vector.load %arg2[%c1_165, %c0_166, %c0_167] : memref<3x50x256xbf16, #tpu.memory_space<vmem>>, vector<1x50x256xbf16>
    %444 = vector.shape_cast %443 : vector<1x50x256xbf16> to vector<50x256xbf16>
    %445 = arith.truncf %442 : vector<32x50xf32> to vector<32x50xbf16>
    %cst_168 = arith.constant dense<0.000000e+00> : vector<32x256xf32>
    %446 = tpu.matmul %445, %444, %cst_168 {dimension_numbers = #tpu.dot_dimension_numbers<[1], [0], [0], [1], [0, 0, 1, 1], [], []>} : vector<32x50xbf16>, vector<50x256xbf16>, vector<32x256xf32> -> vector<32x256xf32>
    %447 = arith.addf %441, %446 : vector<32x256xf32>
    %448 = vector.extract_strided_slice %436 {offsets = [2, 0], sizes = [32, 50], strides = [1, 1]} : vector<34x50xf32> to vector<32x50xf32>
    %c2_169 = arith.constant 2 : index
    %c0_170 = arith.constant 0 : index
    %c0_171 = arith.constant 0 : index
    %449 = vector.load %arg2[%c2_169, %c0_170, %c0_171] : memref<3x50x256xbf16, #tpu.memory_space<vmem>>, vector<1x50x256xbf16>
    %450 = vector.shape_cast %449 : vector<1x50x256xbf16> to vector<50x256xbf16>
    %451 = arith.truncf %448 : vector<32x50xf32> to vector<32x50xbf16>
    %cst_172 = arith.constant dense<0.000000e+00> : vector<32x256xf32>
    %452 = tpu.matmul %451, %450, %cst_172 {dimension_numbers = #tpu.dot_dimension_numbers<[1], [0], [0], [1], [0, 0, 1, 1], [], []>} : vector<32x50xbf16>, vector<50x256xbf16>, vector<32x256xf32> -> vector<32x256xf32>
    %453 = arith.addf %447, %452 : vector<32x256xf32>
    %454 = vector.broadcast %10 : vector<1x256xf32> to vector<32x256xf32>
    %455 = arith.addf %453, %454 : vector<32x256xf32>
    %cst_173 = arith.constant 0.000000e+00 : f32
    %456 = vector.broadcast %cst_173 : f32 to vector<32x256xf32>
    %457 = arith.maximumf %455, %456 : vector<32x256xf32>
    %458 = vector.extract_strided_slice %457 {offsets = [0, 0], sizes = [1, 256], strides = [1, 1]} : vector<32x256xf32> to vector<1x256xf32>
    %459 = vector.shape_cast %458 : vector<1x256xf32> to vector<256xf32>
    %460 = vector.extract_strided_slice %457 {offsets = [1, 0], sizes = [1, 256], strides = [1, 1]} : vector<32x256xf32> to vector<1x256xf32>
    %461 = vector.shape_cast %460 : vector<1x256xf32> to vector<256xf32>
    %462 = arith.maximumf %459, %461 : vector<256xf32>
    %c3_174 = arith.constant 3 : index
    %c1_175 = arith.constant 1 : index
    %c0_176 = arith.constant 0 : index
    %463 = vector.load %arg12[%c3_174, %c1_175, %c0_176] : memref<4x13x256xf32, #tpu.memory_space<vmem>>, vector<1x1x256xf32>
    %464 = vector.shape_cast %463 : vector<1x1x256xf32> to vector<256xf32>
    %465 = vector.shape_cast %462 : vector<256xf32> to vector<1x1x256xf32>
    tpu.vector_store %arg12[%c3_174, %c1_175, %c0_176], %465 {strides = array<i32>} : memref<4x13x256xf32, #tpu.memory_space<vmem>>, vector<1x1x256xf32>,
    %466 = vector.extract_strided_slice %457 {offsets = [2, 0], sizes = [1, 256], strides = [1, 1]} : vector<32x256xf32> to vector<1x256xf32>
    %467 = vector.shape_cast %466 : vector<1x256xf32> to vector<256xf32>
    %468 = vector.extract_strided_slice %457 {offsets = [3, 0], sizes = [1, 256], strides = [1, 1]} : vector<32x256xf32> to vector<1x256xf32>
    %469 = vector.shape_cast %468 : vector<1x256xf32> to vector<256xf32>
    %470 = arith.maximumf %467, %469 : vector<256xf32>
    %471 = vector.extract_strided_slice %457 {offsets = [4, 0], sizes = [1, 256], strides = [1, 1]} : vector<32x256xf32> to vector<1x256xf32>
    %472 = vector.shape_cast %471 : vector<1x256xf32> to vector<256xf32>
    %473 = arith.maximumf %470, %472 : vector<256xf32>
    %c3_177 = arith.constant 3 : index
    %c2_178 = arith.constant 2 : index
    %c0_179 = arith.constant 0 : index
    %474 = vector.load %arg12[%c3_177, %c2_178, %c0_179] : memref<4x13x256xf32, #tpu.memory_space<vmem>>, vector<1x1x256xf32>
    %475 = vector.shape_cast %474 : vector<1x1x256xf32> to vector<256xf32>
    %476 = vector.shape_cast %473 : vector<256xf32> to vector<1x1x256xf32>
    tpu.vector_store %arg12[%c3_177, %c2_178, %c0_179], %476 {strides = array<i32>} : memref<4x13x256xf32, #tpu.memory_space<vmem>>, vector<1x1x256xf32>,
    %477 = vector.extract_strided_slice %457 {offsets = [5, 0], sizes = [1, 256], strides = [1, 1]} : vector<32x256xf32> to vector<1x256xf32>
    %478 = vector.shape_cast %477 : vector<1x256xf32> to vector<256xf32>
    %479 = vector.extract_strided_slice %457 {offsets = [6, 0], sizes = [1, 256], strides = [1, 1]} : vector<32x256xf32> to vector<1x256xf32>
    %480 = vector.shape_cast %479 : vector<1x256xf32> to vector<256xf32>
    %481 = arith.maximumf %478, %480 : vector<256xf32>
    %482 = vector.extract_strided_slice %457 {offsets = [7, 0], sizes = [1, 256], strides = [1, 1]} : vector<32x256xf32> to vector<1x256xf32>
    %483 = vector.shape_cast %482 : vector<1x256xf32> to vector<256xf32>
    %484 = arith.maximumf %481, %483 : vector<256xf32>
    %c3_180 = arith.constant 3 : index
    %c3_181 = arith.constant 3 : index
    %c0_182 = arith.constant 0 : index
    %485 = vector.load %arg12[%c3_180, %c3_181, %c0_182] : memref<4x13x256xf32, #tpu.memory_space<vmem>>, vector<1x1x256xf32>
    %486 = vector.shape_cast %485 : vector<1x1x256xf32> to vector<256xf32>
    %487 = vector.shape_cast %484 : vector<256xf32> to vector<1x1x256xf32>
    tpu.vector_store %arg12[%c3_180, %c3_181, %c0_182], %487 {strides = array<i32>} : memref<4x13x256xf32, #tpu.memory_space<vmem>>, vector<1x1x256xf32>,
    %488 = vector.extract_strided_slice %457 {offsets = [8, 0], sizes = [1, 256], strides = [1, 1]} : vector<32x256xf32> to vector<1x256xf32>
    %489 = vector.shape_cast %488 : vector<1x256xf32> to vector<256xf32>
    %490 = vector.extract_strided_slice %457 {offsets = [9, 0], sizes = [1, 256], strides = [1, 1]} : vector<32x256xf32> to vector<1x256xf32>
    %491 = vector.shape_cast %490 : vector<1x256xf32> to vector<256xf32>
    %492 = arith.maximumf %489, %491 : vector<256xf32>
    %493 = vector.extract_strided_slice %457 {offsets = [10, 0], sizes = [1, 256], strides = [1, 1]} : vector<32x256xf32> to vector<1x256xf32>
    %494 = vector.shape_cast %493 : vector<1x256xf32> to vector<256xf32>
    %495 = arith.maximumf %492, %494 : vector<256xf32>
    %c3_183 = arith.constant 3 : index
    %c4_184 = arith.constant 4 : index
    %c0_185 = arith.constant 0 : index
    %496 = vector.load %arg12[%c3_183, %c4_184, %c0_185] : memref<4x13x256xf32, #tpu.memory_space<vmem>>, vector<1x1x256xf32>
    %497 = vector.shape_cast %496 : vector<1x1x256xf32> to vector<256xf32>
    %498 = vector.shape_cast %495 : vector<256xf32> to vector<1x1x256xf32>
    tpu.vector_store %arg12[%c3_183, %c4_184, %c0_185], %498 {strides = array<i32>} : memref<4x13x256xf32, #tpu.memory_space<vmem>>, vector<1x1x256xf32>,
    %499 = vector.extract_strided_slice %457 {offsets = [11, 0], sizes = [1, 256], strides = [1, 1]} : vector<32x256xf32> to vector<1x256xf32>
    %500 = vector.shape_cast %499 : vector<1x256xf32> to vector<256xf32>
    %501 = vector.extract_strided_slice %457 {offsets = [12, 0], sizes = [1, 256], strides = [1, 1]} : vector<32x256xf32> to vector<1x256xf32>
    %502 = vector.shape_cast %501 : vector<1x256xf32> to vector<256xf32>
    %503 = arith.maximumf %500, %502 : vector<256xf32>
    %504 = vector.extract_strided_slice %457 {offsets = [13, 0], sizes = [1, 256], strides = [1, 1]} : vector<32x256xf32> to vector<1x256xf32>
    %505 = vector.shape_cast %504 : vector<1x256xf32> to vector<256xf32>
    %506 = arith.maximumf %503, %505 : vector<256xf32>
    %c3_186 = arith.constant 3 : index
    %c5_187 = arith.constant 5 : index
    %c0_188 = arith.constant 0 : index
    %507 = vector.load %arg12[%c3_186, %c5_187, %c0_188] : memref<4x13x256xf32, #tpu.memory_space<vmem>>, vector<1x1x256xf32>
    %508 = vector.shape_cast %507 : vector<1x1x256xf32> to vector<256xf32>
    %509 = vector.shape_cast %506 : vector<256xf32> to vector<1x1x256xf32>
    tpu.vector_store %arg12[%c3_186, %c5_187, %c0_188], %509 {strides = array<i32>} : memref<4x13x256xf32, #tpu.memory_space<vmem>>, vector<1x1x256xf32>,
    %510 = vector.extract_strided_slice %457 {offsets = [14, 0], sizes = [1, 256], strides = [1, 1]} : vector<32x256xf32> to vector<1x256xf32>
    %511 = vector.shape_cast %510 : vector<1x256xf32> to vector<256xf32>
    %512 = vector.extract_strided_slice %457 {offsets = [15, 0], sizes = [1, 256], strides = [1, 1]} : vector<32x256xf32> to vector<1x256xf32>
    %513 = vector.shape_cast %512 : vector<1x256xf32> to vector<256xf32>
    %514 = arith.maximumf %511, %513 : vector<256xf32>
    %515 = vector.extract_strided_slice %457 {offsets = [16, 0], sizes = [1, 256], strides = [1, 1]} : vector<32x256xf32> to vector<1x256xf32>
    %516 = vector.shape_cast %515 : vector<1x256xf32> to vector<256xf32>
    %517 = arith.maximumf %514, %516 : vector<256xf32>
    %c3_189 = arith.constant 3 : index
    %c6_190 = arith.constant 6 : index
    %c0_191 = arith.constant 0 : index
    %518 = vector.load %arg12[%c3_189, %c6_190, %c0_191] : memref<4x13x256xf32, #tpu.memory_space<vmem>>, vector<1x1x256xf32>
    %519 = vector.shape_cast %518 : vector<1x1x256xf32> to vector<256xf32>
    %520 = vector.shape_cast %517 : vector<256xf32> to vector<1x1x256xf32>
    tpu.vector_store %arg12[%c3_189, %c6_190, %c0_191], %520 {strides = array<i32>} : memref<4x13x256xf32, #tpu.memory_space<vmem>>, vector<1x1x256xf32>,
    %521 = vector.extract_strided_slice %457 {offsets = [17, 0], sizes = [1, 256], strides = [1, 1]} : vector<32x256xf32> to vector<1x256xf32>
    %522 = vector.shape_cast %521 : vector<1x256xf32> to vector<256xf32>
    %523 = vector.extract_strided_slice %457 {offsets = [18, 0], sizes = [1, 256], strides = [1, 1]} : vector<32x256xf32> to vector<1x256xf32>
    %524 = vector.shape_cast %523 : vector<1x256xf32> to vector<256xf32>
    %525 = arith.maximumf %522, %524 : vector<256xf32>
    %526 = vector.extract_strided_slice %457 {offsets = [19, 0], sizes = [1, 256], strides = [1, 1]} : vector<32x256xf32> to vector<1x256xf32>
    %527 = vector.shape_cast %526 : vector<1x256xf32> to vector<256xf32>
    %528 = arith.maximumf %525, %527 : vector<256xf32>
    %c3_192 = arith.constant 3 : index
    %c7_193 = arith.constant 7 : index
    %c0_194 = arith.constant 0 : index
    %529 = vector.load %arg12[%c3_192, %c7_193, %c0_194] : memref<4x13x256xf32, #tpu.memory_space<vmem>>, vector<1x1x256xf32>
    %530 = vector.shape_cast %529 : vector<1x1x256xf32> to vector<256xf32>
    %531 = vector.shape_cast %528 : vector<256xf32> to vector<1x1x256xf32>
    tpu.vector_store %arg12[%c3_192, %c7_193, %c0_194], %531 {strides = array<i32>} : memref<4x13x256xf32, #tpu.memory_space<vmem>>, vector<1x1x256xf32>,
    %532 = vector.extract_strided_slice %457 {offsets = [20, 0], sizes = [1, 256], strides = [1, 1]} : vector<32x256xf32> to vector<1x256xf32>
    %533 = vector.shape_cast %532 : vector<1x256xf32> to vector<256xf32>
    %534 = vector.extract_strided_slice %457 {offsets = [21, 0], sizes = [1, 256], strides = [1, 1]} : vector<32x256xf32> to vector<1x256xf32>
    %535 = vector.shape_cast %534 : vector<1x256xf32> to vector<256xf32>
    %536 = arith.maximumf %533, %535 : vector<256xf32>
    %537 = vector.extract_strided_slice %457 {offsets = [22, 0], sizes = [1, 256], strides = [1, 1]} : vector<32x256xf32> to vector<1x256xf32>
    %538 = vector.shape_cast %537 : vector<1x256xf32> to vector<256xf32>
    %539 = arith.maximumf %536, %538 : vector<256xf32>
    %c3_195 = arith.constant 3 : index
    %c8_196 = arith.constant 8 : index
    %c0_197 = arith.constant 0 : index
    %540 = vector.load %arg12[%c3_195, %c8_196, %c0_197] : memref<4x13x256xf32, #tpu.memory_space<vmem>>, vector<1x1x256xf32>
    %541 = vector.shape_cast %540 : vector<1x1x256xf32> to vector<256xf32>
    %542 = vector.shape_cast %539 : vector<256xf32> to vector<1x1x256xf32>
    tpu.vector_store %arg12[%c3_195, %c8_196, %c0_197], %542 {strides = array<i32>} : memref<4x13x256xf32, #tpu.memory_space<vmem>>, vector<1x1x256xf32>,
    %543 = vector.extract_strided_slice %457 {offsets = [23, 0], sizes = [1, 256], strides = [1, 1]} : vector<32x256xf32> to vector<1x256xf32>
    %544 = vector.shape_cast %543 : vector<1x256xf32> to vector<256xf32>
    %545 = vector.extract_strided_slice %457 {offsets = [24, 0], sizes = [1, 256], strides = [1, 1]} : vector<32x256xf32> to vector<1x256xf32>
    %546 = vector.shape_cast %545 : vector<1x256xf32> to vector<256xf32>
    %547 = arith.maximumf %544, %546 : vector<256xf32>
    %548 = vector.extract_strided_slice %457 {offsets = [25, 0], sizes = [1, 256], strides = [1, 1]} : vector<32x256xf32> to vector<1x256xf32>
    %549 = vector.shape_cast %548 : vector<1x256xf32> to vector<256xf32>
    %550 = arith.maximumf %547, %549 : vector<256xf32>
    %c3_198 = arith.constant 3 : index
    %c9_199 = arith.constant 9 : index
    %c0_200 = arith.constant 0 : index
    %551 = vector.load %arg12[%c3_198, %c9_199, %c0_200] : memref<4x13x256xf32, #tpu.memory_space<vmem>>, vector<1x1x256xf32>
    %552 = vector.shape_cast %551 : vector<1x1x256xf32> to vector<256xf32>
    %553 = vector.shape_cast %550 : vector<256xf32> to vector<1x1x256xf32>
    tpu.vector_store %arg12[%c3_198, %c9_199, %c0_200], %553 {strides = array<i32>} : memref<4x13x256xf32, #tpu.memory_space<vmem>>, vector<1x1x256xf32>,
    %554 = vector.extract_strided_slice %457 {offsets = [26, 0], sizes = [1, 256], strides = [1, 1]} : vector<32x256xf32> to vector<1x256xf32>
    %555 = vector.shape_cast %554 : vector<1x256xf32> to vector<256xf32>
    %556 = vector.extract_strided_slice %457 {offsets = [27, 0], sizes = [1, 256], strides = [1, 1]} : vector<32x256xf32> to vector<1x256xf32>
    %557 = vector.shape_cast %556 : vector<1x256xf32> to vector<256xf32>
    %558 = arith.maximumf %555, %557 : vector<256xf32>
    %559 = vector.extract_strided_slice %457 {offsets = [28, 0], sizes = [1, 256], strides = [1, 1]} : vector<32x256xf32> to vector<1x256xf32>
    %560 = vector.shape_cast %559 : vector<1x256xf32> to vector<256xf32>
    %561 = arith.maximumf %558, %560 : vector<256xf32>
    %c3_201 = arith.constant 3 : index
    %c10_202 = arith.constant 10 : index
    %c0_203 = arith.constant 0 : index
    %562 = vector.load %arg12[%c3_201, %c10_202, %c0_203] : memref<4x13x256xf32, #tpu.memory_space<vmem>>, vector<1x1x256xf32>
    %563 = vector.shape_cast %562 : vector<1x1x256xf32> to vector<256xf32>
    %564 = vector.shape_cast %561 : vector<256xf32> to vector<1x1x256xf32>
    tpu.vector_store %arg12[%c3_201, %c10_202, %c0_203], %564 {strides = array<i32>} : memref<4x13x256xf32, #tpu.memory_space<vmem>>, vector<1x1x256xf32>,
    %565 = vector.extract_strided_slice %457 {offsets = [29, 0], sizes = [1, 256], strides = [1, 1]} : vector<32x256xf32> to vector<1x256xf32>
    %566 = vector.shape_cast %565 : vector<1x256xf32> to vector<256xf32>
    %567 = vector.extract_strided_slice %457 {offsets = [30, 0], sizes = [1, 256], strides = [1, 1]} : vector<32x256xf32> to vector<1x256xf32>
    %568 = vector.shape_cast %567 : vector<1x256xf32> to vector<256xf32>
    %569 = arith.maximumf %566, %568 : vector<256xf32>
    %570 = vector.extract_strided_slice %457 {offsets = [31, 0], sizes = [1, 256], strides = [1, 1]} : vector<32x256xf32> to vector<1x256xf32>
    %571 = vector.shape_cast %570 : vector<1x256xf32> to vector<256xf32>
    %572 = arith.maximumf %569, %571 : vector<256xf32>
    %c3_204 = arith.constant 3 : index
    %c11_205 = arith.constant 11 : index
    %c0_206 = arith.constant 0 : index
    %573 = vector.load %arg12[%c3_204, %c11_205, %c0_206] : memref<4x13x256xf32, #tpu.memory_space<vmem>>, vector<1x1x256xf32>
    %574 = vector.shape_cast %573 : vector<1x1x256xf32> to vector<256xf32>
    %575 = vector.shape_cast %572 : vector<256xf32> to vector<1x1x256xf32>
    tpu.vector_store %arg12[%c3_204, %c11_205, %c0_206], %575 {strides = array<i32>} : memref<4x13x256xf32, #tpu.memory_space<vmem>>, vector<1x1x256xf32>,
    %c0_207 = arith.constant 0 : index
    %c0_208 = arith.constant 0 : index
    %c0_209 = arith.constant 0 : index
    %576 = vector.load %arg12[%c0_207, %c0_208, %c0_209] : memref<4x13x256xf32, #tpu.memory_space<vmem>>, vector<1x13x256xf32>
    %577 = vector.shape_cast %576 : vector<1x13x256xf32> to vector<13x256xf32>
    %578 = vector.extract_strided_slice %577 {offsets = [0, 0], sizes = [11, 256], strides = [1, 1]} : vector<13x256xf32> to vector<11x256xf32>
    %c0_210 = arith.constant 0 : index
    %c0_211 = arith.constant 0 : index
    %c0_212 = arith.constant 0 : index
    %579 = vector.load %arg4[%c0_210, %c0_211, %c0_212] : memref<3x256x50xbf16, #tpu.memory_space<vmem>>, vector<1x256x50xbf16>
    %580 = vector.shape_cast %579 : vector<1x256x50xbf16> to vector<256x50xbf16>
    %581 = arith.truncf %578 : vector<11x256xf32> to vector<11x256xbf16>
    %cst_213 = arith.constant dense<0.000000e+00> : vector<11x50xf32>
    %582 = tpu.matmul %581, %580, %cst_213 {dimension_numbers = #tpu.dot_dimension_numbers<[1], [0], [0], [1], [0, 0, 1, 1], [], []>} : vector<11x256xbf16>, vector<256x50xbf16>, vector<11x50xf32> -> vector<11x50xf32>
    %583 = vector.extract_strided_slice %577 {offsets = [1, 0], sizes = [11, 256], strides = [1, 1]} : vector<13x256xf32> to vector<11x256xf32>
    %c1_214 = arith.constant 1 : index
    %c0_215 = arith.constant 0 : index
    %c0_216 = arith.constant 0 : index
    %584 = vector.load %arg4[%c1_214, %c0_215, %c0_216] : memref<3x256x50xbf16, #tpu.memory_space<vmem>>, vector<1x256x50xbf16>
    %585 = vector.shape_cast %584 : vector<1x256x50xbf16> to vector<256x50xbf16>
    %586 = arith.truncf %583 : vector<11x256xf32> to vector<11x256xbf16>
    %cst_217 = arith.constant dense<0.000000e+00> : vector<11x50xf32>
    %587 = tpu.matmul %586, %585, %cst_217 {dimension_numbers = #tpu.dot_dimension_numbers<[1], [0], [0], [1], [0, 0, 1, 1], [], []>} : vector<11x256xbf16>, vector<256x50xbf16>, vector<11x50xf32> -> vector<11x50xf32>
    %588 = arith.addf %582, %587 : vector<11x50xf32>
    %589 = vector.extract_strided_slice %577 {offsets = [2, 0], sizes = [11, 256], strides = [1, 1]} : vector<13x256xf32> to vector<11x256xf32>
    %c2_218 = arith.constant 2 : index
    %c0_219 = arith.constant 0 : index
    %c0_220 = arith.constant 0 : index
    %590 = vector.load %arg4[%c2_218, %c0_219, %c0_220] : memref<3x256x50xbf16, #tpu.memory_space<vmem>>, vector<1x256x50xbf16>
    %591 = vector.shape_cast %590 : vector<1x256x50xbf16> to vector<256x50xbf16>
    %592 = arith.truncf %589 : vector<11x256xf32> to vector<11x256xbf16>
    %cst_221 = arith.constant dense<0.000000e+00> : vector<11x50xf32>
    %593 = tpu.matmul %592, %591, %cst_221 {dimension_numbers = #tpu.dot_dimension_numbers<[1], [0], [0], [1], [0, 0, 1, 1], [], []>} : vector<11x256xbf16>, vector<256x50xbf16>, vector<11x50xf32> -> vector<11x50xf32>
    %594 = arith.addf %588, %593 : vector<11x50xf32>
    %595 = vector.broadcast %11 : vector<1x50xf32> to vector<11x50xf32>
    %596 = arith.addf %594, %595 : vector<11x50xf32>
    %cst_222 = arith.constant 0.000000e+00 : f32
    %597 = vector.broadcast %cst_222 : f32 to vector<11x50xf32>
    %598 = arith.maximumf %596, %597 : vector<11x50xf32>
    %c0_223 = arith.constant 0 : index
    %c0_224 = arith.constant 0 : index
    %c0_225 = arith.constant 0 : index
    %599 = vector.load %arg13[%c0_223, %c0_224, %c0_225] : memref<4x11x50xf32, #tpu.memory_space<vmem>>, vector<1x11x50xf32>
    %600 = vector.shape_cast %599 : vector<1x11x50xf32> to vector<11x50xf32>
    %601 = vector.shape_cast %598 : vector<11x50xf32> to vector<1x11x50xf32>
    tpu.vector_store %arg13[%c0_223, %c0_224, %c0_225], %601 {strides = array<i32>} : memref<4x11x50xf32, #tpu.memory_space<vmem>>, vector<1x11x50xf32>,
    %c1_226 = arith.constant 1 : index
    %c0_227 = arith.constant 0 : index
    %c0_228 = arith.constant 0 : index
    %602 = vector.load %arg12[%c1_226, %c0_227, %c0_228] : memref<4x13x256xf32, #tpu.memory_space<vmem>>, vector<1x13x256xf32>
    %603 = vector.shape_cast %602 : vector<1x13x256xf32> to vector<13x256xf32>
    %604 = vector.extract_strided_slice %603 {offsets = [0, 0], sizes = [11, 256], strides = [1, 1]} : vector<13x256xf32> to vector<11x256xf32>
    %c0_229 = arith.constant 0 : index
    %c0_230 = arith.constant 0 : index
    %c0_231 = arith.constant 0 : index
    %605 = vector.load %arg4[%c0_229, %c0_230, %c0_231] : memref<3x256x50xbf16, #tpu.memory_space<vmem>>, vector<1x256x50xbf16>
    %606 = vector.shape_cast %605 : vector<1x256x50xbf16> to vector<256x50xbf16>
    %607 = arith.truncf %604 : vector<11x256xf32> to vector<11x256xbf16>
    %cst_232 = arith.constant dense<0.000000e+00> : vector<11x50xf32>
    %608 = tpu.matmul %607, %606, %cst_232 {dimension_numbers = #tpu.dot_dimension_numbers<[1], [0], [0], [1], [0, 0, 1, 1], [], []>} : vector<11x256xbf16>, vector<256x50xbf16>, vector<11x50xf32> -> vector<11x50xf32>
    %609 = vector.extract_strided_slice %603 {offsets = [1, 0], sizes = [11, 256], strides = [1, 1]} : vector<13x256xf32> to vector<11x256xf32>
    %c1_233 = arith.constant 1 : index
    %c0_234 = arith.constant 0 : index
    %c0_235 = arith.constant 0 : index
    %610 = vector.load %arg4[%c1_233, %c0_234, %c0_235] : memref<3x256x50xbf16, #tpu.memory_space<vmem>>, vector<1x256x50xbf16>
    %611 = vector.shape_cast %610 : vector<1x256x50xbf16> to vector<256x50xbf16>
    %612 = arith.truncf %609 : vector<11x256xf32> to vector<11x256xbf16>
    %cst_236 = arith.constant dense<0.000000e+00> : vector<11x50xf32>
    %613 = tpu.matmul %612, %611, %cst_236 {dimension_numbers = #tpu.dot_dimension_numbers<[1], [0], [0], [1], [0, 0, 1, 1], [], []>} : vector<11x256xbf16>, vector<256x50xbf16>, vector<11x50xf32> -> vector<11x50xf32>
    %614 = arith.addf %608, %613 : vector<11x50xf32>
    %615 = vector.extract_strided_slice %603 {offsets = [2, 0], sizes = [11, 256], strides = [1, 1]} : vector<13x256xf32> to vector<11x256xf32>
    %c2_237 = arith.constant 2 : index
    %c0_238 = arith.constant 0 : index
    %c0_239 = arith.constant 0 : index
    %616 = vector.load %arg4[%c2_237, %c0_238, %c0_239] : memref<3x256x50xbf16, #tpu.memory_space<vmem>>, vector<1x256x50xbf16>
    %617 = vector.shape_cast %616 : vector<1x256x50xbf16> to vector<256x50xbf16>
    %618 = arith.truncf %615 : vector<11x256xf32> to vector<11x256xbf16>
    %cst_240 = arith.constant dense<0.000000e+00> : vector<11x50xf32>
    %619 = tpu.matmul %618, %617, %cst_240 {dimension_numbers = #tpu.dot_dimension_numbers<[1], [0], [0], [1], [0, 0, 1, 1], [], []>} : vector<11x256xbf16>, vector<256x50xbf16>, vector<11x50xf32> -> vector<11x50xf32>
    %620 = arith.addf %614, %619 : vector<11x50xf32>
    %621 = vector.broadcast %11 : vector<1x50xf32> to vector<11x50xf32>
    %622 = arith.addf %620, %621 : vector<11x50xf32>
    %cst_241 = arith.constant 0.000000e+00 : f32
    %623 = vector.broadcast %cst_241 : f32 to vector<11x50xf32>
    %624 = arith.maximumf %622, %623 : vector<11x50xf32>
    %c1_242 = arith.constant 1 : index
    %c0_243 = arith.constant 0 : index
    %c0_244 = arith.constant 0 : index
    %625 = vector.load %arg13[%c1_242, %c0_243, %c0_244] : memref<4x11x50xf32, #tpu.memory_space<vmem>>, vector<1x11x50xf32>
    %626 = vector.shape_cast %625 : vector<1x11x50xf32> to vector<11x50xf32>
    %627 = vector.shape_cast %624 : vector<11x50xf32> to vector<1x11x50xf32>
    tpu.vector_store %arg13[%c1_242, %c0_243, %c0_244], %627 {strides = array<i32>} : memref<4x11x50xf32, #tpu.memory_space<vmem>>, vector<1x11x50xf32>,
    %c2_245 = arith.constant 2 : index
    %c0_246 = arith.constant 0 : index
    %c0_247 = arith.constant 0 : index
    %628 = vector.load %arg12[%c2_245, %c0_246, %c0_247] : memref<4x13x256xf32, #tpu.memory_space<vmem>>, vector<1x13x256xf32>
    %629 = vector.shape_cast %628 : vector<1x13x256xf32> to vector<13x256xf32>
    %630 = vector.extract_strided_slice %629 {offsets = [0, 0], sizes = [11, 256], strides = [1, 1]} : vector<13x256xf32> to vector<11x256xf32>
    %c0_248 = arith.constant 0 : index
    %c0_249 = arith.constant 0 : index
    %c0_250 = arith.constant 0 : index
    %631 = vector.load %arg4[%c0_248, %c0_249, %c0_250] : memref<3x256x50xbf16, #tpu.memory_space<vmem>>, vector<1x256x50xbf16>
    %632 = vector.shape_cast %631 : vector<1x256x50xbf16> to vector<256x50xbf16>
    %633 = arith.truncf %630 : vector<11x256xf32> to vector<11x256xbf16>
    %cst_251 = arith.constant dense<0.000000e+00> : vector<11x50xf32>
    %634 = tpu.matmul %633, %632, %cst_251 {dimension_numbers = #tpu.dot_dimension_numbers<[1], [0], [0], [1], [0, 0, 1, 1], [], []>} : vector<11x256xbf16>, vector<256x50xbf16>, vector<11x50xf32> -> vector<11x50xf32>
    %635 = vector.extract_strided_slice %629 {offsets = [1, 0], sizes = [11, 256], strides = [1, 1]} : vector<13x256xf32> to vector<11x256xf32>
    %c1_252 = arith.constant 1 : index
    %c0_253 = arith.constant 0 : index
    %c0_254 = arith.constant 0 : index
    %636 = vector.load %arg4[%c1_252, %c0_253, %c0_254] : memref<3x256x50xbf16, #tpu.memory_space<vmem>>, vector<1x256x50xbf16>
    %637 = vector.shape_cast %636 : vector<1x256x50xbf16> to vector<256x50xbf16>
    %638 = arith.truncf %635 : vector<11x256xf32> to vector<11x256xbf16>
    %cst_255 = arith.constant dense<0.000000e+00> : vector<11x50xf32>
    %639 = tpu.matmul %638, %637, %cst_255 {dimension_numbers = #tpu.dot_dimension_numbers<[1], [0], [0], [1], [0, 0, 1, 1], [], []>} : vector<11x256xbf16>, vector<256x50xbf16>, vector<11x50xf32> -> vector<11x50xf32>
    %640 = arith.addf %634, %639 : vector<11x50xf32>
    %641 = vector.extract_strided_slice %629 {offsets = [2, 0], sizes = [11, 256], strides = [1, 1]} : vector<13x256xf32> to vector<11x256xf32>
    %c2_256 = arith.constant 2 : index
    %c0_257 = arith.constant 0 : index
    %c0_258 = arith.constant 0 : index
    %642 = vector.load %arg4[%c2_256, %c0_257, %c0_258] : memref<3x256x50xbf16, #tpu.memory_space<vmem>>, vector<1x256x50xbf16>
    %643 = vector.shape_cast %642 : vector<1x256x50xbf16> to vector<256x50xbf16>
    %644 = arith.truncf %641 : vector<11x256xf32> to vector<11x256xbf16>
    %cst_259 = arith.constant dense<0.000000e+00> : vector<11x50xf32>
    %645 = tpu.matmul %644, %643, %cst_259 {dimension_numbers = #tpu.dot_dimension_numbers<[1], [0], [0], [1], [0, 0, 1, 1], [], []>} : vector<11x256xbf16>, vector<256x50xbf16>, vector<11x50xf32> -> vector<11x50xf32>
    %646 = arith.addf %640, %645 : vector<11x50xf32>
    %647 = vector.broadcast %11 : vector<1x50xf32> to vector<11x50xf32>
    %648 = arith.addf %646, %647 : vector<11x50xf32>
    %cst_260 = arith.constant 0.000000e+00 : f32
    %649 = vector.broadcast %cst_260 : f32 to vector<11x50xf32>
    %650 = arith.maximumf %648, %649 : vector<11x50xf32>
    %c2_261 = arith.constant 2 : index
    %c0_262 = arith.constant 0 : index
    %c0_263 = arith.constant 0 : index
    %651 = vector.load %arg13[%c2_261, %c0_262, %c0_263] : memref<4x11x50xf32, #tpu.memory_space<vmem>>, vector<1x11x50xf32>
    %652 = vector.shape_cast %651 : vector<1x11x50xf32> to vector<11x50xf32>
    %653 = vector.shape_cast %650 : vector<11x50xf32> to vector<1x11x50xf32>
    tpu.vector_store %arg13[%c2_261, %c0_262, %c0_263], %653 {strides = array<i32>} : memref<4x11x50xf32, #tpu.memory_space<vmem>>, vector<1x11x50xf32>,
    %c3_264 = arith.constant 3 : index
    %c0_265 = arith.constant 0 : index
    %c0_266 = arith.constant 0 : index
    %654 = vector.load %arg12[%c3_264, %c0_265, %c0_266] : memref<4x13x256xf32, #tpu.memory_space<vmem>>, vector<1x13x256xf32>
    %655 = vector.shape_cast %654 : vector<1x13x256xf32> to vector<13x256xf32>
    %656 = vector.extract_strided_slice %655 {offsets = [0, 0], sizes = [11, 256], strides = [1, 1]} : vector<13x256xf32> to vector<11x256xf32>
    %c0_267 = arith.constant 0 : index
    %c0_268 = arith.constant 0 : index
    %c0_269 = arith.constant 0 : index
    %657 = vector.load %arg4[%c0_267, %c0_268, %c0_269] : memref<3x256x50xbf16, #tpu.memory_space<vmem>>, vector<1x256x50xbf16>
    %658 = vector.shape_cast %657 : vector<1x256x50xbf16> to vector<256x50xbf16>
    %659 = arith.truncf %656 : vector<11x256xf32> to vector<11x256xbf16>
    %cst_270 = arith.constant dense<0.000000e+00> : vector<11x50xf32>
    %660 = tpu.matmul %659, %658, %cst_270 {dimension_numbers = #tpu.dot_dimension_numbers<[1], [0], [0], [1], [0, 0, 1, 1], [], []>} : vector<11x256xbf16>, vector<256x50xbf16>, vector<11x50xf32> -> vector<11x50xf32>
    %661 = vector.extract_strided_slice %655 {offsets = [1, 0], sizes = [11, 256], strides = [1, 1]} : vector<13x256xf32> to vector<11x256xf32>
    %c1_271 = arith.constant 1 : index
    %c0_272 = arith.constant 0 : index
    %c0_273 = arith.constant 0 : index
    %662 = vector.load %arg4[%c1_271, %c0_272, %c0_273] : memref<3x256x50xbf16, #tpu.memory_space<vmem>>, vector<1x256x50xbf16>
    %663 = vector.shape_cast %662 : vector<1x256x50xbf16> to vector<256x50xbf16>
    %664 = arith.truncf %661 : vector<11x256xf32> to vector<11x256xbf16>
    %cst_274 = arith.constant dense<0.000000e+00> : vector<11x50xf32>
    %665 = tpu.matmul %664, %663, %cst_274 {dimension_numbers = #tpu.dot_dimension_numbers<[1], [0], [0], [1], [0, 0, 1, 1], [], []>} : vector<11x256xbf16>, vector<256x50xbf16>, vector<11x50xf32> -> vector<11x50xf32>
    %666 = arith.addf %660, %665 : vector<11x50xf32>
    %667 = vector.extract_strided_slice %655 {offsets = [2, 0], sizes = [11, 256], strides = [1, 1]} : vector<13x256xf32> to vector<11x256xf32>
    %c2_275 = arith.constant 2 : index
    %c0_276 = arith.constant 0 : index
    %c0_277 = arith.constant 0 : index
    %668 = vector.load %arg4[%c2_275, %c0_276, %c0_277] : memref<3x256x50xbf16, #tpu.memory_space<vmem>>, vector<1x256x50xbf16>
    %669 = vector.shape_cast %668 : vector<1x256x50xbf16> to vector<256x50xbf16>
    %670 = arith.truncf %667 : vector<11x256xf32> to vector<11x256xbf16>
    %cst_278 = arith.constant dense<0.000000e+00> : vector<11x50xf32>
    %671 = tpu.matmul %670, %669, %cst_278 {dimension_numbers = #tpu.dot_dimension_numbers<[1], [0], [0], [1], [0, 0, 1, 1], [], []>} : vector<11x256xbf16>, vector<256x50xbf16>, vector<11x50xf32> -> vector<11x50xf32>
    %672 = arith.addf %666, %671 : vector<11x50xf32>
    %673 = vector.broadcast %11 : vector<1x50xf32> to vector<11x50xf32>
    %674 = arith.addf %672, %673 : vector<11x50xf32>
    %cst_279 = arith.constant 0.000000e+00 : f32
    %675 = vector.broadcast %cst_279 : f32 to vector<11x50xf32>
    %676 = arith.maximumf %674, %675 : vector<11x50xf32>
    %c3_280 = arith.constant 3 : index
    %c0_281 = arith.constant 0 : index
    %c0_282 = arith.constant 0 : index
    %677 = vector.load %arg13[%c3_280, %c0_281, %c0_282] : memref<4x11x50xf32, #tpu.memory_space<vmem>>, vector<1x11x50xf32>
    %678 = vector.shape_cast %677 : vector<1x11x50xf32> to vector<11x50xf32>
    %679 = vector.shape_cast %676 : vector<11x50xf32> to vector<1x11x50xf32>
    tpu.vector_store %arg13[%c3_280, %c0_281, %c0_282], %679 {strides = array<i32>} : memref<4x11x50xf32, #tpu.memory_space<vmem>>, vector<1x11x50xf32>,
    %cst_283 = arith.constant 0.000000e+00 : f32
    %680 = vector.broadcast %cst_283 : f32 to vector<4x256xf32>
    %c0_284 = arith.constant 0 : index
    %c0_285 = arith.constant 0 : index
    %c0_286 = arith.constant 0 : index
    %681 = vector.load %arg13[%c0_284, %c0_285, %c0_286] : memref<4x11x50xf32, #tpu.memory_space<vmem>>, vector<4x1x50xf32>
    %682 = vector.shape_cast %681 : vector<4x1x50xf32> to vector<4x50xf32>
    %c0_287 = arith.constant 0 : index
    %c0_288 = arith.constant 0 : index
    %c0_289 = arith.constant 0 : index
    %683 = vector.load %arg6[%c0_287, %c0_288, %c0_289] : memref<11x50x256xbf16, #tpu.memory_space<vmem>>, vector<1x50x256xbf16>
    %684 = vector.shape_cast %683 : vector<1x50x256xbf16> to vector<50x256xbf16>
    %685 = arith.truncf %682 : vector<4x50xf32> to vector<4x50xbf16>
    %cst_290 = arith.constant dense<0.000000e+00> : vector<4x256xf32>
    %686 = tpu.matmul %685, %684, %cst_290 {dimension_numbers = #tpu.dot_dimension_numbers<[1], [0], [0], [1], [0, 0, 1, 1], [], []>} : vector<4x50xbf16>, vector<50x256xbf16>, vector<4x256xf32> -> vector<4x256xf32>
    %687 = arith.addf %680, %686 : vector<4x256xf32>
    %c0_291 = arith.constant 0 : index
    %c1_292 = arith.constant 1 : index
    %c0_293 = arith.constant 0 : index
    %688 = vector.load %arg13[%c0_291, %c1_292, %c0_293] : memref<4x11x50xf32, #tpu.memory_space<vmem>>, vector<4x1x50xf32>
    %689 = vector.shape_cast %688 : vector<4x1x50xf32> to vector<4x50xf32>
    %c1_294 = arith.constant 1 : index
    %c0_295 = arith.constant 0 : index
    %c0_296 = arith.constant 0 : index
    %690 = vector.load %arg6[%c1_294, %c0_295, %c0_296] : memref<11x50x256xbf16, #tpu.memory_space<vmem>>, vector<1x50x256xbf16>
    %691 = vector.shape_cast %690 : vector<1x50x256xbf16> to vector<50x256xbf16>
    %692 = arith.truncf %689 : vector<4x50xf32> to vector<4x50xbf16>
    %cst_297 = arith.constant dense<0.000000e+00> : vector<4x256xf32>
    %693 = tpu.matmul %692, %691, %cst_297 {dimension_numbers = #tpu.dot_dimension_numbers<[1], [0], [0], [1], [0, 0, 1, 1], [], []>} : vector<4x50xbf16>, vector<50x256xbf16>, vector<4x256xf32> -> vector<4x256xf32>
    %694 = arith.addf %687, %693 : vector<4x256xf32>
    %c0_298 = arith.constant 0 : index
    %c2_299 = arith.constant 2 : index
    %c0_300 = arith.constant 0 : index
    %695 = vector.load %arg13[%c0_298, %c2_299, %c0_300] : memref<4x11x50xf32, #tpu.memory_space<vmem>>, vector<4x1x50xf32>
    %696 = vector.shape_cast %695 : vector<4x1x50xf32> to vector<4x50xf32>
    %c2_301 = arith.constant 2 : index
    %c0_302 = arith.constant 0 : index
    %c0_303 = arith.constant 0 : index
    %697 = vector.load %arg6[%c2_301, %c0_302, %c0_303] : memref<11x50x256xbf16, #tpu.memory_space<vmem>>, vector<1x50x256xbf16>
    %698 = vector.shape_cast %697 : vector<1x50x256xbf16> to vector<50x256xbf16>
    %699 = arith.truncf %696 : vector<4x50xf32> to vector<4x50xbf16>
    %cst_304 = arith.constant dense<0.000000e+00> : vector<4x256xf32>
    %700 = tpu.matmul %699, %698, %cst_304 {dimension_numbers = #tpu.dot_dimension_numbers<[1], [0], [0], [1], [0, 0, 1, 1], [], []>} : vector<4x50xbf16>, vector<50x256xbf16>, vector<4x256xf32> -> vector<4x256xf32>
    %701 = arith.addf %694, %700 : vector<4x256xf32>
    %c0_305 = arith.constant 0 : index
    %c3_306 = arith.constant 3 : index
    %c0_307 = arith.constant 0 : index
    %702 = vector.load %arg13[%c0_305, %c3_306, %c0_307] : memref<4x11x50xf32, #tpu.memory_space<vmem>>, vector<4x1x50xf32>
    %703 = vector.shape_cast %702 : vector<4x1x50xf32> to vector<4x50xf32>
    %c3_308 = arith.constant 3 : index
    %c0_309 = arith.constant 0 : index
    %c0_310 = arith.constant 0 : index
    %704 = vector.load %arg6[%c3_308, %c0_309, %c0_310] : memref<11x50x256xbf16, #tpu.memory_space<vmem>>, vector<1x50x256xbf16>
    %705 = vector.shape_cast %704 : vector<1x50x256xbf16> to vector<50x256xbf16>
    %706 = arith.truncf %703 : vector<4x50xf32> to vector<4x50xbf16>
    %cst_311 = arith.constant dense<0.000000e+00> : vector<4x256xf32>
    %707 = tpu.matmul %706, %705, %cst_311 {dimension_numbers = #tpu.dot_dimension_numbers<[1], [0], [0], [1], [0, 0, 1, 1], [], []>} : vector<4x50xbf16>, vector<50x256xbf16>, vector<4x256xf32> -> vector<4x256xf32>
    %708 = arith.addf %701, %707 : vector<4x256xf32>
    %c0_312 = arith.constant 0 : index
    %c4_313 = arith.constant 4 : index
    %c0_314 = arith.constant 0 : index
    %709 = vector.load %arg13[%c0_312, %c4_313, %c0_314] : memref<4x11x50xf32, #tpu.memory_space<vmem>>, vector<4x1x50xf32>
    %710 = vector.shape_cast %709 : vector<4x1x50xf32> to vector<4x50xf32>
    %c4_315 = arith.constant 4 : index
    %c0_316 = arith.constant 0 : index
    %c0_317 = arith.constant 0 : index
    %711 = vector.load %arg6[%c4_315, %c0_316, %c0_317] : memref<11x50x256xbf16, #tpu.memory_space<vmem>>, vector<1x50x256xbf16>
    %712 = vector.shape_cast %711 : vector<1x50x256xbf16> to vector<50x256xbf16>
    %713 = arith.truncf %710 : vector<4x50xf32> to vector<4x50xbf16>
    %cst_318 = arith.constant dense<0.000000e+00> : vector<4x256xf32>
    %714 = tpu.matmul %713, %712, %cst_318 {dimension_numbers = #tpu.dot_dimension_numbers<[1], [0], [0], [1], [0, 0, 1, 1], [], []>} : vector<4x50xbf16>, vector<50x256xbf16>, vector<4x256xf32> -> vector<4x256xf32>
    %715 = arith.addf %708, %714 : vector<4x256xf32>
    %c0_319 = arith.constant 0 : index
    %c5_320 = arith.constant 5 : index
    %c0_321 = arith.constant 0 : index
    %716 = vector.load %arg13[%c0_319, %c5_320, %c0_321] : memref<4x11x50xf32, #tpu.memory_space<vmem>>, vector<4x1x50xf32>
    %717 = vector.shape_cast %716 : vector<4x1x50xf32> to vector<4x50xf32>
    %c5_322 = arith.constant 5 : index
    %c0_323 = arith.constant 0 : index
    %c0_324 = arith.constant 0 : index
    %718 = vector.load %arg6[%c5_322, %c0_323, %c0_324] : memref<11x50x256xbf16, #tpu.memory_space<vmem>>, vector<1x50x256xbf16>
    %719 = vector.shape_cast %718 : vector<1x50x256xbf16> to vector<50x256xbf16>
    %720 = arith.truncf %717 : vector<4x50xf32> to vector<4x50xbf16>
    %cst_325 = arith.constant dense<0.000000e+00> : vector<4x256xf32>
    %721 = tpu.matmul %720, %719, %cst_325 {dimension_numbers = #tpu.dot_dimension_numbers<[1], [0], [0], [1], [0, 0, 1, 1], [], []>} : vector<4x50xbf16>, vector<50x256xbf16>, vector<4x256xf32> -> vector<4x256xf32>
    %722 = arith.addf %715, %721 : vector<4x256xf32>
    %c0_326 = arith.constant 0 : index
    %c6_327 = arith.constant 6 : index
    %c0_328 = arith.constant 0 : index
    %723 = vector.load %arg13[%c0_326, %c6_327, %c0_328] : memref<4x11x50xf32, #tpu.memory_space<vmem>>, vector<4x1x50xf32>
    %724 = vector.shape_cast %723 : vector<4x1x50xf32> to vector<4x50xf32>
    %c6_329 = arith.constant 6 : index
    %c0_330 = arith.constant 0 : index
    %c0_331 = arith.constant 0 : index
    %725 = vector.load %arg6[%c6_329, %c0_330, %c0_331] : memref<11x50x256xbf16, #tpu.memory_space<vmem>>, vector<1x50x256xbf16>
    %726 = vector.shape_cast %725 : vector<1x50x256xbf16> to vector<50x256xbf16>
    %727 = arith.truncf %724 : vector<4x50xf32> to vector<4x50xbf16>
    %cst_332 = arith.constant dense<0.000000e+00> : vector<4x256xf32>
    %728 = tpu.matmul %727, %726, %cst_332 {dimension_numbers = #tpu.dot_dimension_numbers<[1], [0], [0], [1], [0, 0, 1, 1], [], []>} : vector<4x50xbf16>, vector<50x256xbf16>, vector<4x256xf32> -> vector<4x256xf32>
    %729 = arith.addf %722, %728 : vector<4x256xf32>
    %c0_333 = arith.constant 0 : index
    %c7_334 = arith.constant 7 : index
    %c0_335 = arith.constant 0 : index
    %730 = vector.load %arg13[%c0_333, %c7_334, %c0_335] : memref<4x11x50xf32, #tpu.memory_space<vmem>>, vector<4x1x50xf32>
    %731 = vector.shape_cast %730 : vector<4x1x50xf32> to vector<4x50xf32>
    %c7_336 = arith.constant 7 : index
    %c0_337 = arith.constant 0 : index
    %c0_338 = arith.constant 0 : index
    %732 = vector.load %arg6[%c7_336, %c0_337, %c0_338] : memref<11x50x256xbf16, #tpu.memory_space<vmem>>, vector<1x50x256xbf16>
    %733 = vector.shape_cast %732 : vector<1x50x256xbf16> to vector<50x256xbf16>
    %734 = arith.truncf %731 : vector<4x50xf32> to vector<4x50xbf16>
    %cst_339 = arith.constant dense<0.000000e+00> : vector<4x256xf32>
    %735 = tpu.matmul %734, %733, %cst_339 {dimension_numbers = #tpu.dot_dimension_numbers<[1], [0], [0], [1], [0, 0, 1, 1], [], []>} : vector<4x50xbf16>, vector<50x256xbf16>, vector<4x256xf32> -> vector<4x256xf32>
    %736 = arith.addf %729, %735 : vector<4x256xf32>
    %c0_340 = arith.constant 0 : index
    %c8_341 = arith.constant 8 : index
    %c0_342 = arith.constant 0 : index
    %737 = vector.load %arg13[%c0_340, %c8_341, %c0_342] : memref<4x11x50xf32, #tpu.memory_space<vmem>>, vector<4x1x50xf32>
    %738 = vector.shape_cast %737 : vector<4x1x50xf32> to vector<4x50xf32>
    %c8_343 = arith.constant 8 : index
    %c0_344 = arith.constant 0 : index
    %c0_345 = arith.constant 0 : index
    %739 = vector.load %arg6[%c8_343, %c0_344, %c0_345] : memref<11x50x256xbf16, #tpu.memory_space<vmem>>, vector<1x50x256xbf16>
    %740 = vector.shape_cast %739 : vector<1x50x256xbf16> to vector<50x256xbf16>
    %741 = arith.truncf %738 : vector<4x50xf32> to vector<4x50xbf16>
    %cst_346 = arith.constant dense<0.000000e+00> : vector<4x256xf32>
    %742 = tpu.matmul %741, %740, %cst_346 {dimension_numbers = #tpu.dot_dimension_numbers<[1], [0], [0], [1], [0, 0, 1, 1], [], []>} : vector<4x50xbf16>, vector<50x256xbf16>, vector<4x256xf32> -> vector<4x256xf32>
    %743 = arith.addf %736, %742 : vector<4x256xf32>
    %c0_347 = arith.constant 0 : index
    %c9_348 = arith.constant 9 : index
    %c0_349 = arith.constant 0 : index
    %744 = vector.load %arg13[%c0_347, %c9_348, %c0_349] : memref<4x11x50xf32, #tpu.memory_space<vmem>>, vector<4x1x50xf32>
    %745 = vector.shape_cast %744 : vector<4x1x50xf32> to vector<4x50xf32>
    %c9_350 = arith.constant 9 : index
    %c0_351 = arith.constant 0 : index
    %c0_352 = arith.constant 0 : index
    %746 = vector.load %arg6[%c9_350, %c0_351, %c0_352] : memref<11x50x256xbf16, #tpu.memory_space<vmem>>, vector<1x50x256xbf16>
    %747 = vector.shape_cast %746 : vector<1x50x256xbf16> to vector<50x256xbf16>
    %748 = arith.truncf %745 : vector<4x50xf32> to vector<4x50xbf16>
    %cst_353 = arith.constant dense<0.000000e+00> : vector<4x256xf32>
    %749 = tpu.matmul %748, %747, %cst_353 {dimension_numbers = #tpu.dot_dimension_numbers<[1], [0], [0], [1], [0, 0, 1, 1], [], []>} : vector<4x50xbf16>, vector<50x256xbf16>, vector<4x256xf32> -> vector<4x256xf32>
    %750 = arith.addf %743, %749 : vector<4x256xf32>
    %c0_354 = arith.constant 0 : index
    %c10_355 = arith.constant 10 : index
    %c0_356 = arith.constant 0 : index
    %751 = vector.load %arg13[%c0_354, %c10_355, %c0_356] : memref<4x11x50xf32, #tpu.memory_space<vmem>>, vector<4x1x50xf32>
    %752 = vector.shape_cast %751 : vector<4x1x50xf32> to vector<4x50xf32>
    %c10_357 = arith.constant 10 : index
    %c0_358 = arith.constant 0 : index
    %c0_359 = arith.constant 0 : index
    %753 = vector.load %arg6[%c10_357, %c0_358, %c0_359] : memref<11x50x256xbf16, #tpu.memory_space<vmem>>, vector<1x50x256xbf16>
    %754 = vector.shape_cast %753 : vector<1x50x256xbf16> to vector<50x256xbf16>
    %755 = arith.truncf %752 : vector<4x50xf32> to vector<4x50xbf16>
    %cst_360 = arith.constant dense<0.000000e+00> : vector<4x256xf32>
    %756 = tpu.matmul %755, %754, %cst_360 {dimension_numbers = #tpu.dot_dimension_numbers<[1], [0], [0], [1], [0, 0, 1, 1], [], []>} : vector<4x50xbf16>, vector<50x256xbf16>, vector<4x256xf32> -> vector<4x256xf32>
    %757 = arith.addf %750, %756 : vector<4x256xf32>
    %c0_361 = arith.constant 0 : index
    %c0_362 = arith.constant 0 : index
    %758 = vector.load %arg7[%c0_361, %c0_362] : memref<1x256xf32, #tpu.memory_space<vmem>>, vector<1x256xf32>
    %759 = vector.broadcast %758 : vector<1x256xf32> to vector<4x256xf32>
    %760 = arith.addf %757, %759 : vector<4x256xf32>
    %c0_363 = arith.constant 0 : index
    %c0_364 = arith.constant 0 : index
    %761 = vector.load %arg8[%c0_363, %c0_364] : memref<256x10xbf16, #tpu.memory_space<vmem>>, vector<256x10xbf16>
    %762 = arith.truncf %760 : vector<4x256xf32> to vector<4x256xbf16>
    %cst_365 = arith.constant dense<0.000000e+00> : vector<4x10xf32>
    %763 = tpu.matmul %762, %761, %cst_365 {dimension_numbers = #tpu.dot_dimension_numbers<[1], [0], [0], [1], [0, 0, 1, 1], [], []>} : vector<4x256xbf16>, vector<256x10xbf16>, vector<4x10xf32> -> vector<4x10xf32>
    %c0_366 = arith.constant 0 : index
    %c0_367 = arith.constant 0 : index
    %764 = vector.load %arg9[%c0_366, %c0_367] : memref<1x10xf32, #tpu.memory_space<vmem>>, vector<1x10xf32>
    %765 = vector.broadcast %764 : vector<1x10xf32> to vector<4x10xf32>
    %766 = arith.addf %763, %765 : vector<4x10xf32>
    %cst_368 = arith.constant dense<0xFF800000> : vector<4xf32>
    %767 = vector.multi_reduction <maximumf>, %766, %cst_368 [1] : vector<4x10xf32> to vector<4xf32>
    %768 = vector.shape_cast %767 : vector<4xf32> to vector<4x1xf32>
    %769 = vector.broadcast %768 : vector<4x1xf32> to vector<4x10xf32>
    %770 = arith.subf %766, %769 : vector<4x10xf32>
    %771 = math.exp %770 : vector<4x10xf32>
    %cst_369 = arith.constant dense<0.000000e+00> : vector<4xf32>
    %772 = vector.multi_reduction <add>, %771, %cst_369 [1] : vector<4x10xf32> to vector<4xf32>
    %773 = vector.shape_cast %772 : vector<4xf32> to vector<4x1xf32>
    %774 = vector.broadcast %773 : vector<4x1xf32> to vector<4x10xf32>
    %775 = arith.divf %771, %774 : vector<4x10xf32>
    %c0_370 = arith.constant 0 : index
    %c0_371 = arith.constant 0 : index
    %c0_372 = arith.constant 0 : index
    %776 = vector.load %arg10[%c0_370, %c0_371, %c0_372] : memref<1x4x10xf32, #tpu.memory_space<vmem>>, vector<1x4x10xf32>
    %777 = vector.shape_cast %776 : vector<1x4x10xf32> to vector<4x10xf32>
    %778 = vector.shape_cast %775 : vector<4x10xf32> to vector<1x4x10xf32>
    tpu.vector_store %arg10[%c0_370, %c0_371, %c0_372], %778 {strides = array<i32>} : memref<1x4x10xf32, #tpu.memory_space<vmem>>, vector<1x4x10xf32>,
    return
  }
  func.func @transform_0(%arg0: i32) -> (i32, i32, i32) {
    %c0_i32 = arith.constant 0 : i32
    %c0_i32_0 = arith.constant 0 : i32
    %c0_i32_1 = arith.constant 0 : i32
    return %arg0, %c0_i32, %c0_i32_0 : i32, i32, i32
  }
  func.func @transform_1(%arg0: i32) -> (i32, i32, i32) {
    %c0_i32 = arith.constant 0 : i32
    %c0_i32_0 = arith.constant 0 : i32
    %c0_i32_1 = arith.constant 0 : i32
    %c0_i32_2 = arith.constant 0 : i32
    return %c0_i32, %c0_i32_0, %c0_i32_1 : i32, i32, i32
  }
  func.func @transform_2(%arg0: i32) -> (i32, i32) {
    %c0_i32 = arith.constant 0 : i32
    %c0_i32_0 = arith.constant 0 : i32
    %c0_i32_1 = arith.constant 0 : i32
    return %c0_i32, %c0_i32_0 : i32, i32
  }
  func.func @transform_3(%arg0: i32) -> (i32, i32, i32) {
    %c0_i32 = arith.constant 0 : i32
    %c0_i32_0 = arith.constant 0 : i32
    %c0_i32_1 = arith.constant 0 : i32
    %c0_i32_2 = arith.constant 0 : i32
    return %c0_i32, %c0_i32_0, %c0_i32_1 : i32, i32, i32
  }
  func.func @transform_4(%arg0: i32) -> (i32, i32) {
    %c0_i32 = arith.constant 0 : i32
    %c0_i32_0 = arith.constant 0 : i32
    %c0_i32_1 = arith.constant 0 : i32
    return %c0_i32, %c0_i32_0 : i32, i32
  }
  func.func @transform_5(%arg0: i32) -> (i32, i32, i32) {
    %c0_i32 = arith.constant 0 : i32
    %c0_i32_0 = arith.constant 0 : i32
    %c0_i32_1 = arith.constant 0 : i32
    %c0_i32_2 = arith.constant 0 : i32
    return %c0_i32, %c0_i32_0, %c0_i32_1 : i32, i32, i32
  }
  func.func @transform_6(%arg0: i32) -> (i32, i32) {
    %c0_i32 = arith.constant 0 : i32
    %c0_i32_0 = arith.constant 0 : i32
    %c0_i32_1 = arith.constant 0 : i32
    return %c0_i32, %c0_i32_0 : i32, i32
  }
  func.func @transform_7(%arg0: i32) -> (i32, i32) {
    %c0_i32 = arith.constant 0 : i32
    %c0_i32_0 = arith.constant 0 : i32
    %c0_i32_1 = arith.constant 0 : i32
    return %c0_i32, %c0_i32_0 : i32, i32
  }
  func.func @transform_8(%arg0: i32) -> (i32, i32) {
    %c0_i32 = arith.constant 0 : i32
    %c0_i32_0 = arith.constant 0 : i32
    %c0_i32_1 = arith.constant 0 : i32
    return %c0_i32, %c0_i32_0 : i32, i32
  }
  func.func @transform_9(%arg0: i32) -> (i32, i32, i32) {
    %c0_i32 = arith.constant 0 : i32
    %c0_i32_0 = arith.constant 0 : i32
    %c0_i32_1 = arith.constant 0 : i32
    return %arg0, %c0_i32, %c0_i32_0 : i32, i32, i32
  }
}

</mosaic_0001>

<llo_original>
// kernel: recruitment2_forward.1
$region0: #{recruitment2_forward.1}
  #allocation0 [shape = 'u32[]', space=smem, size = 0x4, offset = 0x4, fixed_abs, tag = 'smem constant byte address 0x4 - core index']
  #allocation1 [shape = 'u32[144,128]{1,0:T(1,128)}', space=vmem, size = 0x12000, scoped, tag = 'internal scratch']
  #allocation2 [shape = 'f32[4,34,50]{2,1,0:T(8,128)}', space=vmem, size = 0x14000, scoped, tag = 'scratch operand']
  #allocation3 [shape = 'f32[4,13,256]{2,1,0:T(8,128)}', space=vmem, size = 0x10000, scoped, tag = 'scratch operand']
  #allocation4 [shape = 'f32[4,11,50]{2,1,0:T(8,128)}', space=vmem, size = 0x8000, scoped, tag = 'scratch operand']
  %s0 = inlined_call_operand.vmem [shape: f32[8,32,50], index: 0, kind: input, shape index: {}]
  %s1 = inlined_call_operand.vmem [shape: bf16[3,50,256], index: 1, kind: input, shape index: {}]
  %s2 = inlined_call_operand.vmem [shape: f32[1,256], index: 2, kind: input, shape index: {}]
  %s3 = inlined_call_operand.vmem [shape: bf16[3,256,50], index: 3, kind: input, shape index: {}]
  %s4 = inlined_call_operand.vmem [shape: f32[1,50], index: 4, kind: input, shape index: {}]
  %s5 = inlined_call_operand.vmem [shape: bf16[11,50,256], index: 5, kind: input, shape index: {}]
  %s6 = inlined_call_operand.vmem [shape: f32[1,256], index: 6, kind: input, shape index: {}]
  %s7 = inlined_call_operand.vmem [shape: bf16[256,10], index: 7, kind: input, shape index: {}]
  %s8 = inlined_call_operand.vmem [shape: f32[1,10], index: 8, kind: input, shape index: {}]
  %s9 = inlined_call_operand.hbm [shape: f32[2,4,10], index: 9, kind: output, shape index: {}]
  %s10 = sld [smem:[#allocation0]]
  $region69: #{recruitment2_forward.1} parent=0
    _
  %s12 = ssub.s32 1, %s10
  %s13 = scalar_select 0, %s12, %s10
  $region1: #{recruitment2_forward.1} parent=0
    #allocation5 [shape = 'u8[4096]{0}', space=vmem, size = 0x1000, scoped, tag = 'output window, operand 0']
    #allocation6 [shape = 's32[2]{0}', space=sflag, size = 0x8, scoped, tag = 'scoped memory for recruitment2_forward.1']
    %14 = vsyncpa [#allocation6], 0
    %s15 = scalar_lea.sflag [#allocation6], 1
    %16 = vsyncpa %s15, 0
    loop: start=0, step=1, limit=4
    $region2: #{recruitment2_forward.1} parent=1 // loop_pre_header
      _
    $region3: #{recruitment2_forward.1} parent=1 // loop_header
      %s18 = sphi 0, %s22
      %p19 = scmp.ge.s32.totalorder %s18, 4
      %s28 = sphi 0, %s30
      %s31 = sphi 0, %s28
      %s32 = sphi 0, %s31
      %s48 = sphi 0, %s32
      %s52 = sphi 0, %s52
      %s54 = sphi 0, %s52
      %s55 = sphi 0, %s54
      %s69 = sphi 0, %s55
      %s73 = sphi 0, %s73
      %s75 = sphi 0, %s73
      %s76 = sphi 0, %s75
      %s90 = sphi 0, %s76
      %s94 = sphi 0, %s94
      %s96 = sphi 0, %s94
      %s97 = sphi 0, %s96
      %s111 = sphi 0, %s97
      %s115 = sphi 0, %s115
      %s117 = sphi 0, %s115
      %s118 = sphi 0, %s117
      %s132 = sphi 0, %s118
      %s136 = sphi 0, %s136
      %s138 = sphi 0, %s136
      %s139 = sphi 0, %s138
      %s153 = sphi 0, %s139
      %s157 = sphi 0, %s157
      %s159 = sphi 0, %s157
      %s160 = sphi 0, %s159
      %s174 = sphi 0, %s160
      %s178 = sphi 0, %s178
      %s180 = sphi 0, %s178
      %s181 = sphi 0, %s180
      %s195 = sphi 0, %s181
      %s199 = sphi 0, %s199
      %s201 = sphi 0, %s199
      %s202 = sphi 0, %s201
      %s216 = sphi 0, %s202
      %s222 = sphi 0, %s224
      %s225 = sphi 0, %s222
      %s226 = sphi 0, %s225
      %s242 = sphi 0, %s226
    $region4: #{recruitment2_forward.1} parent=1 // loop_header_branch
      %21 = sbr.rel (%p19) target = $region8
    $region5: #{recruitment2_forward.1} parent=1 // loop_body
      %s23 = ssub.s32 %s18, 1
      %s24 = ssub.s32 %s18, 2
      %s25 = sadd.s32 %s18, 1
      %s26 = ssub.s32 %s18, %s25
      %p27 = scmp.eq.s32.totalorder %s26, 0
      %s29 = sadd.s32 %s28, 1
      %s30 = scalar_select %p27, %s28, %s29
      %p33 = pneg %p27
      %p34 = scmp.eq.s32.totalorder %s18, 1
      %p35 = por %p33, %p34
      %p36 = scmp.ne.s32.totalorder %s28, %s31
      %p37 = scmp.eq.s32.totalorder %s18, 0
      %p38 = por %p36, %p37
      %p39 = scmp.ne.s32.totalorder %s28, %s31
      %p40 = scmp.eq.s32.totalorder %s23, 1
      %p41 = por %p39, %p40
      %p42 = scmp.ne.s32.totalorder %s31, %s32
      %p43 = scmp.eq.s32.totalorder %s23, 0
      %p44 = por %p42, %p43
      %p45 = scmp.ne.s32.totalorder %s31, %s32
      %p46 = scmp.eq.s32.totalorder %s24, 1
      %p47 = por %p45, %p46
      %p49 = scmp.ne.s32.totalorder %s32, %s48
      %p50 = scmp.eq.s32.totalorder %s24, 0
      %p51 = por %p49, %p50
      %s53 = sadd.s32 %s52, 1
      %p56 = scmp.eq.s32.totalorder %s18, 1
      %p57 = scmp.ne.s32.totalorder %s52, %s54
      %p58 = scmp.eq.s32.totalorder %s18, 0
      %p59 = por %p57, %p58
      %p60 = scmp.ne.s32.totalorder %s52, %s54
      %p61 = scmp.eq.s32.totalorder %s23, 1
      %p62 = por %p60, %p61
      %p63 = scmp.ne.s32.totalorder %s54, %s55
      %p64 = scmp.eq.s32.totalorder %s23, 0
      %p65 = por %p63, %p64
      %p66 = scmp.ne.s32.totalorder %s54, %s55
      %p67 = scmp.eq.s32.totalorder %s24, 1
      %p68 = por %p66, %p67
      %p70 = scmp.ne.s32.totalorder %s55, %s69
      %p71 = scmp.eq.s32.totalorder %s24, 0
      %p72 = por %p70, %p71
      %s74 = sadd.s32 %s73, 1
      %p77 = scmp.eq.s32.totalorder %s18, 1
      %p78 = scmp.ne.s32.totalorder %s73, %s75
      %p79 = scmp.eq.s32.totalorder %s18, 0
      %p80 = por %p78, %p79
      %p81 = scmp.ne.s32.totalorder %s73, %s75
      %p82 = scmp.eq.s32.totalorder %s23, 1
      %p83 = por %p81, %p82
      %p84 = scmp.ne.s32.totalorder %s75, %s76
      %p85 = scmp.eq.s32.totalorder %s23, 0
      %p86 = por %p84, %p85
      %p87 = scmp.ne.s32.totalorder %s75, %s76
      %p88 = scmp.eq.s32.totalorder %s24, 1
      %p89 = por %p87, %p88
      %p91 = scmp.ne.s32.totalorder %s76, %s90
      %p92 = scmp.eq.s32.totalorder %s24, 0
      %p93 = por %p91, %p92
      %s95 = sadd.s32 %s94, 1
      %p98 = scmp.eq.s32.totalorder %s18, 1
      %p99 = scmp.ne.s32.totalorder %s94, %s96
      %p100 = scmp.eq.s32.totalorder %s18, 0
      %p101 = por %p99, %p100
      %p102 = scmp.ne.s32.totalorder %s94, %s96
      %p103 = scmp.eq.s32.totalorder %s23, 1
      %p104 = por %p102, %p103
      %p105 = scmp.ne.s32.totalorder %s96, %s97
      %p106 = scmp.eq.s32.totalorder %s23, 0
      %p107 = por %p105, %p106
      %p108 = scmp.ne.s32.totalorder %s96, %s97
      %p109 = scmp.eq.s32.totalorder %s24, 1
      %p110 = por %p108, %p109
      %p112 = scmp.ne.s32.totalorder %s97, %s111
      %p113 = scmp.eq.s32.totalorder %s24, 0
      %p114 = por %p112, %p113
      %s116 = sadd.s32 %s115, 1
      %p119 = scmp.eq.s32.totalorder %s18, 1
      %p120 = scmp.ne.s32.totalorder %s115, %s117
      %p121 = scmp.eq.s32.totalorder %s18, 0
      %p122 = por %p120, %p121
      %p123 = scmp.ne.s32.totalorder %s115, %s117
      %p124 = scmp.eq.s32.totalorder %s23, 1
      %p125 = por %p123, %p124
      %p126 = scmp.ne.s32.totalorder %s117, %s118
      %p127 = scmp.eq.s32.totalorder %s23, 0
      %p128 = por %p126, %p127
      %p129 = scmp.ne.s32.totalorder %s117, %s118
      %p130 = scmp.eq.s32.totalorder %s24, 1
      %p131 = por %p129, %p130
      %p133 = scmp.ne.s32.totalorder %s118, %s132
      %p134 = scmp.eq.s32.totalorder %s24, 0
      %p135 = por %p133, %p134
      %s137 = sadd.s32 %s136, 1
      %p140 = scmp.eq.s32.totalorder %s18, 1
      %p141 = scmp.ne.s32.totalorder %s136, %s138
      %p142 = scmp.eq.s32.totalorder %s18, 0
      %p143 = por %p141, %p142
      %p144 = scmp.ne.s32.totalorder %s136, %s138
      %p145 = scmp.eq.s32.totalorder %s23, 1
      %p146 = por %p144, %p145
      %p147 = scmp.ne.s32.totalorder %s138, %s139
      %p148 = scmp.eq.s32.totalorder %s23, 0
      %p149 = por %p147, %p148
      %p150 = scmp.ne.s32.totalorder %s138, %s139
      %p151 = scmp.eq.s32.totalorder %s24, 1
      %p152 = por %p150, %p151
      %p154 = scmp.ne.s32.totalorder %s139, %s153
      %p155 = scmp.eq.s32.totalorder %s24, 0
      %p156 = por %p154, %p155
      %s158 = sadd.s32 %s157, 1
      %p161 = scmp.eq.s32.totalorder %s18, 1
      %p162 = scmp.ne.s32.totalorder %s157, %s159
      %p163 = scmp.eq.s32.totalorder %s18, 0
      %p164 = por %p162, %p163
      %p165 = scmp.ne.s32.totalorder %s157, %s159
      %p166 = scmp.eq.s32.totalorder %s23, 1
      %p167 = por %p165, %p166
      %p168 = scmp.ne.s32.totalorder %s159, %s160
      %p169 = scmp.eq.s32.totalorder %s23, 0
      %p170 = por %p168, %p169
      %p171 = scmp.ne.s32.totalorder %s159, %s160
      %p172 = scmp.eq.s32.totalorder %s24, 1
      %p173 = por %p171, %p172
      %p175 = scmp.ne.s32.totalorder %s160, %s174
      %p176 = scmp.eq.s32.totalorder %s24, 0
      %p177 = por %p175, %p176
      %s179 = sadd.s32 %s178, 1
      %p182 = scmp.eq.s32.totalorder %s18, 1
      %p183 = scmp.ne.s32.totalorder %s178, %s180
      %p184 = scmp.eq.s32.totalorder %s18, 0
      %p185 = por %p183, %p184
      %p186 = scmp.ne.s32.totalorder %s178, %s180
      %p187 = scmp.eq.s32.totalorder %s23, 1
      %p188 = por %p186, %p187
      %p189 = scmp.ne.s32.totalorder %s180, %s181
      %p190 = scmp.eq.s32.totalorder %s23, 0
      %p191 = por %p189, %p190
      %p192 = scmp.ne.s32.totalorder %s180, %s181
      %p193 = scmp.eq.s32.totalorder %s24, 1
      %p194 = por %p192, %p193
      %p196 = scmp.ne.s32.totalorder %s181, %s195
      %p197 = scmp.eq.s32.totalorder %s24, 0
      %p198 = por %p196, %p197
      %s200 = sadd.s32 %s199, 1
      %p203 = scmp.eq.s32.totalorder %s18, 1
      %p204 = scmp.ne.s32.totalorder %s199, %s201
      %p205 = scmp.eq.s32.totalorder %s18, 0
      %p206 = por %p204, %p205
      %p207 = scmp.ne.s32.totalorder %s199, %s201
      %p208 = scmp.eq.s32.totalorder %s23, 1
      %p209 = por %p207, %p208
      %p210 = scmp.ne.s32.totalorder %s201, %s202
      %p211 = scmp.eq.s32.totalorder %s23, 0
      %p212 = por %p210, %p211
      %p213 = scmp.ne.s32.totalorder %s201, %s202
      %p214 = scmp.eq.s32.totalorder %s24, 1
      %p215 = por %p213, %p214
      %p217 = scmp.ne.s32.totalorder %s202, %s216
      %p218 = scmp.eq.s32.totalorder %s24, 0
      %p219 = por %p217, %p218
      %s220 = ssub.s32 %s18, %s25
      %p221 = scmp.eq.s32.totalorder %s220, 0
      %s223 = sadd.s32 %s222, 1
      %s224 = scalar_select %p221, %s222, %s223
      %p227 = pneg %p221
      %p228 = scmp.eq.s32.totalorder %s18, 1
      %p229 = por %p227, %p228
      %p230 = scmp.ne.s32.totalorder %s222, %s225
      %p231 = scmp.eq.s32.totalorder %s18, 0
      %p232 = por %p230, %p231
      %p233 = scmp.ne.s32.totalorder %s222, %s225
      %p234 = scmp.eq.s32.totalorder %s23, 1
      %p235 = por %p233, %p234
      %p236 = scmp.ne.s32.totalorder %s225, %s226
      %p237 = scmp.eq.s32.totalorder %s23, 0
      %p238 = por %p236, %p237
      %p239 = scmp.ne.s32.totalorder %s225, %s226
      %p240 = scmp.eq.s32.totalorder %s24, 1
      %p241 = por %p239, %p240
      %p243 = scmp.ne.s32.totalorder %s226, %s242
      %p244 = scmp.eq.s32.totalorder %s24, 0
      %p245 = por %p243, %p244
      %p246 = scmp.le.s32.totalorder 1, %s18
      %p247 = scmp.lt.s32.totalorder %s18, 3
      %p248 = pnand %p246, %p247
      %p249 = pneg %p248
      // Predicated region
      $region9: #{recruitment2_forward.1} parent=5 // pred_check
        _
      $region10: #{recruitment2_forward.1} parent=5 // pred_check_branch
        %251 = sbr.rel (%p248) target = $region12
      $region11: #{recruitment2_forward.1} parent=5 // pred_region
        %s252 = ssub.s32 %s18, 1
        // Predicated region
        $region13: #{recruitment2_forward.1} parent=11 // pred_check
          %p253 = pneg %p65
        $region14: #{recruitment2_forward.1} parent=11 // pred_check_branch
          %255 = sbr.rel (%p253) target = $region16
        $region15: #{recruitment2_forward.1} parent=11 // pred_region
          _
        $region16: #{recruitment2_forward.1} parent=11 // pred_fallthru
          _
        // Predicated region
        $region17: #{recruitment2_forward.1} parent=11 // pred_check
          %p256 = pneg %p86
        $region18: #{recruitment2_forward.1} parent=11 // pred_check_branch
          %258 = sbr.rel (%p256) target = $region20
        $region19: #{recruitment2_forward.1} parent=11 // pred_region
          _
        $region20: #{recruitment2_forward.1} parent=11 // pred_fallthru
          _
        // Predicated region
        $region21: #{recruitment2_forward.1} parent=11 // pred_check
          %p259 = pneg %p107
        $region22: #{recruitment2_forward.1} parent=11 // pred_check_branch
          %261 = sbr.rel (%p259) target = $region24
        $region23: #{recruitment2_forward.1} parent=11 // pred_region
          _
        $region24: #{recruitment2_forward.1} parent=11 // pred_fallthru
          _
        // Predicated region
        $region25: #{recruitment2_forward.1} parent=11 // pred_check
          %p262 = pneg %p128
        $region26: #{recruitment2_forward.1} parent=11 // pred_check_branch
          %264 = sbr.rel (%p262) target = $region28
        $region27: #{recruitment2_forward.1} parent=11 // pred_region
          _
        $region28: #{recruitment2_forward.1} parent=11 // pred_fallthru
          _
        // Predicated region
        $region29: #{recruitment2_forward.1} parent=11 // pred_check
          %p265 = pneg %p149
        $region30: #{recruitment2_forward.1} parent=11 // pred_check_branch
          %267 = sbr.rel (%p265) target = $region32
        $region31: #{recruitment2_forward.1} parent=11 // pred_region
          _
        $region32: #{recruitment2_forward.1} parent=11 // pred_fallthru
          _
        // Predicated region
        $region33: #{recruitment2_forward.1} parent=11 // pred_check
          %p268 = pneg %p170
        $region34: #{recruitment2_forward.1} parent=11 // pred_check_branch
          %270 = sbr.rel (%p268) target = $region36
        $region35: #{recruitment2_forward.1} parent=11 // pred_region
          _
        $region36: #{recruitment2_forward.1} parent=11 // pred_fallthru
          _
        // Predicated region
        $region37: #{recruitment2_forward.1} parent=11 // pred_check
          %p271 = pneg %p191
        $region38: #{recruitment2_forward.1} parent=11 // pred_check_branch
          %273 = sbr.rel (%p271) target = $region40
        $region39: #{recruitment2_forward.1} parent=11 // pred_region
          _
        $region40: #{recruitment2_forward.1} parent=11 // pred_fallthru
          _
        // Predicated region
        $region41: #{recruitment2_forward.1} parent=11 // pred_check
          %p274 = pneg %p212
        $region42: #{recruitment2_forward.1} parent=11 // pred_check_branch
          %276 = sbr.rel (%p274) target = $region44
        $region43: #{recruitment2_forward.1} parent=11 // pred_region
          _
        $region44: #{recruitment2_forward.1} parent=11 // pred_fallthru
          _
      $region12: #{recruitment2_forward.1} parent=5 // pred_fallthru
        _
      %p277 = scmp.lt.s32.totalorder %s18, 2
      // Predicated region
      $region45: #{recruitment2_forward.1} parent=5 // pred_check
        %p278 = pneg %p277
      $region46: #{recruitment2_forward.1} parent=5 // pred_check_branch
        %280 = sbr.rel (%p278) target = $region48
      $region47: #{recruitment2_forward.1} parent=5 // pred_region
        // Predicated region
        $region49: #{recruitment2_forward.1} parent=47 // pred_check
          %p281 = pneg %p38
        $region50: #{recruitment2_forward.1} parent=47 // pred_check_branch
          %283 = sbr.rel (%p281) target = $region52
        $region51: #{recruitment2_forward.1} parent=47 // pred_region
          %s284 = smul.u32 4, %s18
          %p285 = scmp.lt.s32.totalorder %s284, 7
          %s286 = scalar_select %p285, %s284, 7
          %s287 = smul.addr %s286, 4
          %s288 = smul.addr %s287, 8
          %s289 = scalar_lea.vmem %s0, %s288
          %s290 = smul.u32 4, %s18
        $region52: #{recruitment2_forward.1} parent=47 // pred_fallthru
          _
      $region48: #{recruitment2_forward.1} parent=5 // pred_fallthru
        _
      %p291 = scmp.le.s32.totalorder 1, %s18
      %p292 = scmp.lt.s32.totalorder %s18, 3
      %p293 = pnand %p291, %p292
      %p294 = pneg %p293
      // Predicated region
      $region53: #{recruitment2_forward.1} parent=5 // pred_check
        _
      $region54: #{recruitment2_forward.1} parent=5 // pred_check_branch
        %296 = sbr.rel (%p293) target = $region56
      $region55: #{recruitment2_forward.1} parent=5 // pred_region
        %s297 = ssub.s32 %s18, 1
        %s298 = smul.u32 4, %s23
        %p299 = scmp.lt.s32.totalorder %s298, 7
        %s300 = scalar_select %p299, %s298, 7
        %s301 = smul.addr %s300, 4
        %s302 = smul.addr %s301, 8
        %s303 = scalar_lea.vmem %s0, %s302
        %p304 = pneg %p44
        %p305 = pneg %p41
        %p306 = pneg %p65
        %p307 = pneg %p62
        %p308 = pneg %p86
        %p309 = pneg %p83
        %p310 = pneg %p107
        %p311 = pneg %p104
        %p312 = pneg %p128
        %p313 = pneg %p125
        %p314 = pneg %p149
        %p315 = pneg %p146
        %p316 = pneg %p170
        %p317 = pneg %p167
        %p318 = pneg %p191
        %p319 = pneg %p188
        %p320 = pneg %p212
        %p321 = pneg %p209
        %p322 = pneg %p238
        %p323 = pneg %p235
        %s324 = sand.u32 %s225, 1
        %s325 = scalar_lea.sflag [#allocation6], %s324
        %s326 = sand.u32 %s225, 1
        %s327 = smul.addr %s326, 4
        %s328 = scalar_lea.vmem [#allocation5], %s327
        %s329 = smul.u32 4, %s23
        %p330 = scmp.lt.s32.totalorder %s329, 7
        %s331 = scalar_select %p330, %s329, 7
        %s332 = smul.addr %s331, 4
        %s333 = smul.addr %s332, 8
        %s334 = scalar_lea.vmem %s0, %s333
        %s335 = smul.u32 4, %s23
        %vm337 = vcmask 401408
        %338 = vst.msk [vmem:[#allocation2] sm:$0x1] %vm337, 0.0
        %339 = vst.msk [vmem:[#allocation2 + $0x28] sm:$0x1] %vm337, 0.0
        %340 = vst.msk [vmem:[#allocation2 + $0x50] sm:$0x1] %vm337, 0.0
        %341 = vst.msk [vmem:[#allocation2 + $0x78] sm:$0x1] %vm337, 0.0
        %342 = vst.msk [vmem:[#allocation2 + $0x21] sm:$0x1] %vm337, 0.0
        %343 = vst.msk [vmem:[#allocation2 + $0x49] sm:$0x1] %vm337, 0.0
        %344 = vst.msk [vmem:[#allocation2 + $0x71] sm:$0x1] %vm337, 0.0
        %345 = vst.msk [vmem:[#allocation2 + $0x99] sm:$0x1] %vm337, 0.0
        %v346 = vld [vmem:[%s334] sm:$0xff]
        %v347 = vld [vmem:[%s334 + $0x8] sm:$0xff]
        %v348 = vld [vmem:[%s334 + $0x10] sm:$0xff]
        %v349 = vld [vmem:[%s334 + $0x18] sm:$0xff]
        %v350 = vld [vmem:[%s334 + $0x20] sm:$0xff]
        %v351 = vld [vmem:[%s334 + $0x28] sm:$0xff]
        %v352 = vld [vmem:[%s334 + $0x30] sm:$0xff]
        %v353 = vld [vmem:[%s334 + $0x38] sm:$0xff]
        %v354 = vld [vmem:[%s334 + $0x40] sm:$0xff]
        %v355 = vld [vmem:[%s334 + $0x48] sm:$0xff]
        %v356 = vld [vmem:[%s334 + $0x50] sm:$0xff]
        %v357 = vld [vmem:[%s334 + $0x58] sm:$0xff]
        %v358 = vld [vmem:[%s334 + $0x60] sm:$0xff]
        %v359 = vld [vmem:[%s334 + $0x68] sm:$0xff]
        %v360 = vld [vmem:[%s334 + $0x70] sm:$0xff]
        %v361 = vld [vmem:[%s334 + $0x78] sm:$0xff]
        %vm362 = vcmask 408576
        %363 = vst.msk [vmem:[#allocation2 + $0x1] sm:$0xff] %vm362, %v346
        %364 = vst.msk [vmem:[#allocation2 + $0x9] sm:$0xff] %vm362, %v347
        %365 = vst.msk [vmem:[#allocation2 + $0x11] sm:$0xff] %vm362, %v348
        %366 = vst.msk [vmem:[#allocation2 + $0x19] sm:$0xff] %vm362, %v349
        %367 = vst.msk [vmem:[#allocation2 + $0x29] sm:$0xff] %vm362, %v350
        %368 = vst.msk [vmem:[#allocation2 + $0x31] sm:$0xff] %vm362, %v351
        %369 = vst.msk [vmem:[#allocation2 + $0x39] sm:$0xff] %vm362, %v352
        %370 = vst.msk [vmem:[#allocation2 + $0x41] sm:$0xff] %vm362, %v353
        %371 = vst.msk [vmem:[#allocation2 + $0x51] sm:$0xff] %vm362, %v354
        %372 = vst.msk [vmem:[#allocation2 + $0x59] sm:$0xff] %vm362, %v355
        %373 = vst.msk [vmem:[#allocation2 + $0x61] sm:$0xff] %vm362, %v356
        %374 = vst.msk [vmem:[#allocation2 + $0x69] sm:$0xff] %vm362, %v357
        %375 = vst.msk [vmem:[#allocation2 + $0x79] sm:$0xff] %vm362, %v358
        %376 = vst.msk [vmem:[#allocation2 + $0x81] sm:$0xff] %vm362, %v359
        %377 = vst.msk [vmem:[#allocation2 + $0x89] sm:$0xff] %vm362, %v360
        %378 = vst.msk [vmem:[#allocation2 + $0x91] sm:$0xff] %vm362, %v361
        %v379 = vlaneseq
        %vm380 = vcmp.ge.s32.totalorder %v379, 0
        %vm381 = vcmp.lt.s32.totalorder %v379, 256
        %vm382 = vmand %vm380, %vm381
        %383 = vst.msk [vmem:[#allocation3] ss:$8 sm:$0x3] %vm382, 0.0
        %384 = vst.msk [vmem:[#allocation3] ss:$8 sm:$0x0] %vm382, 0.0
        %s385 = scalar_lea.vmem [#allocation3], 32
        %386 = vst.msk [vmem:[%s385] ss:$8 sm:$0x3] %vm382, 0.0
        %387 = vst.msk [vmem:[%s385] ss:$8 sm:$0x0] %vm382, 0.0
        %s388 = scalar_lea.vmem [#allocation3], 64
        %389 = vst.msk [vmem:[%s388] ss:$8 sm:$0x3] %vm382, 0.0
        %390 = vst.msk [vmem:[%s388] ss:$8 sm:$0x0] %vm382, 0.0
        %s391 = scalar_lea.vmem [#allocation3], 96
        %392 = vst.msk [vmem:[%s391] ss:$8 sm:$0x3] %vm382, 0.0
        %393 = vst.msk [vmem:[%s391] ss:$8 sm:$0x0] %vm382, 0.0
        %s394 = scalar_lea.vmem [#allocation3], 20
        %395 = vst.msk [vmem:[%s394] ss:$8 sm:$0x3] %vm382, 0.0
        %396 = vst.msk [vmem:[%s394] ss:$8 sm:$0x0] %vm382, 0.0
        %s397 = scalar_lea.vmem [#allocation3], 52
        %398 = vst.msk [vmem:[%s397] ss:$8 sm:$0x3] %vm382, 0.0
        %399 = vst.msk [vmem:[%s397] ss:$8 sm:$0x0] %vm382, 0.0
        %s400 = scalar_lea.vmem [#allocation3], 84
        %401 = vst.msk [vmem:[%s400] ss:$8 sm:$0x3] %vm382, 0.0
        %402 = vst.msk [vmem:[%s400] ss:$8 sm:$0x0] %vm382, 0.0
        %s403 = scalar_lea.vmem [#allocation3], 116
        %404 = vst.msk [vmem:[%s403] ss:$8 sm:$0x3] %vm382, 0.0
        %405 = vst.msk [vmem:[%s403] ss:$8 sm:$0x0] %vm382, 0.0
        %v406 = vld [vmem:[%s2] sm:$0x3]
        %v407 = vld [vmem:[%s4] sm:$0x1]
        %v408 = vld [vmem:[#allocation2] sm:$0xff]
        %v409 = vld [vmem:[#allocation2 + $0x8] sm:$0xff]
        %v410 = vld [vmem:[#allocation2 + $0x10] sm:$0xff]
        %v411 = vld [vmem:[#allocation2 + $0x18] sm:$0xff]
        %v412 = vld [vmem:[#allocation2 + $0x20] sm:$0x3]
        %v413 = vld [vmem:[%s1] sm:$0xff]
        %v414 = vld [vmem:[%s1 + $0x8] sm:$0xff]
        %v415 = vld [vmem:[%s1 + $0x10] sm:$0xff]
        %v416 = vld [vmem:[%s1 + $0x18] sm:$0xff]
        %v417 = vld [vmem:[%s1 + $0x20] sm:$0xff]
        %v418 = vld [vmem:[%s1 + $0x28] sm:$0xff]
        %v419 = vld [vmem:[%s1 + $0x30] sm:$0x11]
        %v420 = vpack.c.bf16 %v409, %v408
        %v421 = vpack.c.bf16 %v411, %v410
        %s422 = scalar_lea.vmem %s1, 56
        %v423 = vld [vmem:[%s422] sm:$0xff]
        %v424 = vld [vmem:[%s422 + $0x8] sm:$0xff]
        %v425 = vld [vmem:[%s422 + $0x10] sm:$0xff]
        %v426 = vld [vmem:[%s422 + $0x18] sm:$0xff]
        %v427 = vld [vmem:[%s422 + $0x20] sm:$0xff]
        %v428 = vld [vmem:[%s422 + $0x28] sm:$0xff]
        %v429 = vld [vmem:[%s422 + $0x30] sm:$0x11]
        %v430 = vpack.c.bf16 %v412, %v412
        %vm431 = vsmask.f32 7424
        %v433 = vshrl.u32 %v420, 16
        %v435 = vshll.u32 %v420, 16
        %v437 = vrot.slane %v435, 1
        %v438 = vor.u32 %v433, %v437
        %v440 = vshll.u32 %v421, 16
        %v442 = vrot.slane %v440, 1
        %v443 = vsel %vm431, %v438, %v442
        %v444 = vshrl.u32 %v421, 16
        %v446 = vor.u32 %v444, %v442
        %v448 = vshll.u32 %v430, 16
        %v450 = vrot.slane %v448, 1
        %v451 = vsel %vm431, %v446, %v450
        %v459 = vunpack.c.l.b16 %v423
        %v460 = vunpack.c.h.b16 %v423
        %v461 = vunpack.c.l.b16 %v424
        %v462 = vunpack.c.h.b16 %v424
        %v463 = vunpack.c.l.b16 %v425
        %v464 = vunpack.c.h.b16 %v425
        %v465 = vunpack.c.l.b16 %v426
        %v466 = vunpack.c.h.b16 %v426
        %v467 = vunpack.c.l.b16 %v427
        %v468 = vunpack.c.h.b16 %v427
        %v469 = vunpack.c.l.b16 %v428
        %v470 = vunpack.c.h.b16 %v428
        %v471 = vunpack.c.l.b16 %v429
        %v472 = vunpack.c.h.b16 %v429
        %v473 = vpack.c.b16 %v461, %v459
        %v474 = vpack.c.b16 %v462, %v460
        %v475 = vpack.c.b16 %v465, %v463
        %v476 = vpack.c.b16 %v466, %v464
        %v477 = vpack.c.b16 %v469, %v467
        %v478 = vpack.c.b16 %v470, %v468
        %v479 = vpack.c.b16 %v471, %v471
        %v480 = vpack.c.b16 %v472, %v472
        %v488 = vsel %vm362, %v443, 0
        %v491 = vsel %vm362, %v451, 0
        %vm493 = vcmask 1040384
        %v495 = vsel %vm493, %v479, 0
        %v498 = vsel %vm493, %v480, 0
        %500 = vmatprep.subr.bf16.mxu0 0
        %501 = vmatpush1.bf16.msra.mxu0 0
        %502 = vmatprep.subr.bf16.mxu0 0
        %503 = vmatpush1.bf16.msra.mxu0 0
        %504 = vmatprep.subr.bf16.mxu0 0
        %505 = vmatpush1.bf16.msra.mxu0 0
        %506 = vmatprep.subr.bf16.mxu0 0
        %507 = vmatpush1.bf16.msra.mxu0 0
        %508 = vmatprep.subr.bf16.mxu0 %v498
        %509 = vmatpush1.bf16.msra.mxu0 %v495
        %510 = vmatprep.subr.bf16.mxu0 %v478
        %511 = vmatpush1.bf16.msra.mxu0 %v477
        %512 = vmatprep.subr.bf16.mxu0 %v476
        %513 = vmatpush1.bf16.msra.mxu0 %v475
        %514 = vmatprep.subr.bf16.mxu0 %v474
        %515 = vmatpush1.bf16.msra.mxu0 %v473
        %516 = vmatprep.subr.bf16.mxu0 0
        %517 = vmatpush2.bf16.msra.mxu0 0
        %518 = vmatprep.subr.bf16.mxu0 0
        %519 = vmatpush2.bf16.msra.mxu0 0
        %520 = vmatprep.subr.bf16.mxu0 0
        %521 = vmatpush2.bf16.msra.mxu0 0
        %522 = vmatprep.subr.bf16.mxu0 0
        %523 = vmatpush2.bf16.msra.mxu0 0
        %524 = vmatprep.subr.bf16.mxu0 0
        %525 = vmatpush2.bf16.msra.mxu0 0
        %526 = vmatprep.subr.bf16.mxu0 0
        %527 = vmatpush2.bf16.msra.mxu0 0
        %528 = vmatprep.subr.bf16.mxu0 0
        %529 = vmatpush2.bf16.msra.mxu0 0
        %530 = vmatprep.subr.bf16.mxu0 0
        %531 = vmatpush2.bf16.msra.mxu0 0
        %532 = vmatprep.mubr.bf16.mxu0 0
        %533 = vmatmul.mubr.bf16.gmra.mxu0 %v488
        %v534 = vpop.f32.mrf.mxu0
        %v535 = vadd.f32 0.0, %v534
        %v536 = vpop.f32.mrf.mxu0
        %v537 = vadd.f32 0.0, %v536
        %v538 = vpop.f32.mrf.mxu0
        %v539 = vadd.f32 0.0, %v538
        %v540 = vpop.f32.mrf.mxu0
        %v541 = vadd.f32 0.0, %v540
        %542 = vmatprep.mubr.bf16.mxu0 0
        %543 = vmatmul.mubr.bf16.gmra.mxu0 %v491
        %v544 = vpop.f32.mrf.mxu0
        %v545 = vadd.f32 0.0, %v544
        %v546 = vpop.f32.mrf.mxu0
        %v547 = vadd.f32 0.0, %v546
        %v548 = vpop.f32.mrf.mxu0
        %v549 = vadd.f32 0.0, %v548
        %v550 = vpop.f32.mrf.mxu0
        %v551 = vadd.f32 0.0, %v550
        %552 = vdwg.mxu0
        %v560 = vunpack.c.l.b16 %v413
        %v561 = vunpack.c.h.b16 %v413
        %v562 = vunpack.c.l.b16 %v414
        %v563 = vunpack.c.h.b16 %v414
        %v564 = vunpack.c.l.b16 %v415
        %v565 = vunpack.c.h.b16 %v415
        %v566 = vunpack.c.l.b16 %v416
        %v567 = vunpack.c.h.b16 %v416
        %v568 = vunpack.c.l.b16 %v417
        %v569 = vunpack.c.h.b16 %v417
        %v570 = vunpack.c.l.b16 %v418
        %v571 = vunpack.c.h.b16 %v418
        %v572 = vunpack.c.l.b16 %v419
        %v573 = vunpack.c.h.b16 %v419
        %v574 = vpack.c.b16 %v562, %v560
        %v575 = vpack.c.b16 %v563, %v561
        %v576 = vpack.c.b16 %v566, %v564
        %v577 = vpack.c.b16 %v567, %v565
        %v578 = vpack.c.b16 %v570, %v568
        %v579 = vpack.c.b16 %v571, %v569
        %v580 = vpack.c.b16 %v572, %v572
        %v581 = vpack.c.b16 %v573, %v573
        %v588 = vsel %vm362, %v420, 0
        %v590 = vsel %vm362, %v421, 0
        %v593 = vsel %vm493, %v580, 0
        %v596 = vsel %vm493, %v581, 0
        %598 = vmatprep.subr.bf16.mxu0 0
        %599 = vmatpush1.bf16.msra.mxu0 0
        %600 = vmatprep.subr.bf16.mxu0 0
        %601 = vmatpush1.bf16.msra.mxu0 0
        %602 = vmatprep.subr.bf16.mxu0 0
        %603 = vmatpush1.bf16.msra.mxu0 0
        %604 = vmatprep.subr.bf16.mxu0 0
        %605 = vmatpush1.bf16.msra.mxu0 0
        %606 = vmatprep.subr.bf16.mxu0 %v596
        %607 = vmatpush1.bf16.msra.mxu0 %v593
        %608 = vmatprep.subr.bf16.mxu0 %v579
        %609 = vmatpush1.bf16.msra.mxu0 %v578
        %610 = vmatprep.subr.bf16.mxu0 %v577
        %611 = vmatpush1.bf16.msra.mxu0 %v576
        %612 = vmatprep.subr.bf16.mxu0 %v575
        %613 = vmatpush1.bf16.msra.mxu0 %v574
        %614 = vmatprep.subr.bf16.mxu0 0
        %615 = vmatpush2.bf16.msra.mxu0 0
        %616 = vmatprep.subr.bf16.mxu0 0
        %617 = vmatpush2.bf16.msra.mxu0 0
        %618 = vmatprep.subr.bf16.mxu0 0
        %619 = vmatpush2.bf16.msra.mxu0 0
        %620 = vmatprep.subr.bf16.mxu0 0
        %621 = vmatpush2.bf16.msra.mxu0 0
        %622 = vmatprep.subr.bf16.mxu0 0
        %623 = vmatpush2.bf16.msra.mxu0 0
        %624 = vmatprep.subr.bf16.mxu0 0
        %625 = vmatpush2.bf16.msra.mxu0 0
        %626 = vmatprep.subr.bf16.mxu0 0
        %627 = vmatpush2.bf16.msra.mxu0 0
        %628 = vmatprep.subr.bf16.mxu0 0
        %629 = vmatpush2.bf16.msra.mxu0 0
        %630 = vmatprep.mubr.bf16.mxu0 0
        %631 = vmatmul.mubr.bf16.gmra.mxu0 %v588
        %v632 = vpop.f32.mrf.mxu0
        %v633 = vadd.f32 %v535, %v632
        %v634 = vpop.f32.mrf.mxu0
        %v635 = vadd.f32 %v537, %v634
        %v636 = vpop.f32.mrf.mxu0
        %v637 = vadd.f32 %v539, %v636
        %v638 = vpop.f32.mrf.mxu0
        %v639 = vadd.f32 %v541, %v638
        %640 = vmatprep.mubr.bf16.mxu0 0
        %641 = vmatmul.mubr.bf16.gmra.mxu0 %v590
        %v642 = vpop.f32.mrf.mxu0
        %v643 = vadd.f32 %v545, %v642
        %v644 = vpop.f32.mrf.mxu0
        %v645 = vadd.f32 %v547, %v644
        %v646 = vpop.f32.mrf.mxu0
        %v647 = vadd.f32 %v549, %v646
        %v648 = vpop.f32.mrf.mxu0
        %v649 = vadd.f32 %v551, %v648
        %650 = vdwg.mxu0
        %s651 = scalar_lea.vmem %s1, 112
        %v652 = vld [vmem:[%s651] sm:$0xff]
        %v653 = vld [vmem:[%s651 + $0x8] sm:$0xff]
        %v654 = vld [vmem:[%s651 + $0x10] sm:$0xff]
        %v655 = vld [vmem:[%s651 + $0x18] sm:$0xff]
        %v656 = vld [vmem:[%s651 + $0x20] sm:$0xff]
        %v657 = vld [vmem:[%s651 + $0x28] sm:$0xff]
        %v658 = vld [vmem:[%s651 + $0x30] sm:$0x11]
        %vm662 = vcmask 1046528
        %v663 = vrot.slane %v420, 1
        %v664 = vrot.slane %v421, 1
        %v665 = vsel %vm662, %v663, %v664
        %v666 = vrot.slane %v430, 1
        %v667 = vsel %vm662, %v664, %v666
        %v675 = vunpack.c.l.b16 %v652
        %v676 = vunpack.c.h.b16 %v652
        %v677 = vunpack.c.l.b16 %v653
        %v678 = vunpack.c.h.b16 %v653
        %v679 = vunpack.c.l.b16 %v654
        %v680 = vunpack.c.h.b16 %v654
        %v681 = vunpack.c.l.b16 %v655
        %v682 = vunpack.c.h.b16 %v655
        %v683 = vunpack.c.l.b16 %v656
        %v684 = vunpack.c.h.b16 %v656
        %v685 = vunpack.c.l.b16 %v657
        %v686 = vunpack.c.h.b16 %v657
        %v687 = vunpack.c.l.b16 %v658
        %v688 = vunpack.c.h.b16 %v658
        %v689 = vpack.c.b16 %v677, %v675
        %v690 = vpack.c.b16 %v678, %v676
        %v691 = vpack.c.b16 %v681, %v679
        %v692 = vpack.c.b16 %v682, %v680
        %v693 = vpack.c.b16 %v685, %v683
        %v694 = vpack.c.b16 %v686, %v684
        %v695 = vpack.c.b16 %v687, %v687
        %v696 = vpack.c.b16 %v688, %v688
        %v704 = vsel %vm362, %v665, 0
        %v707 = vsel %vm362, %v667, 0
        %v710 = vsel %vm493, %v695, 0
        %v713 = vsel %vm493, %v696, 0
        %715 = vmatprep.subr.bf16.mxu0 0
        %716 = vmatpush1.bf16.msra.mxu0 0
        %717 = vmatprep.subr.bf16.mxu0 0
        %718 = vmatpush1.bf16.msra.mxu0 0
        %719 = vmatprep.subr.bf16.mxu0 0
        %720 = vmatpush1.bf16.msra.mxu0 0
        %721 = vmatprep.subr.bf16.mxu0 0
        %722 = vmatpush1.bf16.msra.mxu0 0
        %723 = vmatprep.subr.bf16.mxu0 %v713
        %724 = vmatpush1.bf16.msra.mxu0 %v710
        %725 = vmatprep.subr.bf16.mxu0 %v694
        %726 = vmatpush1.bf16.msra.mxu0 %v693
        %727 = vmatprep.subr.bf16.mxu0 %v692
        %728 = vmatpush1.bf16.msra.mxu0 %v691
        %729 = vmatprep.subr.bf16.mxu0 %v690
        %730 = vmatpush1.bf16.msra.mxu0 %v689
        %731 = vmatprep.subr.bf16.mxu0 0
        %732 = vmatpush2.bf16.msra.mxu0 0
        %733 = vmatprep.subr.bf16.mxu0 0
        %734 = vmatpush2.bf16.msra.mxu0 0
        %735 = vmatprep.subr.bf16.mxu0 0
        %736 = vmatpush2.bf16.msra.mxu0 0
        %737 = vmatprep.subr.bf16.mxu0 0
        %738 = vmatpush2.bf16.msra.mxu0 0
        %739 = vmatprep.subr.bf16.mxu0 0
        %740 = vmatpush2.bf16.msra.mxu0 0
        %741 = vmatprep.subr.bf16.mxu0 0
        %742 = vmatpush2.bf16.msra.mxu0 0
        %743 = vmatprep.subr.bf16.mxu0 0
        %744 = vmatpush2.bf16.msra.mxu0 0
        %745 = vmatprep.subr.bf16.mxu0 0
        %746 = vmatpush2.bf16.msra.mxu0 0
        %747 = vmatprep.mubr.bf16.mxu0 0
        %748 = vmatmul.mubr.bf16.gmra.mxu0 %v704
        %v749 = vpop.f32.mrf.mxu0
        %v750 = vadd.f32 0.0, %v749
        %v751 = vpop.f32.mrf.mxu0
        %v752 = vadd.f32 0.0, %v751
        %v753 = vpop.f32.mrf.mxu0
        %v754 = vadd.f32 0.0, %v753
        %v755 = vpop.f32.mrf.mxu0
        %v756 = vadd.f32 0.0, %v755
        %757 = vmatprep.mubr.bf16.mxu0 0
        %758 = vmatmul.mubr.bf16.gmra.mxu0 %v707
        %v759 = vpop.f32.mrf.mxu0
        %v760 = vadd.f32 0.0, %v759
        %v761 = vpop.f32.mrf.mxu0
        %v762 = vadd.f32 0.0, %v761
        %v763 = vpop.f32.mrf.mxu0
        %v764 = vadd.f32 0.0, %v763
        %v765 = vpop.f32.mrf.mxu0
        %v766 = vadd.f32 0.0, %v765
        %767 = vdwg.mxu0
        %v768 = vadd.f32 %v633, %v750
        %v769 = vadd.f32 %v635, %v752
        %v770 = vadd.f32 %v637, %v754
        %v771 = vadd.f32 %v639, %v756
        %v772 = vadd.f32 %v643, %v760
        %v773 = vadd.f32 %v645, %v762
        %v774 = vadd.f32 %v647, %v764
        %v775 = vadd.f32 %v649, %v766
        %v777 = vlaneseq
        %v778 = vshrl.u32 %v777, 7
        %v779 = vsub.s32 0, %v778
        %v780 = vrot.slane %v406, %v779
        %v781 = vlaneseq
        %v782 = vshrl.u32 %v781, 7
        %v783 = vsub.s32 1, %v782
        %v784 = vrot.slane %v406, %v783
        %v787 = vadd.f32 %v768, %v780
        %v788 = vadd.f32 %v769, %v784
        %v789 = vadd.f32 %v770, %v780
        %v790 = vadd.f32 %v771, %v784
        %v791 = vadd.f32 %v772, %v780
        %v792 = vadd.f32 %v773, %v784
        %v793 = vadd.f32 %v774, %v780
        %v794 = vadd.f32 %v775, %v784
        %v795 = vmax.f32 %v787, 0.0
        %v796 = vmax.f32 %v788, 0.0
        %v797 = vmax.f32 %v789, 0.0
        %v798 = vmax.f32 %v790, 0.0
        %v799 = vmax.f32 %v791, 0.0
        %v800 = vmax.f32 %v792, 0.0
        %v801 = vmax.f32 %v793, 0.0
        %v802 = vmax.f32 %v794, 0.0
        %v805 = vrot.slane %v795, 1
        %v806 = vrot.slane %v796, 1
        %v809 = vmax.f32 %v795, %v805
        %v810 = vmax.f32 %v796, %v806
        %v813 = vcombine.low %v809, %v810
        %v815 = vunpack.c.l.s4 1966171168
        %v816 = vunpack.c.0.s8 %v815
        %v817 = vlaneseq
        %v818 = vshrl.u32 %v817, 7
        %v819 = vsub.s32 %v816, %v818
        %v820 = vrot.slane %v813, %v819
        %v822 = vunpack.c.l.s4 1966171168
        %v823 = vunpack.c.0.s8 %v822
        %v824 = vlaneseq
        %v825 = vshrl.u32 %v824, 7
        %v826 = vsub.s32 %v823, %v825
        %v827 = vrot.slane %v820, %v826
        %s829 = scalar_lea.vmem [#allocation3], 1
        %830 = vst.msk [vmem:[%s829] ss:$8 sm:$0x3] %vm382, %v827
        %831 = vst.msk [vmem:[%s829] ss:$8 sm:$0x0] %vm382, %v827
        %v832 = vrot.slane %v795, 2
        %v833 = vrot.slane %v796, 2
        %v836 = vmax.f32 %v809, %v832
        %v837 = vmax.f32 %v810, %v833
        %v840 = vcombine.low %v836, %v837
        %v842 = vunpack.c.l.s4 1966171168
        %v843 = vunpack.c.0.s8 %v842
        %v844 = vlaneseq
        %v845 = vshrl.u32 %v844, 7
        %v846 = vsub.s32 %v843, %v845
        %v847 = vrot.slane %v840, %v846
        %v849 = vunpack.c.l.s4 1966171168
        %v850 = vunpack.c.0.s8 %v849
        %v851 = vlaneseq
        %v852 = vshrl.u32 %v851, 7
        %v853 = vsub.s32 %v850, %v852
        %v854 = vrot.slane %v847, %v853
        %v855 = vcombine.high %v854, %v854
        %s857 = scalar_lea.vmem [#allocation3], 2
        %858 = vst.msk [vmem:[%s857] ss:$8 sm:$0x3] %vm382, %v855
        %859 = vst.msk [vmem:[%s857] ss:$8 sm:$0x0] %vm382, %v855
        %v860 = vcombine.high %v836, %v837
        %v862 = vunpack.c.l.s4 1966171168
        %v863 = vunpack.c.0.s8 %v862
        %v864 = vlaneseq
        %v865 = vshrl.u32 %v864, 7
        %v866 = vsub.s32 %v863, %v865
        %v867 = vrot.slane %v860, %v866
        %v868 = vcombine.high %v867, %v867
        %v870 = vunpack.c.l.s4 1966171168
        %v871 = vunpack.c.0.s8 %v870
        %v872 = vlaneseq
        %v873 = vshrl.u32 %v872, 7
        %v874 = vsub.s32 %v871, %v873
        %v875 = vrot.slane %v868, %v874
        %s877 = scalar_lea.vmem [#allocation3], 3
        %878 = vst.msk [vmem:[%s877] ss:$8 sm:$0x3] %vm382, %v875
        %879 = vst.msk [vmem:[%s877] ss:$8 sm:$0x0] %vm382, %v875
        %v882 = vrot.slane %v797, 1
        %v883 = vrot.slane %v798, 1
        %v886 = vmax.f32 %v797, %v882
        %v887 = vmax.f32 %v798, %v883
        %v888 = vrot.slane %v797, 2
        %v889 = vrot.slane %v798, 2
        %v892 = vmax.f32 %v886, %v888
        %v893 = vmax.f32 %v887, %v889
        %v896 = vcombine.low %v892, %v893
        %v898 = vunpack.c.l.s4 1966171168
        %v899 = vunpack.c.0.s8 %v898
        %v900 = vlaneseq
        %v901 = vshrl.u32 %v900, 7
        %v902 = vsub.s32 %v899, %v901
        %v903 = vrot.slane %v896, %v902
        %v905 = vunpack.c.l.s4 1966171168
        %v906 = vunpack.c.0.s8 %v905
        %v907 = vlaneseq
        %v908 = vshrl.u32 %v907, 7
        %v909 = vsub.s32 %v906, %v908
        %v910 = vrot.slane %v903, %v909
        %s912 = scalar_lea.vmem [#allocation3], 4
        %913 = vst.msk [vmem:[%s912] ss:$8 sm:$0x3] %vm382, %v910
        %914 = vst.msk [vmem:[%s912] ss:$8 sm:$0x0] %vm382, %v910
        %v915 = vcombine.high %v903, %v903
        %v917 = vunpack.c.l.s4 1966171168
        %v918 = vunpack.c.0.s8 %v917
        %v919 = vlaneseq
        %v920 = vshrl.u32 %v919, 7
        %v921 = vsub.s32 %v918, %v920
        %v922 = vrot.slane %v915, %v921
        %v923 = vcombine.high %v922, %v922
        %s925 = scalar_lea.vmem [#allocation3], 5
        %926 = vst.msk [vmem:[%s925] ss:$8 sm:$0x3] %vm382, %v923
        %927 = vst.msk [vmem:[%s925] ss:$8 sm:$0x0] %vm382, %v923
        %v930 = vrot.slane %v799, 2
        %v931 = vrot.slane %v800, 2
        %v934 = vmax.f32 %v886, %v930
        %v935 = vmax.f32 %v887, %v931
        %v938 = vcombine.high %v934, %v935
        %v940 = vunpack.c.l.s4 1966171168
        %v941 = vunpack.c.0.s8 %v940
        %v942 = vlaneseq
        %v943 = vshrl.u32 %v942, 7
        %v944 = vsub.s32 %v941, %v943
        %v945 = vrot.slane %v938, %v944
        %v947 = vunpack.c.l.s4 1966171168
        %v948 = vunpack.c.0.s8 %v947
        %v949 = vlaneseq
        %v950 = vshrl.u32 %v949, 7
        %v951 = vsub.s32 %v948, %v950
        %v952 = vrot.slane %v945, %v951
        %v953 = vcombine.high %v952, %v952
        %s955 = scalar_lea.vmem [#allocation3], 6
        %956 = vst.msk [vmem:[%s955] ss:$8 sm:$0x3] %vm382, %v953
        %957 = vst.msk [vmem:[%s955] ss:$8 sm:$0x0] %vm382, %v953
        %v958 = vrot.slane %v799, 1
        %v959 = vrot.slane %v800, 1
        %v962 = vmax.f32 %v799, %v958
        %v963 = vmax.f32 %v800, %v959
        %v964 = vmax.f32 %v962, %v930
        %v965 = vmax.f32 %v963, %v931
        %v968 = vcombine.low %v964, %v965
        %v970 = vunpack.c.l.s4 1966171168
        %v971 = vunpack.c.0.s8 %v970
        %v972 = vlaneseq
        %v973 = vshrl.u32 %v972, 7
        %v974 = vsub.s32 %v971, %v973
        %v975 = vrot.slane %v968, %v974
        %v976 = vcombine.high %v975, %v975
        %v978 = vunpack.c.l.s4 1966171168
        %v979 = vunpack.c.0.s8 %v978
        %v980 = vlaneseq
        %v981 = vshrl.u32 %v980, 7
        %v982 = vsub.s32 %v979, %v981
        %v983 = vrot.slane %v976, %v982
        %s985 = scalar_lea.vmem [#allocation3], 7
        %986 = vst.msk [vmem:[%s985] ss:$8 sm:$0x3] %vm382, %v983
        %987 = vst.msk [vmem:[%s985] ss:$8 sm:$0x0] %vm382, %v983
        %v988 = vcombine.high %v964, %v965
        %v990 = vunpack.c.l.s4 1966171168
        %v991 = vunpack.c.0.s8 %v990
        %v992 = vlaneseq
        %v993 = vshrl.u32 %v992, 7
        %v994 = vsub.s32 %v991, %v993
        %v995 = vrot.slane %v988, %v994
        %v997 = vunpack.c.l.s4 1966171168
        %v998 = vunpack.c.0.s8 %v997
        %v999 = vlaneseq
        %v1000 = vshrl.u32 %v999, 7
        %v1001 = vsub.s32 %v998, %v1000
        %v1002 = vrot.slane %v995, %v1001
        %s1004 = scalar_lea.vmem [#allocation3], 16
        %1005 = vst.msk [vmem:[%s1004] ss:$8 sm:$0x3] %vm382, %v1002
        %1006 = vst.msk [vmem:[%s1004] ss:$8 sm:$0x0] %vm382, %v1002
        %v1009 = vrot.slane %v801, 1
        %v1010 = vrot.slane %v802, 1
        %v1013 = vmax.f32 %v799, %v1009
        %v1014 = vmax.f32 %v800, %v1010
        %v1015 = vrot.slane %v801, 2
        %v1016 = vrot.slane %v802, 2
        %v1019 = vmax.f32 %v1013, %v1015
        %v1020 = vmax.f32 %v1014, %v1016
        %v1023 = vcombine.high %v1019, %v1020
        %v1025 = vunpack.c.l.s4 1966171168
        %v1026 = vunpack.c.0.s8 %v1025
        %v1027 = vlaneseq
        %v1028 = vshrl.u32 %v1027, 7
        %v1029 = vsub.s32 %v1026, %v1028
        %v1030 = vrot.slane %v1023, %v1029
        %v1031 = vcombine.high %v1030, %v1030
        %v1033 = vunpack.c.l.s4 1966171168
        %v1034 = vunpack.c.0.s8 %v1033
        %v1035 = vlaneseq
        %v1036 = vshrl.u32 %v1035, 7
        %v1037 = vsub.s32 %v1034, %v1036
        %v1038 = vrot.slane %v1031, %v1037
        %v1039 = vcombine.high %v1038, %v1038
        %s1041 = scalar_lea.vmem [#allocation3], 17
        %1042 = vst.msk [vmem:[%s1041] ss:$8 sm:$0x3] %vm382, %v1039
        %1043 = vst.msk [vmem:[%s1041] ss:$8 sm:$0x0] %vm382, %v1039
        %v1044 = vmax.f32 %v801, %v1009
        %v1045 = vmax.f32 %v802, %v1010
        %v1046 = vmax.f32 %v1044, %v1015
        %v1047 = vmax.f32 %v1045, %v1016
        %v1050 = vcombine.low %v1046, %v1047
        %v1052 = vunpack.c.l.s4 1966171168
        %v1053 = vunpack.c.0.s8 %v1052
        %v1054 = vlaneseq
        %v1055 = vshrl.u32 %v1054, 7
        %v1056 = vsub.s32 %v1053, %v1055
        %v1057 = vrot.slane %v1050, %v1056
        %v1059 = vunpack.c.l.s4 1966171168
        %v1060 = vunpack.c.0.s8 %v1059
        %v1061 = vlaneseq
        %v1062 = vshrl.u32 %v1061, 7
        %v1063 = vsub.s32 %v1060, %v1062
        %v1064 = vrot.slane %v1057, %v1063
        %v1065 = vcombine.high %v1064, %v1064
        %s1067 = scalar_lea.vmem [#allocation3], 18
        %1068 = vst.msk [vmem:[%s1067] ss:$8 sm:$0x3] %vm382, %v1065
        %1069 = vst.msk [vmem:[%s1067] ss:$8 sm:$0x0] %vm382, %v1065
        %v1070 = vcombine.high %v1046, %v1047
        %v1072 = vunpack.c.l.s4 1966171168
        %v1073 = vunpack.c.0.s8 %v1072
        %v1074 = vlaneseq
        %v1075 = vshrl.u32 %v1074, 7
        %v1076 = vsub.s32 %v1073, %v1075
        %v1077 = vrot.slane %v1070, %v1076
        %v1078 = vcombine.high %v1077, %v1077
        %v1080 = vunpack.c.l.s4 1966171168
        %v1081 = vunpack.c.0.s8 %v1080
        %v1082 = vlaneseq
        %v1083 = vshrl.u32 %v1082, 7
        %v1084 = vsub.s32 %v1081, %v1083
        %v1085 = vrot.slane %v1078, %v1084
        %s1087 = scalar_lea.vmem [#allocation3], 19
        %1088 = vst.msk [vmem:[%s1087] ss:$8 sm:$0x3] %vm382, %v1085
        %1089 = vst.msk [vmem:[%s1087] ss:$8 sm:$0x0] %vm382, %v1085
        %s1090 = scalar_lea.vmem [#allocation2], 40
        %v1091 = vld [vmem:[%s1090] sm:$0xff]
        %v1092 = vld [vmem:[%s1090 + $0x8] sm:$0xff]
        %v1093 = vld [vmem:[%s1090 + $0x10] sm:$0xff]
        %v1094 = vld [vmem:[%s1090 + $0x18] sm:$0xff]
        %v1095 = vld [vmem:[%s1090 + $0x20] sm:$0x3]
        %v1096 = vld [vmem:[%s1] sm:$0xff]
        %v1097 = vld [vmem:[%s1 + $0x8] sm:$0xff]
        %v1098 = vld [vmem:[%s1 + $0x10] sm:$0xff]
        %v1099 = vld [vmem:[%s1 + $0x18] sm:$0xff]
        %v1100 = vld [vmem:[%s1 + $0x20] sm:$0xff]
        %v1101 = vld [vmem:[%s1 + $0x28] sm:$0xff]
        %v1102 = vld [vmem:[%s1 + $0x30] sm:$0x11]
        %v1103 = vpack.c.bf16 %v1092, %v1091
        %v1104 = vpack.c.bf16 %v1094, %v1093
        %v1105 = vld [vmem:[%s422] sm:$0xff]
        %v1106 = vld [vmem:[%s422 + $0x8] sm:$0xff]
        %v1107 = vld [vmem:[%s422 + $0x10] sm:$0xff]
        %v1108 = vld [vmem:[%s422 + $0x18] sm:$0xff]
        %v1109 = vld [vmem:[%s422 + $0x20] sm:$0xff]
        %v1110 = vld [vmem:[%s422 + $0x28] sm:$0xff]
        %v1111 = vld [vmem:[%s422 + $0x30] sm:$0x11]
        %v1112 = vpack.c.bf16 %v1095, %v1095
        %v1114 = vshrl.u32 %v1103, 16
        %v1116 = vshll.u32 %v1103, 16
        %v1118 = vrot.slane %v1116, 1
        %v1119 = vor.u32 %v1114, %v1118
        %v1121 = vshll.u32 %v1104, 16
        %v1123 = vrot.slane %v1121, 1
        %v1124 = vsel %vm431, %v1119, %v1123
        %v1125 = vshrl.u32 %v1104, 16
        %v1127 = vor.u32 %v1125, %v1123
        %v1129 = vshll.u32 %v1112, 16
        %v1131 = vrot.slane %v1129, 1
        %v1132 = vsel %vm431, %v1127, %v1131
        %v1140 = vunpack.c.l.b16 %v1105
        %v1141 = vunpack.c.h.b16 %v1105
        %v1142 = vunpack.c.l.b16 %v1106
        %v1143 = vunpack.c.h.b16 %v1106
        %v1144 = vunpack.c.l.b16 %v1107
        %v1145 = vunpack.c.h.b16 %v1107
        %v1146 = vunpack.c.l.b16 %v1108
        %v1147 = vunpack.c.h.b16 %v1108
        %v1148 = vunpack.c.l.b16 %v1109
        %v1149 = vunpack.c.h.b16 %v1109
        %v1150 = vunpack.c.l.b16 %v1110
        %v1151 = vunpack.c.h.b16 %v1110
        %v1152 = vunpack.c.l.b16 %v1111
        %v1153 = vunpack.c.h.b16 %v1111
        %v1154 = vpack.c.b16 %v1142, %v1140
        %v1155 = vpack.c.b16 %v1143, %v1141
        %v1156 = vpack.c.b16 %v1146, %v1144
        %v1157 = vpack.c.b16 %v1147, %v1145
        %v1158 = vpack.c.b16 %v1150, %v1148
        %v1159 = vpack.c.b16 %v1151, %v1149
        %v1160 = vpack.c.b16 %v1152, %v1152
        %v1161 = vpack.c.b16 %v1153, %v1153
        %v1169 = vsel %vm362, %v1124, 0
        %v1172 = vsel %vm362, %v1132, 0
        %v1175 = vsel %vm493, %v1160, 0
        %v1178 = vsel %vm493, %v1161, 0
        %1180 = vmatprep.subr.bf16.mxu0 0
        %1181 = vmatpush1.bf16.msra.mxu0 0
        %1182 = vmatprep.subr.bf16.mxu0 0
        %1183 = vmatpush1.bf16.msra.mxu0 0
        %1184 = vmatprep.subr.bf16.mxu0 0
        %1185 = vmatpush1.bf16.msra.mxu0 0
        %1186 = vmatprep.subr.bf16.mxu0 0
        %1187 = vmatpush1.bf16.msra.mxu0 0
        %1188 = vmatprep.subr.bf16.mxu0 %v1178
        %1189 = vmatpush1.bf16.msra.mxu0 %v1175
        %1190 = vmatprep.subr.bf16.mxu0 %v1159
        %1191 = vmatpush1.bf16.msra.mxu0 %v1158
        %1192 = vmatprep.subr.bf16.mxu0 %v1157
        %1193 = vmatpush1.bf16.msra.mxu0 %v1156
        %1194 = vmatprep.subr.bf16.mxu0 %v1155
        %1195 = vmatpush1.bf16.msra.mxu0 %v1154
        %1196 = vmatprep.subr.bf16.mxu0 0
        %1197 = vmatpush2.bf16.msra.mxu0 0
        %1198 = vmatprep.subr.bf16.mxu0 0
        %1199 = vmatpush2.bf16.msra.mxu0 0
        %1200 = vmatprep.subr.bf16.mxu0 0
        %1201 = vmatpush2.bf16.msra.mxu0 0
        %1202 = vmatprep.subr.bf16.mxu0 0
        %1203 = vmatpush2.bf16.msra.mxu0 0
        %1204 = vmatprep.subr.bf16.mxu0 0
        %1205 = vmatpush2.bf16.msra.mxu0 0
        %1206 = vmatprep.subr.bf16.mxu0 0
        %1207 = vmatpush2.bf16.msra.mxu0 0
        %1208 = vmatprep.subr.bf16.mxu0 0
        %1209 = vmatpush2.bf16.msra.mxu0 0
        %1210 = vmatprep.subr.bf16.mxu0 0
        %1211 = vmatpush2.bf16.msra.mxu0 0
        %1212 = vmatprep.mubr.bf16.mxu0 0
        %1213 = vmatmul.mubr.bf16.gmra.mxu0 %v1169
        %v1214 = vpop.f32.mrf.mxu0
        %v1215 = vadd.f32 0.0, %v1214
        %v1216 = vpop.f32.mrf.mxu0
        %v1217 = vadd.f32 0.0, %v1216
        %v1218 = vpop.f32.mrf.mxu0
        %v1219 = vadd.f32 0.0, %v1218
        %v1220 = vpop.f32.mrf.mxu0
        %v1221 = vadd.f32 0.0, %v1220
        %1222 = vmatprep.mubr.bf16.mxu0 0
        %1223 = vmatmul.mubr.bf16.gmra.mxu0 %v1172
        %v1224 = vpop.f32.mrf.mxu0
        %v1225 = vadd.f32 0.0, %v1224
        %v1226 = vpop.f32.mrf.mxu0
        %v1227 = vadd.f32 0.0, %v1226
        %v1228 = vpop.f32.mrf.mxu0
        %v1229 = vadd.f32 0.0, %v1228
        %v1230 = vpop.f32.mrf.mxu0
        %v1231 = vadd.f32 0.0, %v1230
        %1232 = vdwg.mxu0
        %v1240 = vunpack.c.l.b16 %v1096
        %v1241 = vunpack.c.h.b16 %v1096
        %v1242 = vunpack.c.l.b16 %v1097
        %v1243 = vunpack.c.h.b16 %v1097
        %v1244 = vunpack.c.l.b16 %v1098
        %v1245 = vunpack.c.h.b16 %v1098
        %v1246 = vunpack.c.l.b16 %v1099
        %v1247 = vunpack.c.h.b16 %v1099
        %v1248 = vunpack.c.l.b16 %v1100
        %v1249 = vunpack.c.h.b16 %v1100
        %v1250 = vunpack.c.l.b16 %v1101
        %v1251 = vunpack.c.h.b16 %v1101
        %v1252 = vunpack.c.l.b16 %v1102
        %v1253 = vunpack.c.h.b16 %v1102
        %v1254 = vpack.c.b16 %v1242, %v1240
        %v1255 = vpack.c.b16 %v1243, %v1241
        %v1256 = vpack.c.b16 %v1246, %v1244
        %v1257 = vpack.c.b16 %v1247, %v1245
        %v1258 = vpack.c.b16 %v1250, %v1248
        %v1259 = vpack.c.b16 %v1251, %v1249
        %v1260 = vpack.c.b16 %v1252, %v1252
        %v1261 = vpack.c.b16 %v1253, %v1253
        %v1268 = vsel %vm362, %v1103, 0
        %v1270 = vsel %vm362, %v1104, 0
        %v1273 = vsel %vm493, %v1260, 0
        %v1276 = vsel %vm493, %v1261, 0
        %1278 = vmatprep.subr.bf16.mxu0 0
        %1279 = vmatpush1.bf16.msra.mxu0 0
        %1280 = vmatprep.subr.bf16.mxu0 0
        %1281 = vmatpush1.bf16.msra.mxu0 0
        %1282 = vmatprep.subr.bf16.mxu0 0
        %1283 = vmatpush1.bf16.msra.mxu0 0
        %1284 = vmatprep.subr.bf16.mxu0 0
        %1285 = vmatpush1.bf16.msra.mxu0 0
        %1286 = vmatprep.subr.bf16.mxu0 %v1276
        %1287 = vmatpush1.bf16.msra.mxu0 %v1273
        %1288 = vmatprep.subr.bf16.mxu0 %v1259
        %1289 = vmatpush1.bf16.msra.mxu0 %v1258
        %1290 = vmatprep.subr.bf16.mxu0 %v1257
        %1291 = vmatpush1.bf16.msra.mxu0 %v1256
        %1292 = vmatprep.subr.bf16.mxu0 %v1255
        %1293 = vmatpush1.bf16.msra.mxu0 %v1254
        %1294 = vmatprep.subr.bf16.mxu0 0
        %1295 = vmatpush2.bf16.msra.mxu0 0
        %1296 = vmatprep.subr.bf16.mxu0 0
        %1297 = vmatpush2.bf16.msra.mxu0 0
        %1298 = vmatprep.subr.bf16.mxu0 0
        %1299 = vmatpush2.bf16.msra.mxu0 0
        %1300 = vmatprep.subr.bf16.mxu0 0
        %1301 = vmatpush2.bf16.msra.mxu0 0
        %1302 = vmatprep.subr.bf16.mxu0 0
        %1303 = vmatpush2.bf16.msra.mxu0 0
        %1304 = vmatprep.subr.bf16.mxu0 0
        %1305 = vmatpush2.bf16.msra.mxu0 0
        %1306 = vmatprep.subr.bf16.mxu0 0
        %1307 = vmatpush2.bf16.msra.mxu0 0
        %1308 = vmatprep.subr.bf16.mxu0 0
        %1309 = vmatpush2.bf16.msra.mxu0 0
        %1310 = vmatprep.mubr.bf16.mxu0 0
        %1311 = vmatmul.mubr.bf16.gmra.mxu0 %v1268
        %v1312 = vpop.f32.mrf.mxu0
        %v1313 = vadd.f32 %v1215, %v1312
        %v1314 = vpop.f32.mrf.mxu0
        %v1315 = vadd.f32 %v1217, %v1314
        %v1316 = vpop.f32.mrf.mxu0
        %v1317 = vadd.f32 %v1219, %v1316
        %v1318 = vpop.f32.mrf.mxu0
        %v1319 = vadd.f32 %v1221, %v1318
        %1320 = vmatprep.mubr.bf16.mxu0 0
        %1321 = vmatmul.mubr.bf16.gmra.mxu0 %v1270
        %v1322 = vpop.f32.mrf.mxu0
        %v1323 = vadd.f32 %v1225, %v1322
        %v1324 = vpop.f32.mrf.mxu0
        %v1325 = vadd.f32 %v1227, %v1324
        %v1326 = vpop.f32.mrf.mxu0
        %v1327 = vadd.f32 %v1229, %v1326
        %v1328 = vpop.f32.mrf.mxu0
        %v1329 = vadd.f32 %v1231, %v1328
        %1330 = vdwg.mxu0
        %v1331 = vld [vmem:[%s651] sm:$0xff]
        %v1332 = vld [vmem:[%s651 + $0x8] sm:$0xff]
        %v1333 = vld [vmem:[%s651 + $0x10] sm:$0xff]
        %v1334 = vld [vmem:[%s651 + $0x18] sm:$0xff]
        %v1335 = vld [vmem:[%s651 + $0x20] sm:$0xff]
        %v1336 = vld [vmem:[%s651 + $0x28] sm:$0xff]
        %v1337 = vld [vmem:[%s651 + $0x30] sm:$0x11]
        %v1341 = vrot.slane %v1103, 1
        %v1342 = vrot.slane %v1104, 1
        %v1343 = vsel %vm662, %v1341, %v1342
        %v1344 = vrot.slane %v1112, 1
        %v1345 = vsel %vm662, %v1342, %v1344
        %v1353 = vunpack.c.l.b16 %v1331
        %v1354 = vunpack.c.h.b16 %v1331
        %v1355 = vunpack.c.l.b16 %v1332
        %v1356 = vunpack.c.h.b16 %v1332
        %v1357 = vunpack.c.l.b16 %v1333
        %v1358 = vunpack.c.h.b16 %v1333
        %v1359 = vunpack.c.l.b16 %v1334
        %v1360 = vunpack.c.h.b16 %v1334
        %v1361 = vunpack.c.l.b16 %v1335
        %v1362 = vunpack.c.h.b16 %v1335
        %v1363 = vunpack.c.l.b16 %v1336
        %v1364 = vunpack.c.h.b16 %v1336
        %v1365 = vunpack.c.l.b16 %v1337
        %v1366 = vunpack.c.h.b16 %v1337
        %v1367 = vpack.c.b16 %v1355, %v1353
        %v1368 = vpack.c.b16 %v1356, %v1354
        %v1369 = vpack.c.b16 %v1359, %v1357
        %v1370 = vpack.c.b16 %v1360, %v1358
        %v1371 = vpack.c.b16 %v1363, %v1361
        %v1372 = vpack.c.b16 %v1364, %v1362
        %v1373 = vpack.c.b16 %v1365, %v1365
        %v1374 = vpack.c.b16 %v1366, %v1366
        %v1382 = vsel %vm362, %v1343, 0
        %v1385 = vsel %vm362, %v1345, 0
        %v1388 = vsel %vm493, %v1373, 0
        %v1391 = vsel %vm493, %v1374, 0
        %1393 = vmatprep.subr.bf16.mxu0 0
        %1394 = vmatpush1.bf16.msra.mxu0 0
        %1395 = vmatprep.subr.bf16.mxu0 0
        %1396 = vmatpush1.bf16.msra.mxu0 0
        %1397 = vmatprep.subr.bf16.mxu0 0
        %1398 = vmatpush1.bf16.msra.mxu0 0
        %1399 = vmatprep.subr.bf16.mxu0 0
        %1400 = vmatpush1.bf16.msra.mxu0 0
        %1401 = vmatprep.subr.bf16.mxu0 %v1391
        %1402 = vmatpush1.bf16.msra.mxu0 %v1388
        %1403 = vmatprep.subr.bf16.mxu0 %v1372
        %1404 = vmatpush1.bf16.msra.mxu0 %v1371
        %1405 = vmatprep.subr.bf16.mxu0 %v1370
        %1406 = vmatpush1.bf16.msra.mxu0 %v1369
        %1407 = vmatprep.subr.bf16.mxu0 %v1368
        %1408 = vmatpush1.bf16.msra.mxu0 %v1367
        %1409 = vmatprep.subr.bf16.mxu0 0
        %1410 = vmatpush2.bf16.msra.mxu0 0
        %1411 = vmatprep.subr.bf16.mxu0 0
        %1412 = vmatpush2.bf16.msra.mxu0 0
        %1413 = vmatprep.subr.bf16.mxu0 0
        %1414 = vmatpush2.bf16.msra.mxu0 0
        %1415 = vmatprep.subr.bf16.mxu0 0
        %1416 = vmatpush2.bf16.msra.mxu0 0
        %1417 = vmatprep.subr.bf16.mxu0 0
        %1418 = vmatpush2.bf16.msra.mxu0 0
        %1419 = vmatprep.subr.bf16.mxu0 0
        %1420 = vmatpush2.bf16.msra.mxu0 0
        %1421 = vmatprep.subr.bf16.mxu0 0
        %1422 = vmatpush2.bf16.msra.mxu0 0
        %1423 = vmatprep.subr.bf16.mxu0 0
        %1424 = vmatpush2.bf16.msra.mxu0 0
        %1425 = vmatprep.mubr.bf16.mxu0 0
        %1426 = vmatmul.mubr.bf16.gmra.mxu0 %v1382
        %v1427 = vpop.f32.mrf.mxu0
        %v1428 = vadd.f32 0.0, %v1427
        %v1429 = vpop.f32.mrf.mxu0
        %v1430 = vadd.f32 0.0, %v1429
        %v1431 = vpop.f32.mrf.mxu0
        %v1432 = vadd.f32 0.0, %v1431
        %v1433 = vpop.f32.mrf.mxu0
        %v1434 = vadd.f32 0.0, %v1433
        %1435 = vmatprep.mubr.bf16.mxu0 0
        %1436 = vmatmul.mubr.bf16.gmra.mxu0 %v1385
        %v1437 = vpop.f32.mrf.mxu0
        %v1438 = vadd.f32 0.0, %v1437
        %v1439 = vpop.f32.mrf.mxu0
        %v1440 = vadd.f32 0.0, %v1439
        %v1441 = vpop.f32.mrf.mxu0
        %v1442 = vadd.f32 0.0, %v1441
        %v1443 = vpop.f32.mrf.mxu0
        %v1444 = vadd.f32 0.0, %v1443
        %1445 = vdwg.mxu0
        %v1446 = vadd.f32 %v1313, %v1428
        %v1447 = vadd.f32 %v1315, %v1430
        %v1448 = vadd.f32 %v1317, %v1432
        %v1449 = vadd.f32 %v1319, %v1434
        %v1450 = vadd.f32 %v1323, %v1438
        %v1451 = vadd.f32 %v1325, %v1440
        %v1452 = vadd.f32 %v1327, %v1442
        %v1453 = vadd.f32 %v1329, %v1444
        %v1454 = vadd.f32 %v1446, %v780
        %v1455 = vadd.f32 %v1447, %v784
        %v1456 = vadd.f32 %v1448, %v780
        %v1457 = vadd.f32 %v1449, %v784
        %v1458 = vadd.f32 %v1450, %v780
        %v1459 = vadd.f32 %v1451, %v784
        %v1460 = vadd.f32 %v1452, %v780
        %v1461 = vadd.f32 %v1453, %v784
        %v1462 = vmax.f32 %v1454, 0.0
        %v1463 = vmax.f32 %v1455, 0.0
        %v1464 = vmax.f32 %v1456, 0.0
        %v1465 = vmax.f32 %v1457, 0.0
        %v1466 = vmax.f32 %v1458, 0.0
        %v1467 = vmax.f32 %v1459, 0.0
        %v1468 = vmax.f32 %v1460, 0.0
        %v1469 = vmax.f32 %v1461, 0.0
        %v1472 = vrot.slane %v1462, 1
        %v1473 = vrot.slane %v1463, 1
        %v1476 = vmax.f32 %v1462, %v1472
        %v1477 = vmax.f32 %v1463, %v1473
        %v1480 = vcombine.low %v1476, %v1477
        %v1482 = vunpack.c.l.s4 1966171168
        %v1483 = vunpack.c.0.s8 %v1482
        %v1484 = vlaneseq
        %v1485 = vshrl.u32 %v1484, 7
        %v1486 = vsub.s32 %v1483, %v1485
        %v1487 = vrot.slane %v1480, %v1486
        %v1489 = vunpack.c.l.s4 1966171168
        %v1490 = vunpack.c.0.s8 %v1489
        %v1491 = vlaneseq
        %v1492 = vshrl.u32 %v1491, 7
        %v1493 = vsub.s32 %v1490, %v1492
        %v1494 = vrot.slane %v1487, %v1493
        %s1496 = scalar_lea.vmem [#allocation3], 32
        %s1497 = scalar_lea.vmem %s1496, 1 [#allocation3]
        %1498 = vst.msk [vmem:[%s1497] ss:$8 sm:$0x3] %vm382, %v1494
        %1499 = vst.msk [vmem:[%s1497] ss:$8 sm:$0x0] %vm382, %v1494
        %v1500 = vrot.slane %v1462, 2
        %v1501 = vrot.slane %v1463, 2
        %v1504 = vmax.f32 %v1476, %v1500
        %v1505 = vmax.f32 %v1477, %v1501
        %v1508 = vcombine.low %v1504, %v1505
        %v1510 = vunpack.c.l.s4 1966171168
        %v1511 = vunpack.c.0.s8 %v1510
        %v1512 = vlaneseq
        %v1513 = vshrl.u32 %v1512, 7
        %v1514 = vsub.s32 %v1511, %v1513
        %v1515 = vrot.slane %v1508, %v1514
        %v1517 = vunpack.c.l.s4 1966171168
        %v1518 = vunpack.c.0.s8 %v1517
        %v1519 = vlaneseq
        %v1520 = vshrl.u32 %v1519, 7
        %v1521 = vsub.s32 %v1518, %v1520
        %v1522 = vrot.slane %v1515, %v1521
        %v1523 = vcombine.high %v1522, %v1522
        %s1525 = scalar_lea.vmem %s1496, 2 [#allocation3]
        %1526 = vst.msk [vmem:[%s1525] ss:$8 sm:$0x3] %vm382, %v1523
        %1527 = vst.msk [vmem:[%s1525] ss:$8 sm:$0x0] %vm382, %v1523
        %v1528 = vcombine.high %v1504, %v1505
        %v1530 = vunpack.c.l.s4 1966171168
        %v1531 = vunpack.c.0.s8 %v1530
        %v1532 = vlaneseq
        %v1533 = vshrl.u32 %v1532, 7
        %v1534 = vsub.s32 %v1531, %v1533
        %v1535 = vrot.slane %v1528, %v1534
        %v1536 = vcombine.high %v1535, %v1535
        %v1538 = vunpack.c.l.s4 1966171168
        %v1539 = vunpack.c.0.s8 %v1538
        %v1540 = vlaneseq
        %v1541 = vshrl.u32 %v1540, 7
        %v1542 = vsub.s32 %v1539, %v1541
        %v1543 = vrot.slane %v1536, %v1542
        %s1545 = scalar_lea.vmem %s1496, 3 [#allocation3]
        %1546 = vst.msk [vmem:[%s1545] ss:$8 sm:$0x3] %vm382, %v1543
        %1547 = vst.msk [vmem:[%s1545] ss:$8 sm:$0x0] %vm382, %v1543
        %v1550 = vrot.slane %v1464, 1
        %v1551 = vrot.slane %v1465, 1
        %v1554 = vmax.f32 %v1464, %v1550
        %v1555 = vmax.f32 %v1465, %v1551
        %v1556 = vrot.slane %v1464, 2
        %v1557 = vrot.slane %v1465, 2
        %v1560 = vmax.f32 %v1554, %v1556
        %v1561 = vmax.f32 %v1555, %v1557
        %v1564 = vcombine.low %v1560, %v1561
        %v1566 = vunpack.c.l.s4 1966171168
        %v1567 = vunpack.c.0.s8 %v1566
        %v1568 = vlaneseq
        %v1569 = vshrl.u32 %v1568, 7
        %v1570 = vsub.s32 %v1567, %v1569
        %v1571 = vrot.slane %v1564, %v1570
        %v1573 = vunpack.c.l.s4 1966171168
        %v1574 = vunpack.c.0.s8 %v1573
        %v1575 = vlaneseq
        %v1576 = vshrl.u32 %v1575, 7
        %v1577 = vsub.s32 %v1574, %v1576
        %v1578 = vrot.slane %v1571, %v1577
        %s1580 = scalar_lea.vmem %s1496, 4 [#allocation3]
        %1581 = vst.msk [vmem:[%s1580] ss:$8 sm:$0x3] %vm382, %v1578
        %1582 = vst.msk [vmem:[%s1580] ss:$8 sm:$0x0] %vm382, %v1578
        %v1583 = vcombine.high %v1571, %v1571
        %v1585 = vunpack.c.l.s4 1966171168
        %v1586 = vunpack.c.0.s8 %v1585
        %v1587 = vlaneseq
        %v1588 = vshrl.u32 %v1587, 7
        %v1589 = vsub.s32 %v1586, %v1588
        %v1590 = vrot.slane %v1583, %v1589
        %v1591 = vcombine.high %v1590, %v1590
        %s1593 = scalar_lea.vmem %s1496, 5 [#allocation3]
        %1594 = vst.msk [vmem:[%s1593] ss:$8 sm:$0x3] %vm382, %v1591
        %1595 = vst.msk [vmem:[%s1593] ss:$8 sm:$0x0] %vm382, %v1591
        %v1598 = vrot.slane %v1466, 2
        %v1599 = vrot.slane %v1467, 2
        %v1602 = vmax.f32 %v1554, %v1598
        %v1603 = vmax.f32 %v1555, %v1599
        %v1606 = vcombine.high %v1602, %v1603
        %v1608 = vunpack.c.l.s4 1966171168
        %v1609 = vunpack.c.0.s8 %v1608
        %v1610 = vlaneseq
        %v1611 = vshrl.u32 %v1610, 7
        %v1612 = vsub.s32 %v1609, %v1611
        %v1613 = vrot.slane %v1606, %v1612
        %v1615 = vunpack.c.l.s4 1966171168
        %v1616 = vunpack.c.0.s8 %v1615
        %v1617 = vlaneseq
        %v1618 = vshrl.u32 %v1617, 7
        %v1619 = vsub.s32 %v1616, %v1618
        %v1620 = vrot.slane %v1613, %v1619
        %v1621 = vcombine.high %v1620, %v1620
        %s1623 = scalar_lea.vmem %s1496, 6 [#allocation3]
        %1624 = vst.msk [vmem:[%s1623] ss:$8 sm:$0x3] %vm382, %v1621
        %1625 = vst.msk [vmem:[%s1623] ss:$8 sm:$0x0] %vm382, %v1621
        %v1626 = vrot.slane %v1466, 1
        %v1627 = vrot.slane %v1467, 1
        %v1630 = vmax.f32 %v1466, %v1626
        %v1631 = vmax.f32 %v1467, %v1627
        %v1632 = vmax.f32 %v1630, %v1598
        %v1633 = vmax.f32 %v1631, %v1599
        %v1636 = vcombine.low %v1632, %v1633
        %v1638 = vunpack.c.l.s4 1966171168
        %v1639 = vunpack.c.0.s8 %v1638
        %v1640 = vlaneseq
        %v1641 = vshrl.u32 %v1640, 7
        %v1642 = vsub.s32 %v1639, %v1641
        %v1643 = vrot.slane %v1636, %v1642
        %v1644 = vcombine.high %v1643, %v1643
        %v1646 = vunpack.c.l.s4 1966171168
        %v1647 = vunpack.c.0.s8 %v1646
        %v1648 = vlaneseq
        %v1649 = vshrl.u32 %v1648, 7
        %v1650 = vsub.s32 %v1647, %v1649
        %v1651 = vrot.slane %v1644, %v1650
        %s1653 = scalar_lea.vmem %s1496, 7 [#allocation3]
        %1654 = vst.msk [vmem:[%s1653] ss:$8 sm:$0x3] %vm382, %v1651
        %1655 = vst.msk [vmem:[%s1653] ss:$8 sm:$0x0] %vm382, %v1651
        %v1656 = vcombine.high %v1632, %v1633
        %v1658 = vunpack.c.l.s4 1966171168
        %v1659 = vunpack.c.0.s8 %v1658
        %v1660 = vlaneseq
        %v1661 = vshrl.u32 %v1660, 7
        %v1662 = vsub.s32 %v1659, %v1661
        %v1663 = vrot.slane %v1656, %v1662
        %v1665 = vunpack.c.l.s4 1966171168
        %v1666 = vunpack.c.0.s8 %v1665
        %v1667 = vlaneseq
        %v1668 = vshrl.u32 %v1667, 7
        %v1669 = vsub.s32 %v1666, %v1668
        %v1670 = vrot.slane %v1663, %v1669
        %s1672 = scalar_lea.vmem %s1496, 16 [#allocation3]
        %1673 = vst.msk [vmem:[%s1672] ss:$8 sm:$0x3] %vm382, %v1670
        %1674 = vst.msk [vmem:[%s1672] ss:$8 sm:$0x0] %vm382, %v1670
        %v1677 = vrot.slane %v1468, 1
        %v1678 = vrot.slane %v1469, 1
        %v1681 = vmax.f32 %v1466, %v1677
        %v1682 = vmax.f32 %v1467, %v1678
        %v1683 = vrot.slane %v1468, 2
        %v1684 = vrot.slane %v1469, 2
        %v1687 = vmax.f32 %v1681, %v1683
        %v1688 = vmax.f32 %v1682, %v1684
        %v1691 = vcombine.high %v1687, %v1688
        %v1693 = vunpack.c.l.s4 1966171168
        %v1694 = vunpack.c.0.s8 %v1693
        %v1695 = vlaneseq
        %v1696 = vshrl.u32 %v1695, 7
        %v1697 = vsub.s32 %v1694, %v1696
        %v1698 = vrot.slane %v1691, %v1697
        %v1699 = vcombine.high %v1698, %v1698
        %v1701 = vunpack.c.l.s4 1966171168
        %v1702 = vunpack.c.0.s8 %v1701
        %v1703 = vlaneseq
        %v1704 = vshrl.u32 %v1703, 7
        %v1705 = vsub.s32 %v1702, %v1704
        %v1706 = vrot.slane %v1699, %v1705
        %v1707 = vcombine.high %v1706, %v1706
        %s1709 = scalar_lea.vmem %s1496, 17 [#allocation3]
        %1710 = vst.msk [vmem:[%s1709] ss:$8 sm:$0x3] %vm382, %v1707
        %1711 = vst.msk [vmem:[%s1709] ss:$8 sm:$0x0] %vm382, %v1707
        %v1712 = vmax.f32 %v1468, %v1677
        %v1713 = vmax.f32 %v1469, %v1678
        %v1714 = vmax.f32 %v1712, %v1683
        %v1715 = vmax.f32 %v1713, %v1684
        %v1718 = vcombine.low %v1714, %v1715
        %v1720 = vunpack.c.l.s4 1966171168
        %v1721 = vunpack.c.0.s8 %v1720
        %v1722 = vlaneseq
        %v1723 = vshrl.u32 %v1722, 7
        %v1724 = vsub.s32 %v1721, %v1723
        %v1725 = vrot.slane %v1718, %v1724
        %v1727 = vunpack.c.l.s4 1966171168
        %v1728 = vunpack.c.0.s8 %v1727
        %v1729 = vlaneseq
        %v1730 = vshrl.u32 %v1729, 7
        %v1731 = vsub.s32 %v1728, %v1730
        %v1732 = vrot.slane %v1725, %v1731
        %v1733 = vcombine.high %v1732, %v1732
        %s1735 = scalar_lea.vmem %s1496, 18 [#allocation3]
        %1736 = vst.msk [vmem:[%s1735] ss:$8 sm:$0x3] %vm382, %v1733
        %1737 = vst.msk [vmem:[%s1735] ss:$8 sm:$0x0] %vm382, %v1733
        %v1738 = vcombine.high %v1714, %v1715
        %v1740 = vunpack.c.l.s4 1966171168
        %v1741 = vunpack.c.0.s8 %v1740
        %v1742 = vlaneseq
        %v1743 = vshrl.u32 %v1742, 7
        %v1744 = vsub.s32 %v1741, %v1743
        %v1745 = vrot.slane %v1738, %v1744
        %v1746 = vcombine.high %v1745, %v1745
        %v1748 = vunpack.c.l.s4 1966171168
        %v1749 = vunpack.c.0.s8 %v1748
        %v1750 = vlaneseq
        %v1751 = vshrl.u32 %v1750, 7
        %v1752 = vsub.s32 %v1749, %v1751
        %v1753 = vrot.slane %v1746, %v1752
        %s1755 = scalar_lea.vmem %s1496, 19 [#allocation3]
        %1756 = vst.msk [vmem:[%s1755] ss:$8 sm:$0x3] %vm382, %v1753
        %1757 = vst.msk [vmem:[%s1755] ss:$8 sm:$0x0] %vm382, %v1753
        %s1758 = scalar_lea.vmem [#allocation2], 80
        %v1759 = vld [vmem:[%s1758] sm:$0xff]
        %v1760 = vld [vmem:[%s1758 + $0x8] sm:$0xff]
        %v1761 = vld [vmem:[%s1758 + $0x10] sm:$0xff]
        %v1762 = vld [vmem:[%s1758 + $0x18] sm:$0xff]
        %v1763 = vld [vmem:[%s1758 + $0x20] sm:$0x3]
        %v1764 = vld [vmem:[%s1] sm:$0xff]
        %v1765 = vld [vmem:[%s1 + $0x8] sm:$0xff]
        %v1766 = vld [vmem:[%s1 + $0x10] sm:$0xff]
        %v1767 = vld [vmem:[%s1 + $0x18] sm:$0xff]
        %v1768 = vld [vmem:[%s1 + $0x20] sm:$0xff]
        %v1769 = vld [vmem:[%s1 + $0x28] sm:$0xff]
        %v1770 = vld [vmem:[%s1 + $0x30] sm:$0x11]
        %v1771 = vpack.c.bf16 %v1760, %v1759
        %v1772 = vpack.c.bf16 %v1762, %v1761
        %v1773 = vld [vmem:[%s422] sm:$0xff]
        %v1774 = vld [vmem:[%s422 + $0x8] sm:$0xff]
        %v1775 = vld [vmem:[%s422 + $0x10] sm:$0xff]
        %v1776 = vld [vmem:[%s422 + $0x18] sm:$0xff]
        %v1777 = vld [vmem:[%s422 + $0x20] sm:$0xff]
        %v1778 = vld [vmem:[%s422 + $0x28] sm:$0xff]
        %v1779 = vld [vmem:[%s422 + $0x30] sm:$0x11]
        %v1780 = vpack.c.bf16 %v1763, %v1763
        %v1782 = vshrl.u32 %v1771, 16
        %v1784 = vshll.u32 %v1771, 16
        %v1786 = vrot.slane %v1784, 1
        %v1787 = vor.u32 %v1782, %v1786
        %v1789 = vshll.u32 %v1772, 16
        %v1791 = vrot.slane %v1789, 1
        %v1792 = vsel %vm431, %v1787, %v1791
        %v1793 = vshrl.u32 %v1772, 16
        %v1795 = vor.u32 %v1793, %v1791
        %v1797 = vshll.u32 %v1780, 16
        %v1799 = vrot.slane %v1797, 1
        %v1800 = vsel %vm431, %v1795, %v1799
        %v1808 = vunpack.c.l.b16 %v1773
        %v1809 = vunpack.c.h.b16 %v1773
        %v1810 = vunpack.c.l.b16 %v1774
        %v1811 = vunpack.c.h.b16 %v1774
        %v1812 = vunpack.c.l.b16 %v1775
        %v1813 = vunpack.c.h.b16 %v1775
        %v1814 = vunpack.c.l.b16 %v1776
        %v1815 = vunpack.c.h.b16 %v1776
        %v1816 = vunpack.c.l.b16 %v1777
        %v1817 = vunpack.c.h.b16 %v1777
        %v1818 = vunpack.c.l.b16 %v1778
        %v1819 = vunpack.c.h.b16 %v1778
        %v1820 = vunpack.c.l.b16 %v1779
        %v1821 = vunpack.c.h.b16 %v1779
        %v1822 = vpack.c.b16 %v1810, %v1808
        %v1823 = vpack.c.b16 %v1811, %v1809
        %v1824 = vpack.c.b16 %v1814, %v1812
        %v1825 = vpack.c.b16 %v1815, %v1813
        %v1826 = vpack.c.b16 %v1818, %v1816
        %v1827 = vpack.c.b16 %v1819, %v1817
        %v1828 = vpack.c.b16 %v1820, %v1820
        %v1829 = vpack.c.b16 %v1821, %v1821
        %v1837 = vsel %vm362, %v1792, 0
        %v1840 = vsel %vm362, %v1800, 0
        %v1843 = vsel %vm493, %v1828, 0
        %v1846 = vsel %vm493, %v1829, 0
        %1848 = vmatprep.subr.bf16.mxu0 0
        %1849 = vmatpush1.bf16.msra.mxu0 0
        %1850 = vmatprep.subr.bf16.mxu0 0
        %1851 = vmatpush1.bf16.msra.mxu0 0
        %1852 = vmatprep.subr.bf16.mxu0 0
        %1853 = vmatpush1.bf16.msra.mxu0 0
        %1854 = vmatprep.subr.bf16.mxu0 0
        %1855 = vmatpush1.bf16.msra.mxu0 0
        %1856 = vmatprep.subr.bf16.mxu0 %v1846
        %1857 = vmatpush1.bf16.msra.mxu0 %v1843
        %1858 = vmatprep.subr.bf16.mxu0 %v1827
        %1859 = vmatpush1.bf16.msra.mxu0 %v1826
        %1860 = vmatprep.subr.bf16.mxu0 %v1825
        %1861 = vmatpush1.bf16.msra.mxu0 %v1824
        %1862 = vmatprep.subr.bf16.mxu0 %v1823
        %1863 = vmatpush1.bf16.msra.mxu0 %v1822
        %1864 = vmatprep.subr.bf16.mxu0 0
        %1865 = vmatpush2.bf16.msra.mxu0 0
        %1866 = vmatprep.subr.bf16.mxu0 0
        %1867 = vmatpush2.bf16.msra.mxu0 0
        %1868 = vmatprep.subr.bf16.mxu0 0
        %1869 = vmatpush2.bf16.msra.mxu0 0
        %1870 = vmatprep.subr.bf16.mxu0 0
        %1871 = vmatpush2.bf16.msra.mxu0 0
        %1872 = vmatprep.subr.bf16.mxu0 0
        %1873 = vmatpush2.bf16.msra.mxu0 0
        %1874 = vmatprep.subr.bf16.mxu0 0
        %1875 = vmatpush2.bf16.msra.mxu0 0
        %1876 = vmatprep.subr.bf16.mxu0 0
        %1877 = vmatpush2.bf16.msra.mxu0 0
        %1878 = vmatprep.subr.bf16.mxu0 0
        %1879 = vmatpush2.bf16.msra.mxu0 0
        %1880 = vmatprep.mubr.bf16.mxu0 0
        %1881 = vmatmul.mubr.bf16.gmra.mxu0 %v1837
        %v1882 = vpop.f32.mrf.mxu0
        %v1883 = vadd.f32 0.0, %v1882
        %v1884 = vpop.f32.mrf.mxu0
        %v1885 = vadd.f32 0.0, %v1884
        %v1886 = vpop.f32.mrf.mxu0
        %v1887 = vadd.f32 0.0, %v1886
        %v1888 = vpop.f32.mrf.mxu0
        %v1889 = vadd.f32 0.0, %v1888
        %1890 = vmatprep.mubr.bf16.mxu0 0
        %1891 = vmatmul.mubr.bf16.gmra.mxu0 %v1840
        %v1892 = vpop.f32.mrf.mxu0
        %v1893 = vadd.f32 0.0, %v1892
        %v1894 = vpop.f32.mrf.mxu0
        %v1895 = vadd.f32 0.0, %v1894
        %v1896 = vpop.f32.mrf.mxu0
        %v1897 = vadd.f32 0.0, %v1896
        %v1898 = vpop.f32.mrf.mxu0
        %v1899 = vadd.f32 0.0, %v1898
        %1900 = vdwg.mxu0
        %v1908 = vunpack.c.l.b16 %v1764
        %v1909 = vunpack.c.h.b16 %v1764
        %v1910 = vunpack.c.l.b16 %v1765
        %v1911 = vunpack.c.h.b16 %v1765
        %v1912 = vunpack.c.l.b16 %v1766
        %v1913 = vunpack.c.h.b16 %v1766
        %v1914 = vunpack.c.l.b16 %v1767
        %v1915 = vunpack.c.h.b16 %v1767
        %v1916 = vunpack.c.l.b16 %v1768
        %v1917 = vunpack.c.h.b16 %v1768
        %v1918 = vunpack.c.l.b16 %v1769
        %v1919 = vunpack.c.h.b16 %v1769
        %v1920 = vunpack.c.l.b16 %v1770
        %v1921 = vunpack.c.h.b16 %v1770
        %v1922 = vpack.c.b16 %v1910, %v1908
        %v1923 = vpack.c.b16 %v1911, %v1909
        %v1924 = vpack.c.b16 %v1914, %v1912
        %v1925 = vpack.c.b16 %v1915, %v1913
        %v1926 = vpack.c.b16 %v1918, %v1916
        %v1927 = vpack.c.b16 %v1919, %v1917
        %v1928 = vpack.c.b16 %v1920, %v1920
        %v1929 = vpack.c.b16 %v1921, %v1921
        %v1936 = vsel %vm362, %v1771, 0
        %v1938 = vsel %vm362, %v1772, 0
        %v1941 = vsel %vm493, %v1928, 0
        %v1944 = vsel %vm493, %v1929, 0
        %1946 = vmatprep.subr.bf16.mxu0 0
        %1947 = vmatpush1.bf16.msra.mxu0 0
        %1948 = vmatprep.subr.bf16.mxu0 0
        %1949 = vmatpush1.bf16.msra.mxu0 0
        %1950 = vmatprep.subr.bf16.mxu0 0
        %1951 = vmatpush1.bf16.msra.mxu0 0
        %1952 = vmatprep.subr.bf16.mxu0 0
        %1953 = vmatpush1.bf16.msra.mxu0 0
        %1954 = vmatprep.subr.bf16.mxu0 %v1944
        %1955 = vmatpush1.bf16.msra.mxu0 %v1941
        %1956 = vmatprep.subr.bf16.mxu0 %v1927
        %1957 = vmatpush1.bf16.msra.mxu0 %v1926
        %1958 = vmatprep.subr.bf16.mxu0 %v1925
        %1959 = vmatpush1.bf16.msra.mxu0 %v1924
        %1960 = vmatprep.subr.bf16.mxu0 %v1923
        %1961 = vmatpush1.bf16.msra.mxu0 %v1922
        %1962 = vmatprep.subr.bf16.mxu0 0
        %1963 = vmatpush2.bf16.msra.mxu0 0
        %1964 = vmatprep.subr.bf16.mxu0 0
        %1965 = vmatpush2.bf16.msra.mxu0 0
        %1966 = vmatprep.subr.bf16.mxu0 0
        %1967 = vmatpush2.bf16.msra.mxu0 0
        %1968 = vmatprep.subr.bf16.mxu0 0
        %1969 = vmatpush2.bf16.msra.mxu0 0
        %1970 = vmatprep.subr.bf16.mxu0 0
        %1971 = vmatpush2.bf16.msra.mxu0 0
        %1972 = vmatprep.subr.bf16.mxu0 0
        %1973 = vmatpush2.bf16.msra.mxu0 0
        %1974 = vmatprep.subr.bf16.mxu0 0
        %1975 = vmatpush2.bf16.msra.mxu0 0
        %1976 = vmatprep.subr.bf16.mxu0 0
        %1977 = vmatpush2.bf16.msra.mxu0 0
        %1978 = vmatprep.mubr.bf16.mxu0 0
        %1979 = vmatmul.mubr.bf16.gmra.mxu0 %v1936
        %v1980 = vpop.f32.mrf.mxu0
        %v1981 = vadd.f32 %v1883, %v1980
        %v1982 = vpop.f32.mrf.mxu0
        %v1983 = vadd.f32 %v1885, %v1982
        %v1984 = vpop.f32.mrf.mxu0
        %v1985 = vadd.f32 %v1887, %v1984
        %v1986 = vpop.f32.mrf.mxu0
        %v1987 = vadd.f32 %v1889, %v1986
        %1988 = vmatprep.mubr.bf16.mxu0 0
        %1989 = vmatmul.mubr.bf16.gmra.mxu0 %v1938
        %v1990 = vpop.f32.mrf.mxu0
        %v1991 = vadd.f32 %v1893, %v1990
        %v1992 = vpop.f32.mrf.mxu0
        %v1993 = vadd.f32 %v1895, %v1992
        %v1994 = vpop.f32.mrf.mxu0
        %v1995 = vadd.f32 %v1897, %v1994
        %v1996 = vpop.f32.mrf.mxu0
        %v1997 = vadd.f32 %v1899, %v1996
        %1998 = vdwg.mxu0
        %v1999 = vld [vmem:[%s651] sm:$0xff]
        %v2000 = vld [vmem:[%s651 + $0x8] sm:$0xff]
        %v2001 = vld [vmem:[%s651 + $0x10] sm:$0xff]
        %v2002 = vld [vmem:[%s651 + $0x18] sm:$0xff]
        %v2003 = vld [vmem:[%s651 + $0x20] sm:$0xff]
        %v2004 = vld [vmem:[%s651 + $0x28] sm:$0xff]
        %v2005 = vld [vmem:[%s651 + $0x30] sm:$0x11]
        %v2009 = vrot.slane %v1771, 1
        %v2010 = vrot.slane %v1772, 1
        %v2011 = vsel %vm662, %v2009, %v2010
        %v2012 = vrot.slane %v1780, 1
        %v2013 = vsel %vm662, %v2010, %v2012
        %v2021 = vunpack.c.l.b16 %v1999
        %v2022 = vunpack.c.h.b16 %v1999
        %v2023 = vunpack.c.l.b16 %v2000
        %v2024 = vunpack.c.h.b16 %v2000
        %v2025 = vunpack.c.l.b16 %v2001
        %v2026 = vunpack.c.h.b16 %v2001
        %v2027 = vunpack.c.l.b16 %v2002
        %v2028 = vunpack.c.h.b16 %v2002
        %v2029 = vunpack.c.l.b16 %v2003
        %v2030 = vunpack.c.h.b16 %v2003
        %v2031 = vunpack.c.l.b16 %v2004
        %v2032 = vunpack.c.h.b16 %v2004
        %v2033 = vunpack.c.l.b16 %v2005
        %v2034 = vunpack.c.h.b16 %v2005
        %v2035 = vpack.c.b16 %v2023, %v2021
        %v2036 = vpack.c.b16 %v2024, %v2022
        %v2037 = vpack.c.b16 %v2027, %v2025
        %v2038 = vpack.c.b16 %v2028, %v2026
        %v2039 = vpack.c.b16 %v2031, %v2029
        %v2040 = vpack.c.b16 %v2032, %v2030
        %v2041 = vpack.c.b16 %v2033, %v2033
        %v2042 = vpack.c.b16 %v2034, %v2034
        %v2050 = vsel %vm362, %v2011, 0
        %v2053 = vsel %vm362, %v2013, 0
        %v2056 = vsel %vm493, %v2041, 0
        %v2059 = vsel %vm493, %v2042, 0
        %2061 = vmatprep.subr.bf16.mxu0 0
        %2062 = vmatpush1.bf16.msra.mxu0 0
        %2063 = vmatprep.subr.bf16.mxu0 0
        %2064 = vmatpush1.bf16.msra.mxu0 0
        %2065 = vmatprep.subr.bf16.mxu0 0
        %2066 = vmatpush1.bf16.msra.mxu0 0
        %2067 = vmatprep.subr.bf16.mxu0 0
        %2068 = vmatpush1.bf16.msra.mxu0 0
        %2069 = vmatprep.subr.bf16.mxu0 %v2059
        %2070 = vmatpush1.bf16.msra.mxu0 %v2056
        %2071 = vmatprep.subr.bf16.mxu0 %v2040
        %2072 = vmatpush1.bf16.msra.mxu0 %v2039
        %2073 = vmatprep.subr.bf16.mxu0 %v2038
        %2074 = vmatpush1.bf16.msra.mxu0 %v2037
        %2075 = vmatprep.subr.bf16.mxu0 %v2036
        %2076 = vmatpush1.bf16.msra.mxu0 %v2035
        %2077 = vmatprep.subr.bf16.mxu0 0
        %2078 = vmatpush2.bf16.msra.mxu0 0
        %2079 = vmatprep.subr.bf16.mxu0 0
        %2080 = vmatpush2.bf16.msra.mxu0 0
        %2081 = vmatprep.subr.bf16.mxu0 0
        %2082 = vmatpush2.bf16.msra.mxu0 0
        %2083 = vmatprep.subr.bf16.mxu0 0
        %2084 = vmatpush2.bf16.msra.mxu0 0
        %2085 = vmatprep.subr.bf16.mxu0 0
        %2086 = vmatpush2.bf16.msra.mxu0 0
        %2087 = vmatprep.subr.bf16.mxu0 0
        %2088 = vmatpush2.bf16.msra.mxu0 0
        %2089 = vmatprep.subr.bf16.mxu0 0
        %2090 = vmatpush2.bf16.msra.mxu0 0
        %2091 = vmatprep.subr.bf16.mxu0 0
        %2092 = vmatpush2.bf16.msra.mxu0 0
        %2093 = vmatprep.mubr.bf16.mxu0 0
        %2094 = vmatmul.mubr.bf16.gmra.mxu0 %v2050
        %v2095 = vpop.f32.mrf.mxu0
        %v2096 = vadd.f32 0.0, %v2095
        %v2097 = vpop.f32.mrf.mxu0
        %v2098 = vadd.f32 0.0, %v2097
        %v2099 = vpop.f32.mrf.mxu0
        %v2100 = vadd.f32 0.0, %v2099
        %v2101 = vpop.f32.mrf.mxu0
        %v2102 = vadd.f32 0.0, %v2101
        %2103 = vmatprep.mubr.bf16.mxu0 0
        %2104 = vmatmul.mubr.bf16.gmra.mxu0 %v2053
        %v2105 = vpop.f32.mrf.mxu0
        %v2106 = vadd.f32 0.0, %v2105
        %v2107 = vpop.f32.mrf.mxu0
        %v2108 = vadd.f32 0.0, %v2107
        %v2109 = vpop.f32.mrf.mxu0
        %v2110 = vadd.f32 0.0, %v2109
        %v2111 = vpop.f32.mrf.mxu0
        %v2112 = vadd.f32 0.0, %v2111
        %2113 = vdwg.mxu0
        %v2114 = vadd.f32 %v1981, %v2096
        %v2115 = vadd.f32 %v1983, %v2098
        %v2116 = vadd.f32 %v1985, %v2100
        %v2117 = vadd.f32 %v1987, %v2102
        %v2118 = vadd.f32 %v1991, %v2106
        %v2119 = vadd.f32 %v1993, %v2108
        %v2120 = vadd.f32 %v1995, %v2110
        %v2121 = vadd.f32 %v1997, %v2112
        %v2122 = vadd.f32 %v2114, %v780
        %v2123 = vadd.f32 %v2115, %v784
        %v2124 = vadd.f32 %v2116, %v780
        %v2125 = vadd.f32 %v2117, %v784
        %v2126 = vadd.f32 %v2118, %v780
        %v2127 = vadd.f32 %v2119, %v784
        %v2128 = vadd.f32 %v2120, %v780
        %v2129 = vadd.f32 %v2121, %v784
        %v2130 = vmax.f32 %v2122, 0.0
        %v2131 = vmax.f32 %v2123, 0.0
        %v2132 = vmax.f32 %v2124, 0.0
        %v2133 = vmax.f32 %v2125, 0.0
        %v2134 = vmax.f32 %v2126, 0.0
        %v2135 = vmax.f32 %v2127, 0.0
        %v2136 = vmax.f32 %v2128, 0.0
        %v2137 = vmax.f32 %v2129, 0.0
        %v2140 = vrot.slane %v2130, 1
        %v2141 = vrot.slane %v2131, 1
        %v2144 = vmax.f32 %v2130, %v2140
        %v2145 = vmax.f32 %v2131, %v2141
        %v2148 = vcombine.low %v2144, %v2145
        %v2150 = vunpack.c.l.s4 1966171168
        %v2151 = vunpack.c.0.s8 %v2150
        %v2152 = vlaneseq
        %v2153 = vshrl.u32 %v2152, 7
        %v2154 = vsub.s32 %v2151, %v2153
        %v2155 = vrot.slane %v2148, %v2154
        %v2157 = vunpack.c.l.s4 1966171168
        %v2158 = vunpack.c.0.s8 %v2157
        %v2159 = vlaneseq
        %v2160 = vshrl.u32 %v2159, 7
        %v2161 = vsub.s32 %v2158, %v2160
        %v2162 = vrot.slane %v2155, %v2161
        %s2164 = scalar_lea.vmem [#allocation3], 64
        %s2165 = scalar_lea.vmem %s2164, 1 [#allocation3]
        %2166 = vst.msk [vmem:[%s2165] ss:$8 sm:$0x3] %vm382, %v2162
        %2167 = vst.msk [vmem:[%s2165] ss:$8 sm:$0x0] %vm382, %v2162
        %v2168 = vrot.slane %v2130, 2
        %v2169 = vrot.slane %v2131, 2
        %v2172 = vmax.f32 %v2144, %v2168
        %v2173 = vmax.f32 %v2145, %v2169
        %v2176 = vcombine.low %v2172, %v2173
        %v2178 = vunpack.c.l.s4 1966171168
        %v2179 = vunpack.c.0.s8 %v2178
        %v2180 = vlaneseq
        %v2181 = vshrl.u32 %v2180, 7
        %v2182 = vsub.s32 %v2179, %v2181
        %v2183 = vrot.slane %v2176, %v2182
        %v2185 = vunpack.c.l.s4 1966171168
        %v2186 = vunpack.c.0.s8 %v2185
        %v2187 = vlaneseq
        %v2188 = vshrl.u32 %v2187, 7
        %v2189 = vsub.s32 %v2186, %v2188
        %v2190 = vrot.slane %v2183, %v2189
        %v2191 = vcombine.high %v2190, %v2190
        %s2193 = scalar_lea.vmem %s2164, 2 [#allocation3]
        %2194 = vst.msk [vmem:[%s2193] ss:$8 sm:$0x3] %vm382, %v2191
        %2195 = vst.msk [vmem:[%s2193] ss:$8 sm:$0x0] %vm382, %v2191
        %v2196 = vcombine.high %v2172, %v2173
        %v2198 = vunpack.c.l.s4 1966171168
        %v2199 = vunpack.c.0.s8 %v2198
        %v2200 = vlaneseq
        %v2201 = vshrl.u32 %v2200, 7
        %v2202 = vsub.s32 %v2199, %v2201
        %v2203 = vrot.slane %v2196, %v2202
        %v2204 = vcombine.high %v2203, %v2203
        %v2206 = vunpack.c.l.s4 1966171168
        %v2207 = vunpack.c.0.s8 %v2206
        %v2208 = vlaneseq
        %v2209 = vshrl.u32 %v2208, 7
        %v2210 = vsub.s32 %v2207, %v2209
        %v2211 = vrot.slane %v2204, %v2210
        %s2213 = scalar_lea.vmem %s2164, 3 [#allocation3]
        %2214 = vst.msk [vmem:[%s2213] ss:$8 sm:$0x3] %vm382, %v2211
        %2215 = vst.msk [vmem:[%s2213] ss:$8 sm:$0x0] %vm382, %v2211
        %v2218 = vrot.slane %v2132, 1
        %v2219 = vrot.slane %v2133, 1
        %v2222 = vmax.f32 %v2132, %v2218
        %v2223 = vmax.f32 %v2133, %v2219
        %v2224 = vrot.slane %v2132, 2
        %v2225 = vrot.slane %v2133, 2
        %v2228 = vmax.f32 %v2222, %v2224
        %v2229 = vmax.f32 %v2223, %v2225
        %v2232 = vcombine.low %v2228, %v2229
        %v2234 = vunpack.c.l.s4 1966171168
        %v2235 = vunpack.c.0.s8 %v2234
        %v2236 = vlaneseq
        %v2237 = vshrl.u32 %v2236, 7
        %v2238 = vsub.s32 %v2235, %v2237
        %v2239 = vrot.slane %v2232, %v2238
        %v2241 = vunpack.c.l.s4 1966171168
        %v2242 = vunpack.c.0.s8 %v2241
        %v2243 = vlaneseq
        %v2244 = vshrl.u32 %v2243, 7
        %v2245 = vsub.s32 %v2242, %v2244
        %v2246 = vrot.slane %v2239, %v2245
        %s2248 = scalar_lea.vmem %s2164, 4 [#allocation3]
        %2249 = vst.msk [vmem:[%s2248] ss:$8 sm:$0x3] %vm382, %v2246
        %2250 = vst.msk [vmem:[%s2248] ss:$8 sm:$0x0] %vm382, %v2246
        %v2251 = vcombine.high %v2239, %v2239
        %v2253 = vunpack.c.l.s4 1966171168
        %v2254 = vunpack.c.0.s8 %v2253
        %v2255 = vlaneseq
        %v2256 = vshrl.u32 %v2255, 7
        %v2257 = vsub.s32 %v2254, %v2256
        %v2258 = vrot.slane %v2251, %v2257
        %v2259 = vcombine.high %v2258, %v2258
        %s2261 = scalar_lea.vmem %s2164, 5 [#allocation3]
        %2262 = vst.msk [vmem:[%s2261] ss:$8 sm:$0x3] %vm382, %v2259
        %2263 = vst.msk [vmem:[%s2261] ss:$8 sm:$0x0] %vm382, %v2259
        %v2266 = vrot.slane %v2134, 2
        %v2267 = vrot.slane %v2135, 2
        %v2270 = vmax.f32 %v2222, %v2266
        %v2271 = vmax.f32 %v2223, %v2267
        %v2274 = vcombine.high %v2270, %v2271
        %v2276 = vunpack.c.l.s4 1966171168
        %v2277 = vunpack.c.0.s8 %v2276
        %v2278 = vlaneseq
        %v2279 = vshrl.u32 %v2278, 7
        %v2280 = vsub.s32 %v2277, %v2279
        %v2281 = vrot.slane %v2274, %v2280
        %v2283 = vunpack.c.l.s4 1966171168
        %v2284 = vunpack.c.0.s8 %v2283
        %v2285 = vlaneseq
        %v2286 = vshrl.u32 %v2285, 7
        %v2287 = vsub.s32 %v2284, %v2286
        %v2288 = vrot.slane %v2281, %v2287
        %v2289 = vcombine.high %v2288, %v2288
        %s2291 = scalar_lea.vmem %s2164, 6 [#allocation3]
        %2292 = vst.msk [vmem:[%s2291] ss:$8 sm:$0x3] %vm382, %v2289
        %2293 = vst.msk [vmem:[%s2291] ss:$8 sm:$0x0] %vm382, %v2289
        %v2294 = vrot.slane %v2134, 1
        %v2295 = vrot.slane %v2135, 1
        %v2298 = vmax.f32 %v2134, %v2294
        %v2299 = vmax.f32 %v2135, %v2295
        %v2300 = vmax.f32 %v2298, %v2266
        %v2301 = vmax.f32 %v2299, %v2267
        %v2304 = vcombine.low %v2300, %v2301
        %v2306 = vunpack.c.l.s4 1966171168
        %v2307 = vunpack.c.0.s8 %v2306
        %v2308 = vlaneseq
        %v2309 = vshrl.u32 %v2308, 7
        %v2310 = vsub.s32 %v2307, %v2309
        %v2311 = vrot.slane %v2304, %v2310
        %v2312 = vcombine.high %v2311, %v2311
        %v2314 = vunpack.c.l.s4 1966171168
        %v2315 = vunpack.c.0.s8 %v2314
        %v2316 = vlaneseq
        %v2317 = vshrl.u32 %v2316, 7
        %v2318 = vsub.s32 %v2315, %v2317
        %v2319 = vrot.slane %v2312, %v2318
        %s2321 = scalar_lea.vmem %s2164, 7 [#allocation3]
        %2322 = vst.msk [vmem:[%s2321] ss:$8 sm:$0x3] %vm382, %v2319
        %2323 = vst.msk [vmem:[%s2321] ss:$8 sm:$0x0] %vm382, %v2319
        %v2324 = vcombine.high %v2300, %v2301
        %v2326 = vunpack.c.l.s4 1966171168
        %v2327 = vunpack.c.0.s8 %v2326
        %v2328 = vlaneseq
        %v2329 = vshrl.u32 %v2328, 7
        %v2330 = vsub.s32 %v2327, %v2329
        %v2331 = vrot.slane %v2324, %v2330
        %v2333 = vunpack.c.l.s4 1966171168
        %v2334 = vunpack.c.0.s8 %v2333
        %v2335 = vlaneseq
        %v2336 = vshrl.u32 %v2335, 7
        %v2337 = vsub.s32 %v2334, %v2336
        %v2338 = vrot.slane %v2331, %v2337
        %s2340 = scalar_lea.vmem %s2164, 16 [#allocation3]
        %2341 = vst.msk [vmem:[%s2340] ss:$8 sm:$0x3] %vm382, %v2338
        %2342 = vst.msk [vmem:[%s2340] ss:$8 sm:$0x0] %vm382, %v2338
        %v2345 = vrot.slane %v2136, 1
        %v2346 = vrot.slane %v2137, 1
        %v2349 = vmax.f32 %v2134, %v2345
        %v2350 = vmax.f32 %v2135, %v2346
        %v2351 = vrot.slane %v2136, 2
        %v2352 = vrot.slane %v2137, 2
        %v2355 = vmax.f32 %v2349, %v2351
        %v2356 = vmax.f32 %v2350, %v2352
        %v2359 = vcombine.high %v2355, %v2356
        %v2361 = vunpack.c.l.s4 1966171168
        %v2362 = vunpack.c.0.s8 %v2361
        %v2363 = vlaneseq
        %v2364 = vshrl.u32 %v2363, 7
        %v2365 = vsub.s32 %v2362, %v2364
        %v2366 = vrot.slane %v2359, %v2365
        %v2367 = vcombine.high %v2366, %v2366
        %v2369 = vunpack.c.l.s4 1966171168
        %v2370 = vunpack.c.0.s8 %v2369
        %v2371 = vlaneseq
        %v2372 = vshrl.u32 %v2371, 7
        %v2373 = vsub.s32 %v2370, %v2372
        %v2374 = vrot.slane %v2367, %v2373
        %v2375 = vcombine.high %v2374, %v2374
        %s2377 = scalar_lea.vmem %s2164, 17 [#allocation3]
        %2378 = vst.msk [vmem:[%s2377] ss:$8 sm:$0x3] %vm382, %v2375
        %2379 = vst.msk [vmem:[%s2377] ss:$8 sm:$0x0] %vm382, %v2375
        %v2380 = vmax.f32 %v2136, %v2345
        %v2381 = vmax.f32 %v2137, %v2346
        %v2382 = vmax.f32 %v2380, %v2351
        %v2383 = vmax.f32 %v2381, %v2352
        %v2386 = vcombine.low %v2382, %v2383
        %v2388 = vunpack.c.l.s4 1966171168
        %v2389 = vunpack.c.0.s8 %v2388
        %v2390 = vlaneseq
        %v2391 = vshrl.u32 %v2390, 7
        %v2392 = vsub.s32 %v2389, %v2391
        %v2393 = vrot.slane %v2386, %v2392
        %v2395 = vunpack.c.l.s4 1966171168
        %v2396 = vunpack.c.0.s8 %v2395
        %v2397 = vlaneseq
        %v2398 = vshrl.u32 %v2397, 7
        %v2399 = vsub.s32 %v2396, %v2398
        %v2400 = vrot.slane %v2393, %v2399
        %v2401 = vcombine.high %v2400, %v2400
        %s2403 = scalar_lea.vmem %s2164, 18 [#allocation3]
        %2404 = vst.msk [vmem:[%s2403] ss:$8 sm:$0x3] %vm382, %v2401
        %2405 = vst.msk [vmem:[%s2403] ss:$8 sm:$0x0] %vm382, %v2401
        %v2406 = vcombine.high %v2382, %v2383
        %v2408 = vunpack.c.l.s4 1966171168
        %v2409 = vunpack.c.0.s8 %v2408
        %v2410 = vlaneseq
        %v2411 = vshrl.u32 %v2410, 7
        %v2412 = vsub.s32 %v2409, %v2411
        %v2413 = vrot.slane %v2406, %v2412
        %v2414 = vcombine.high %v2413, %v2413
        %v2416 = vunpack.c.l.s4 1966171168
        %v2417 = vunpack.c.0.s8 %v2416
        %v2418 = vlaneseq
        %v2419 = vshrl.u32 %v2418, 7
        %v2420 = vsub.s32 %v2417, %v2419
        %v2421 = vrot.slane %v2414, %v2420
        %s2423 = scalar_lea.vmem %s2164, 19 [#allocation3]
        %2424 = vst.msk [vmem:[%s2423] ss:$8 sm:$0x3] %vm382, %v2421
        %2425 = vst.msk [vmem:[%s2423] ss:$8 sm:$0x0] %vm382, %v2421
        %s2426 = scalar_lea.vmem [#allocation2], 120
        %v2427 = vld [vmem:[%s2426] sm:$0xff]
        %v2428 = vld [vmem:[%s2426 + $0x8] sm:$0xff]
        %v2429 = vld [vmem:[%s2426 + $0x10] sm:$0xff]
        %v2430 = vld [vmem:[%s2426 + $0x18] sm:$0xff]
        %v2431 = vld [vmem:[%s2426 + $0x20] sm:$0x3]
        %v2432 = vld [vmem:[%s1] sm:$0xff]
        %v2433 = vld [vmem:[%s1 + $0x8] sm:$0xff]
        %v2434 = vld [vmem:[%s1 + $0x10] sm:$0xff]
        %v2435 = vld [vmem:[%s1 + $0x18] sm:$0xff]
        %v2436 = vld [vmem:[%s1 + $0x20] sm:$0xff]
        %v2437 = vld [vmem:[%s1 + $0x28] sm:$0xff]
        %v2438 = vld [vmem:[%s1 + $0x30] sm:$0x11]
        %v2439 = vpack.c.bf16 %v2428, %v2427
        %v2440 = vpack.c.bf16 %v2430, %v2429
        %v2441 = vld [vmem:[%s422] sm:$0xff]
        %v2442 = vld [vmem:[%s422 + $0x8] sm:$0xff]
        %v2443 = vld [vmem:[%s422 + $0x10] sm:$0xff]
        %v2444 = vld [vmem:[%s422 + $0x18] sm:$0xff]
        %v2445 = vld [vmem:[%s422 + $0x20] sm:$0xff]
        %v2446 = vld [vmem:[%s422 + $0x28] sm:$0xff]
        %v2447 = vld [vmem:[%s422 + $0x30] sm:$0x11]
        %v2448 = vpack.c.bf16 %v2431, %v2431
        %v2450 = vshrl.u32 %v2439, 16
        %v2452 = vshll.u32 %v2439, 16
        %v2454 = vrot.slane %v2452, 1
        %v2455 = vor.u32 %v2450, %v2454
        %v2457 = vshll.u32 %v2440, 16
        %v2459 = vrot.slane %v2457, 1
        %v2460 = vsel %vm431, %v2455, %v2459
        %v2461 = vshrl.u32 %v2440, 16
        %v2463 = vor.u32 %v2461, %v2459
        %v2465 = vshll.u32 %v2448, 16
        %v2467 = vrot.slane %v2465, 1
        %v2468 = vsel %vm431, %v2463, %v2467
        %v2476 = vunpack.c.l.b16 %v2441
        %v2477 = vunpack.c.h.b16 %v2441
        %v2478 = vunpack.c.l.b16 %v2442
        %v2479 = vunpack.c.h.b16 %v2442
        %v2480 = vunpack.c.l.b16 %v2443
        %v2481 = vunpack.c.h.b16 %v2443
        %v2482 = vunpack.c.l.b16 %v2444
        %v2483 = vunpack.c.h.b16 %v2444
        %v2484 = vunpack.c.l.b16 %v2445
        %v2485 = vunpack.c.h.b16 %v2445
        %v2486 = vunpack.c.l.b16 %v2446
        %v2487 = vunpack.c.h.b16 %v2446
        %v2488 = vunpack.c.l.b16 %v2447
        %v2489 = vunpack.c.h.b16 %v2447
        %v2490 = vpack.c.b16 %v2478, %v2476
        %v2491 = vpack.c.b16 %v2479, %v2477
        %v2492 = vpack.c.b16 %v2482, %v2480
        %v2493 = vpack.c.b16 %v2483, %v2481
        %v2494 = vpack.c.b16 %v2486, %v2484
        %v2495 = vpack.c.b16 %v2487, %v2485
        %v2496 = vpack.c.b16 %v2488, %v2488
        %v2497 = vpack.c.b16 %v2489, %v2489
        %v2505 = vsel %vm362, %v2460, 0
        %v2508 = vsel %vm362, %v2468, 0
        %v2511 = vsel %vm493, %v2496, 0
        %v2514 = vsel %vm493, %v2497, 0
        %2516 = vmatprep.subr.bf16.mxu0 0
        %2517 = vmatpush1.bf16.msra.mxu0 0
        %2518 = vmatprep.subr.bf16.mxu0 0
        %2519 = vmatpush1.bf16.msra.mxu0 0
        %2520 = vmatprep.subr.bf16.mxu0 0
        %2521 = vmatpush1.bf16.msra.mxu0 0
        %2522 = vmatprep.subr.bf16.mxu0 0
        %2523 = vmatpush1.bf16.msra.mxu0 0
        %2524 = vmatprep.subr.bf16.mxu0 %v2514
        %2525 = vmatpush1.bf16.msra.mxu0 %v2511
        %2526 = vmatprep.subr.bf16.mxu0 %v2495
        %2527 = vmatpush1.bf16.msra.mxu0 %v2494
        %2528 = vmatprep.subr.bf16.mxu0 %v2493
        %2529 = vmatpush1.bf16.msra.mxu0 %v2492
        %2530 = vmatprep.subr.bf16.mxu0 %v2491
        %2531 = vmatpush1.bf16.msra.mxu0 %v2490
        %2532 = vmatprep.subr.bf16.mxu0 0
        %2533 = vmatpush2.bf16.msra.mxu0 0
        %2534 = vmatprep.subr.bf16.mxu0 0
        %2535 = vmatpush2.bf16.msra.mxu0 0
        %2536 = vmatprep.subr.bf16.mxu0 0
        %2537 = vmatpush2.bf16.msra.mxu0 0
        %2538 = vmatprep.subr.bf16.mxu0 0
        %2539 = vmatpush2.bf16.msra.mxu0 0
        %2540 = vmatprep.subr.bf16.mxu0 0
        %2541 = vmatpush2.bf16.msra.mxu0 0
        %2542 = vmatprep.subr.bf16.mxu0 0
        %2543 = vmatpush2.bf16.msra.mxu0 0
        %2544 = vmatprep.subr.bf16.mxu0 0
        %2545 = vmatpush2.bf16.msra.mxu0 0
        %2546 = vmatprep.subr.bf16.mxu0 0
        %2547 = vmatpush2.bf16.msra.mxu0 0
        %2548 = vmatprep.mubr.bf16.mxu0 0
        %2549 = vmatmul.mubr.bf16.gmra.mxu0 %v2505
        %v2550 = vpop.f32.mrf.mxu0
        %v2551 = vadd.f32 0.0, %v2550
        %v2552 = vpop.f32.mrf.mxu0
        %v2553 = vadd.f32 0.0, %v2552
        %v2554 = vpop.f32.mrf.mxu0
        %v2555 = vadd.f32 0.0, %v2554
        %v2556 = vpop.f32.mrf.mxu0
        %v2557 = vadd.f32 0.0, %v2556
        %2558 = vmatprep.mubr.bf16.mxu0 0
        %2559 = vmatmul.mubr.bf16.gmra.mxu0 %v2508
        %v2560 = vpop.f32.mrf.mxu0
        %v2561 = vadd.f32 0.0, %v2560
        %v2562 = vpop.f32.mrf.mxu0
        %v2563 = vadd.f32 0.0, %v2562
        %v2564 = vpop.f32.mrf.mxu0
        %v2565 = vadd.f32 0.0, %v2564
        %v2566 = vpop.f32.mrf.mxu0
        %v2567 = vadd.f32 0.0, %v2566
        %2568 = vdwg.mxu0
        %v2576 = vunpack.c.l.b16 %v2432
        %v2577 = vunpack.c.h.b16 %v2432
        %v2578 = vunpack.c.l.b16 %v2433
        %v2579 = vunpack.c.h.b16 %v2433
        %v2580 = vunpack.c.l.b16 %v2434
        %v2581 = vunpack.c.h.b16 %v2434
        %v2582 = vunpack.c.l.b16 %v2435
        %v2583 = vunpack.c.h.b16 %v2435
        %v2584 = vunpack.c.l.b16 %v2436
        %v2585 = vunpack.c.h.b16 %v2436
        %v2586 = vunpack.c.l.b16 %v2437
        %v2587 = vunpack.c.h.b16 %v2437
        %v2588 = vunpack.c.l.b16 %v2438
        %v2589 = vunpack.c.h.b16 %v2438
        %v2590 = vpack.c.b16 %v2578, %v2576
        %v2591 = vpack.c.b16 %v2579, %v2577
        %v2592 = vpack.c.b16 %v2582, %v2580
        %v2593 = vpack.c.b16 %v2583, %v2581
        %v2594 = vpack.c.b16 %v2586, %v2584
        %v2595 = vpack.c.b16 %v2587, %v2585
        %v2596 = vpack.c.b16 %v2588, %v2588
        %v2597 = vpack.c.b16 %v2589, %v2589
        %v2604 = vsel %vm362, %v2439, 0
        %v2606 = vsel %vm362, %v2440, 0
        %v2609 = vsel %vm493, %v2596, 0
        %v2612 = vsel %vm493, %v2597, 0
        %2614 = vmatprep.subr.bf16.mxu0 0
        %2615 = vmatpush1.bf16.msra.mxu0 0
        %2616 = vmatprep.subr.bf16.mxu0 0
        %2617 = vmatpush1.bf16.msra.mxu0 0
        %2618 = vmatprep.subr.bf16.mxu0 0
        %2619 = vmatpush1.bf16.msra.mxu0 0
        %2620 = vmatprep.subr.bf16.mxu0 0
        %2621 = vmatpush1.bf16.msra.mxu0 0
        %2622 = vmatprep.subr.bf16.mxu0 %v2612
        %2623 = vmatpush1.bf16.msra.mxu0 %v2609
        %2624 = vmatprep.subr.bf16.mxu0 %v2595
        %2625 = vmatpush1.bf16.msra.mxu0 %v2594
        %2626 = vmatprep.subr.bf16.mxu0 %v2593
        %2627 = vmatpush1.bf16.msra.mxu0 %v2592
        %2628 = vmatprep.subr.bf16.mxu0 %v2591
        %2629 = vmatpush1.bf16.msra.mxu0 %v2590
        %2630 = vmatprep.subr.bf16.mxu0 0
        %2631 = vmatpush2.bf16.msra.mxu0 0
        %2632 = vmatprep.subr.bf16.mxu0 0
        %2633 = vmatpush2.bf16.msra.mxu0 0
        %2634 = vmatprep.subr.bf16.mxu0 0
        %2635 = vmatpush2.bf16.msra.mxu0 0
        %2636 = vmatprep.subr.bf16.mxu0 0
        %2637 = vmatpush2.bf16.msra.mxu0 0
        %2638 = vmatprep.subr.bf16.mxu0 0
        %2639 = vmatpush2.bf16.msra.mxu0 0
        %2640 = vmatprep.subr.bf16.mxu0 0
        %2641 = vmatpush2.bf16.msra.mxu0 0
        %2642 = vmatprep.subr.bf16.mxu0 0
        %2643 = vmatpush2.bf16.msra.mxu0 0
        %2644 = vmatprep.subr.bf16.mxu0 0
        %2645 = vmatpush2.bf16.msra.mxu0 0
        %2646 = vmatprep.mubr.bf16.mxu0 0
        %2647 = vmatmul.mubr.bf16.gmra.mxu0 %v2604
        %v2648 = vpop.f32.mrf.mxu0
        %v2649 = vadd.f32 %v2551, %v2648
        %v2650 = vpop.f32.mrf.mxu0
        %v2651 = vadd.f32 %v2553, %v2650
        %v2652 = vpop.f32.mrf.mxu0
        %v2653 = vadd.f32 %v2555, %v2652
        %v2654 = vpop.f32.mrf.mxu0
        %v2655 = vadd.f32 %v2557, %v2654
        %2656 = vmatprep.mubr.bf16.mxu0 0
        %2657 = vmatmul.mubr.bf16.gmra.mxu0 %v2606
        %v2658 = vpop.f32.mrf.mxu0
        %v2659 = vadd.f32 %v2561, %v2658
        %v2660 = vpop.f32.mrf.mxu0
        %v2661 = vadd.f32 %v2563, %v2660
        %v2662 = vpop.f32.mrf.mxu0
        %v2663 = vadd.f32 %v2565, %v2662
        %v2664 = vpop.f32.mrf.mxu0
        %v2665 = vadd.f32 %v2567, %v2664
        %2666 = vdwg.mxu0
        %v2667 = vld [vmem:[%s651] sm:$0xff]
        %v2668 = vld [vmem:[%s651 + $0x8] sm:$0xff]
        %v2669 = vld [vmem:[%s651 + $0x10] sm:$0xff]
        %v2670 = vld [vmem:[%s651 + $0x18] sm:$0xff]
        %v2671 = vld [vmem:[%s651 + $0x20] sm:$0xff]
        %v2672 = vld [vmem:[%s651 + $0x28] sm:$0xff]
        %v2673 = vld [vmem:[%s651 + $0x30] sm:$0x11]
        %v2677 = vrot.slane %v2439, 1
        %v2678 = vrot.slane %v2440, 1
        %v2679 = vsel %vm662, %v2677, %v2678
        %v2680 = vrot.slane %v2448, 1
        %v2681 = vsel %vm662, %v2678, %v2680
        %v2689 = vunpack.c.l.b16 %v2667
        %v2690 = vunpack.c.h.b16 %v2667
        %v2691 = vunpack.c.l.b16 %v2668
        %v2692 = vunpack.c.h.b16 %v2668
        %v2693 = vunpack.c.l.b16 %v2669
        %v2694 = vunpack.c.h.b16 %v2669
        %v2695 = vunpack.c.l.b16 %v2670
        %v2696 = vunpack.c.h.b16 %v2670
        %v2697 = vunpack.c.l.b16 %v2671
        %v2698 = vunpack.c.h.b16 %v2671
        %v2699 = vunpack.c.l.b16 %v2672
        %v2700 = vunpack.c.h.b16 %v2672
        %v2701 = vunpack.c.l.b16 %v2673
        %v2702 = vunpack.c.h.b16 %v2673
        %v2703 = vpack.c.b16 %v2691, %v2689
        %v2704 = vpack.c.b16 %v2692, %v2690
        %v2705 = vpack.c.b16 %v2695, %v2693
        %v2706 = vpack.c.b16 %v2696, %v2694
        %v2707 = vpack.c.b16 %v2699, %v2697
        %v2708 = vpack.c.b16 %v2700, %v2698
        %v2709 = vpack.c.b16 %v2701, %v2701
        %v2710 = vpack.c.b16 %v2702, %v2702
        %v2718 = vsel %vm362, %v2679, 0
        %v2721 = vsel %vm362, %v2681, 0
        %v2724 = vsel %vm493, %v2709, 0
        %v2727 = vsel %vm493, %v2710, 0
        %2729 = vmatprep.subr.bf16.mxu0 0
        %2730 = vmatpush1.bf16.msra.mxu0 0
        %2731 = vmatprep.subr.bf16.mxu0 0
        %2732 = vmatpush1.bf16.msra.mxu0 0
        %2733 = vmatprep.subr.bf16.mxu0 0
        %2734 = vmatpush1.bf16.msra.mxu0 0
        %2735 = vmatprep.subr.bf16.mxu0 0
        %2736 = vmatpush1.bf16.msra.mxu0 0
        %2737 = vmatprep.subr.bf16.mxu0 %v2727
        %2738 = vmatpush1.bf16.msra.mxu0 %v2724
        %2739 = vmatprep.subr.bf16.mxu0 %v2708
        %2740 = vmatpush1.bf16.msra.mxu0 %v2707
        %2741 = vmatprep.subr.bf16.mxu0 %v2706
        %2742 = vmatpush1.bf16.msra.mxu0 %v2705
        %2743 = vmatprep.subr.bf16.mxu0 %v2704
        %2744 = vmatpush1.bf16.msra.mxu0 %v2703
        %2745 = vmatprep.subr.bf16.mxu0 0
        %2746 = vmatpush2.bf16.msra.mxu0 0
        %2747 = vmatprep.subr.bf16.mxu0 0
        %2748 = vmatpush2.bf16.msra.mxu0 0
        %2749 = vmatprep.subr.bf16.mxu0 0
        %2750 = vmatpush2.bf16.msra.mxu0 0
        %2751 = vmatprep.subr.bf16.mxu0 0
        %2752 = vmatpush2.bf16.msra.mxu0 0
        %2753 = vmatprep.subr.bf16.mxu0 0
        %2754 = vmatpush2.bf16.msra.mxu0 0
        %2755 = vmatprep.subr.bf16.mxu0 0
        %2756 = vmatpush2.bf16.msra.mxu0 0
        %2757 = vmatprep.subr.bf16.mxu0 0
        %2758 = vmatpush2.bf16.msra.mxu0 0
        %2759 = vmatprep.subr.bf16.mxu0 0
        %2760 = vmatpush2.bf16.msra.mxu0 0
        %2761 = vmatprep.mubr.bf16.mxu0 0
        %2762 = vmatmul.mubr.bf16.gmra.mxu0 %v2718
        %v2763 = vpop.f32.mrf.mxu0
        %v2764 = vadd.f32 0.0, %v2763
        %v2765 = vpop.f32.mrf.mxu0
        %v2766 = vadd.f32 0.0, %v2765
        %v2767 = vpop.f32.mrf.mxu0
        %v2768 = vadd.f32 0.0, %v2767
        %v2769 = vpop.f32.mrf.mxu0
        %v2770 = vadd.f32 0.0, %v2769
        %2771 = vmatprep.mubr.bf16.mxu0 0
        %2772 = vmatmul.mubr.bf16.gmra.mxu0 %v2721
        %v2773 = vpop.f32.mrf.mxu0
        %v2774 = vadd.f32 0.0, %v2773
        %v2775 = vpop.f32.mrf.mxu0
        %v2776 = vadd.f32 0.0, %v2775
        %v2777 = vpop.f32.mrf.mxu0
        %v2778 = vadd.f32 0.0, %v2777
        %v2779 = vpop.f32.mrf.mxu0
        %v2780 = vadd.f32 0.0, %v2779
        %2781 = vdwg.mxu0
        %v2782 = vadd.f32 %v2649, %v2764
        %v2783 = vadd.f32 %v2651, %v2766
        %v2784 = vadd.f32 %v2653, %v2768
        %v2785 = vadd.f32 %v2655, %v2770
        %v2786 = vadd.f32 %v2659, %v2774
        %v2787 = vadd.f32 %v2661, %v2776
        %v2788 = vadd.f32 %v2663, %v2778
        %v2789 = vadd.f32 %v2665, %v2780
        %v2790 = vadd.f32 %v2782, %v780
        %v2791 = vadd.f32 %v2783, %v784
        %v2792 = vadd.f32 %v2784, %v780
        %v2793 = vadd.f32 %v2785, %v784
        %v2794 = vadd.f32 %v2786, %v780
        %v2795 = vadd.f32 %v2787, %v784
        %v2796 = vadd.f32 %v2788, %v780
        %v2797 = vadd.f32 %v2789, %v784
        %v2798 = vmax.f32 %v2790, 0.0
        %v2799 = vmax.f32 %v2791, 0.0
        %v2800 = vmax.f32 %v2792, 0.0
        %v2801 = vmax.f32 %v2793, 0.0
        %v2802 = vmax.f32 %v2794, 0.0
        %v2803 = vmax.f32 %v2795, 0.0
        %v2804 = vmax.f32 %v2796, 0.0
        %v2805 = vmax.f32 %v2797, 0.0
        %v2808 = vrot.slane %v2798, 1
        %v2809 = vrot.slane %v2799, 1
        %v2812 = vmax.f32 %v2798, %v2808
        %v2813 = vmax.f32 %v2799, %v2809
        %v2816 = vcombine.low %v2812, %v2813
        %v2818 = vunpack.c.l.s4 1966171168
        %v2819 = vunpack.c.0.s8 %v2818
        %v2820 = vlaneseq
        %v2821 = vshrl.u32 %v2820, 7
        %v2822 = vsub.s32 %v2819, %v2821
        %v2823 = vrot.slane %v2816, %v2822
        %v2825 = vunpack.c.l.s4 1966171168
        %v2826 = vunpack.c.0.s8 %v2825
        %v2827 = vlaneseq
        %v2828 = vshrl.u32 %v2827, 7
        %v2829 = vsub.s32 %v2826, %v2828
        %v2830 = vrot.slane %v2823, %v2829
        %s2832 = scalar_lea.vmem [#allocation3], 96
        %s2833 = scalar_lea.vmem %s2832, 1 [#allocation3]
        %2834 = vst.msk [vmem:[%s2833] ss:$8 sm:$0x3] %vm382, %v2830
        %2835 = vst.msk [vmem:[%s2833] ss:$8 sm:$0x0] %vm382, %v2830
        %v2836 = vrot.slane %v2798, 2
        %v2837 = vrot.slane %v2799, 2
        %v2840 = vmax.f32 %v2812, %v2836
        %v2841 = vmax.f32 %v2813, %v2837
        %v2844 = vcombine.low %v2840, %v2841
        %v2846 = vunpack.c.l.s4 1966171168
        %v2847 = vunpack.c.0.s8 %v2846
        %v2848 = vlaneseq
        %v2849 = vshrl.u32 %v2848, 7
        %v2850 = vsub.s32 %v2847, %v2849
        %v2851 = vrot.slane %v2844, %v2850
        %v2853 = vunpack.c.l.s4 1966171168
        %v2854 = vunpack.c.0.s8 %v2853
        %v2855 = vlaneseq
        %v2856 = vshrl.u32 %v2855, 7
        %v2857 = vsub.s32 %v2854, %v2856
        %v2858 = vrot.slane %v2851, %v2857
        %v2859 = vcombine.high %v2858, %v2858
        %s2861 = scalar_lea.vmem %s2832, 2 [#allocation3]
        %2862 = vst.msk [vmem:[%s2861] ss:$8 sm:$0x3] %vm382, %v2859
        %2863 = vst.msk [vmem:[%s2861] ss:$8 sm:$0x0] %vm382, %v2859
        %v2864 = vcombine.high %v2840, %v2841
        %v2866 = vunpack.c.l.s4 1966171168
        %v2867 = vunpack.c.0.s8 %v2866
        %v2868 = vlaneseq
        %v2869 = vshrl.u32 %v2868, 7
        %v2870 = vsub.s32 %v2867, %v2869
        %v2871 = vrot.slane %v2864, %v2870
        %v2872 = vcombine.high %v2871, %v2871
        %v2874 = vunpack.c.l.s4 1966171168
        %v2875 = vunpack.c.0.s8 %v2874
        %v2876 = vlaneseq
        %v2877 = vshrl.u32 %v2876, 7
        %v2878 = vsub.s32 %v2875, %v2877
        %v2879 = vrot.slane %v2872, %v2878
        %s2881 = scalar_lea.vmem %s2832, 3 [#allocation3]
        %2882 = vst.msk [vmem:[%s2881] ss:$8 sm:$0x3] %vm382, %v2879
        %2883 = vst.msk [vmem:[%s2881] ss:$8 sm:$0x0] %vm382, %v2879
        %v2886 = vrot.slane %v2800, 1
        %v2887 = vrot.slane %v2801, 1
        %v2890 = vmax.f32 %v2800, %v2886
        %v2891 = vmax.f32 %v2801, %v2887
        %v2892 = vrot.slane %v2800, 2
        %v2893 = vrot.slane %v2801, 2
        %v2896 = vmax.f32 %v2890, %v2892
        %v2897 = vmax.f32 %v2891, %v2893
        %v2900 = vcombine.low %v2896, %v2897
        %v2902 = vunpack.c.l.s4 1966171168
        %v2903 = vunpack.c.0.s8 %v2902
        %v2904 = vlaneseq
        %v2905 = vshrl.u32 %v2904, 7
        %v2906 = vsub.s32 %v2903, %v2905
        %v2907 = vrot.slane %v2900, %v2906
        %v2909 = vunpack.c.l.s4 1966171168
        %v2910 = vunpack.c.0.s8 %v2909
        %v2911 = vlaneseq
        %v2912 = vshrl.u32 %v2911, 7
        %v2913 = vsub.s32 %v2910, %v2912
        %v2914 = vrot.slane %v2907, %v2913
        %s2916 = scalar_lea.vmem %s2832, 4 [#allocation3]
        %2917 = vst.msk [vmem:[%s2916] ss:$8 sm:$0x3] %vm382, %v2914
        %2918 = vst.msk [vmem:[%s2916] ss:$8 sm:$0x0] %vm382, %v2914
        %v2919 = vcombine.high %v2907, %v2907
        %v2921 = vunpack.c.l.s4 1966171168
        %v2922 = vunpack.c.0.s8 %v2921
        %v2923 = vlaneseq
        %v2924 = vshrl.u32 %v2923, 7
        %v2925 = vsub.s32 %v2922, %v2924
        %v2926 = vrot.slane %v2919, %v2925
        %v2927 = vcombine.high %v2926, %v2926
        %s2929 = scalar_lea.vmem %s2832, 5 [#allocation3]
        %2930 = vst.msk [vmem:[%s2929] ss:$8 sm:$0x3] %vm382, %v2927
        %2931 = vst.msk [vmem:[%s2929] ss:$8 sm:$0x0] %vm382, %v2927
        %v2934 = vrot.slane %v2802, 2
        %v2935 = vrot.slane %v2803, 2
        %v2938 = vmax.f32 %v2890, %v2934
        %v2939 = vmax.f32 %v2891, %v2935
        %v2942 = vcombine.high %v2938, %v2939
        %v2944 = vunpack.c.l.s4 1966171168
        %v2945 = vunpack.c.0.s8 %v2944
        %v2946 = vlaneseq
        %v2947 = vshrl.u32 %v2946, 7
        %v2948 = vsub.s32 %v2945, %v2947
        %v2949 = vrot.slane %v2942, %v2948
        %v2951 = vunpack.c.l.s4 1966171168
        %v2952 = vunpack.c.0.s8 %v2951
        %v2953 = vlaneseq
        %v2954 = vshrl.u32 %v2953, 7
        %v2955 = vsub.s32 %v2952, %v2954
        %v2956 = vrot.slane %v2949, %v2955
        %v2957 = vcombine.high %v2956, %v2956
        %s2959 = scalar_lea.vmem %s2832, 6 [#allocation3]
        %2960 = vst.msk [vmem:[%s2959] ss:$8 sm:$0x3] %vm382, %v2957
        %2961 = vst.msk [vmem:[%s2959] ss:$8 sm:$0x0] %vm382, %v2957
        %v2962 = vrot.slane %v2802, 1
        %v2963 = vrot.slane %v2803, 1
        %v2966 = vmax.f32 %v2802, %v2962
        %v2967 = vmax.f32 %v2803, %v2963
        %v2968 = vmax.f32 %v2966, %v2934
        %v2969 = vmax.f32 %v2967, %v2935
        %v2972 = vcombine.low %v2968, %v2969
        %v2974 = vunpack.c.l.s4 1966171168
        %v2975 = vunpack.c.0.s8 %v2974
        %v2976 = vlaneseq
        %v2977 = vshrl.u32 %v2976, 7
        %v2978 = vsub.s32 %v2975, %v2977
        %v2979 = vrot.slane %v2972, %v2978
        %v2980 = vcombine.high %v2979, %v2979
        %v2982 = vunpack.c.l.s4 1966171168
        %v2983 = vunpack.c.0.s8 %v2982
        %v2984 = vlaneseq
        %v2985 = vshrl.u32 %v2984, 7
        %v2986 = vsub.s32 %v2983, %v2985
        %v2987 = vrot.slane %v2980, %v2986
        %s2989 = scalar_lea.vmem %s2832, 7 [#allocation3]
        %2990 = vst.msk [vmem:[%s2989] ss:$8 sm:$0x3] %vm382, %v2987
        %2991 = vst.msk [vmem:[%s2989] ss:$8 sm:$0x0] %vm382, %v2987
        %v2992 = vcombine.high %v2968, %v2969
        %v2994 = vunpack.c.l.s4 1966171168
        %v2995 = vunpack.c.0.s8 %v2994
        %v2996 = vlaneseq
        %v2997 = vshrl.u32 %v2996, 7
        %v2998 = vsub.s32 %v2995, %v2997
        %v2999 = vrot.slane %v2992, %v2998
        %v3001 = vunpack.c.l.s4 1966171168
        %v3002 = vunpack.c.0.s8 %v3001
        %v3003 = vlaneseq
        %v3004 = vshrl.u32 %v3003, 7
        %v3005 = vsub.s32 %v3002, %v3004
        %v3006 = vrot.slane %v2999, %v3005
        %s3008 = scalar_lea.vmem %s2832, 16 [#allocation3]
        %3009 = vst.msk [vmem:[%s3008] ss:$8 sm:$0x3] %vm382, %v3006
        %3010 = vst.msk [vmem:[%s3008] ss:$8 sm:$0x0] %vm382, %v3006
        %v3013 = vrot.slane %v2804, 1
        %v3014 = vrot.slane %v2805, 1
        %v3017 = vmax.f32 %v2802, %v3013
        %v3018 = vmax.f32 %v2803, %v3014
        %v3019 = vrot.slane %v2804, 2
        %v3020 = vrot.slane %v2805, 2
        %v3023 = vmax.f32 %v3017, %v3019
        %v3024 = vmax.f32 %v3018, %v3020
        %v3027 = vcombine.high %v3023, %v3024
        %v3029 = vunpack.c.l.s4 1966171168
        %v3030 = vunpack.c.0.s8 %v3029
        %v3031 = vlaneseq
        %v3032 = vshrl.u32 %v3031, 7
        %v3033 = vsub.s32 %v3030, %v3032
        %v3034 = vrot.slane %v3027, %v3033
        %v3035 = vcombine.high %v3034, %v3034
        %v3037 = vunpack.c.l.s4 1966171168
        %v3038 = vunpack.c.0.s8 %v3037
        %v3039 = vlaneseq
        %v3040 = vshrl.u32 %v3039, 7
        %v3041 = vsub.s32 %v3038, %v3040
        %v3042 = vrot.slane %v3035, %v3041
        %v3043 = vcombine.high %v3042, %v3042
        %s3045 = scalar_lea.vmem %s2832, 17 [#allocation3]
        %3046 = vst.msk [vmem:[%s3045] ss:$8 sm:$0x3] %vm382, %v3043
        %3047 = vst.msk [vmem:[%s3045] ss:$8 sm:$0x0] %vm382, %v3043
        %v3048 = vmax.f32 %v2804, %v3013
        %v3049 = vmax.f32 %v2805, %v3014
        %v3050 = vmax.f32 %v3048, %v3019
        %v3051 = vmax.f32 %v3049, %v3020
        %v3054 = vcombine.low %v3050, %v3051
        %v3056 = vunpack.c.l.s4 1966171168
        %v3057 = vunpack.c.0.s8 %v3056
        %v3058 = vlaneseq
        %v3059 = vshrl.u32 %v3058, 7
        %v3060 = vsub.s32 %v3057, %v3059
        %v3061 = vrot.slane %v3054, %v3060
        %v3063 = vunpack.c.l.s4 1966171168
        %v3064 = vunpack.c.0.s8 %v3063
        %v3065 = vlaneseq
        %v3066 = vshrl.u32 %v3065, 7
        %v3067 = vsub.s32 %v3064, %v3066
        %v3068 = vrot.slane %v3061, %v3067
        %v3069 = vcombine.high %v3068, %v3068
        %s3071 = scalar_lea.vmem %s2832, 18 [#allocation3]
        %3072 = vst.msk [vmem:[%s3071] ss:$8 sm:$0x3] %vm382, %v3069
        %3073 = vst.msk [vmem:[%s3071] ss:$8 sm:$0x0] %vm382, %v3069
        %v3074 = vcombine.high %v3050, %v3051
        %v3076 = vunpack.c.l.s4 1966171168
        %v3077 = vunpack.c.0.s8 %v3076
        %v3078 = vlaneseq
        %v3079 = vshrl.u32 %v3078, 7
        %v3080 = vsub.s32 %v3077, %v3079
        %v3081 = vrot.slane %v3074, %v3080
        %v3082 = vcombine.high %v3081, %v3081
        %v3084 = vunpack.c.l.s4 1966171168
        %v3085 = vunpack.c.0.s8 %v3084
        %v3086 = vlaneseq
        %v3087 = vshrl.u32 %v3086, 7
        %v3088 = vsub.s32 %v3085, %v3087
        %v3089 = vrot.slane %v3082, %v3088
        %s3091 = scalar_lea.vmem %s2832, 19 [#allocation3]
        %3092 = vst.msk [vmem:[%s3091] ss:$8 sm:$0x3] %vm382, %v3089
        %3093 = vst.msk [vmem:[%s3091] ss:$8 sm:$0x0] %vm382, %v3089
        %v3094 = vld [vmem:[#allocation3] sm:$0xff]
        %v3095 = vld [vmem:[#allocation3 + $0x8] sm:$0xff]
        %v3096 = vld [vmem:[#allocation3 + $0x10] sm:$0x1f]
        %v3097 = vld [vmem:[#allocation3 + $0x18] sm:$0x1f]
        %v3098 = vld [vmem:[%s3] sm:$0xf]
        %v3099 = vld [vmem:[%s3 + $0x4] sm:$0xf]
        %v3100 = vld [vmem:[%s3 + $0x8] sm:$0xf]
        %v3101 = vld [vmem:[%s3 + $0xc] sm:$0xf]
        %v3102 = vld [vmem:[%s3 + $0x10] sm:$0xf]
        %v3103 = vld [vmem:[%s3 + $0x14] sm:$0xf]
        %v3104 = vld [vmem:[%s3 + $0x18] sm:$0xf]
        %v3105 = vld [vmem:[%s3 + $0x1c] sm:$0xf]
        %v3106 = vld [vmem:[%s3 + $0x20] sm:$0xf]
        %v3107 = vld [vmem:[%s3 + $0x24] sm:$0xf]
        %v3108 = vld [vmem:[%s3 + $0x28] sm:$0xf]
        %v3109 = vld [vmem:[%s3 + $0x2c] sm:$0xf]
        %v3110 = vld [vmem:[%s3 + $0x30] sm:$0xf]
        %v3111 = vld [vmem:[%s3 + $0x34] sm:$0xf]
        %v3112 = vld [vmem:[%s3 + $0x38] sm:$0xf]
        %v3113 = vld [vmem:[%s3 + $0x3c] sm:$0xf]
        %v3114 = vld [vmem:[%s3 + $0x40] sm:$0xf]
        %v3115 = vld [vmem:[%s3 + $0x44] sm:$0xf]
        %v3116 = vld [vmem:[%s3 + $0x48] sm:$0xf]
        %v3117 = vld [vmem:[%s3 + $0x4c] sm:$0xf]
        %v3118 = vld [vmem:[%s3 + $0x50] sm:$0xf]
        %v3119 = vld [vmem:[%s3 + $0x54] sm:$0xf]
        %v3120 = vld [vmem:[%s3 + $0x58] sm:$0xf]
        %v3121 = vld [vmem:[%s3 + $0x5c] sm:$0xf]
        %v3122 = vld [vmem:[%s3 + $0x60] sm:$0xf]
        %v3123 = vld [vmem:[%s3 + $0x64] sm:$0xf]
        %v3124 = vld [vmem:[%s3 + $0x68] sm:$0xf]
        %v3125 = vld [vmem:[%s3 + $0x6c] sm:$0xf]
        %v3126 = vld [vmem:[%s3 + $0x70] sm:$0xf]
        %v3127 = vld [vmem:[%s3 + $0x74] sm:$0xf]
        %v3128 = vld [vmem:[%s3 + $0x78] sm:$0xf]
        %v3129 = vld [vmem:[%s3 + $0x7c] sm:$0xf]
        %v3130 = vpack.c.bf16 %v3096, %v3094
        %v3131 = vpack.c.bf16 %v3097, %v3095
        %s3132 = scalar_lea.vmem %s3, 128
        %v3133 = vld [vmem:[%s3132] sm:$0xf]
        %v3134 = vld [vmem:[%s3132 + $0x4] sm:$0xf]
        %v3135 = vld [vmem:[%s3132 + $0x8] sm:$0xf]
        %v3136 = vld [vmem:[%s3132 + $0xc] sm:$0xf]
        %v3137 = vld [vmem:[%s3132 + $0x10] sm:$0xf]
        %v3138 = vld [vmem:[%s3132 + $0x14] sm:$0xf]
        %v3139 = vld [vmem:[%s3132 + $0x18] sm:$0xf]
        %v3140 = vld [vmem:[%s3132 + $0x1c] sm:$0xf]
        %v3141 = vld [vmem:[%s3132 + $0x20] sm:$0xf]
        %v3142 = vld [vmem:[%s3132 + $0x24] sm:$0xf]
        %v3143 = vld [vmem:[%s3132 + $0x28] sm:$0xf]
        %v3144 = vld [vmem:[%s3132 + $0x2c] sm:$0xf]
        %v3145 = vld [vmem:[%s3132 + $0x30] sm:$0xf]
        %v3146 = vld [vmem:[%s3132 + $0x34] sm:$0xf]
        %v3147 = vld [vmem:[%s3132 + $0x38] sm:$0xf]
        %v3148 = vld [vmem:[%s3132 + $0x3c] sm:$0xf]
        %v3149 = vld [vmem:[%s3132 + $0x40] sm:$0xf]
        %v3150 = vld [vmem:[%s3132 + $0x44] sm:$0xf]
        %v3151 = vld [vmem:[%s3132 + $0x48] sm:$0xf]
        %v3152 = vld [vmem:[%s3132 + $0x4c] sm:$0xf]
        %v3153 = vld [vmem:[%s3132 + $0x50] sm:$0xf]
        %v3154 = vld [vmem:[%s3132 + $0x54] sm:$0xf]
        %v3155 = vld [vmem:[%s3132 + $0x58] sm:$0xf]
        %v3156 = vld [vmem:[%s3132 + $0x5c] sm:$0xf]
        %v3157 = vld [vmem:[%s3132 + $0x60] sm:$0xf]
        %v3158 = vld [vmem:[%s3132 + $0x64] sm:$0xf]
        %v3159 = vld [vmem:[%s3132 + $0x68] sm:$0xf]
        %v3160 = vld [vmem:[%s3132 + $0x6c] sm:$0xf]
        %v3161 = vld [vmem:[%s3132 + $0x70] sm:$0xf]
        %v3162 = vld [vmem:[%s3132 + $0x74] sm:$0xf]
        %v3163 = vld [vmem:[%s3132 + $0x78] sm:$0xf]
        %v3164 = vld [vmem:[%s3132 + $0x7c] sm:$0xf]
        %v3166 = vshrl.u32 %v3130, 16
        %v3168 = vshll.u32 %v3130, 16
        %v3170 = vrot.slane %v3168, 1
        %v3171 = vor.u32 %v3166, %v3170
        %v3173 = vshrl.u32 %v3131, 16
        %v3175 = vshll.u32 %v3131, 16
        %v3177 = vrot.slane %v3175, 1
        %v3178 = vor.u32 %v3173, %v3177
        %v3213 = vunpack.c.l.b16 %v3133
        %v3214 = vunpack.c.l.b16 %v3134
        %v3215 = vunpack.c.l.b16 %v3135
        %v3216 = vunpack.c.l.b16 %v3136
        %v3217 = vunpack.c.l.b16 %v3137
        %v3218 = vunpack.c.l.b16 %v3138
        %v3219 = vunpack.c.l.b16 %v3139
        %v3220 = vunpack.c.l.b16 %v3140
        %v3221 = vunpack.c.l.b16 %v3141
        %v3222 = vunpack.c.l.b16 %v3142
        %v3223 = vunpack.c.l.b16 %v3143
        %v3224 = vunpack.c.l.b16 %v3144
        %v3225 = vunpack.c.l.b16 %v3145
        %v3226 = vunpack.c.l.b16 %v3146
        %v3227 = vunpack.c.l.b16 %v3147
        %v3228 = vunpack.c.l.b16 %v3148
        %v3229 = vunpack.c.l.b16 %v3149
        %v3230 = vunpack.c.l.b16 %v3150
        %v3231 = vunpack.c.l.b16 %v3151
        %v3232 = vunpack.c.l.b16 %v3152
        %v3233 = vunpack.c.l.b16 %v3153
        %v3234 = vunpack.c.l.b16 %v3154
        %v3235 = vunpack.c.l.b16 %v3155
        %v3236 = vunpack.c.l.b16 %v3156
        %v3237 = vunpack.c.l.b16 %v3157
        %v3238 = vunpack.c.l.b16 %v3158
        %v3239 = vunpack.c.l.b16 %v3159
        %v3240 = vunpack.c.l.b16 %v3160
        %v3241 = vunpack.c.l.b16 %v3161
        %v3242 = vunpack.c.l.b16 %v3162
        %v3243 = vunpack.c.l.b16 %v3163
        %v3244 = vunpack.c.l.b16 %v3164
        %v3245 = vpack.c.b16 %v3214, %v3213
        %v3246 = vpack.c.b16 %v3216, %v3215
        %v3247 = vpack.c.b16 %v3218, %v3217
        %v3248 = vpack.c.b16 %v3220, %v3219
        %v3249 = vpack.c.b16 %v3222, %v3221
        %v3250 = vpack.c.b16 %v3224, %v3223
        %v3251 = vpack.c.b16 %v3226, %v3225
        %v3252 = vpack.c.b16 %v3228, %v3227
        %v3253 = vpack.c.b16 %v3230, %v3229
        %v3254 = vpack.c.b16 %v3232, %v3231
        %v3255 = vpack.c.b16 %v3234, %v3233
        %v3256 = vpack.c.b16 %v3236, %v3235
        %v3257 = vpack.c.b16 %v3238, %v3237
        %v3258 = vpack.c.b16 %v3240, %v3239
        %v3259 = vpack.c.b16 %v3242, %v3241
        %v3260 = vpack.c.b16 %v3244, %v3243
        %3277 = vmatprep.subr.bf16.mxu0 0
        %3278 = vmatpush1.bf16.msra.mxu0 %v3252
        %3279 = vmatprep.subr.bf16.mxu0 0
        %3280 = vmatpush1.bf16.msra.mxu0 %v3251
        %3281 = vmatprep.subr.bf16.mxu0 0
        %3282 = vmatpush1.bf16.msra.mxu0 %v3250
        %3283 = vmatprep.subr.bf16.mxu0 0
        %3284 = vmatpush1.bf16.msra.mxu0 %v3249
        %3285 = vmatprep.subr.bf16.mxu0 0
        %3286 = vmatpush1.bf16.msra.mxu0 %v3248
        %3287 = vmatprep.subr.bf16.mxu0 0
        %3288 = vmatpush1.bf16.msra.mxu0 %v3247
        %3289 = vmatprep.subr.bf16.mxu0 0
        %3290 = vmatpush1.bf16.msra.mxu0 %v3246
        %3291 = vmatprep.subr.bf16.mxu0 0
        %3292 = vmatpush1.bf16.msra.mxu0 %v3245
        %3293 = vmatprep.subr.bf16.mxu0 0
        %3294 = vmatpush2.bf16.msra.mxu0 %v3260
        %3295 = vmatprep.subr.bf16.mxu0 0
        %3296 = vmatpush2.bf16.msra.mxu0 %v3259
        %3297 = vmatprep.subr.bf16.mxu0 0
        %3298 = vmatpush2.bf16.msra.mxu0 %v3258
        %3299 = vmatprep.subr.bf16.mxu0 0
        %3300 = vmatpush2.bf16.msra.mxu0 %v3257
        %3301 = vmatprep.subr.bf16.mxu0 0
        %3302 = vmatpush2.bf16.msra.mxu0 %v3256
        %3303 = vmatprep.subr.bf16.mxu0 0
        %3304 = vmatpush2.bf16.msra.mxu0 %v3255
        %3305 = vmatprep.subr.bf16.mxu0 0
        %3306 = vmatpush2.bf16.msra.mxu0 %v3254
        %3307 = vmatprep.subr.bf16.mxu0 0
        %3308 = vmatpush2.bf16.msra.mxu0 %v3253
        %3309 = vmatprep.mubr.bf16.mxu0 %v3178
        %3310 = vmatmul.mubr.bf16.gmra.mxu0 %v3171
        %v3311 = vpop.f32.mrf.mxu0
        %v3312 = vadd.f32 0.0, %v3311
        %v3313 = vpop.f32.mrf.mxu0
        %v3314 = vpop.f32.mrf.mxu0
        %v3315 = vadd.f32 0.0, %v3314
        %v3316 = vpop.f32.mrf.mxu0
        %3317 = vdwg.mxu0
        %v3350 = vunpack.c.l.b16 %v3098
        %v3351 = vunpack.c.l.b16 %v3099
        %v3352 = vunpack.c.l.b16 %v3100
        %v3353 = vunpack.c.l.b16 %v3101
        %v3354 = vunpack.c.l.b16 %v3102
        %v3355 = vunpack.c.l.b16 %v3103
        %v3356 = vunpack.c.l.b16 %v3104
        %v3357 = vunpack.c.l.b16 %v3105
        %v3358 = vunpack.c.l.b16 %v3106
        %v3359 = vunpack.c.l.b16 %v3107
        %v3360 = vunpack.c.l.b16 %v3108
        %v3361 = vunpack.c.l.b16 %v3109
        %v3362 = vunpack.c.l.b16 %v3110
        %v3363 = vunpack.c.l.b16 %v3111
        %v3364 = vunpack.c.l.b16 %v3112
        %v3365 = vunpack.c.l.b16 %v3113
        %v3366 = vunpack.c.l.b16 %v3114
        %v3367 = vunpack.c.l.b16 %v3115
        %v3368 = vunpack.c.l.b16 %v3116
        %v3369 = vunpack.c.l.b16 %v3117
        %v3370 = vunpack.c.l.b16 %v3118
        %v3371 = vunpack.c.l.b16 %v3119
        %v3372 = vunpack.c.l.b16 %v3120
        %v3373 = vunpack.c.l.b16 %v3121
        %v3374 = vunpack.c.l.b16 %v3122
        %v3375 = vunpack.c.l.b16 %v3123
        %v3376 = vunpack.c.l.b16 %v3124
        %v3377 = vunpack.c.l.b16 %v3125
        %v3378 = vunpack.c.l.b16 %v3126
        %v3379 = vunpack.c.l.b16 %v3127
        %v3380 = vunpack.c.l.b16 %v3128
        %v3381 = vunpack.c.l.b16 %v3129
        %v3382 = vpack.c.b16 %v3351, %v3350
        %v3383 = vpack.c.b16 %v3353, %v3352
        %v3384 = vpack.c.b16 %v3355, %v3354
        %v3385 = vpack.c.b16 %v3357, %v3356
        %v3386 = vpack.c.b16 %v3359, %v3358
        %v3387 = vpack.c.b16 %v3361, %v3360
        %v3388 = vpack.c.b16 %v3363, %v3362
        %v3389 = vpack.c.b16 %v3365, %v3364
        %v3390 = vpack.c.b16 %v3367, %v3366
        %v3391 = vpack.c.b16 %v3369, %v3368
        %v3392 = vpack.c.b16 %v3371, %v3370
        %v3393 = vpack.c.b16 %v3373, %v3372
        %v3394 = vpack.c.b16 %v3375, %v3374
        %v3395 = vpack.c.b16 %v3377, %v3376
        %v3396 = vpack.c.b16 %v3379, %v3378
        %v3397 = vpack.c.b16 %v3381, %v3380
        %3414 = vmatprep.subr.bf16.mxu0 0
        %3415 = vmatpush1.bf16.msra.mxu0 %v3389
        %3416 = vmatprep.subr.bf16.mxu0 0
        %3417 = vmatpush1.bf16.msra.mxu0 %v3388
        %3418 = vmatprep.subr.bf16.mxu0 0
        %3419 = vmatpush1.bf16.msra.mxu0 %v3387
        %3420 = vmatprep.subr.bf16.mxu0 0
        %3421 = vmatpush1.bf16.msra.mxu0 %v3386
        %3422 = vmatprep.subr.bf16.mxu0 0
        %3423 = vmatpush1.bf16.msra.mxu0 %v3385
        %3424 = vmatprep.subr.bf16.mxu0 0
        %3425 = vmatpush1.bf16.msra.mxu0 %v3384
        %3426 = vmatprep.subr.bf16.mxu0 0
        %3427 = vmatpush1.bf16.msra.mxu0 %v3383
        %3428 = vmatprep.subr.bf16.mxu0 0
        %3429 = vmatpush1.bf16.msra.mxu0 %v3382
        %3430 = vmatprep.subr.bf16.mxu0 0
        %3431 = vmatpush2.bf16.msra.mxu0 %v3397
        %3432 = vmatprep.subr.bf16.mxu0 0
        %3433 = vmatpush2.bf16.msra.mxu0 %v3396
        %3434 = vmatprep.subr.bf16.mxu0 0
        %3435 = vmatpush2.bf16.msra.mxu0 %v3395
        %3436 = vmatprep.subr.bf16.mxu0 0
        %3437 = vmatpush2.bf16.msra.mxu0 %v3394
        %3438 = vmatprep.subr.bf16.mxu0 0
        %3439 = vmatpush2.bf16.msra.mxu0 %v3393
        %3440 = vmatprep.subr.bf16.mxu0 0
        %3441 = vmatpush2.bf16.msra.mxu0 %v3392
        %3442 = vmatprep.subr.bf16.mxu0 0
        %3443 = vmatpush2.bf16.msra.mxu0 %v3391
        %3444 = vmatprep.subr.bf16.mxu0 0
        %3445 = vmatpush2.bf16.msra.mxu0 %v3390
        %3446 = vmatprep.mubr.bf16.mxu0 %v3131
        %3447 = vmatmul.mubr.bf16.gmra.mxu0 %v3130
        %v3448 = vpop.f32.mrf.mxu0
        %v3449 = vadd.f32 %v3312, %v3448
        %v3450 = vpop.f32.mrf.mxu0
        %v3451 = vpop.f32.mrf.mxu0
        %v3452 = vadd.f32 %v3315, %v3451
        %v3453 = vpop.f32.mrf.mxu0
        %3454 = vdwg.mxu0
        %s3455 = scalar_lea.vmem %s3, 256
        %v3456 = vld [vmem:[%s3455] sm:$0xf]
        %v3457 = vld [vmem:[%s3455 + $0x4] sm:$0xf]
        %v3458 = vld [vmem:[%s3455 + $0x8] sm:$0xf]
        %v3459 = vld [vmem:[%s3455 + $0xc] sm:$0xf]
        %v3460 = vld [vmem:[%s3455 + $0x10] sm:$0xf]
        %v3461 = vld [vmem:[%s3455 + $0x14] sm:$0xf]
        %v3462 = vld [vmem:[%s3455 + $0x18] sm:$0xf]
        %v3463 = vld [vmem:[%s3455 + $0x1c] sm:$0xf]
        %v3464 = vld [vmem:[%s3455 + $0x20] sm:$0xf]
        %v3465 = vld [vmem:[%s3455 + $0x24] sm:$0xf]
        %v3466 = vld [vmem:[%s3455 + $0x28] sm:$0xf]
        %v3467 = vld [vmem:[%s3455 + $0x2c] sm:$0xf]
        %v3468 = vld [vmem:[%s3455 + $0x30] sm:$0xf]
        %v3469 = vld [vmem:[%s3455 + $0x34] sm:$0xf]
        %v3470 = vld [vmem:[%s3455 + $0x38] sm:$0xf]
        %v3471 = vld [vmem:[%s3455 + $0x3c] sm:$0xf]
        %v3472 = vld [vmem:[%s3455 + $0x40] sm:$0xf]
        %v3473 = vld [vmem:[%s3455 + $0x44] sm:$0xf]
        %v3474 = vld [vmem:[%s3455 + $0x48] sm:$0xf]
        %v3475 = vld [vmem:[%s3455 + $0x4c] sm:$0xf]
        %v3476 = vld [vmem:[%s3455 + $0x50] sm:$0xf]
        %v3477 = vld [vmem:[%s3455 + $0x54] sm:$0xf]
        %v3478 = vld [vmem:[%s3455 + $0x58] sm:$0xf]
        %v3479 = vld [vmem:[%s3455 + $0x5c] sm:$0xf]
        %v3480 = vld [vmem:[%s3455 + $0x60] sm:$0xf]
        %v3481 = vld [vmem:[%s3455 + $0x64] sm:$0xf]
        %v3482 = vld [vmem:[%s3455 + $0x68] sm:$0xf]
        %v3483 = vld [vmem:[%s3455 + $0x6c] sm:$0xf]
        %v3484 = vld [vmem:[%s3455 + $0x70] sm:$0xf]
        %v3485 = vld [vmem:[%s3455 + $0x74] sm:$0xf]
        %v3486 = vld [vmem:[%s3455 + $0x78] sm:$0xf]
        %v3487 = vld [vmem:[%s3455 + $0x7c] sm:$0xf]
        %v3490 = vrot.slane %v3130, 1
        %v3491 = vrot.slane %v3131, 1
        %v3526 = vunpack.c.l.b16 %v3456
        %v3527 = vunpack.c.l.b16 %v3457
        %v3528 = vunpack.c.l.b16 %v3458
        %v3529 = vunpack.c.l.b16 %v3459
        %v3530 = vunpack.c.l.b16 %v3460
        %v3531 = vunpack.c.l.b16 %v3461
        %v3532 = vunpack.c.l.b16 %v3462
        %v3533 = vunpack.c.l.b16 %v3463
        %v3534 = vunpack.c.l.b16 %v3464
        %v3535 = vunpack.c.l.b16 %v3465
        %v3536 = vunpack.c.l.b16 %v3466
        %v3537 = vunpack.c.l.b16 %v3467
        %v3538 = vunpack.c.l.b16 %v3468
        %v3539 = vunpack.c.l.b16 %v3469
        %v3540 = vunpack.c.l.b16 %v3470
        %v3541 = vunpack.c.l.b16 %v3471
        %v3542 = vunpack.c.l.b16 %v3472
        %v3543 = vunpack.c.l.b16 %v3473
        %v3544 = vunpack.c.l.b16 %v3474
        %v3545 = vunpack.c.l.b16 %v3475
        %v3546 = vunpack.c.l.b16 %v3476
        %v3547 = vunpack.c.l.b16 %v3477
        %v3548 = vunpack.c.l.b16 %v3478
        %v3549 = vunpack.c.l.b16 %v3479
        %v3550 = vunpack.c.l.b16 %v3480
        %v3551 = vunpack.c.l.b16 %v3481
        %v3552 = vunpack.c.l.b16 %v3482
        %v3553 = vunpack.c.l.b16 %v3483
        %v3554 = vunpack.c.l.b16 %v3484
        %v3555 = vunpack.c.l.b16 %v3485
        %v3556 = vunpack.c.l.b16 %v3486
        %v3557 = vunpack.c.l.b16 %v3487
        %v3558 = vpack.c.b16 %v3527, %v3526
        %v3559 = vpack.c.b16 %v3529, %v3528
        %v3560 = vpack.c.b16 %v3531, %v3530
        %v3561 = vpack.c.b16 %v3533, %v3532
        %v3562 = vpack.c.b16 %v3535, %v3534
        %v3563 = vpack.c.b16 %v3537, %v3536
        %v3564 = vpack.c.b16 %v3539, %v3538
        %v3565 = vpack.c.b16 %v3541, %v3540
        %v3566 = vpack.c.b16 %v3543, %v3542
        %v3567 = vpack.c.b16 %v3545, %v3544
        %v3568 = vpack.c.b16 %v3547, %v3546
        %v3569 = vpack.c.b16 %v3549, %v3548
        %v3570 = vpack.c.b16 %v3551, %v3550
        %v3571 = vpack.c.b16 %v3553, %v3552
        %v3572 = vpack.c.b16 %v3555, %v3554
        %v3573 = vpack.c.b16 %v3557, %v3556
        %3590 = vmatprep.subr.bf16.mxu0 0
        %3591 = vmatpush1.bf16.msra.mxu0 %v3565
        %3592 = vmatprep.subr.bf16.mxu0 0
        %3593 = vmatpush1.bf16.msra.mxu0 %v3564
        %3594 = vmatprep.subr.bf16.mxu0 0
        %3595 = vmatpush1.bf16.msra.mxu0 %v3563
        %3596 = vmatprep.subr.bf16.mxu0 0
        %3597 = vmatpush1.bf16.msra.mxu0 %v3562
        %3598 = vmatprep.subr.bf16.mxu0 0
        %3599 = vmatpush1.bf16.msra.mxu0 %v3561
        %3600 = vmatprep.subr.bf16.mxu0 0
        %3601 = vmatpush1.bf16.msra.mxu0 %v3560
        %3602 = vmatprep.subr.bf16.mxu0 0
        %3603 = vmatpush1.bf16.msra.mxu0 %v3559
        %3604 = vmatprep.subr.bf16.mxu0 0
        %3605 = vmatpush1.bf16.msra.mxu0 %v3558
        %3606 = vmatprep.subr.bf16.mxu0 0
        %3607 = vmatpush2.bf16.msra.mxu0 %v3573
        %3608 = vmatprep.subr.bf16.mxu0 0
        %3609 = vmatpush2.bf16.msra.mxu0 %v3572
        %3610 = vmatprep.subr.bf16.mxu0 0
        %3611 = vmatpush2.bf16.msra.mxu0 %v3571
        %3612 = vmatprep.subr.bf16.mxu0 0
        %3613 = vmatpush2.bf16.msra.mxu0 %v3570
        %3614 = vmatprep.subr.bf16.mxu0 0
        %3615 = vmatpush2.bf16.msra.mxu0 %v3569
        %3616 = vmatprep.subr.bf16.mxu0 0
        %3617 = vmatpush2.bf16.msra.mxu0 %v3568
        %3618 = vmatprep.subr.bf16.mxu0 0
        %3619 = vmatpush2.bf16.msra.mxu0 %v3567
        %3620 = vmatprep.subr.bf16.mxu0 0
        %3621 = vmatpush2.bf16.msra.mxu0 %v3566
        %3622 = vmatprep.mubr.bf16.mxu0 %v3491
        %3623 = vmatmul.mubr.bf16.gmra.mxu0 %v3490
        %v3624 = vpop.f32.mrf.mxu0
        %v3625 = vadd.f32 0.0, %v3624
        %v3626 = vpop.f32.mrf.mxu0
        %v3627 = vpop.f32.mrf.mxu0
        %v3628 = vadd.f32 0.0, %v3627
        %v3629 = vpop.f32.mrf.mxu0
        %3630 = vdwg.mxu0
        %v3631 = vadd.f32 %v3449, %v3625
        %v3632 = vadd.f32 %v3452, %v3628
        %v3634 = vlaneseq
        %v3635 = vshrl.u32 %v3634, 7
        %v3636 = vsub.s32 0, %v3635
        %v3637 = vrot.slane %v407, %v3636
        %v3639 = vadd.f32 %v3631, %v3637
        %v3640 = vadd.f32 %v3632, %v3637
        %v3641 = vmax.f32 %v3639, 0.0
        %v3642 = vmax.f32 %v3640, 0.0
        %3643 = vst.msk [vmem:[#allocation4] sm:$0xff] %vm362, %v3641
        %vm3644 = vcmask 403456
        %3645 = vst.msk [vmem:[#allocation4 + $0x8] sm:$0x7] %vm3644, %v3642
        %v3646 = vld [vmem:[%s1496] sm:$0xff]
        %v3647 = vld [vmem:[%s1496 + $0x8] sm:$0xff]
        %v3648 = vld [vmem:[%s1496 + $0x10] sm:$0x1f]
        %v3649 = vld [vmem:[%s1496 + $0x18] sm:$0x1f]
        %v3650 = vld [vmem:[%s3] sm:$0xf]
        %v3651 = vld [vmem:[%s3 + $0x4] sm:$0xf]
        %v3652 = vld [vmem:[%s3 + $0x8] sm:$0xf]
        %v3653 = vld [vmem:[%s3 + $0xc] sm:$0xf]
        %v3654 = vld [vmem:[%s3 + $0x10] sm:$0xf]
        %v3655 = vld [vmem:[%s3 + $0x14] sm:$0xf]
        %v3656 = vld [vmem:[%s3 + $0x18] sm:$0xf]
        %v3657 = vld [vmem:[%s3 + $0x1c] sm:$0xf]
        %v3658 = vld [vmem:[%s3 + $0x20] sm:$0xf]
        %v3659 = vld [vmem:[%s3 + $0x24] sm:$0xf]
        %v3660 = vld [vmem:[%s3 + $0x28] sm:$0xf]
        %v3661 = vld [vmem:[%s3 + $0x2c] sm:$0xf]
        %v3662 = vld [vmem:[%s3 + $0x30] sm:$0xf]
        %v3663 = vld [vmem:[%s3 + $0x34] sm:$0xf]
        %v3664 = vld [vmem:[%s3 + $0x38] sm:$0xf]
        %v3665 = vld [vmem:[%s3 + $0x3c] sm:$0xf]
        %v3666 = vld [vmem:[%s3 + $0x40] sm:$0xf]
        %v3667 = vld [vmem:[%s3 + $0x44] sm:$0xf]
        %v3668 = vld [vmem:[%s3 + $0x48] sm:$0xf]
        %v3669 = vld [vmem:[%s3 + $0x4c] sm:$0xf]
        %v3670 = vld [vmem:[%s3 + $0x50] sm:$0xf]
        %v3671 = vld [vmem:[%s3 + $0x54] sm:$0xf]
        %v3672 = vld [vmem:[%s3 + $0x58] sm:$0xf]
        %v3673 = vld [vmem:[%s3 + $0x5c] sm:$0xf]
        %v3674 = vld [vmem:[%s3 + $0x60] sm:$0xf]
        %v3675 = vld [vmem:[%s3 + $0x64] sm:$0xf]
        %v3676 = vld [vmem:[%s3 + $0x68] sm:$0xf]
        %v3677 = vld [vmem:[%s3 + $0x6c] sm:$0xf]
        %v3678 = vld [vmem:[%s3 + $0x70] sm:$0xf]
        %v3679 = vld [vmem:[%s3 + $0x74] sm:$0xf]
        %v3680 = vld [vmem:[%s3 + $0x78] sm:$0xf]
        %v3681 = vld [vmem:[%s3 + $0x7c] sm:$0xf]
        %v3682 = vpack.c.bf16 %v3648, %v3646
        %v3683 = vpack.c.bf16 %v3649, %v3647
        %v3684 = vld [vmem:[%s3132] sm:$0xf]
        %v3685 = vld [vmem:[%s3132 + $0x4] sm:$0xf]
        %v3686 = vld [vmem:[%s3132 + $0x8] sm:$0xf]
        %v3687 = vld [vmem:[%s3132 + $0xc] sm:$0xf]
        %v3688 = vld [vmem:[%s3132 + $0x10] sm:$0xf]
        %v3689 = vld [vmem:[%s3132 + $0x14] sm:$0xf]
        %v3690 = vld [vmem:[%s3132 + $0x18] sm:$0xf]
        %v3691 = vld [vmem:[%s3132 + $0x1c] sm:$0xf]
        %v3692 = vld [vmem:[%s3132 + $0x20] sm:$0xf]
        %v3693 = vld [vmem:[%s3132 + $0x24] sm:$0xf]
        %v3694 = vld [vmem:[%s3132 + $0x28] sm:$0xf]
        %v3695 = vld [vmem:[%s3132 + $0x2c] sm:$0xf]
        %v3696 = vld [vmem:[%s3132 + $0x30] sm:$0xf]
        %v3697 = vld [vmem:[%s3132 + $0x34] sm:$0xf]
        %v3698 = vld [vmem:[%s3132 + $0x38] sm:$0xf]
        %v3699 = vld [vmem:[%s3132 + $0x3c] sm:$0xf]
        %v3700 = vld [vmem:[%s3132 + $0x40] sm:$0xf]
        %v3701 = vld [vmem:[%s3132 + $0x44] sm:$0xf]
        %v3702 = vld [vmem:[%s3132 + $0x48] sm:$0xf]
        %v3703 = vld [vmem:[%s3132 + $0x4c] sm:$0xf]
        %v3704 = vld [vmem:[%s3132 + $0x50] sm:$0xf]
        %v3705 = vld [vmem:[%s3132 + $0x54] sm:$0xf]
        %v3706 = vld [vmem:[%s3132 + $0x58] sm:$0xf]
        %v3707 = vld [vmem:[%s3132 + $0x5c] sm:$0xf]
        %v3708 = vld [vmem:[%s3132 + $0x60] sm:$0xf]
        %v3709 = vld [vmem:[%s3132 + $0x64] sm:$0xf]
        %v3710 = vld [vmem:[%s3132 + $0x68] sm:$0xf]
        %v3711 = vld [vmem:[%s3132 + $0x6c] sm:$0xf]
        %v3712 = vld [vmem:[%s3132 + $0x70] sm:$0xf]
        %v3713 = vld [vmem:[%s3132 + $0x74] sm:$0xf]
        %v3714 = vld [vmem:[%s3132 + $0x78] sm:$0xf]
        %v3715 = vld [vmem:[%s3132 + $0x7c] sm:$0xf]
        %v3717 = vshrl.u32 %v3682, 16
        %v3719 = vshll.u32 %v3682, 16
        %v3721 = vrot.slane %v3719, 1
        %v3722 = vor.u32 %v3717, %v3721
        %v3724 = vshrl.u32 %v3683, 16
        %v3726 = vshll.u32 %v3683, 16
        %v3728 = vrot.slane %v3726, 1
        %v3729 = vor.u32 %v3724, %v3728
        %v3764 = vunpack.c.l.b16 %v3684
        %v3765 = vunpack.c.l.b16 %v3685
        %v3766 = vunpack.c.l.b16 %v3686
        %v3767 = vunpack.c.l.b16 %v3687
        %v3768 = vunpack.c.l.b16 %v3688
        %v3769 = vunpack.c.l.b16 %v3689
        %v3770 = vunpack.c.l.b16 %v3690
        %v3771 = vunpack.c.l.b16 %v3691
        %v3772 = vunpack.c.l.b16 %v3692
        %v3773 = vunpack.c.l.b16 %v3693
        %v3774 = vunpack.c.l.b16 %v3694
        %v3775 = vunpack.c.l.b16 %v3695
        %v3776 = vunpack.c.l.b16 %v3696
        %v3777 = vunpack.c.l.b16 %v3697
        %v3778 = vunpack.c.l.b16 %v3698
        %v3779 = vunpack.c.l.b16 %v3699
        %v3780 = vunpack.c.l.b16 %v3700
        %v3781 = vunpack.c.l.b16 %v3701
        %v3782 = vunpack.c.l.b16 %v3702
        %v3783 = vunpack.c.l.b16 %v3703
        %v3784 = vunpack.c.l.b16 %v3704
        %v3785 = vunpack.c.l.b16 %v3705
        %v3786 = vunpack.c.l.b16 %v3706
        %v3787 = vunpack.c.l.b16 %v3707
        %v3788 = vunpack.c.l.b16 %v3708
        %v3789 = vunpack.c.l.b16 %v3709
        %v3790 = vunpack.c.l.b16 %v3710
        %v3791 = vunpack.c.l.b16 %v3711
        %v3792 = vunpack.c.l.b16 %v3712
        %v3793 = vunpack.c.l.b16 %v3713
        %v3794 = vunpack.c.l.b16 %v3714
        %v3795 = vunpack.c.l.b16 %v3715
        %v3796 = vpack.c.b16 %v3765, %v3764
        %v3797 = vpack.c.b16 %v3767, %v3766
        %v3798 = vpack.c.b16 %v3769, %v3768
        %v3799 = vpack.c.b16 %v3771, %v3770
        %v3800 = vpack.c.b16 %v3773, %v3772
        %v3801 = vpack.c.b16 %v3775, %v3774
        %v3802 = vpack.c.b16 %v3777, %v3776
        %v3803 = vpack.c.b16 %v3779, %v3778
        %v3804 = vpack.c.b16 %v3781, %v3780
        %v3805 = vpack.c.b16 %v3783, %v3782
        %v3806 = vpack.c.b16 %v3785, %v3784
        %v3807 = vpack.c.b16 %v3787, %v3786
        %v3808 = vpack.c.b16 %v3789, %v3788
        %v3809 = vpack.c.b16 %v3791, %v3790
        %v3810 = vpack.c.b16 %v3793, %v3792
        %v3811 = vpack.c.b16 %v3795, %v3794
        %3828 = vmatprep.subr.bf16.mxu0 0
        %3829 = vmatpush1.bf16.msra.mxu0 %v3803
        %3830 = vmatprep.subr.bf16.mxu0 0
        %3831 = vmatpush1.bf16.msra.mxu0 %v3802
        %3832 = vmatprep.subr.bf16.mxu0 0
        %3833 = vmatpush1.bf16.msra.mxu0 %v3801
        %3834 = vmatprep.subr.bf16.mxu0 0
        %3835 = vmatpush1.bf16.msra.mxu0 %v3800
        %3836 = vmatprep.subr.bf16.mxu0 0
        %3837 = vmatpush1.bf16.msra.mxu0 %v3799
        %3838 = vmatprep.subr.bf16.mxu0 0
        %3839 = vmatpush1.bf16.msra.mxu0 %v3798
        %3840 = vmatprep.subr.bf16.mxu0 0
        %3841 = vmatpush1.bf16.msra.mxu0 %v3797
        %3842 = vmatprep.subr.bf16.mxu0 0
        %3843 = vmatpush1.bf16.msra.mxu0 %v3796
        %3844 = vmatprep.subr.bf16.mxu0 0
        %3845 = vmatpush2.bf16.msra.mxu0 %v3811
        %3846 = vmatprep.subr.bf16.mxu0 0
        %3847 = vmatpush2.bf16.msra.mxu0 %v3810
        %3848 = vmatprep.subr.bf16.mxu0 0
        %3849 = vmatpush2.bf16.msra.mxu0 %v3809
        %3850 = vmatprep.subr.bf16.mxu0 0
        %3851 = vmatpush2.bf16.msra.mxu0 %v3808
        %3852 = vmatprep.subr.bf16.mxu0 0
        %3853 = vmatpush2.bf16.msra.mxu0 %v3807
        %3854 = vmatprep.subr.bf16.mxu0 0
        %3855 = vmatpush2.bf16.msra.mxu0 %v3806
        %3856 = vmatprep.subr.bf16.mxu0 0
        %3857 = vmatpush2.bf16.msra.mxu0 %v3805
        %3858 = vmatprep.subr.bf16.mxu0 0
        %3859 = vmatpush2.bf16.msra.mxu0 %v3804
        %3860 = vmatprep.mubr.bf16.mxu0 %v3729
        %3861 = vmatmul.mubr.bf16.gmra.mxu0 %v3722
        %v3862 = vpop.f32.mrf.mxu0
        %v3863 = vadd.f32 0.0, %v3862
        %v3864 = vpop.f32.mrf.mxu0
        %v3865 = vpop.f32.mrf.mxu0
        %v3866 = vadd.f32 0.0, %v3865
        %v3867 = vpop.f32.mrf.mxu0
        %3868 = vdwg.mxu0
        %v3901 = vunpack.c.l.b16 %v3650
        %v3902 = vunpack.c.l.b16 %v3651
        %v3903 = vunpack.c.l.b16 %v3652
        %v3904 = vunpack.c.l.b16 %v3653
        %v3905 = vunpack.c.l.b16 %v3654
        %v3906 = vunpack.c.l.b16 %v3655
        %v3907 = vunpack.c.l.b16 %v3656
        %v3908 = vunpack.c.l.b16 %v3657
        %v3909 = vunpack.c.l.b16 %v3658
        %v3910 = vunpack.c.l.b16 %v3659
        %v3911 = vunpack.c.l.b16 %v3660
        %v3912 = vunpack.c.l.b16 %v3661
        %v3913 = vunpack.c.l.b16 %v3662
        %v3914 = vunpack.c.l.b16 %v3663
        %v3915 = vunpack.c.l.b16 %v3664
        %v3916 = vunpack.c.l.b16 %v3665
        %v3917 = vunpack.c.l.b16 %v3666
        %v3918 = vunpack.c.l.b16 %v3667
        %v3919 = vunpack.c.l.b16 %v3668
        %v3920 = vunpack.c.l.b16 %v3669
        %v3921 = vunpack.c.l.b16 %v3670
        %v3922 = vunpack.c.l.b16 %v3671
        %v3923 = vunpack.c.l.b16 %v3672
        %v3924 = vunpack.c.l.b16 %v3673
        %v3925 = vunpack.c.l.b16 %v3674
        %v3926 = vunpack.c.l.b16 %v3675
        %v3927 = vunpack.c.l.b16 %v3676
        %v3928 = vunpack.c.l.b16 %v3677
        %v3929 = vunpack.c.l.b16 %v3678
        %v3930 = vunpack.c.l.b16 %v3679
        %v3931 = vunpack.c.l.b16 %v3680
        %v3932 = vunpack.c.l.b16 %v3681
        %v3933 = vpack.c.b16 %v3902, %v3901
        %v3934 = vpack.c.b16 %v3904, %v3903
        %v3935 = vpack.c.b16 %v3906, %v3905
        %v3936 = vpack.c.b16 %v3908, %v3907
        %v3937 = vpack.c.b16 %v3910, %v3909
        %v3938 = vpack.c.b16 %v3912, %v3911
        %v3939 = vpack.c.b16 %v3914, %v3913
        %v3940 = vpack.c.b16 %v3916, %v3915
        %v3941 = vpack.c.b16 %v3918, %v3917
        %v3942 = vpack.c.b16 %v3920, %v3919
        %v3943 = vpack.c.b16 %v3922, %v3921
        %v3944 = vpack.c.b16 %v3924, %v3923
        %v3945 = vpack.c.b16 %v3926, %v3925
        %v3946 = vpack.c.b16 %v3928, %v3927
        %v3947 = vpack.c.b16 %v3930, %v3929
        %v3948 = vpack.c.b16 %v3932, %v3931
        %3965 = vmatprep.subr.bf16.mxu0 0
        %3966 = vmatpush1.bf16.msra.mxu0 %v3940
        %3967 = vmatprep.subr.bf16.mxu0 0
        %3968 = vmatpush1.bf16.msra.mxu0 %v3939
        %3969 = vmatprep.subr.bf16.mxu0 0
        %3970 = vmatpush1.bf16.msra.mxu0 %v3938
        %3971 = vmatprep.subr.bf16.mxu0 0
        %3972 = vmatpush1.bf16.msra.mxu0 %v3937
        %3973 = vmatprep.subr.bf16.mxu0 0
        %3974 = vmatpush1.bf16.msra.mxu0 %v3936
        %3975 = vmatprep.subr.bf16.mxu0 0
        %3976 = vmatpush1.bf16.msra.mxu0 %v3935
        %3977 = vmatprep.subr.bf16.mxu0 0
        %3978 = vmatpush1.bf16.msra.mxu0 %v3934
        %3979 = vmatprep.subr.bf16.mxu0 0
        %3980 = vmatpush1.bf16.msra.mxu0 %v3933
        %3981 = vmatprep.subr.bf16.mxu0 0
        %3982 = vmatpush2.bf16.msra.mxu0 %v3948
        %3983 = vmatprep.subr.bf16.mxu0 0
        %3984 = vmatpush2.bf16.msra.mxu0 %v3947
        %3985 = vmatprep.subr.bf16.mxu0 0
        %3986 = vmatpush2.bf16.msra.mxu0 %v3946
        %3987 = vmatprep.subr.bf16.mxu0 0
        %3988 = vmatpush2.bf16.msra.mxu0 %v3945
        %3989 = vmatprep.subr.bf16.mxu0 0
        %3990 = vmatpush2.bf16.msra.mxu0 %v3944
        %3991 = vmatprep.subr.bf16.mxu0 0
        %3992 = vmatpush2.bf16.msra.mxu0 %v3943
        %3993 = vmatprep.subr.bf16.mxu0 0
        %3994 = vmatpush2.bf16.msra.mxu0 %v3942
        %3995 = vmatprep.subr.bf16.mxu0 0
        %3996 = vmatpush2.bf16.msra.mxu0 %v3941
        %3997 = vmatprep.mubr.bf16.mxu0 %v3683
        %3998 = vmatmul.mubr.bf16.gmra.mxu0 %v3682
        %v3999 = vpop.f32.mrf.mxu0
        %v4000 = vadd.f32 %v3863, %v3999
        %v4001 = vpop.f32.mrf.mxu0
        %v4002 = vpop.f32.mrf.mxu0
        %v4003 = vadd.f32 %v3866, %v4002
        %v4004 = vpop.f32.mrf.mxu0
        %4005 = vdwg.mxu0
        %v4006 = vld [vmem:[%s3455] sm:$0xf]
        %v4007 = vld [vmem:[%s3455 + $0x4] sm:$0xf]
        %v4008 = vld [vmem:[%s3455 + $0x8] sm:$0xf]
        %v4009 = vld [vmem:[%s3455 + $0xc] sm:$0xf]
        %v4010 = vld [vmem:[%s3455 + $0x10] sm:$0xf]
        %v4011 = vld [vmem:[%s3455 + $0x14] sm:$0xf]
        %v4012 = vld [vmem:[%s3455 + $0x18] sm:$0xf]
        %v4013 = vld [vmem:[%s3455 + $0x1c] sm:$0xf]
        %v4014 = vld [vmem:[%s3455 + $0x20] sm:$0xf]
        %v4015 = vld [vmem:[%s3455 + $0x24] sm:$0xf]
        %v4016 = vld [vmem:[%s3455 + $0x28] sm:$0xf]
        %v4017 = vld [vmem:[%s3455 + $0x2c] sm:$0xf]
        %v4018 = vld [vmem:[%s3455 + $0x30] sm:$0xf]
        %v4019 = vld [vmem:[%s3455 + $0x34] sm:$0xf]
        %v4020 = vld [vmem:[%s3455 + $0x38] sm:$0xf]
        %v4021 = vld [vmem:[%s3455 + $0x3c] sm:$0xf]
        %v4022 = vld [vmem:[%s3455 + $0x40] sm:$0xf]
        %v4023 = vld [vmem:[%s3455 + $0x44] sm:$0xf]
        %v4024 = vld [vmem:[%s3455 + $0x48] sm:$0xf]
        %v4025 = vld [vmem:[%s3455 + $0x4c] sm:$0xf]
        %v4026 = vld [vmem:[%s3455 + $0x50] sm:$0xf]
        %v4027 = vld [vmem:[%s3455 + $0x54] sm:$0xf]
        %v4028 = vld [vmem:[%s3455 + $0x58] sm:$0xf]
        %v4029 = vld [vmem:[%s3455 + $0x5c] sm:$0xf]
        %v4030 = vld [vmem:[%s3455 + $0x60] sm:$0xf]
        %v4031 = vld [vmem:[%s3455 + $0x64] sm:$0xf]
        %v4032 = vld [vmem:[%s3455 + $0x68] sm:$0xf]
        %v4033 = vld [vmem:[%s3455 + $0x6c] sm:$0xf]
        %v4034 = vld [vmem:[%s3455 + $0x70] sm:$0xf]
        %v4035 = vld [vmem:[%s3455 + $0x74] sm:$0xf]
        %v4036 = vld [vmem:[%s3455 + $0x78] sm:$0xf]
        %v4037 = vld [vmem:[%s3455 + $0x7c] sm:$0xf]
        %v4040 = vrot.slane %v3682, 1
        %v4041 = vrot.slane %v3683, 1
        %v4076 = vunpack.c.l.b16 %v4006
        %v4077 = vunpack.c.l.b16 %v4007
        %v4078 = vunpack.c.l.b16 %v4008
        %v4079 = vunpack.c.l.b16 %v4009
        %v4080 = vunpack.c.l.b16 %v4010
        %v4081 = vunpack.c.l.b16 %v4011
        %v4082 = vunpack.c.l.b16 %v4012
        %v4083 = vunpack.c.l.b16 %v4013
        %v4084 = vunpack.c.l.b16 %v4014
        %v4085 = vunpack.c.l.b16 %v4015
        %v4086 = vunpack.c.l.b16 %v4016
        %v4087 = vunpack.c.l.b16 %v4017
        %v4088 = vunpack.c.l.b16 %v4018
        %v4089 = vunpack.c.l.b16 %v4019
        %v4090 = vunpack.c.l.b16 %v4020
        %v4091 = vunpack.c.l.b16 %v4021
        %v4092 = vunpack.c.l.b16 %v4022
        %v4093 = vunpack.c.l.b16 %v4023
        %v4094 = vunpack.c.l.b16 %v4024
        %v4095 = vunpack.c.l.b16 %v4025
        %v4096 = vunpack.c.l.b16 %v4026
        %v4097 = vunpack.c.l.b16 %v4027
        %v4098 = vunpack.c.l.b16 %v4028
        %v4099 = vunpack.c.l.b16 %v4029
        %v4100 = vunpack.c.l.b16 %v4030
        %v4101 = vunpack.c.l.b16 %v4031
        %v4102 = vunpack.c.l.b16 %v4032
        %v4103 = vunpack.c.l.b16 %v4033
        %v4104 = vunpack.c.l.b16 %v4034
        %v4105 = vunpack.c.l.b16 %v4035
        %v4106 = vunpack.c.l.b16 %v4036
        %v4107 = vunpack.c.l.b16 %v4037
        %v4108 = vpack.c.b16 %v4077, %v4076
        %v4109 = vpack.c.b16 %v4079, %v4078
        %v4110 = vpack.c.b16 %v4081, %v4080
        %v4111 = vpack.c.b16 %v4083, %v4082
        %v4112 = vpack.c.b16 %v4085, %v4084
        %v4113 = vpack.c.b16 %v4087, %v4086
        %v4114 = vpack.c.b16 %v4089, %v4088
        %v4115 = vpack.c.b16 %v4091, %v4090
        %v4116 = vpack.c.b16 %v4093, %v4092
        %v4117 = vpack.c.b16 %v4095, %v4094
        %v4118 = vpack.c.b16 %v4097, %v4096
        %v4119 = vpack.c.b16 %v4099, %v4098
        %v4120 = vpack.c.b16 %v4101, %v4100
        %v4121 = vpack.c.b16 %v4103, %v4102
        %v4122 = vpack.c.b16 %v4105, %v4104
        %v4123 = vpack.c.b16 %v4107, %v4106
        %4140 = vmatprep.subr.bf16.mxu0 0
        %4141 = vmatpush1.bf16.msra.mxu0 %v4115
        %4142 = vmatprep.subr.bf16.mxu0 0
        %4143 = vmatpush1.bf16.msra.mxu0 %v4114
        %4144 = vmatprep.subr.bf16.mxu0 0
        %4145 = vmatpush1.bf16.msra.mxu0 %v4113
        %4146 = vmatprep.subr.bf16.mxu0 0
        %4147 = vmatpush1.bf16.msra.mxu0 %v4112
        %4148 = vmatprep.subr.bf16.mxu0 0
        %4149 = vmatpush1.bf16.msra.mxu0 %v4111
        %4150 = vmatprep.subr.bf16.mxu0 0
        %4151 = vmatpush1.bf16.msra.mxu0 %v4110
        %4152 = vmatprep.subr.bf16.mxu0 0
        %4153 = vmatpush1.bf16.msra.mxu0 %v4109
        %4154 = vmatprep.subr.bf16.mxu0 0
        %4155 = vmatpush1.bf16.msra.mxu0 %v4108
        %4156 = vmatprep.subr.bf16.mxu0 0
        %4157 = vmatpush2.bf16.msra.mxu0 %v4123
        %4158 = vmatprep.subr.bf16.mxu0 0
        %4159 = vmatpush2.bf16.msra.mxu0 %v4122
        %4160 = vmatprep.subr.bf16.mxu0 0
        %4161 = vmatpush2.bf16.msra.mxu0 %v4121
        %4162 = vmatprep.subr.bf16.mxu0 0
        %4163 = vmatpush2.bf16.msra.mxu0 %v4120
        %4164 = vmatprep.subr.bf16.mxu0 0
        %4165 = vmatpush2.bf16.msra.mxu0 %v4119
        %4166 = vmatprep.subr.bf16.mxu0 0
        %4167 = vmatpush2.bf16.msra.mxu0 %v4118
        %4168 = vmatprep.subr.bf16.mxu0 0
        %4169 = vmatpush2.bf16.msra.mxu0 %v4117
        %4170 = vmatprep.subr.bf16.mxu0 0
        %4171 = vmatpush2.bf16.msra.mxu0 %v4116
        %4172 = vmatprep.mubr.bf16.mxu0 %v4041
        %4173 = vmatmul.mubr.bf16.gmra.mxu0 %v4040
        %v4174 = vpop.f32.mrf.mxu0
        %v4175 = vadd.f32 0.0, %v4174
        %v4176 = vpop.f32.mrf.mxu0
        %v4177 = vpop.f32.mrf.mxu0
        %v4178 = vadd.f32 0.0, %v4177
        %v4179 = vpop.f32.mrf.mxu0
        %4180 = vdwg.mxu0
        %v4181 = vadd.f32 %v4000, %v4175
        %v4182 = vadd.f32 %v4003, %v4178
        %v4183 = vadd.f32 %v4181, %v3637
        %v4184 = vadd.f32 %v4182, %v3637
        %v4185 = vmax.f32 %v4183, 0.0
        %v4186 = vmax.f32 %v4184, 0.0
        %s4187 = scalar_lea.vmem [#allocation4], 16
        %4188 = vst.msk [vmem:[%s4187] sm:$0xff] %vm362, %v4185
        %4189 = vst.msk [vmem:[%s4187 + $0x8] sm:$0x7] %vm3644, %v4186
        %v4190 = vld [vmem:[%s2164] sm:$0xff]
        %v4191 = vld [vmem:[%s2164 + $0x8] sm:$0xff]
        %v4192 = vld [vmem:[%s2164 + $0x10] sm:$0x1f]
        %v4193 = vld [vmem:[%s2164 + $0x18] sm:$0x1f]
        %v4194 = vld [vmem:[%s3] sm:$0xf]
        %v4195 = vld [vmem:[%s3 + $0x4] sm:$0xf]
        %v4196 = vld [vmem:[%s3 + $0x8] sm:$0xf]
        %v4197 = vld [vmem:[%s3 + $0xc] sm:$0xf]
        %v4198 = vld [vmem:[%s3 + $0x10] sm:$0xf]
        %v4199 = vld [vmem:[%s3 + $0x14] sm:$0xf]
        %v4200 = vld [vmem:[%s3 + $0x18] sm:$0xf]
        %v4201 = vld [vmem:[%s3 + $0x1c] sm:$0xf]
        %v4202 = vld [vmem:[%s3 + $0x20] sm:$0xf]
        %v4203 = vld [vmem:[%s3 + $0x24] sm:$0xf]
        %v4204 = vld [vmem:[%s3 + $0x28] sm:$0xf]
        %v4205 = vld [vmem:[%s3 + $0x2c] sm:$0xf]
        %v4206 = vld [vmem:[%s3 + $0x30] sm:$0xf]
        %v4207 = vld [vmem:[%s3 + $0x34] sm:$0xf]
        %v4208 = vld [vmem:[%s3 + $0x38] sm:$0xf]
        %v4209 = vld [vmem:[%s3 + $0x3c] sm:$0xf]
        %v4210 = vld [vmem:[%s3 + $0x40] sm:$0xf]
        %v4211 = vld [vmem:[%s3 + $0x44] sm:$0xf]
        %v4212 = vld [vmem:[%s3 + $0x48] sm:$0xf]
        %v4213 = vld [vmem:[%s3 + $0x4c] sm:$0xf]
        %v4214 = vld [vmem:[%s3 + $0x50] sm:$0xf]
        %v4215 = vld [vmem:[%s3 + $0x54] sm:$0xf]
        %v4216 = vld [vmem:[%s3 + $0x58] sm:$0xf]
        %v4217 = vld [vmem:[%s3 + $0x5c] sm:$0xf]
        %v4218 = vld [vmem:[%s3 + $0x60] sm:$0xf]
        %v4219 = vld [vmem:[%s3 + $0x64] sm:$0xf]
        %v4220 = vld [vmem:[%s3 + $0x68] sm:$0xf]
        %v4221 = vld [vmem:[%s3 + $0x6c] sm:$0xf]
        %v4222 = vld [vmem:[%s3 + $0x70] sm:$0xf]
        %v4223 = vld [vmem:[%s3 + $0x74] sm:$0xf]
        %v4224 = vld [vmem:[%s3 + $0x78] sm:$0xf]
        %v4225 = vld [vmem:[%s3 + $0x7c] sm:$0xf]
        %v4226 = vpack.c.bf16 %v4192, %v4190
        %v4227 = vpack.c.bf16 %v4193, %v4191
        %v4228 = vld [vmem:[%s3132] sm:$0xf]
        %v4229 = vld [vmem:[%s3132 + $0x4] sm:$0xf]
        %v4230 = vld [vmem:[%s3132 + $0x8] sm:$0xf]
        %v4231 = vld [vmem:[%s3132 + $0xc] sm:$0xf]
        %v4232 = vld [vmem:[%s3132 + $0x10] sm:$0xf]
        %v4233 = vld [vmem:[%s3132 + $0x14] sm:$0xf]
        %v4234 = vld [vmem:[%s3132 + $0x18] sm:$0xf]
        %v4235 = vld [vmem:[%s3132 + $0x1c] sm:$0xf]
        %v4236 = vld [vmem:[%s3132 + $0x20] sm:$0xf]
        %v4237 = vld [vmem:[%s3132 + $0x24] sm:$0xf]
        %v4238 = vld [vmem:[%s3132 + $0x28] sm:$0xf]
        %v4239 = vld [vmem:[%s3132 + $0x2c] sm:$0xf]
        %v4240 = vld [vmem:[%s3132 + $0x30] sm:$0xf]
        %v4241 = vld [vmem:[%s3132 + $0x34] sm:$0xf]
        %v4242 = vld [vmem:[%s3132 + $0x38] sm:$0xf]
        %v4243 = vld [vmem:[%s3132 + $0x3c] sm:$0xf]
        %v4244 = vld [vmem:[%s3132 + $0x40] sm:$0xf]
        %v4245 = vld [vmem:[%s3132 + $0x44] sm:$0xf]
        %v4246 = vld [vmem:[%s3132 + $0x48] sm:$0xf]
        %v4247 = vld [vmem:[%s3132 + $0x4c] sm:$0xf]
        %v4248 = vld [vmem:[%s3132 + $0x50] sm:$0xf]
        %v4249 = vld [vmem:[%s3132 + $0x54] sm:$0xf]
        %v4250 = vld [vmem:[%s3132 + $0x58] sm:$0xf]
        %v4251 = vld [vmem:[%s3132 + $0x5c] sm:$0xf]
        %v4252 = vld [vmem:[%s3132 + $0x60] sm:$0xf]
        %v4253 = vld [vmem:[%s3132 + $0x64] sm:$0xf]
        %v4254 = vld [vmem:[%s3132 + $0x68] sm:$0xf]
        %v4255 = vld [vmem:[%s3132 + $0x6c] sm:$0xf]
        %v4256 = vld [vmem:[%s3132 + $0x70] sm:$0xf]
        %v4257 = vld [vmem:[%s3132 + $0x74] sm:$0xf]
        %v4258 = vld [vmem:[%s3132 + $0x78] sm:$0xf]
        %v4259 = vld [vmem:[%s3132 + $0x7c] sm:$0xf]
        %v4261 = vshrl.u32 %v4226, 16
        %v4263 = vshll.u32 %v4226, 16
        %v4265 = vrot.slane %v4263, 1
        %v4266 = vor.u32 %v4261, %v4265
        %v4268 = vshrl.u32 %v4227, 16
        %v4270 = vshll.u32 %v4227, 16
        %v4272 = vrot.slane %v4270, 1
        %v4273 = vor.u32 %v4268, %v4272
        %v4308 = vunpack.c.l.b16 %v4228
        %v4309 = vunpack.c.l.b16 %v4229
        %v4310 = vunpack.c.l.b16 %v4230
        %v4311 = vunpack.c.l.b16 %v4231
        %v4312 = vunpack.c.l.b16 %v4232
        %v4313 = vunpack.c.l.b16 %v4233
        %v4314 = vunpack.c.l.b16 %v4234
        %v4315 = vunpack.c.l.b16 %v4235
        %v4316 = vunpack.c.l.b16 %v4236
        %v4317 = vunpack.c.l.b16 %v4237
        %v4318 = vunpack.c.l.b16 %v4238
        %v4319 = vunpack.c.l.b16 %v4239
        %v4320 = vunpack.c.l.b16 %v4240
        %v4321 = vunpack.c.l.b16 %v4241
        %v4322 = vunpack.c.l.b16 %v4242
        %v4323 = vunpack.c.l.b16 %v4243
        %v4324 = vunpack.c.l.b16 %v4244
        %v4325 = vunpack.c.l.b16 %v4245
        %v4326 = vunpack.c.l.b16 %v4246
        %v4327 = vunpack.c.l.b16 %v4247
        %v4328 = vunpack.c.l.b16 %v4248
        %v4329 = vunpack.c.l.b16 %v4249
        %v4330 = vunpack.c.l.b16 %v4250
        %v4331 = vunpack.c.l.b16 %v4251
        %v4332 = vunpack.c.l.b16 %v4252
        %v4333 = vunpack.c.l.b16 %v4253
        %v4334 = vunpack.c.l.b16 %v4254
        %v4335 = vunpack.c.l.b16 %v4255
        %v4336 = vunpack.c.l.b16 %v4256
        %v4337 = vunpack.c.l.b16 %v4257
        %v4338 = vunpack.c.l.b16 %v4258
        %v4339 = vunpack.c.l.b16 %v4259
        %v4340 = vpack.c.b16 %v4309, %v4308
        %v4341 = vpack.c.b16 %v4311, %v4310
        %v4342 = vpack.c.b16 %v4313, %v4312
        %v4343 = vpack.c.b16 %v4315, %v4314
        %v4344 = vpack.c.b16 %v4317, %v4316
        %v4345 = vpack.c.b16 %v4319, %v4318
        %v4346 = vpack.c.b16 %v4321, %v4320
        %v4347 = vpack.c.b16 %v4323, %v4322
        %v4348 = vpack.c.b16 %v4325, %v4324
        %v4349 = vpack.c.b16 %v4327, %v4326
        %v4350 = vpack.c.b16 %v4329, %v4328
        %v4351 = vpack.c.b16 %v4331, %v4330
        %v4352 = vpack.c.b16 %v4333, %v4332
        %v4353 = vpack.c.b16 %v4335, %v4334
        %v4354 = vpack.c.b16 %v4337, %v4336
        %v4355 = vpack.c.b16 %v4339, %v4338
        %4372 = vmatprep.subr.bf16.mxu0 0
        %4373 = vmatpush1.bf16.msra.mxu0 %v4347
        %4374 = vmatprep.subr.bf16.mxu0 0
        %4375 = vmatpush1.bf16.msra.mxu0 %v4346
        %4376 = vmatprep.subr.bf16.mxu0 0
        %4377 = vmatpush1.bf16.msra.mxu0 %v4345
        %4378 = vmatprep.subr.bf16.mxu0 0
        %4379 = vmatpush1.bf16.msra.mxu0 %v4344
        %4380 = vmatprep.subr.bf16.mxu0 0
        %4381 = vmatpush1.bf16.msra.mxu0 %v4343
        %4382 = vmatprep.subr.bf16.mxu0 0
        %4383 = vmatpush1.bf16.msra.mxu0 %v4342
        %4384 = vmatprep.subr.bf16.mxu0 0
        %4385 = vmatpush1.bf16.msra.mxu0 %v4341
        %4386 = vmatprep.subr.bf16.mxu0 0
        %4387 = vmatpush1.bf16.msra.mxu0 %v4340
        %4388 = vmatprep.subr.bf16.mxu0 0
        %4389 = vmatpush2.bf16.msra.mxu0 %v4355
        %4390 = vmatprep.subr.bf16.mxu0 0
        %4391 = vmatpush2.bf16.msra.mxu0 %v4354
        %4392 = vmatprep.subr.bf16.mxu0 0
        %4393 = vmatpush2.bf16.msra.mxu0 %v4353
        %4394 = vmatprep.subr.bf16.mxu0 0
        %4395 = vmatpush2.bf16.msra.mxu0 %v4352
        %4396 = vmatprep.subr.bf16.mxu0 0
        %4397 = vmatpush2.bf16.msra.mxu0 %v4351
        %4398 = vmatprep.subr.bf16.mxu0 0
        %4399 = vmatpush2.bf16.msra.mxu0 %v4350
        %4400 = vmatprep.subr.bf16.mxu0 0
        %4401 = vmatpush2.bf16.msra.mxu0 %v4349
        %4402 = vmatprep.subr.bf16.mxu0 0
        %4403 = vmatpush2.bf16.msra.mxu0 %v4348
        %4404 = vmatprep.mubr.bf16.mxu0 %v4273
        %4405 = vmatmul.mubr.bf16.gmra.mxu0 %v4266
        %v4406 = vpop.f32.mrf.mxu0
        %v4407 = vadd.f32 0.0, %v4406
        %v4408 = vpop.f32.mrf.mxu0
        %v4409 = vpop.f32.mrf.mxu0
        %v4410 = vadd.f32 0.0, %v4409
        %v4411 = vpop.f32.mrf.mxu0
        %4412 = vdwg.mxu0
        %v4445 = vunpack.c.l.b16 %v4194
        %v4446 = vunpack.c.l.b16 %v4195
        %v4447 = vunpack.c.l.b16 %v4196
        %v4448 = vunpack.c.l.b16 %v4197
        %v4449 = vunpack.c.l.b16 %v4198
        %v4450 = vunpack.c.l.b16 %v4199
        %v4451 = vunpack.c.l.b16 %v4200
        %v4452 = vunpack.c.l.b16 %v4201
        %v4453 = vunpack.c.l.b16 %v4202
        %v4454 = vunpack.c.l.b16 %v4203
        %v4455 = vunpack.c.l.b16 %v4204
        %v4456 = vunpack.c.l.b16 %v4205
        %v4457 = vunpack.c.l.b16 %v4206
        %v4458 = vunpack.c.l.b16 %v4207
        %v4459 = vunpack.c.l.b16 %v4208
        %v4460 = vunpack.c.l.b16 %v4209
        %v4461 = vunpack.c.l.b16 %v4210
        %v4462 = vunpack.c.l.b16 %v4211
        %v4463 = vunpack.c.l.b16 %v4212
        %v4464 = vunpack.c.l.b16 %v4213
        %v4465 = vunpack.c.l.b16 %v4214
        %v4466 = vunpack.c.l.b16 %v4215
        %v4467 = vunpack.c.l.b16 %v4216
        %v4468 = vunpack.c.l.b16 %v4217
        %v4469 = vunpack.c.l.b16 %v4218
        %v4470 = vunpack.c.l.b16 %v4219
        %v4471 = vunpack.c.l.b16 %v4220
        %v4472 = vunpack.c.l.b16 %v4221
        %v4473 = vunpack.c.l.b16 %v4222
        %v4474 = vunpack.c.l.b16 %v4223
        %v4475 = vunpack.c.l.b16 %v4224
        %v4476 = vunpack.c.l.b16 %v4225
        %v4477 = vpack.c.b16 %v4446, %v4445
        %v4478 = vpack.c.b16 %v4448, %v4447
        %v4479 = vpack.c.b16 %v4450, %v4449
        %v4480 = vpack.c.b16 %v4452, %v4451
        %v4481 = vpack.c.b16 %v4454, %v4453
        %v4482 = vpack.c.b16 %v4456, %v4455
        %v4483 = vpack.c.b16 %v4458, %v4457
        %v4484 = vpack.c.b16 %v4460, %v4459
        %v4485 = vpack.c.b16 %v4462, %v4461
        %v4486 = vpack.c.b16 %v4464, %v4463
        %v4487 = vpack.c.b16 %v4466, %v4465
        %v4488 = vpack.c.b16 %v4468, %v4467
        %v4489 = vpack.c.b16 %v4470, %v4469
        %v4490 = vpack.c.b16 %v4472, %v4471
        %v4491 = vpack.c.b16 %v4474, %v4473
        %v4492 = vpack.c.b16 %v4476, %v4475
        %4509 = vmatprep.subr.bf16.mxu0 0
        %4510 = vmatpush1.bf16.msra.mxu0 %v4484
        %4511 = vmatprep.subr.bf16.mxu0 0
        %4512 = vmatpush1.bf16.msra.mxu0 %v4483
        %4513 = vmatprep.subr.bf16.mxu0 0
        %4514 = vmatpush1.bf16.msra.mxu0 %v4482
        %4515 = vmatprep.subr.bf16.mxu0 0
        %4516 = vmatpush1.bf16.msra.mxu0 %v4481
        %4517 = vmatprep.subr.bf16.mxu0 0
        %4518 = vmatpush1.bf16.msra.mxu0 %v4480
        %4519 = vmatprep.subr.bf16.mxu0 0
        %4520 = vmatpush1.bf16.msra.mxu0 %v4479
        %4521 = vmatprep.subr.bf16.mxu0 0
        %4522 = vmatpush1.bf16.msra.mxu0 %v4478
        %4523 = vmatprep.subr.bf16.mxu0 0
        %4524 = vmatpush1.bf16.msra.mxu0 %v4477
        %4525 = vmatprep.subr.bf16.mxu0 0
        %4526 = vmatpush2.bf16.msra.mxu0 %v4492
        %4527 = vmatprep.subr.bf16.mxu0 0
        %4528 = vmatpush2.bf16.msra.mxu0 %v4491
        %4529 = vmatprep.subr.bf16.mxu0 0
        %4530 = vmatpush2.bf16.msra.mxu0 %v4490
        %4531 = vmatprep.subr.bf16.mxu0 0
        %4532 = vmatpush2.bf16.msra.mxu0 %v4489
        %4533 = vmatprep.subr.bf16.mxu0 0
        %4534 = vmatpush2.bf16.msra.mxu0 %v4488
        %4535 = vmatprep.subr.bf16.mxu0 0
        %4536 = vmatpush2.bf16.msra.mxu0 %v4487
        %4537 = vmatprep.subr.bf16.mxu0 0
        %4538 = vmatpush2.bf16.msra.mxu0 %v4486
        %4539 = vmatprep.subr.bf16.mxu0 0
        %4540 = vmatpush2.bf16.msra.mxu0 %v4485
        %4541 = vmatprep.mubr.bf16.mxu0 %v4227
        %4542 = vmatmul.mubr.bf16.gmra.mxu0 %v4226
        %v4543 = vpop.f32.mrf.mxu0
        %v4544 = vadd.f32 %v4407, %v4543
        %v4545 = vpop.f32.mrf.mxu0
        %v4546 = vpop.f32.mrf.mxu0
        %v4547 = vadd.f32 %v4410, %v4546
        %v4548 = vpop.f32.mrf.mxu0
        %4549 = vdwg.mxu0
        %v4550 = vld [vmem:[%s3455] sm:$0xf]
        %v4551 = vld [vmem:[%s3455 + $0x4] sm:$0xf]
        %v4552 = vld [vmem:[%s3455 + $0x8] sm:$0xf]
        %v4553 = vld [vmem:[%s3455 + $0xc] sm:$0xf]
        %v4554 = vld [vmem:[%s3455 + $0x10] sm:$0xf]
        %v4555 = vld [vmem:[%s3455 + $0x14] sm:$0xf]
        %v4556 = vld [vmem:[%s3455 + $0x18] sm:$0xf]
        %v4557 = vld [vmem:[%s3455 + $0x1c] sm:$0xf]
        %v4558 = vld [vmem:[%s3455 + $0x20] sm:$0xf]
        %v4559 = vld [vmem:[%s3455 + $0x24] sm:$0xf]
        %v4560 = vld [vmem:[%s3455 + $0x28] sm:$0xf]
        %v4561 = vld [vmem:[%s3455 + $0x2c] sm:$0xf]
        %v4562 = vld [vmem:[%s3455 + $0x30] sm:$0xf]
        %v4563 = vld [vmem:[%s3455 + $0x34] sm:$0xf]
        %v4564 = vld [vmem:[%s3455 + $0x38] sm:$0xf]
        %v4565 = vld [vmem:[%s3455 + $0x3c] sm:$0xf]
        %v4566 = vld [vmem:[%s3455 + $0x40] sm:$0xf]
        %v4567 = vld [vmem:[%s3455 + $0x44] sm:$0xf]
        %v4568 = vld [vmem:[%s3455 + $0x48] sm:$0xf]
        %v4569 = vld [vmem:[%s3455 + $0x4c] sm:$0xf]
        %v4570 = vld [vmem:[%s3455 + $0x50] sm:$0xf]
        %v4571 = vld [vmem:[%s3455 + $0x54] sm:$0xf]
        %v4572 = vld [vmem:[%s3455 + $0x58] sm:$0xf]
        %v4573 = vld [vmem:[%s3455 + $0x5c] sm:$0xf]
        %v4574 = vld [vmem:[%s3455 + $0x60] sm:$0xf]
        %v4575 = vld [vmem:[%s3455 + $0x64] sm:$0xf]
        %v4576 = vld [vmem:[%s3455 + $0x68] sm:$0xf]
        %v4577 = vld [vmem:[%s3455 + $0x6c] sm:$0xf]
        %v4578 = vld [vmem:[%s3455 + $0x70] sm:$0xf]
        %v4579 = vld [vmem:[%s3455 + $0x74] sm:$0xf]
        %v4580 = vld [vmem:[%s3455 + $0x78] sm:$0xf]
        %v4581 = vld [vmem:[%s3455 + $0x7c] sm:$0xf]
        %v4584 = vrot.slane %v4226, 1
        %v4585 = vrot.slane %v4227, 1
        %v4620 = vunpack.c.l.b16 %v4550
        %v4621 = vunpack.c.l.b16 %v4551
        %v4622 = vunpack.c.l.b16 %v4552
        %v4623 = vunpack.c.l.b16 %v4553
        %v4624 = vunpack.c.l.b16 %v4554
        %v4625 = vunpack.c.l.b16 %v4555
        %v4626 = vunpack.c.l.b16 %v4556
        %v4627 = vunpack.c.l.b16 %v4557
        %v4628 = vunpack.c.l.b16 %v4558
        %v4629 = vunpack.c.l.b16 %v4559
        %v4630 = vunpack.c.l.b16 %v4560
        %v4631 = vunpack.c.l.b16 %v4561
        %v4632 = vunpack.c.l.b16 %v4562
        %v4633 = vunpack.c.l.b16 %v4563
        %v4634 = vunpack.c.l.b16 %v4564
        %v4635 = vunpack.c.l.b16 %v4565
        %v4636 = vunpack.c.l.b16 %v4566
        %v4637 = vunpack.c.l.b16 %v4567
        %v4638 = vunpack.c.l.b16 %v4568
        %v4639 = vunpack.c.l.b16 %v4569
        %v4640 = vunpack.c.l.b16 %v4570
        %v4641 = vunpack.c.l.b16 %v4571
        %v4642 = vunpack.c.l.b16 %v4572
        %v4643 = vunpack.c.l.b16 %v4573
        %v4644 = vunpack.c.l.b16 %v4574
        %v4645 = vunpack.c.l.b16 %v4575
        %v4646 = vunpack.c.l.b16 %v4576
        %v4647 = vunpack.c.l.b16 %v4577
        %v4648 = vunpack.c.l.b16 %v4578
        %v4649 = vunpack.c.l.b16 %v4579
        %v4650 = vunpack.c.l.b16 %v4580
        %v4651 = vunpack.c.l.b16 %v4581
        %v4652 = vpack.c.b16 %v4621, %v4620
        %v4653 = vpack.c.b16 %v4623, %v4622
        %v4654 = vpack.c.b16 %v4625, %v4624
        %v4655 = vpack.c.b16 %v4627, %v4626
        %v4656 = vpack.c.b16 %v4629, %v4628
        %v4657 = vpack.c.b16 %v4631, %v4630
        %v4658 = vpack.c.b16 %v4633, %v4632
        %v4659 = vpack.c.b16 %v4635, %v4634
        %v4660 = vpack.c.b16 %v4637, %v4636
        %v4661 = vpack.c.b16 %v4639, %v4638
        %v4662 = vpack.c.b16 %v4641, %v4640
        %v4663 = vpack.c.b16 %v4643, %v4642
        %v4664 = vpack.c.b16 %v4645, %v4644
        %v4665 = vpack.c.b16 %v4647, %v4646
        %v4666 = vpack.c.b16 %v4649, %v4648
        %v4667 = vpack.c.b16 %v4651, %v4650
        %4684 = vmatprep.subr.bf16.mxu0 0
        %4685 = vmatpush1.bf16.msra.mxu0 %v4659
        %4686 = vmatprep.subr.bf16.mxu0 0
        %4687 = vmatpush1.bf16.msra.mxu0 %v4658
        %4688 = vmatprep.subr.bf16.mxu0 0
        %4689 = vmatpush1.bf16.msra.mxu0 %v4657
        %4690 = vmatprep.subr.bf16.mxu0 0
        %4691 = vmatpush1.bf16.msra.mxu0 %v4656
        %4692 = vmatprep.subr.bf16.mxu0 0
        %4693 = vmatpush1.bf16.msra.mxu0 %v4655
        %4694 = vmatprep.subr.bf16.mxu0 0
        %4695 = vmatpush1.bf16.msra.mxu0 %v4654
        %4696 = vmatprep.subr.bf16.mxu0 0
        %4697 = vmatpush1.bf16.msra.mxu0 %v4653
        %4698 = vmatprep.subr.bf16.mxu0 0
        %4699 = vmatpush1.bf16.msra.mxu0 %v4652
        %4700 = vmatprep.subr.bf16.mxu0 0
        %4701 = vmatpush2.bf16.msra.mxu0 %v4667
        %4702 = vmatprep.subr.bf16.mxu0 0
        %4703 = vmatpush2.bf16.msra.mxu0 %v4666
        %4704 = vmatprep.subr.bf16.mxu0 0
        %4705 = vmatpush2.bf16.msra.mxu0 %v4665
        %4706 = vmatprep.subr.bf16.mxu0 0
        %4707 = vmatpush2.bf16.msra.mxu0 %v4664
        %4708 = vmatprep.subr.bf16.mxu0 0
        %4709 = vmatpush2.bf16.msra.mxu0 %v4663
        %4710 = vmatprep.subr.bf16.mxu0 0
        %4711 = vmatpush2.bf16.msra.mxu0 %v4662
        %4712 = vmatprep.subr.bf16.mxu0 0
        %4713 = vmatpush2.bf16.msra.mxu0 %v4661
        %4714 = vmatprep.subr.bf16.mxu0 0
        %4715 = vmatpush2.bf16.msra.mxu0 %v4660
        %4716 = vmatprep.mubr.bf16.mxu0 %v4585
        %4717 = vmatmul.mubr.bf16.gmra.mxu0 %v4584
        %v4718 = vpop.f32.mrf.mxu0
        %v4719 = vadd.f32 0.0, %v4718
        %v4720 = vpop.f32.mrf.mxu0
        %v4721 = vpop.f32.mrf.mxu0
        %v4722 = vadd.f32 0.0, %v4721
        %v4723 = vpop.f32.mrf.mxu0
        %4724 = vdwg.mxu0
        %v4725 = vadd.f32 %v4544, %v4719
        %v4726 = vadd.f32 %v4547, %v4722
        %v4727 = vadd.f32 %v4725, %v3637
        %v4728 = vadd.f32 %v4726, %v3637
        %v4729 = vmax.f32 %v4727, 0.0
        %v4730 = vmax.f32 %v4728, 0.0
        %s4731 = scalar_lea.vmem [#allocation4], 32
        %4732 = vst.msk [vmem:[%s4731] sm:$0xff] %vm362, %v4729
        %4733 = vst.msk [vmem:[%s4731 + $0x8] sm:$0x7] %vm3644, %v4730
        %v4734 = vld [vmem:[%s2832] sm:$0xff]
        %v4735 = vld [vmem:[%s2832 + $0x8] sm:$0xff]
        %v4736 = vld [vmem:[%s2832 + $0x10] sm:$0x1f]
        %v4737 = vld [vmem:[%s2832 + $0x18] sm:$0x1f]
        %v4738 = vld [vmem:[%s3] sm:$0xf]
        %v4739 = vld [vmem:[%s3 + $0x4] sm:$0xf]
        %v4740 = vld [vmem:[%s3 + $0x8] sm:$0xf]
        %v4741 = vld [vmem:[%s3 + $0xc] sm:$0xf]
        %v4742 = vld [vmem:[%s3 + $0x10] sm:$0xf]
        %v4743 = vld [vmem:[%s3 + $0x14] sm:$0xf]
        %v4744 = vld [vmem:[%s3 + $0x18] sm:$0xf]
        %v4745 = vld [vmem:[%s3 + $0x1c] sm:$0xf]
        %v4746 = vld [vmem:[%s3 + $0x20] sm:$0xf]
        %v4747 = vld [vmem:[%s3 + $0x24] sm:$0xf]
        %v4748 = vld [vmem:[%s3 + $0x28] sm:$0xf]
        %v4749 = vld [vmem:[%s3 + $0x2c] sm:$0xf]
        %v4750 = vld [vmem:[%s3 + $0x30] sm:$0xf]
        %v4751 = vld [vmem:[%s3 + $0x34] sm:$0xf]
        %v4752 = vld [vmem:[%s3 + $0x38] sm:$0xf]
        %v4753 = vld [vmem:[%s3 + $0x3c] sm:$0xf]
        %v4754 = vld [vmem:[%s3 + $0x40] sm:$0xf]
        %v4755 = vld [vmem:[%s3 + $0x44] sm:$0xf]
        %v4756 = vld [vmem:[%s3 + $0x48] sm:$0xf]
        %v4757 = vld [vmem:[%s3 + $0x4c] sm:$0xf]
        %v4758 = vld [vmem:[%s3 + $0x50] sm:$0xf]
        %v4759 = vld [vmem:[%s3 + $0x54] sm:$0xf]
        %v4760 = vld [vmem:[%s3 + $0x58] sm:$0xf]
        %v4761 = vld [vmem:[%s3 + $0x5c] sm:$0xf]
        %v4762 = vld [vmem:[%s3 + $0x60] sm:$0xf]
        %v4763 = vld [vmem:[%s3 + $0x64] sm:$0xf]
        %v4764 = vld [vmem:[%s3 + $0x68] sm:$0xf]
        %v4765 = vld [vmem:[%s3 + $0x6c] sm:$0xf]
        %v4766 = vld [vmem:[%s3 + $0x70] sm:$0xf]
        %v4767 = vld [vmem:[%s3 + $0x74] sm:$0xf]
        %v4768 = vld [vmem:[%s3 + $0x78] sm:$0xf]
        %v4769 = vld [vmem:[%s3 + $0x7c] sm:$0xf]
        %v4770 = vpack.c.bf16 %v4736, %v4734
        %v4771 = vpack.c.bf16 %v4737, %v4735
        %v4772 = vld [vmem:[%s3132] sm:$0xf]
        %v4773 = vld [vmem:[%s3132 + $0x4] sm:$0xf]
        %v4774 = vld [vmem:[%s3132 + $0x8] sm:$0xf]
        %v4775 = vld [vmem:[%s3132 + $0xc] sm:$0xf]
        %v4776 = vld [vmem:[%s3132 + $0x10] sm:$0xf]
        %v4777 = vld [vmem:[%s3132 + $0x14] sm:$0xf]
        %v4778 = vld [vmem:[%s3132 + $0x18] sm:$0xf]
        %v4779 = vld [vmem:[%s3132 + $0x1c] sm:$0xf]
        %v4780 = vld [vmem:[%s3132 + $0x20] sm:$0xf]
        %v4781 = vld [vmem:[%s3132 + $0x24] sm:$0xf]
        %v4782 = vld [vmem:[%s3132 + $0x28] sm:$0xf]
        %v4783 = vld [vmem:[%s3132 + $0x2c] sm:$0xf]
        %v4784 = vld [vmem:[%s3132 + $0x30] sm:$0xf]
        %v4785 = vld [vmem:[%s3132 + $0x34] sm:$0xf]
        %v4786 = vld [vmem:[%s3132 + $0x38] sm:$0xf]
        %v4787 = vld [vmem:[%s3132 + $0x3c] sm:$0xf]
        %v4788 = vld [vmem:[%s3132 + $0x40] sm:$0xf]
        %v4789 = vld [vmem:[%s3132 + $0x44] sm:$0xf]
        %v4790 = vld [vmem:[%s3132 + $0x48] sm:$0xf]
        %v4791 = vld [vmem:[%s3132 + $0x4c] sm:$0xf]
        %v4792 = vld [vmem:[%s3132 + $0x50] sm:$0xf]
        %v4793 = vld [vmem:[%s3132 + $0x54] sm:$0xf]
        %v4794 = vld [vmem:[%s3132 + $0x58] sm:$0xf]
        %v4795 = vld [vmem:[%s3132 + $0x5c] sm:$0xf]
        %v4796 = vld [vmem:[%s3132 + $0x60] sm:$0xf]
        %v4797 = vld [vmem:[%s3132 + $0x64] sm:$0xf]
        %v4798 = vld [vmem:[%s3132 + $0x68] sm:$0xf]
        %v4799 = vld [vmem:[%s3132 + $0x6c] sm:$0xf]
        %v4800 = vld [vmem:[%s3132 + $0x70] sm:$0xf]
        %v4801 = vld [vmem:[%s3132 + $0x74] sm:$0xf]
        %v4802 = vld [vmem:[%s3132 + $0x78] sm:$0xf]
        %v4803 = vld [vmem:[%s3132 + $0x7c] sm:$0xf]
        %v4805 = vshrl.u32 %v4770, 16
        %v4807 = vshll.u32 %v4770, 16
        %v4809 = vrot.slane %v4807, 1
        %v4810 = vor.u32 %v4805, %v4809
        %v4812 = vshrl.u32 %v4771, 16
        %v4814 = vshll.u32 %v4771, 16
        %v4816 = vrot.slane %v4814, 1
        %v4817 = vor.u32 %v4812, %v4816
        %v4852 = vunpack.c.l.b16 %v4772
        %v4853 = vunpack.c.l.b16 %v4773
        %v4854 = vunpack.c.l.b16 %v4774
        %v4855 = vunpack.c.l.b16 %v4775
        %v4856 = vunpack.c.l.b16 %v4776
        %v4857 = vunpack.c.l.b16 %v4777
        %v4858 = vunpack.c.l.b16 %v4778
        %v4859 = vunpack.c.l.b16 %v4779
        %v4860 = vunpack.c.l.b16 %v4780
        %v4861 = vunpack.c.l.b16 %v4781
        %v4862 = vunpack.c.l.b16 %v4782
        %v4863 = vunpack.c.l.b16 %v4783
        %v4864 = vunpack.c.l.b16 %v4784
        %v4865 = vunpack.c.l.b16 %v4785
        %v4866 = vunpack.c.l.b16 %v4786
        %v4867 = vunpack.c.l.b16 %v4787
        %v4868 = vunpack.c.l.b16 %v4788
        %v4869 = vunpack.c.l.b16 %v4789
        %v4870 = vunpack.c.l.b16 %v4790
        %v4871 = vunpack.c.l.b16 %v4791
        %v4872 = vunpack.c.l.b16 %v4792
        %v4873 = vunpack.c.l.b16 %v4793
        %v4874 = vunpack.c.l.b16 %v4794
        %v4875 = vunpack.c.l.b16 %v4795
        %v4876 = vunpack.c.l.b16 %v4796
        %v4877 = vunpack.c.l.b16 %v4797
        %v4878 = vunpack.c.l.b16 %v4798
        %v4879 = vunpack.c.l.b16 %v4799
        %v4880 = vunpack.c.l.b16 %v4800
        %v4881 = vunpack.c.l.b16 %v4801
        %v4882 = vunpack.c.l.b16 %v4802
        %v4883 = vunpack.c.l.b16 %v4803
        %v4884 = vpack.c.b16 %v4853, %v4852
        %v4885 = vpack.c.b16 %v4855, %v4854
        %v4886 = vpack.c.b16 %v4857, %v4856
        %v4887 = vpack.c.b16 %v4859, %v4858
        %v4888 = vpack.c.b16 %v4861, %v4860
        %v4889 = vpack.c.b16 %v4863, %v4862
        %v4890 = vpack.c.b16 %v4865, %v4864
        %v4891 = vpack.c.b16 %v4867, %v4866
        %v4892 = vpack.c.b16 %v4869, %v4868
        %v4893 = vpack.c.b16 %v4871, %v4870
        %v4894 = vpack.c.b16 %v4873, %v4872
        %v4895 = vpack.c.b16 %v4875, %v4874
        %v4896 = vpack.c.b16 %v4877, %v4876
        %v4897 = vpack.c.b16 %v4879, %v4878
        %v4898 = vpack.c.b16 %v4881, %v4880
        %v4899 = vpack.c.b16 %v4883, %v4882
        %4916 = vmatprep.subr.bf16.mxu0 0
        %4917 = vmatpush1.bf16.msra.mxu0 %v4891
        %4918 = vmatprep.subr.bf16.mxu0 0
        %4919 = vmatpush1.bf16.msra.mxu0 %v4890
        %4920 = vmatprep.subr.bf16.mxu0 0
        %4921 = vmatpush1.bf16.msra.mxu0 %v4889
        %4922 = vmatprep.subr.bf16.mxu0 0
        %4923 = vmatpush1.bf16.msra.mxu0 %v4888
        %4924 = vmatprep.subr.bf16.mxu0 0
        %4925 = vmatpush1.bf16.msra.mxu0 %v4887
        %4926 = vmatprep.subr.bf16.mxu0 0
        %4927 = vmatpush1.bf16.msra.mxu0 %v4886
        %4928 = vmatprep.subr.bf16.mxu0 0
        %4929 = vmatpush1.bf16.msra.mxu0 %v4885
        %4930 = vmatprep.subr.bf16.mxu0 0
        %4931 = vmatpush1.bf16.msra.mxu0 %v4884
        %4932 = vmatprep.subr.bf16.mxu0 0
        %4933 = vmatpush2.bf16.msra.mxu0 %v4899
        %4934 = vmatprep.subr.bf16.mxu0 0
        %4935 = vmatpush2.bf16.msra.mxu0 %v4898
        %4936 = vmatprep.subr.bf16.mxu0 0
        %4937 = vmatpush2.bf16.msra.mxu0 %v4897
        %4938 = vmatprep.subr.bf16.mxu0 0
        %4939 = vmatpush2.bf16.msra.mxu0 %v4896
        %4940 = vmatprep.subr.bf16.mxu0 0
        %4941 = vmatpush2.bf16.msra.mxu0 %v4895
        %4942 = vmatprep.subr.bf16.mxu0 0
        %4943 = vmatpush2.bf16.msra.mxu0 %v4894
        %4944 = vmatprep.subr.bf16.mxu0 0
        %4945 = vmatpush2.bf16.msra.mxu0 %v4893
        %4946 = vmatprep.subr.bf16.mxu0 0
        %4947 = vmatpush2.bf16.msra.mxu0 %v4892
        %4948 = vmatprep.mubr.bf16.mxu0 %v4817
        %4949 = vmatmul.mubr.bf16.gmra.mxu0 %v4810
        %v4950 = vpop.f32.mrf.mxu0
        %v4951 = vadd.f32 0.0, %v4950
        %v4952 = vpop.f32.mrf.mxu0
        %v4953 = vpop.f32.mrf.mxu0
        %v4954 = vadd.f32 0.0, %v4953
        %v4955 = vpop.f32.mrf.mxu0
        %4956 = vdwg.mxu0
        %v4989 = vunpack.c.l.b16 %v4738
        %v4990 = vunpack.c.l.b16 %v4739
        %v4991 = vunpack.c.l.b16 %v4740
        %v4992 = vunpack.c.l.b16 %v4741
        %v4993 = vunpack.c.l.b16 %v4742
        %v4994 = vunpack.c.l.b16 %v4743
        %v4995 = vunpack.c.l.b16 %v4744
        %v4996 = vunpack.c.l.b16 %v4745
        %v4997 = vunpack.c.l.b16 %v4746
        %v4998 = vunpack.c.l.b16 %v4747
        %v4999 = vunpack.c.l.b16 %v4748
        %v5000 = vunpack.c.l.b16 %v4749
        %v5001 = vunpack.c.l.b16 %v4750
        %v5002 = vunpack.c.l.b16 %v4751
        %v5003 = vunpack.c.l.b16 %v4752
        %v5004 = vunpack.c.l.b16 %v4753
        %v5005 = vunpack.c.l.b16 %v4754
        %v5006 = vunpack.c.l.b16 %v4755
        %v5007 = vunpack.c.l.b16 %v4756
        %v5008 = vunpack.c.l.b16 %v4757
        %v5009 = vunpack.c.l.b16 %v4758
        %v5010 = vunpack.c.l.b16 %v4759
        %v5011 = vunpack.c.l.b16 %v4760
        %v5012 = vunpack.c.l.b16 %v4761
        %v5013 = vunpack.c.l.b16 %v4762
        %v5014 = vunpack.c.l.b16 %v4763
        %v5015 = vunpack.c.l.b16 %v4764
        %v5016 = vunpack.c.l.b16 %v4765
        %v5017 = vunpack.c.l.b16 %v4766
        %v5018 = vunpack.c.l.b16 %v4767
        %v5019 = vunpack.c.l.b16 %v4768
        %v5020 = vunpack.c.l.b16 %v4769
        %v5021 = vpack.c.b16 %v4990, %v4989
        %v5022 = vpack.c.b16 %v4992, %v4991
        %v5023 = vpack.c.b16 %v4994, %v4993
        %v5024 = vpack.c.b16 %v4996, %v4995
        %v5025 = vpack.c.b16 %v4998, %v4997
        %v5026 = vpack.c.b16 %v5000, %v4999
        %v5027 = vpack.c.b16 %v5002, %v5001
        %v5028 = vpack.c.b16 %v5004, %v5003
        %v5029 = vpack.c.b16 %v5006, %v5005
        %v5030 = vpack.c.b16 %v5008, %v5007
        %v5031 = vpack.c.b16 %v5010, %v5009
        %v5032 = vpack.c.b16 %v5012, %v5011
        %v5033 = vpack.c.b16 %v5014, %v5013
        %v5034 = vpack.c.b16 %v5016, %v5015
        %v5035 = vpack.c.b16 %v5018, %v5017
        %v5036 = vpack.c.b16 %v5020, %v5019
        %5053 = vmatprep.subr.bf16.mxu0 0
        %5054 = vmatpush1.bf16.msra.mxu0 %v5028
        %5055 = vmatprep.subr.bf16.mxu0 0
        %5056 = vmatpush1.bf16.msra.mxu0 %v5027
        %5057 = vmatprep.subr.bf16.mxu0 0
        %5058 = vmatpush1.bf16.msra.mxu0 %v5026
        %5059 = vmatprep.subr.bf16.mxu0 0
        %5060 = vmatpush1.bf16.msra.mxu0 %v5025
        %5061 = vmatprep.subr.bf16.mxu0 0
        %5062 = vmatpush1.bf16.msra.mxu0 %v5024
        %5063 = vmatprep.subr.bf16.mxu0 0
        %5064 = vmatpush1.bf16.msra.mxu0 %v5023
        %5065 = vmatprep.subr.bf16.mxu0 0
        %5066 = vmatpush1.bf16.msra.mxu0 %v5022
        %5067 = vmatprep.subr.bf16.mxu0 0
        %5068 = vmatpush1.bf16.msra.mxu0 %v5021
        %5069 = vmatprep.subr.bf16.mxu0 0
        %5070 = vmatpush2.bf16.msra.mxu0 %v5036
        %5071 = vmatprep.subr.bf16.mxu0 0
        %5072 = vmatpush2.bf16.msra.mxu0 %v5035
        %5073 = vmatprep.subr.bf16.mxu0 0
        %5074 = vmatpush2.bf16.msra.mxu0 %v5034
        %5075 = vmatprep.subr.bf16.mxu0 0
        %5076 = vmatpush2.bf16.msra.mxu0 %v5033
        %5077 = vmatprep.subr.bf16.mxu0 0
        %5078 = vmatpush2.bf16.msra.mxu0 %v5032
        %5079 = vmatprep.subr.bf16.mxu0 0
        %5080 = vmatpush2.bf16.msra.mxu0 %v5031
        %5081 = vmatprep.subr.bf16.mxu0 0
        %5082 = vmatpush2.bf16.msra.mxu0 %v5030
        %5083 = vmatprep.subr.bf16.mxu0 0
        %5084 = vmatpush2.bf16.msra.mxu0 %v5029
        %5085 = vmatprep.mubr.bf16.mxu0 %v4771
        %5086 = vmatmul.mubr.bf16.gmra.mxu0 %v4770
        %v5087 = vpop.f32.mrf.mxu0
        %v5088 = vadd.f32 %v4951, %v5087
        %v5089 = vpop.f32.mrf.mxu0
        %v5090 = vpop.f32.mrf.mxu0
        %v5091 = vadd.f32 %v4954, %v5090
        %v5092 = vpop.f32.mrf.mxu0
        %5093 = vdwg.mxu0
        %v5094 = vld [vmem:[%s3455] sm:$0xf]
        %v5095 = vld [vmem:[%s3455 + $0x4] sm:$0xf]
        %v5096 = vld [vmem:[%s3455 + $0x8] sm:$0xf]
        %v5097 = vld [vmem:[%s3455 + $0xc] sm:$0xf]
        %v5098 = vld [vmem:[%s3455 + $0x10] sm:$0xf]
        %v5099 = vld [vmem:[%s3455 + $0x14] sm:$0xf]
        %v5100 = vld [vmem:[%s3455 + $0x18] sm:$0xf]
        %v5101 = vld [vmem:[%s3455 + $0x1c] sm:$0xf]
        %v5102 = vld [vmem:[%s3455 + $0x20] sm:$0xf]
        %v5103 = vld [vmem:[%s3455 + $0x24] sm:$0xf]
        %v5104 = vld [vmem:[%s3455 + $0x28] sm:$0xf]
        %v5105 = vld [vmem:[%s3455 + $0x2c] sm:$0xf]
        %v5106 = vld [vmem:[%s3455 + $0x30] sm:$0xf]
        %v5107 = vld [vmem:[%s3455 + $0x34] sm:$0xf]
        %v5108 = vld [vmem:[%s3455 + $0x38] sm:$0xf]
        %v5109 = vld [vmem:[%s3455 + $0x3c] sm:$0xf]
        %v5110 = vld [vmem:[%s3455 + $0x40] sm:$0xf]
        %v5111 = vld [vmem:[%s3455 + $0x44] sm:$0xf]
        %v5112 = vld [vmem:[%s3455 + $0x48] sm:$0xf]
        %v5113 = vld [vmem:[%s3455 + $0x4c] sm:$0xf]
        %v5114 = vld [vmem:[%s3455 + $0x50] sm:$0xf]
        %v5115 = vld [vmem:[%s3455 + $0x54] sm:$0xf]
        %v5116 = vld [vmem:[%s3455 + $0x58] sm:$0xf]
        %v5117 = vld [vmem:[%s3455 + $0x5c] sm:$0xf]
        %v5118 = vld [vmem:[%s3455 + $0x60] sm:$0xf]
        %v5119 = vld [vmem:[%s3455 + $0x64] sm:$0xf]
        %v5120 = vld [vmem:[%s3455 + $0x68] sm:$0xf]
        %v5121 = vld [vmem:[%s3455 + $0x6c] sm:$0xf]
        %v5122 = vld [vmem:[%s3455 + $0x70] sm:$0xf]
        %v5123 = vld [vmem:[%s3455 + $0x74] sm:$0xf]
        %v5124 = vld [vmem:[%s3455 + $0x78] sm:$0xf]
        %v5125 = vld [vmem:[%s3455 + $0x7c] sm:$0xf]
        %v5128 = vrot.slane %v4770, 1
        %v5129 = vrot.slane %v4771, 1
        %v5164 = vunpack.c.l.b16 %v5094
        %v5165 = vunpack.c.l.b16 %v5095
        %v5166 = vunpack.c.l.b16 %v5096
        %v5167 = vunpack.c.l.b16 %v5097
        %v5168 = vunpack.c.l.b16 %v5098
        %v5169 = vunpack.c.l.b16 %v5099
        %v5170 = vunpack.c.l.b16 %v5100
        %v5171 = vunpack.c.l.b16 %v5101
        %v5172 = vunpack.c.l.b16 %v5102
        %v5173 = vunpack.c.l.b16 %v5103
        %v5174 = vunpack.c.l.b16 %v5104
        %v5175 = vunpack.c.l.b16 %v5105
        %v5176 = vunpack.c.l.b16 %v5106
        %v5177 = vunpack.c.l.b16 %v5107
        %v5178 = vunpack.c.l.b16 %v5108
        %v5179 = vunpack.c.l.b16 %v5109
        %v5180 = vunpack.c.l.b16 %v5110
        %v5181 = vunpack.c.l.b16 %v5111
        %v5182 = vunpack.c.l.b16 %v5112
        %v5183 = vunpack.c.l.b16 %v5113
        %v5184 = vunpack.c.l.b16 %v5114
        %v5185 = vunpack.c.l.b16 %v5115
        %v5186 = vunpack.c.l.b16 %v5116
        %v5187 = vunpack.c.l.b16 %v5117
        %v5188 = vunpack.c.l.b16 %v5118
        %v5189 = vunpack.c.l.b16 %v5119
        %v5190 = vunpack.c.l.b16 %v5120
        %v5191 = vunpack.c.l.b16 %v5121
        %v5192 = vunpack.c.l.b16 %v5122
        %v5193 = vunpack.c.l.b16 %v5123
        %v5194 = vunpack.c.l.b16 %v5124
        %v5195 = vunpack.c.l.b16 %v5125
        %v5196 = vpack.c.b16 %v5165, %v5164
        %v5197 = vpack.c.b16 %v5167, %v5166
        %v5198 = vpack.c.b16 %v5169, %v5168
        %v5199 = vpack.c.b16 %v5171, %v5170
        %v5200 = vpack.c.b16 %v5173, %v5172
        %v5201 = vpack.c.b16 %v5175, %v5174
        %v5202 = vpack.c.b16 %v5177, %v5176
        %v5203 = vpack.c.b16 %v5179, %v5178
        %v5204 = vpack.c.b16 %v5181, %v5180
        %v5205 = vpack.c.b16 %v5183, %v5182
        %v5206 = vpack.c.b16 %v5185, %v5184
        %v5207 = vpack.c.b16 %v5187, %v5186
        %v5208 = vpack.c.b16 %v5189, %v5188
        %v5209 = vpack.c.b16 %v5191, %v5190
        %v5210 = vpack.c.b16 %v5193, %v5192
        %v5211 = vpack.c.b16 %v5195, %v5194
        %5228 = vmatprep.subr.bf16.mxu0 0
        %5229 = vmatpush1.bf16.msra.mxu0 %v5203
        %5230 = vmatprep.subr.bf16.mxu0 0
        %5231 = vmatpush1.bf16.msra.mxu0 %v5202
        %5232 = vmatprep.subr.bf16.mxu0 0
        %5233 = vmatpush1.bf16.msra.mxu0 %v5201
        %5234 = vmatprep.subr.bf16.mxu0 0
        %5235 = vmatpush1.bf16.msra.mxu0 %v5200
        %5236 = vmatprep.subr.bf16.mxu0 0
        %5237 = vmatpush1.bf16.msra.mxu0 %v5199
        %5238 = vmatprep.subr.bf16.mxu0 0
        %5239 = vmatpush1.bf16.msra.mxu0 %v5198
        %5240 = vmatprep.subr.bf16.mxu0 0
        %5241 = vmatpush1.bf16.msra.mxu0 %v5197
        %5242 = vmatprep.subr.bf16.mxu0 0
        %5243 = vmatpush1.bf16.msra.mxu0 %v5196
        %5244 = vmatprep.subr.bf16.mxu0 0
        %5245 = vmatpush2.bf16.msra.mxu0 %v5211
        %5246 = vmatprep.subr.bf16.mxu0 0
        %5247 = vmatpush2.bf16.msra.mxu0 %v5210
        %5248 = vmatprep.subr.bf16.mxu0 0
        %5249 = vmatpush2.bf16.msra.mxu0 %v5209
        %5250 = vmatprep.subr.bf16.mxu0 0
        %5251 = vmatpush2.bf16.msra.mxu0 %v5208
        %5252 = vmatprep.subr.bf16.mxu0 0
        %5253 = vmatpush2.bf16.msra.mxu0 %v5207
        %5254 = vmatprep.subr.bf16.mxu0 0
        %5255 = vmatpush2.bf16.msra.mxu0 %v5206
        %5256 = vmatprep.subr.bf16.mxu0 0
        %5257 = vmatpush2.bf16.msra.mxu0 %v5205
        %5258 = vmatprep.subr.bf16.mxu0 0
        %5259 = vmatpush2.bf16.msra.mxu0 %v5204
        %5260 = vmatprep.mubr.bf16.mxu0 %v5129
        %5261 = vmatmul.mubr.bf16.gmra.mxu0 %v5128
        %v5262 = vpop.f32.mrf.mxu0
        %v5263 = vadd.f32 0.0, %v5262
        %v5264 = vpop.f32.mrf.mxu0
        %v5265 = vpop.f32.mrf.mxu0
        %v5266 = vadd.f32 0.0, %v5265
        %v5267 = vpop.f32.mrf.mxu0
        %5268 = vdwg.mxu0
        %v5269 = vadd.f32 %v5088, %v5263
        %v5270 = vadd.f32 %v5091, %v5266
        %v5271 = vadd.f32 %v5269, %v3637
        %v5272 = vadd.f32 %v5270, %v3637
        %v5273 = vmax.f32 %v5271, 0.0
        %v5274 = vmax.f32 %v5272, 0.0
        %s5275 = scalar_lea.vmem [#allocation4], 48
        %5276 = vst.msk [vmem:[%s5275] sm:$0xff] %vm362, %v5273
        %5277 = vst.msk [vmem:[%s5275 + $0x8] sm:$0x7] %vm3644, %v5274
        %v5278 = vld [vmem:[#allocation4] sm:$0x1]
        %v5279 = vld [vmem:[#allocation4 + $0x10] sm:$0x1]
        %v5280 = vld [vmem:[#allocation4 + $0x20] sm:$0x1]
        %v5281 = vld [vmem:[#allocation4 + $0x30] sm:$0x1]
        %v5282 = vld [vmem:[%s5] sm:$0xff]
        %v5283 = vld [vmem:[%s5 + $0x8] sm:$0xff]
        %v5284 = vld [vmem:[%s5 + $0x10] sm:$0xff]
        %v5285 = vld [vmem:[%s5 + $0x18] sm:$0xff]
        %v5286 = vld [vmem:[%s5 + $0x20] sm:$0xff]
        %v5287 = vld [vmem:[%s5 + $0x28] sm:$0xff]
        %v5288 = vld [vmem:[%s5 + $0x30] sm:$0x11]
        %v5289 = vpack.c.bf16 %v5278, %v5278
        %v5290 = vpack.c.bf16 %v5279, %v5279
        %v5291 = vpack.c.bf16 %v5280, %v5280
        %v5292 = vpack.c.bf16 %v5281, %v5281
        %v5293 = vld [vmem:[#allocation4 + $0x1] sm:$0x1]
        %v5294 = vld [vmem:[#allocation4 + $0x11] sm:$0x1]
        %v5295 = vld [vmem:[#allocation4 + $0x21] sm:$0x1]
        %v5296 = vld [vmem:[#allocation4 + $0x31] sm:$0x1]
        %s5297 = scalar_lea.vmem %s5, 56
        %v5298 = vld [vmem:[%s5297] sm:$0xff]
        %v5299 = vld [vmem:[%s5297 + $0x8] sm:$0xff]
        %v5300 = vld [vmem:[%s5297 + $0x10] sm:$0xff]
        %v5301 = vld [vmem:[%s5297 + $0x18] sm:$0xff]
        %v5302 = vld [vmem:[%s5297 + $0x20] sm:$0xff]
        %v5303 = vld [vmem:[%s5297 + $0x28] sm:$0xff]
        %v5304 = vld [vmem:[%s5297 + $0x30] sm:$0x11]
        %v5305 = vpack.c.bf16 %v5293, %v5293
        %v5306 = vpack.c.bf16 %v5294, %v5294
        %v5307 = vpack.c.bf16 %v5295, %v5295
        %v5308 = vpack.c.bf16 %v5296, %v5296
        %v5313 = vunpack.c.l.b16 %v5305
        %v5314 = vunpack.c.l.b16 %v5306
        %v5315 = vunpack.c.l.b16 %v5307
        %v5316 = vunpack.c.l.b16 %v5308
        %v5317 = vrot.slane %v5314, 7
        %vm5318 = vcmask 1041409
        %v5319 = vsel %vm5318, %v5317, %v5313
        %v5320 = vrot.slane %v5315, 6
        %vm5321 = vcmask 1042434
        %v5322 = vsel %vm5321, %v5320, %v5319
        %v5323 = vrot.slane %v5316, 5
        %vm5324 = vcmask 1043459
        %v5325 = vsel %vm5324, %v5323, %v5322
        %v5326 = vpack.c.b16 %v5325, %v5325
        %v5334 = vunpack.c.l.b16 %v5298
        %v5335 = vunpack.c.h.b16 %v5298
        %v5336 = vunpack.c.l.b16 %v5299
        %v5337 = vunpack.c.h.b16 %v5299
        %v5338 = vunpack.c.l.b16 %v5300
        %v5339 = vunpack.c.h.b16 %v5300
        %v5340 = vunpack.c.l.b16 %v5301
        %v5341 = vunpack.c.h.b16 %v5301
        %v5342 = vunpack.c.l.b16 %v5302
        %v5343 = vunpack.c.h.b16 %v5302
        %v5344 = vunpack.c.l.b16 %v5303
        %v5345 = vunpack.c.h.b16 %v5303
        %v5346 = vunpack.c.l.b16 %v5304
        %v5347 = vunpack.c.h.b16 %v5304
        %v5348 = vpack.c.b16 %v5336, %v5334
        %v5349 = vpack.c.b16 %v5337, %v5335
        %v5350 = vpack.c.b16 %v5340, %v5338
        %v5351 = vpack.c.b16 %v5341, %v5339
        %v5352 = vpack.c.b16 %v5344, %v5342
        %v5353 = vpack.c.b16 %v5345, %v5343
        %v5354 = vpack.c.b16 %v5346, %v5346
        %v5355 = vpack.c.b16 %v5347, %v5347
        %v5363 = vsel %vm362, %v5326, 0
        %v5366 = vsel %vm493, %v5354, 0
        %v5369 = vsel %vm493, %v5355, 0
        %5371 = vmatprep.subr.bf16.mxu0 0
        %5372 = vmatpush1.bf16.msra.mxu0 0
        %5373 = vmatprep.subr.bf16.mxu0 0
        %5374 = vmatpush1.bf16.msra.mxu0 0
        %5375 = vmatprep.subr.bf16.mxu0 0
        %5376 = vmatpush1.bf16.msra.mxu0 0
        %5377 = vmatprep.subr.bf16.mxu0 0
        %5378 = vmatpush1.bf16.msra.mxu0 0
        %5379 = vmatprep.subr.bf16.mxu0 %v5369
        %5380 = vmatpush1.bf16.msra.mxu0 %v5366
        %5381 = vmatprep.subr.bf16.mxu0 %v5353
        %5382 = vmatpush1.bf16.msra.mxu0 %v5352
        %5383 = vmatprep.subr.bf16.mxu0 %v5351
        %5384 = vmatpush1.bf16.msra.mxu0 %v5350
        %5385 = vmatprep.subr.bf16.mxu0 %v5349
        %5386 = vmatpush1.bf16.msra.mxu0 %v5348
        %5387 = vmatprep.subr.bf16.mxu0 0
        %5388 = vmatpush2.bf16.msra.mxu0 0
        %5389 = vmatprep.subr.bf16.mxu0 0
        %5390 = vmatpush2.bf16.msra.mxu0 0
        %5391 = vmatprep.subr.bf16.mxu0 0
        %5392 = vmatpush2.bf16.msra.mxu0 0
        %5393 = vmatprep.subr.bf16.mxu0 0
        %5394 = vmatpush2.bf16.msra.mxu0 0
        %5395 = vmatprep.subr.bf16.mxu0 0
        %5396 = vmatpush2.bf16.msra.mxu0 0
        %5397 = vmatprep.subr.bf16.mxu0 0
        %5398 = vmatpush2.bf16.msra.mxu0 0
        %5399 = vmatprep.subr.bf16.mxu0 0
        %5400 = vmatpush2.bf16.msra.mxu0 0
        %5401 = vmatprep.subr.bf16.mxu0 0
        %5402 = vmatpush2.bf16.msra.mxu0 0
        %5403 = vmatprep.mubr.bf16.mxu0 0
        %5404 = vmatmul.mubr.bf16.gmra.mxu0 %v5363
        %v5405 = vpop.f32.mrf.mxu0
        %v5406 = vadd.f32 0.0, %v5405
        %v5407 = vpop.f32.mrf.mxu0
        %v5408 = vadd.f32 0.0, %v5407
        %v5409 = vpop.f32.mrf.mxu0
        %v5410 = vpop.f32.mrf.mxu0
        %5411 = vdwg.mxu0
        %v5416 = vunpack.c.l.b16 %v5289
        %v5417 = vunpack.c.l.b16 %v5290
        %v5418 = vunpack.c.l.b16 %v5291
        %v5419 = vunpack.c.l.b16 %v5292
        %v5420 = vrot.slane %v5417, 7
        %v5421 = vsel %vm5318, %v5420, %v5416
        %v5422 = vrot.slane %v5418, 6
        %v5423 = vsel %vm5321, %v5422, %v5421
        %v5424 = vrot.slane %v5419, 5
        %v5425 = vsel %vm5324, %v5424, %v5423
        %v5426 = vpack.c.b16 %v5425, %v5425
        %v5434 = vunpack.c.l.b16 %v5282
        %v5435 = vunpack.c.h.b16 %v5282
        %v5436 = vunpack.c.l.b16 %v5283
        %v5437 = vunpack.c.h.b16 %v5283
        %v5438 = vunpack.c.l.b16 %v5284
        %v5439 = vunpack.c.h.b16 %v5284
        %v5440 = vunpack.c.l.b16 %v5285
        %v5441 = vunpack.c.h.b16 %v5285
        %v5442 = vunpack.c.l.b16 %v5286
        %v5443 = vunpack.c.h.b16 %v5286
        %v5444 = vunpack.c.l.b16 %v5287
        %v5445 = vunpack.c.h.b16 %v5287
        %v5446 = vunpack.c.l.b16 %v5288
        %v5447 = vunpack.c.h.b16 %v5288
        %v5448 = vpack.c.b16 %v5436, %v5434
        %v5449 = vpack.c.b16 %v5437, %v5435
        %v5450 = vpack.c.b16 %v5440, %v5438
        %v5451 = vpack.c.b16 %v5441, %v5439
        %v5452 = vpack.c.b16 %v5444, %v5442
        %v5453 = vpack.c.b16 %v5445, %v5443
        %v5454 = vpack.c.b16 %v5446, %v5446
        %v5455 = vpack.c.b16 %v5447, %v5447
        %v5463 = vsel %vm362, %v5426, 0
        %v5466 = vsel %vm493, %v5454, 0
        %v5469 = vsel %vm493, %v5455, 0
        %5471 = vmatprep.subr.bf16.mxu0 0
        %5472 = vmatpush1.bf16.msra.mxu0 0
        %5473 = vmatprep.subr.bf16.mxu0 0
        %5474 = vmatpush1.bf16.msra.mxu0 0
        %5475 = vmatprep.subr.bf16.mxu0 0
        %5476 = vmatpush1.bf16.msra.mxu0 0
        %5477 = vmatprep.subr.bf16.mxu0 0
        %5478 = vmatpush1.bf16.msra.mxu0 0
        %5479 = vmatprep.subr.bf16.mxu0 %v5469
        %5480 = vmatpush1.bf16.msra.mxu0 %v5466
        %5481 = vmatprep.subr.bf16.mxu0 %v5453
        %5482 = vmatpush1.bf16.msra.mxu0 %v5452
        %5483 = vmatprep.subr.bf16.mxu0 %v5451
        %5484 = vmatpush1.bf16.msra.mxu0 %v5450
        %5485 = vmatprep.subr.bf16.mxu0 %v5449
        %5486 = vmatpush1.bf16.msra.mxu0 %v5448
        %5487 = vmatprep.subr.bf16.mxu0 0
        %5488 = vmatpush2.bf16.msra.mxu0 0
        %5489 = vmatprep.subr.bf16.mxu0 0
        %5490 = vmatpush2.bf16.msra.mxu0 0
        %5491 = vmatprep.subr.bf16.mxu0 0
        %5492 = vmatpush2.bf16.msra.mxu0 0
        %5493 = vmatprep.subr.bf16.mxu0 0
        %5494 = vmatpush2.bf16.msra.mxu0 0
        %5495 = vmatprep.subr.bf16.mxu0 0
        %5496 = vmatpush2.bf16.msra.mxu0 0
        %5497 = vmatprep.subr.bf16.mxu0 0
        %5498 = vmatpush2.bf16.msra.mxu0 0
        %5499 = vmatprep.subr.bf16.mxu0 0
        %5500 = vmatpush2.bf16.msra.mxu0 0
        %5501 = vmatprep.subr.bf16.mxu0 0
        %5502 = vmatpush2.bf16.msra.mxu0 0
        %5503 = vmatprep.mubr.bf16.mxu0 0
        %5504 = vmatmul.mubr.bf16.gmra.mxu0 %v5463
        %v5505 = vpop.f32.mrf.mxu0
        %v5506 = vadd.f32 %v5406, %v5505
        %v5507 = vpop.f32.mrf.mxu0
        %v5508 = vadd.f32 %v5408, %v5507
        %v5509 = vpop.f32.mrf.mxu0
        %v5510 = vpop.f32.mrf.mxu0
        %5511 = vdwg.mxu0
        %v5512 = vld [vmem:[#allocation4 + $0x2] sm:$0x1]
        %v5513 = vld [vmem:[#allocation4 + $0x12] sm:$0x1]
        %v5514 = vld [vmem:[#allocation4 + $0x22] sm:$0x1]
        %v5515 = vld [vmem:[#allocation4 + $0x32] sm:$0x1]
        %s5516 = scalar_lea.vmem %s5, 112
        %v5517 = vld [vmem:[%s5516] sm:$0xff]
        %v5518 = vld [vmem:[%s5516 + $0x8] sm:$0xff]
        %v5519 = vld [vmem:[%s5516 + $0x10] sm:$0xff]
        %v5520 = vld [vmem:[%s5516 + $0x18] sm:$0xff]
        %v5521 = vld [vmem:[%s5516 + $0x20] sm:$0xff]
        %v5522 = vld [vmem:[%s5516 + $0x28] sm:$0xff]
        %v5523 = vld [vmem:[%s5516 + $0x30] sm:$0x11]
        %v5524 = vpack.c.bf16 %v5512, %v5512
        %v5525 = vpack.c.bf16 %v5513, %v5513
        %v5526 = vpack.c.bf16 %v5514, %v5514
        %v5527 = vpack.c.bf16 %v5515, %v5515
        %v5532 = vunpack.c.l.b16 %v5524
        %v5533 = vunpack.c.l.b16 %v5525
        %v5534 = vunpack.c.l.b16 %v5526
        %v5535 = vunpack.c.l.b16 %v5527
        %v5536 = vrot.slane %v5533, 7
        %v5537 = vsel %vm5318, %v5536, %v5532
        %v5538 = vrot.slane %v5534, 6
        %v5539 = vsel %vm5321, %v5538, %v5537
        %v5540 = vrot.slane %v5535, 5
        %v5541 = vsel %vm5324, %v5540, %v5539
        %v5542 = vpack.c.b16 %v5541, %v5541
        %v5550 = vunpack.c.l.b16 %v5517
        %v5551 = vunpack.c.h.b16 %v5517
        %v5552 = vunpack.c.l.b16 %v5518
        %v5553 = vunpack.c.h.b16 %v5518
        %v5554 = vunpack.c.l.b16 %v5519
        %v5555 = vunpack.c.h.b16 %v5519
        %v5556 = vunpack.c.l.b16 %v5520
        %v5557 = vunpack.c.h.b16 %v5520
        %v5558 = vunpack.c.l.b16 %v5521
        %v5559 = vunpack.c.h.b16 %v5521
        %v5560 = vunpack.c.l.b16 %v5522
        %v5561 = vunpack.c.h.b16 %v5522
        %v5562 = vunpack.c.l.b16 %v5523
        %v5563 = vunpack.c.h.b16 %v5523
        %v5564 = vpack.c.b16 %v5552, %v5550
        %v5565 = vpack.c.b16 %v5553, %v5551
        %v5566 = vpack.c.b16 %v5556, %v5554
        %v5567 = vpack.c.b16 %v5557, %v5555
        %v5568 = vpack.c.b16 %v5560, %v5558
        %v5569 = vpack.c.b16 %v5561, %v5559
        %v5570 = vpack.c.b16 %v5562, %v5562
        %v5571 = vpack.c.b16 %v5563, %v5563
        %v5579 = vsel %vm362, %v5542, 0
        %v5582 = vsel %vm493, %v5570, 0
        %v5585 = vsel %vm493, %v5571, 0
        %5587 = vmatprep.subr.bf16.mxu0 0
        %5588 = vmatpush1.bf16.msra.mxu0 0
        %5589 = vmatprep.subr.bf16.mxu0 0
        %5590 = vmatpush1.bf16.msra.mxu0 0
        %5591 = vmatprep.subr.bf16.mxu0 0
        %5592 = vmatpush1.bf16.msra.mxu0 0
        %5593 = vmatprep.subr.bf16.mxu0 0
        %5594 = vmatpush1.bf16.msra.mxu0 0
        %5595 = vmatprep.subr.bf16.mxu0 %v5585
        %5596 = vmatpush1.bf16.msra.mxu0 %v5582
        %5597 = vmatprep.subr.bf16.mxu0 %v5569
        %5598 = vmatpush1.bf16.msra.mxu0 %v5568
        %5599 = vmatprep.subr.bf16.mxu0 %v5567
        %5600 = vmatpush1.bf16.msra.mxu0 %v5566
        %5601 = vmatprep.subr.bf16.mxu0 %v5565
        %5602 = vmatpush1.bf16.msra.mxu0 %v5564
        %5603 = vmatprep.subr.bf16.mxu0 0
        %5604 = vmatpush2.bf16.msra.mxu0 0
        %5605 = vmatprep.subr.bf16.mxu0 0
        %5606 = vmatpush2.bf16.msra.mxu0 0
        %5607 = vmatprep.subr.bf16.mxu0 0
        %5608 = vmatpush2.bf16.msra.mxu0 0
        %5609 = vmatprep.subr.bf16.mxu0 0
        %5610 = vmatpush2.bf16.msra.mxu0 0
        %5611 = vmatprep.subr.bf16.mxu0 0
        %5612 = vmatpush2.bf16.msra.mxu0 0
        %5613 = vmatprep.subr.bf16.mxu0 0
        %5614 = vmatpush2.bf16.msra.mxu0 0
        %5615 = vmatprep.subr.bf16.mxu0 0
        %5616 = vmatpush2.bf16.msra.mxu0 0
        %5617 = vmatprep.subr.bf16.mxu0 0
        %5618 = vmatpush2.bf16.msra.mxu0 0
        %5619 = vmatprep.mubr.bf16.mxu0 0
        %5620 = vmatmul.mubr.bf16.gmra.mxu0 %v5579
        %v5621 = vpop.f32.mrf.mxu0
        %v5622 = vadd.f32 0.0, %v5621
        %v5623 = vpop.f32.mrf.mxu0
        %v5624 = vadd.f32 0.0, %v5623
        %v5625 = vpop.f32.mrf.mxu0
        %v5626 = vpop.f32.mrf.mxu0
        %5627 = vdwg.mxu0
        %v5628 = vadd.f32 %v5506, %v5622
        %v5629 = vadd.f32 %v5508, %v5624
        %v5630 = vld [vmem:[#allocation4 + $0x3] sm:$0x1]
        %v5631 = vld [vmem:[#allocation4 + $0x13] sm:$0x1]
        %v5632 = vld [vmem:[#allocation4 + $0x23] sm:$0x1]
        %v5633 = vld [vmem:[#allocation4 + $0x33] sm:$0x1]
        %s5634 = scalar_lea.vmem %s5, 168
        %v5635 = vld [vmem:[%s5634] sm:$0xff]
        %v5636 = vld [vmem:[%s5634 + $0x8] sm:$0xff]
        %v5637 = vld [vmem:[%s5634 + $0x10] sm:$0xff]
        %v5638 = vld [vmem:[%s5634 + $0x18] sm:$0xff]
        %v5639 = vld [vmem:[%s5634 + $0x20] sm:$0xff]
        %v5640 = vld [vmem:[%s5634 + $0x28] sm:$0xff]
        %v5641 = vld [vmem:[%s5634 + $0x30] sm:$0x11]
        %v5642 = vpack.c.bf16 %v5630, %v5630
        %v5643 = vpack.c.bf16 %v5631, %v5631
        %v5644 = vpack.c.bf16 %v5632, %v5632
        %v5645 = vpack.c.bf16 %v5633, %v5633
        %v5650 = vunpack.c.l.b16 %v5642
        %v5651 = vunpack.c.l.b16 %v5643
        %v5652 = vunpack.c.l.b16 %v5644
        %v5653 = vunpack.c.l.b16 %v5645
        %v5654 = vrot.slane %v5651, 7
        %v5655 = vsel %vm5318, %v5654, %v5650
        %v5656 = vrot.slane %v5652, 6
        %v5657 = vsel %vm5321, %v5656, %v5655
        %v5658 = vrot.slane %v5653, 5
        %v5659 = vsel %vm5324, %v5658, %v5657
        %v5660 = vpack.c.b16 %v5659, %v5659
        %v5668 = vunpack.c.l.b16 %v5635
        %v5669 = vunpack.c.h.b16 %v5635
        %v5670 = vunpack.c.l.b16 %v5636
        %v5671 = vunpack.c.h.b16 %v5636
        %v5672 = vunpack.c.l.b16 %v5637
        %v5673 = vunpack.c.h.b16 %v5637
        %v5674 = vunpack.c.l.b16 %v5638
        %v5675 = vunpack.c.h.b16 %v5638
        %v5676 = vunpack.c.l.b16 %v5639
        %v5677 = vunpack.c.h.b16 %v5639
        %v5678 = vunpack.c.l.b16 %v5640
        %v5679 = vunpack.c.h.b16 %v5640
        %v5680 = vunpack.c.l.b16 %v5641
        %v5681 = vunpack.c.h.b16 %v5641
        %v5682 = vpack.c.b16 %v5670, %v5668
        %v5683 = vpack.c.b16 %v5671, %v5669
        %v5684 = vpack.c.b16 %v5674, %v5672
        %v5685 = vpack.c.b16 %v5675, %v5673
        %v5686 = vpack.c.b16 %v5678, %v5676
        %v5687 = vpack.c.b16 %v5679, %v5677
        %v5688 = vpack.c.b16 %v5680, %v5680
        %v5689 = vpack.c.b16 %v5681, %v5681
        %v5697 = vsel %vm362, %v5660, 0
        %v5700 = vsel %vm493, %v5688, 0
        %v5703 = vsel %vm493, %v5689, 0
        %5705 = vmatprep.subr.bf16.mxu0 0
        %5706 = vmatpush1.bf16.msra.mxu0 0
        %5707 = vmatprep.subr.bf16.mxu0 0
        %5708 = vmatpush1.bf16.msra.mxu0 0
        %5709 = vmatprep.subr.bf16.mxu0 0
        %5710 = vmatpush1.bf16.msra.mxu0 0
        %5711 = vmatprep.subr.bf16.mxu0 0
        %5712 = vmatpush1.bf16.msra.mxu0 0
        %5713 = vmatprep.subr.bf16.mxu0 %v5703
        %5714 = vmatpush1.bf16.msra.mxu0 %v5700
        %5715 = vmatprep.subr.bf16.mxu0 %v5687
        %5716 = vmatpush1.bf16.msra.mxu0 %v5686
        %5717 = vmatprep.subr.bf16.mxu0 %v5685
        %5718 = vmatpush1.bf16.msra.mxu0 %v5684
        %5719 = vmatprep.subr.bf16.mxu0 %v5683
        %5720 = vmatpush1.bf16.msra.mxu0 %v5682
        %5721 = vmatprep.subr.bf16.mxu0 0
        %5722 = vmatpush2.bf16.msra.mxu0 0
        %5723 = vmatprep.subr.bf16.mxu0 0
        %5724 = vmatpush2.bf16.msra.mxu0 0
        %5725 = vmatprep.subr.bf16.mxu0 0
        %5726 = vmatpush2.bf16.msra.mxu0 0
        %5727 = vmatprep.subr.bf16.mxu0 0
        %5728 = vmatpush2.bf16.msra.mxu0 0
        %5729 = vmatprep.subr.bf16.mxu0 0
        %5730 = vmatpush2.bf16.msra.mxu0 0
        %5731 = vmatprep.subr.bf16.mxu0 0
        %5732 = vmatpush2.bf16.msra.mxu0 0
        %5733 = vmatprep.subr.bf16.mxu0 0
        %5734 = vmatpush2.bf16.msra.mxu0 0
        %5735 = vmatprep.subr.bf16.mxu0 0
        %5736 = vmatpush2.bf16.msra.mxu0 0
        %5737 = vmatprep.mubr.bf16.mxu0 0
        %5738 = vmatmul.mubr.bf16.gmra.mxu0 %v5697
        %v5739 = vpop.f32.mrf.mxu0
        %v5740 = vadd.f32 0.0, %v5739
        %v5741 = vpop.f32.mrf.mxu0
        %v5742 = vadd.f32 0.0, %v5741
        %v5743 = vpop.f32.mrf.mxu0
        %v5744 = vpop.f32.mrf.mxu0
        %5745 = vdwg.mxu0
        %v5746 = vadd.f32 %v5628, %v5740
        %v5747 = vadd.f32 %v5629, %v5742
        %v5748 = vld [vmem:[#allocation4 + $0x4] sm:$0x1]
        %v5749 = vld [vmem:[#allocation4 + $0x14] sm:$0x1]
        %v5750 = vld [vmem:[#allocation4 + $0x24] sm:$0x1]
        %v5751 = vld [vmem:[#allocation4 + $0x34] sm:$0x1]
        %s5752 = scalar_lea.vmem %s5, 224
        %v5753 = vld [vmem:[%s5752] sm:$0xff]
        %v5754 = vld [vmem:[%s5752 + $0x8] sm:$0xff]
        %v5755 = vld [vmem:[%s5752 + $0x10] sm:$0xff]
        %v5756 = vld [vmem:[%s5752 + $0x18] sm:$0xff]
        %v5757 = vld [vmem:[%s5752 + $0x20] sm:$0xff]
        %v5758 = vld [vmem:[%s5752 + $0x28] sm:$0xff]
        %v5759 = vld [vmem:[%s5752 + $0x30] sm:$0x11]
        %v5760 = vpack.c.bf16 %v5748, %v5748
        %v5761 = vpack.c.bf16 %v5749, %v5749
        %v5762 = vpack.c.bf16 %v5750, %v5750
        %v5763 = vpack.c.bf16 %v5751, %v5751
        %v5768 = vunpack.c.l.b16 %v5760
        %v5769 = vunpack.c.l.b16 %v5761
        %v5770 = vunpack.c.l.b16 %v5762
        %v5771 = vunpack.c.l.b16 %v5763
        %v5772 = vrot.slane %v5769, 7
        %v5773 = vsel %vm5318, %v5772, %v5768
        %v5774 = vrot.slane %v5770, 6
        %v5775 = vsel %vm5321, %v5774, %v5773
        %v5776 = vrot.slane %v5771, 5
        %v5777 = vsel %vm5324, %v5776, %v5775
        %v5778 = vpack.c.b16 %v5777, %v5777
        %v5786 = vunpack.c.l.b16 %v5753
        %v5787 = vunpack.c.h.b16 %v5753
        %v5788 = vunpack.c.l.b16 %v5754
        %v5789 = vunpack.c.h.b16 %v5754
        %v5790 = vunpack.c.l.b16 %v5755
        %v5791 = vunpack.c.h.b16 %v5755
        %v5792 = vunpack.c.l.b16 %v5756
        %v5793 = vunpack.c.h.b16 %v5756
        %v5794 = vunpack.c.l.b16 %v5757
        %v5795 = vunpack.c.h.b16 %v5757
        %v5796 = vunpack.c.l.b16 %v5758
        %v5797 = vunpack.c.h.b16 %v5758
        %v5798 = vunpack.c.l.b16 %v5759
        %v5799 = vunpack.c.h.b16 %v5759
        %v5800 = vpack.c.b16 %v5788, %v5786
        %v5801 = vpack.c.b16 %v5789, %v5787
        %v5802 = vpack.c.b16 %v5792, %v5790
        %v5803 = vpack.c.b16 %v5793, %v5791
        %v5804 = vpack.c.b16 %v5796, %v5794
        %v5805 = vpack.c.b16 %v5797, %v5795
        %v5806 = vpack.c.b16 %v5798, %v5798
        %v5807 = vpack.c.b16 %v5799, %v5799
        %v5815 = vsel %vm362, %v5778, 0
        %v5818 = vsel %vm493, %v5806, 0
        %v5821 = vsel %vm493, %v5807, 0
        %5823 = vmatprep.subr.bf16.mxu0 0
        %5824 = vmatpush1.bf16.msra.mxu0 0
        %5825 = vmatprep.subr.bf16.mxu0 0
        %5826 = vmatpush1.bf16.msra.mxu0 0
        %5827 = vmatprep.subr.bf16.mxu0 0
        %5828 = vmatpush1.bf16.msra.mxu0 0
        %5829 = vmatprep.subr.bf16.mxu0 0
        %5830 = vmatpush1.bf16.msra.mxu0 0
        %5831 = vmatprep.subr.bf16.mxu0 %v5821
        %5832 = vmatpush1.bf16.msra.mxu0 %v5818
        %5833 = vmatprep.subr.bf16.mxu0 %v5805
        %5834 = vmatpush1.bf16.msra.mxu0 %v5804
        %5835 = vmatprep.subr.bf16.mxu0 %v5803
        %5836 = vmatpush1.bf16.msra.mxu0 %v5802
        %5837 = vmatprep.subr.bf16.mxu0 %v5801
        %5838 = vmatpush1.bf16.msra.mxu0 %v5800
        %5839 = vmatprep.subr.bf16.mxu0 0
        %5840 = vmatpush2.bf16.msra.mxu0 0
        %5841 = vmatprep.subr.bf16.mxu0 0
        %5842 = vmatpush2.bf16.msra.mxu0 0
        %5843 = vmatprep.subr.bf16.mxu0 0
        %5844 = vmatpush2.bf16.msra.mxu0 0
        %5845 = vmatprep.subr.bf16.mxu0 0
        %5846 = vmatpush2.bf16.msra.mxu0 0
        %5847 = vmatprep.subr.bf16.mxu0 0
        %5848 = vmatpush2.bf16.msra.mxu0 0
        %5849 = vmatprep.subr.bf16.mxu0 0
        %5850 = vmatpush2.bf16.msra.mxu0 0
        %5851 = vmatprep.subr.bf16.mxu0 0
        %5852 = vmatpush2.bf16.msra.mxu0 0
        %5853 = vmatprep.subr.bf16.mxu0 0
        %5854 = vmatpush2.bf16.msra.mxu0 0
        %5855 = vmatprep.mubr.bf16.mxu0 0
        %5856 = vmatmul.mubr.bf16.gmra.mxu0 %v5815
        %v5857 = vpop.f32.mrf.mxu0
        %v5858 = vadd.f32 0.0, %v5857
        %v5859 = vpop.f32.mrf.mxu0
        %v5860 = vadd.f32 0.0, %v5859
        %v5861 = vpop.f32.mrf.mxu0
        %v5862 = vpop.f32.mrf.mxu0
        %5863 = vdwg.mxu0
        %v5864 = vadd.f32 %v5746, %v5858
        %v5865 = vadd.f32 %v5747, %v5860
        %v5866 = vld [vmem:[#allocation4 + $0x5] sm:$0x1]
        %v5867 = vld [vmem:[#allocation4 + $0x15] sm:$0x1]
        %v5868 = vld [vmem:[#allocation4 + $0x25] sm:$0x1]
        %v5869 = vld [vmem:[#allocation4 + $0x35] sm:$0x1]
        %s5870 = scalar_lea.vmem %s5, 280
        %v5871 = vld [vmem:[%s5870] sm:$0xff]
        %v5872 = vld [vmem:[%s5870 + $0x8] sm:$0xff]
        %v5873 = vld [vmem:[%s5870 + $0x10] sm:$0xff]
        %v5874 = vld [vmem:[%s5870 + $0x18] sm:$0xff]
        %v5875 = vld [vmem:[%s5870 + $0x20] sm:$0xff]
        %v5876 = vld [vmem:[%s5870 + $0x28] sm:$0xff]
        %v5877 = vld [vmem:[%s5870 + $0x30] sm:$0x11]
        %v5878 = vpack.c.bf16 %v5866, %v5866
        %v5879 = vpack.c.bf16 %v5867, %v5867
        %v5880 = vpack.c.bf16 %v5868, %v5868
        %v5881 = vpack.c.bf16 %v5869, %v5869
        %v5886 = vunpack.c.l.b16 %v5878
        %v5887 = vunpack.c.l.b16 %v5879
        %v5888 = vunpack.c.l.b16 %v5880
        %v5889 = vunpack.c.l.b16 %v5881
        %v5890 = vrot.slane %v5887, 7
        %v5891 = vsel %vm5318, %v5890, %v5886
        %v5892 = vrot.slane %v5888, 6
        %v5893 = vsel %vm5321, %v5892, %v5891
        %v5894 = vrot.slane %v5889, 5
        %v5895 = vsel %vm5324, %v5894, %v5893
        %v5896 = vpack.c.b16 %v5895, %v5895
        %v5904 = vunpack.c.l.b16 %v5871
        %v5905 = vunpack.c.h.b16 %v5871
        %v5906 = vunpack.c.l.b16 %v5872
        %v5907 = vunpack.c.h.b16 %v5872
        %v5908 = vunpack.c.l.b16 %v5873
        %v5909 = vunpack.c.h.b16 %v5873
        %v5910 = vunpack.c.l.b16 %v5874
        %v5911 = vunpack.c.h.b16 %v5874
        %v5912 = vunpack.c.l.b16 %v5875
        %v5913 = vunpack.c.h.b16 %v5875
        %v5914 = vunpack.c.l.b16 %v5876
        %v5915 = vunpack.c.h.b16 %v5876
        %v5916 = vunpack.c.l.b16 %v5877
        %v5917 = vunpack.c.h.b16 %v5877
        %v5918 = vpack.c.b16 %v5906, %v5904
        %v5919 = vpack.c.b16 %v5907, %v5905
        %v5920 = vpack.c.b16 %v5910, %v5908
        %v5921 = vpack.c.b16 %v5911, %v5909
        %v5922 = vpack.c.b16 %v5914, %v5912
        %v5923 = vpack.c.b16 %v5915, %v5913
        %v5924 = vpack.c.b16 %v5916, %v5916
        %v5925 = vpack.c.b16 %v5917, %v5917
        %v5933 = vsel %vm362, %v5896, 0
        %v5936 = vsel %vm493, %v5924, 0
        %v5939 = vsel %vm493, %v5925, 0
        %5941 = vmatprep.subr.bf16.mxu0 0
        %5942 = vmatpush1.bf16.msra.mxu0 0
        %5943 = vmatprep.subr.bf16.mxu0 0
        %5944 = vmatpush1.bf16.msra.mxu0 0
        %5945 = vmatprep.subr.bf16.mxu0 0
        %5946 = vmatpush1.bf16.msra.mxu0 0
        %5947 = vmatprep.subr.bf16.mxu0 0
        %5948 = vmatpush1.bf16.msra.mxu0 0
        %5949 = vmatprep.subr.bf16.mxu0 %v5939
        %5950 = vmatpush1.bf16.msra.mxu0 %v5936
        %5951 = vmatprep.subr.bf16.mxu0 %v5923
        %5952 = vmatpush1.bf16.msra.mxu0 %v5922
        %5953 = vmatprep.subr.bf16.mxu0 %v5921
        %5954 = vmatpush1.bf16.msra.mxu0 %v5920
        %5955 = vmatprep.subr.bf16.mxu0 %v5919
        %5956 = vmatpush1.bf16.msra.mxu0 %v5918
        %5957 = vmatprep.subr.bf16.mxu0 0
        %5958 = vmatpush2.bf16.msra.mxu0 0
        %5959 = vmatprep.subr.bf16.mxu0 0
        %5960 = vmatpush2.bf16.msra.mxu0 0
        %5961 = vmatprep.subr.bf16.mxu0 0
        %5962 = vmatpush2.bf16.msra.mxu0 0
        %5963 = vmatprep.subr.bf16.mxu0 0
        %5964 = vmatpush2.bf16.msra.mxu0 0
        %5965 = vmatprep.subr.bf16.mxu0 0
        %5966 = vmatpush2.bf16.msra.mxu0 0
        %5967 = vmatprep.subr.bf16.mxu0 0
        %5968 = vmatpush2.bf16.msra.mxu0 0
        %5969 = vmatprep.subr.bf16.mxu0 0
        %5970 = vmatpush2.bf16.msra.mxu0 0
        %5971 = vmatprep.subr.bf16.mxu0 0
        %5972 = vmatpush2.bf16.msra.mxu0 0
        %5973 = vmatprep.mubr.bf16.mxu0 0
        %5974 = vmatmul.mubr.bf16.gmra.mxu0 %v5933
        %v5975 = vpop.f32.mrf.mxu0
        %v5976 = vadd.f32 0.0, %v5975
        %v5977 = vpop.f32.mrf.mxu0
        %v5978 = vadd.f32 0.0, %v5977
        %v5979 = vpop.f32.mrf.mxu0
        %v5980 = vpop.f32.mrf.mxu0
        %5981 = vdwg.mxu0
        %v5982 = vadd.f32 %v5864, %v5976
        %v5983 = vadd.f32 %v5865, %v5978
        %v5984 = vld [vmem:[#allocation4 + $0x6] sm:$0x1]
        %v5985 = vld [vmem:[#allocation4 + $0x16] sm:$0x1]
        %v5986 = vld [vmem:[#allocation4 + $0x26] sm:$0x1]
        %v5987 = vld [vmem:[#allocation4 + $0x36] sm:$0x1]
        %s5988 = scalar_lea.vmem %s5, 336
        %v5989 = vld [vmem:[%s5988] sm:$0xff]
        %v5990 = vld [vmem:[%s5988 + $0x8] sm:$0xff]
        %v5991 = vld [vmem:[%s5988 + $0x10] sm:$0xff]
        %v5992 = vld [vmem:[%s5988 + $0x18] sm:$0xff]
        %v5993 = vld [vmem:[%s5988 + $0x20] sm:$0xff]
        %v5994 = vld [vmem:[%s5988 + $0x28] sm:$0xff]
        %v5995 = vld [vmem:[%s5988 + $0x30] sm:$0x11]
        %v5996 = vpack.c.bf16 %v5984, %v5984
        %v5997 = vpack.c.bf16 %v5985, %v5985
        %v5998 = vpack.c.bf16 %v5986, %v5986
        %v5999 = vpack.c.bf16 %v5987, %v5987
        %v6004 = vunpack.c.l.b16 %v5996
        %v6005 = vunpack.c.l.b16 %v5997
        %v6006 = vunpack.c.l.b16 %v5998
        %v6007 = vunpack.c.l.b16 %v5999
        %v6008 = vrot.slane %v6005, 7
        %v6009 = vsel %vm5318, %v6008, %v6004
        %v6010 = vrot.slane %v6006, 6
        %v6011 = vsel %vm5321, %v6010, %v6009
        %v6012 = vrot.slane %v6007, 5
        %v6013 = vsel %vm5324, %v6012, %v6011
        %v6014 = vpack.c.b16 %v6013, %v6013
        %v6022 = vunpack.c.l.b16 %v5989
        %v6023 = vunpack.c.h.b16 %v5989
        %v6024 = vunpack.c.l.b16 %v5990
        %v6025 = vunpack.c.h.b16 %v5990
        %v6026 = vunpack.c.l.b16 %v5991
        %v6027 = vunpack.c.h.b16 %v5991
        %v6028 = vunpack.c.l.b16 %v5992
        %v6029 = vunpack.c.h.b16 %v5992
        %v6030 = vunpack.c.l.b16 %v5993
        %v6031 = vunpack.c.h.b16 %v5993
        %v6032 = vunpack.c.l.b16 %v5994
        %v6033 = vunpack.c.h.b16 %v5994
        %v6034 = vunpack.c.l.b16 %v5995
        %v6035 = vunpack.c.h.b16 %v5995
        %v6036 = vpack.c.b16 %v6024, %v6022
        %v6037 = vpack.c.b16 %v6025, %v6023
        %v6038 = vpack.c.b16 %v6028, %v6026
        %v6039 = vpack.c.b16 %v6029, %v6027
        %v6040 = vpack.c.b16 %v6032, %v6030
        %v6041 = vpack.c.b16 %v6033, %v6031
        %v6042 = vpack.c.b16 %v6034, %v6034
        %v6043 = vpack.c.b16 %v6035, %v6035
        %v6051 = vsel %vm362, %v6014, 0
        %v6054 = vsel %vm493, %v6042, 0
        %v6057 = vsel %vm493, %v6043, 0
        %6059 = vmatprep.subr.bf16.mxu0 0
        %6060 = vmatpush1.bf16.msra.mxu0 0
        %6061 = vmatprep.subr.bf16.mxu0 0
        %6062 = vmatpush1.bf16.msra.mxu0 0
        %6063 = vmatprep.subr.bf16.mxu0 0
        %6064 = vmatpush1.bf16.msra.mxu0 0
        %6065 = vmatprep.subr.bf16.mxu0 0
        %6066 = vmatpush1.bf16.msra.mxu0 0
        %6067 = vmatprep.subr.bf16.mxu0 %v6057
        %6068 = vmatpush1.bf16.msra.mxu0 %v6054
        %6069 = vmatprep.subr.bf16.mxu0 %v6041
        %6070 = vmatpush1.bf16.msra.mxu0 %v6040
        %6071 = vmatprep.subr.bf16.mxu0 %v6039
        %6072 = vmatpush1.bf16.msra.mxu0 %v6038
        %6073 = vmatprep.subr.bf16.mxu0 %v6037
        %6074 = vmatpush1.bf16.msra.mxu0 %v6036
        %6075 = vmatprep.subr.bf16.mxu0 0
        %6076 = vmatpush2.bf16.msra.mxu0 0
        %6077 = vmatprep.subr.bf16.mxu0 0
        %6078 = vmatpush2.bf16.msra.mxu0 0
        %6079 = vmatprep.subr.bf16.mxu0 0
        %6080 = vmatpush2.bf16.msra.mxu0 0
        %6081 = vmatprep.subr.bf16.mxu0 0
        %6082 = vmatpush2.bf16.msra.mxu0 0
        %6083 = vmatprep.subr.bf16.mxu0 0
        %6084 = vmatpush2.bf16.msra.mxu0 0
        %6085 = vmatprep.subr.bf16.mxu0 0
        %6086 = vmatpush2.bf16.msra.mxu0 0
        %6087 = vmatprep.subr.bf16.mxu0 0
        %6088 = vmatpush2.bf16.msra.mxu0 0
        %6089 = vmatprep.subr.bf16.mxu0 0
        %6090 = vmatpush2.bf16.msra.mxu0 0
        %6091 = vmatprep.mubr.bf16.mxu0 0
        %6092 = vmatmul.mubr.bf16.gmra.mxu0 %v6051
        %v6093 = vpop.f32.mrf.mxu0
        %v6094 = vadd.f32 0.0, %v6093
        %v6095 = vpop.f32.mrf.mxu0
        %v6096 = vadd.f32 0.0, %v6095
        %v6097 = vpop.f32.mrf.mxu0
        %v6098 = vpop.f32.mrf.mxu0
        %6099 = vdwg.mxu0
        %v6100 = vadd.f32 %v5982, %v6094
        %v6101 = vadd.f32 %v5983, %v6096
        %v6102 = vld [vmem:[#allocation4 + $0x7] sm:$0x1]
        %v6103 = vld [vmem:[#allocation4 + $0x17] sm:$0x1]
        %v6104 = vld [vmem:[#allocation4 + $0x27] sm:$0x1]
        %v6105 = vld [vmem:[#allocation4 + $0x37] sm:$0x1]
        %s6106 = scalar_lea.vmem %s5, 392
        %v6107 = vld [vmem:[%s6106] sm:$0xff]
        %v6108 = vld [vmem:[%s6106 + $0x8] sm:$0xff]
        %v6109 = vld [vmem:[%s6106 + $0x10] sm:$0xff]
        %v6110 = vld [vmem:[%s6106 + $0x18] sm:$0xff]
        %v6111 = vld [vmem:[%s6106 + $0x20] sm:$0xff]
        %v6112 = vld [vmem:[%s6106 + $0x28] sm:$0xff]
        %v6113 = vld [vmem:[%s6106 + $0x30] sm:$0x11]
        %v6114 = vpack.c.bf16 %v6102, %v6102
        %v6115 = vpack.c.bf16 %v6103, %v6103
        %v6116 = vpack.c.bf16 %v6104, %v6104
        %v6117 = vpack.c.bf16 %v6105, %v6105
        %v6122 = vunpack.c.l.b16 %v6114
        %v6123 = vunpack.c.l.b16 %v6115
        %v6124 = vunpack.c.l.b16 %v6116
        %v6125 = vunpack.c.l.b16 %v6117
        %v6126 = vrot.slane %v6123, 7
        %v6127 = vsel %vm5318, %v6126, %v6122
        %v6128 = vrot.slane %v6124, 6
        %v6129 = vsel %vm5321, %v6128, %v6127
        %v6130 = vrot.slane %v6125, 5
        %v6131 = vsel %vm5324, %v6130, %v6129
        %v6132 = vpack.c.b16 %v6131, %v6131
        %v6140 = vunpack.c.l.b16 %v6107
        %v6141 = vunpack.c.h.b16 %v6107
        %v6142 = vunpack.c.l.b16 %v6108
        %v6143 = vunpack.c.h.b16 %v6108
        %v6144 = vunpack.c.l.b16 %v6109
        %v6145 = vunpack.c.h.b16 %v6109
        %v6146 = vunpack.c.l.b16 %v6110
        %v6147 = vunpack.c.h.b16 %v6110
        %v6148 = vunpack.c.l.b16 %v6111
        %v6149 = vunpack.c.h.b16 %v6111
        %v6150 = vunpack.c.l.b16 %v6112
        %v6151 = vunpack.c.h.b16 %v6112
        %v6152 = vunpack.c.l.b16 %v6113
        %v6153 = vunpack.c.h.b16 %v6113
        %v6154 = vpack.c.b16 %v6142, %v6140
        %v6155 = vpack.c.b16 %v6143, %v6141
        %v6156 = vpack.c.b16 %v6146, %v6144
        %v6157 = vpack.c.b16 %v6147, %v6145
        %v6158 = vpack.c.b16 %v6150, %v6148
        %v6159 = vpack.c.b16 %v6151, %v6149
        %v6160 = vpack.c.b16 %v6152, %v6152
        %v6161 = vpack.c.b16 %v6153, %v6153
        %v6169 = vsel %vm362, %v6132, 0
        %v6172 = vsel %vm493, %v6160, 0
        %v6175 = vsel %vm493, %v6161, 0
        %6177 = vmatprep.subr.bf16.mxu0 0
        %6178 = vmatpush1.bf16.msra.mxu0 0
        %6179 = vmatprep.subr.bf16.mxu0 0
        %6180 = vmatpush1.bf16.msra.mxu0 0
        %6181 = vmatprep.subr.bf16.mxu0 0
        %6182 = vmatpush1.bf16.msra.mxu0 0
        %6183 = vmatprep.subr.bf16.mxu0 0
        %6184 = vmatpush1.bf16.msra.mxu0 0
        %6185 = vmatprep.subr.bf16.mxu0 %v6175
        %6186 = vmatpush1.bf16.msra.mxu0 %v6172
        %6187 = vmatprep.subr.bf16.mxu0 %v6159
        %6188 = vmatpush1.bf16.msra.mxu0 %v6158
        %6189 = vmatprep.subr.bf16.mxu0 %v6157
        %6190 = vmatpush1.bf16.msra.mxu0 %v6156
        %6191 = vmatprep.subr.bf16.mxu0 %v6155
        %6192 = vmatpush1.bf16.msra.mxu0 %v6154
        %6193 = vmatprep.subr.bf16.mxu0 0
        %6194 = vmatpush2.bf16.msra.mxu0 0
        %6195 = vmatprep.subr.bf16.mxu0 0
        %6196 = vmatpush2.bf16.msra.mxu0 0
        %6197 = vmatprep.subr.bf16.mxu0 0
        %6198 = vmatpush2.bf16.msra.mxu0 0
        %6199 = vmatprep.subr.bf16.mxu0 0
        %6200 = vmatpush2.bf16.msra.mxu0 0
        %6201 = vmatprep.subr.bf16.mxu0 0
        %6202 = vmatpush2.bf16.msra.mxu0 0
        %6203 = vmatprep.subr.bf16.mxu0 0
        %6204 = vmatpush2.bf16.msra.mxu0 0
        %6205 = vmatprep.subr.bf16.mxu0 0
        %6206 = vmatpush2.bf16.msra.mxu0 0
        %6207 = vmatprep.subr.bf16.mxu0 0
        %6208 = vmatpush2.bf16.msra.mxu0 0
        %6209 = vmatprep.mubr.bf16.mxu0 0
        %6210 = vmatmul.mubr.bf16.gmra.mxu0 %v6169
        %v6211 = vpop.f32.mrf.mxu0
        %v6212 = vadd.f32 0.0, %v6211
        %v6213 = vpop.f32.mrf.mxu0
        %v6214 = vadd.f32 0.0, %v6213
        %v6215 = vpop.f32.mrf.mxu0
        %v6216 = vpop.f32.mrf.mxu0
        %6217 = vdwg.mxu0
        %v6218 = vadd.f32 %v6100, %v6212
        %v6219 = vadd.f32 %v6101, %v6214
        %v6220 = vld [vmem:[#allocation4 + $0x8] sm:$0x1]
        %v6221 = vld [vmem:[#allocation4 + $0x18] sm:$0x1]
        %v6222 = vld [vmem:[#allocation4 + $0x28] sm:$0x1]
        %v6223 = vld [vmem:[#allocation4 + $0x38] sm:$0x1]
        %s6224 = scalar_lea.vmem %s5, 448
        %v6225 = vld [vmem:[%s6224] sm:$0xff]
        %v6226 = vld [vmem:[%s6224 + $0x8] sm:$0xff]
        %v6227 = vld [vmem:[%s6224 + $0x10] sm:$0xff]
        %v6228 = vld [vmem:[%s6224 + $0x18] sm:$0xff]
        %v6229 = vld [vmem:[%s6224 + $0x20] sm:$0xff]
        %v6230 = vld [vmem:[%s6224 + $0x28] sm:$0xff]
        %v6231 = vld [vmem:[%s6224 + $0x30] sm:$0x11]
        %v6232 = vpack.c.bf16 %v6220, %v6220
        %v6233 = vpack.c.bf16 %v6221, %v6221
        %v6234 = vpack.c.bf16 %v6222, %v6222
        %v6235 = vpack.c.bf16 %v6223, %v6223
        %v6240 = vunpack.c.l.b16 %v6232
        %v6241 = vunpack.c.l.b16 %v6233
        %v6242 = vunpack.c.l.b16 %v6234
        %v6243 = vunpack.c.l.b16 %v6235
        %v6244 = vrot.slane %v6241, 7
        %v6245 = vsel %vm5318, %v6244, %v6240
        %v6246 = vrot.slane %v6242, 6
        %v6247 = vsel %vm5321, %v6246, %v6245
        %v6248 = vrot.slane %v6243, 5
        %v6249 = vsel %vm5324, %v6248, %v6247
        %v6250 = vpack.c.b16 %v6249, %v6249
        %v6258 = vunpack.c.l.b16 %v6225
        %v6259 = vunpack.c.h.b16 %v6225
        %v6260 = vunpack.c.l.b16 %v6226
        %v6261 = vunpack.c.h.b16 %v6226
        %v6262 = vunpack.c.l.b16 %v6227
        %v6263 = vunpack.c.h.b16 %v6227
        %v6264 = vunpack.c.l.b16 %v6228
        %v6265 = vunpack.c.h.b16 %v6228
        %v6266 = vunpack.c.l.b16 %v6229
        %v6267 = vunpack.c.h.b16 %v6229
        %v6268 = vunpack.c.l.b16 %v6230
        %v6269 = vunpack.c.h.b16 %v6230
        %v6270 = vunpack.c.l.b16 %v6231
        %v6271 = vunpack.c.h.b16 %v6231
        %v6272 = vpack.c.b16 %v6260, %v6258
        %v6273 = vpack.c.b16 %v6261, %v6259
        %v6274 = vpack.c.b16 %v6264, %v6262
        %v6275 = vpack.c.b16 %v6265, %v6263
        %v6276 = vpack.c.b16 %v6268, %v6266
        %v6277 = vpack.c.b16 %v6269, %v6267
        %v6278 = vpack.c.b16 %v6270, %v6270
        %v6279 = vpack.c.b16 %v6271, %v6271
        %v6287 = vsel %vm362, %v6250, 0
        %v6290 = vsel %vm493, %v6278, 0
        %v6293 = vsel %vm493, %v6279, 0
        %6295 = vmatprep.subr.bf16.mxu0 0
        %6296 = vmatpush1.bf16.msra.mxu0 0
        %6297 = vmatprep.subr.bf16.mxu0 0
        %6298 = vmatpush1.bf16.msra.mxu0 0
        %6299 = vmatprep.subr.bf16.mxu0 0
        %6300 = vmatpush1.bf16.msra.mxu0 0
        %6301 = vmatprep.subr.bf16.mxu0 0
        %6302 = vmatpush1.bf16.msra.mxu0 0
        %6303 = vmatprep.subr.bf16.mxu0 %v6293
        %6304 = vmatpush1.bf16.msra.mxu0 %v6290
        %6305 = vmatprep.subr.bf16.mxu0 %v6277
        %6306 = vmatpush1.bf16.msra.mxu0 %v6276
        %6307 = vmatprep.subr.bf16.mxu0 %v6275
        %6308 = vmatpush1.bf16.msra.mxu0 %v6274
        %6309 = vmatprep.subr.bf16.mxu0 %v6273
        %6310 = vmatpush1.bf16.msra.mxu0 %v6272
        %6311 = vmatprep.subr.bf16.mxu0 0
        %6312 = vmatpush2.bf16.msra.mxu0 0
        %6313 = vmatprep.subr.bf16.mxu0 0
        %6314 = vmatpush2.bf16.msra.mxu0 0
        %6315 = vmatprep.subr.bf16.mxu0 0
        %6316 = vmatpush2.bf16.msra.mxu0 0
        %6317 = vmatprep.subr.bf16.mxu0 0
        %6318 = vmatpush2.bf16.msra.mxu0 0
        %6319 = vmatprep.subr.bf16.mxu0 0
        %6320 = vmatpush2.bf16.msra.mxu0 0
        %6321 = vmatprep.subr.bf16.mxu0 0
        %6322 = vmatpush2.bf16.msra.mxu0 0
        %6323 = vmatprep.subr.bf16.mxu0 0
        %6324 = vmatpush2.bf16.msra.mxu0 0
        %6325 = vmatprep.subr.bf16.mxu0 0
        %6326 = vmatpush2.bf16.msra.mxu0 0
        %6327 = vmatprep.mubr.bf16.mxu0 0
        %6328 = vmatmul.mubr.bf16.gmra.mxu0 %v6287
        %v6329 = vpop.f32.mrf.mxu0
        %v6330 = vadd.f32 0.0, %v6329
        %v6331 = vpop.f32.mrf.mxu0
        %v6332 = vadd.f32 0.0, %v6331
        %v6333 = vpop.f32.mrf.mxu0
        %v6334 = vpop.f32.mrf.mxu0
        %6335 = vdwg.mxu0
        %v6336 = vadd.f32 %v6218, %v6330
        %v6337 = vadd.f32 %v6219, %v6332
        %v6338 = vld [vmem:[#allocation4 + $0x9] sm:$0x1]
        %v6339 = vld [vmem:[#allocation4 + $0x19] sm:$0x1]
        %v6340 = vld [vmem:[#allocation4 + $0x29] sm:$0x1]
        %v6341 = vld [vmem:[#allocation4 + $0x39] sm:$0x1]
        %s6342 = scalar_lea.vmem %s5, 504
        %v6343 = vld [vmem:[%s6342] sm:$0xff]
        %v6344 = vld [vmem:[%s6342 + $0x8] sm:$0xff]
        %v6345 = vld [vmem:[%s6342 + $0x10] sm:$0xff]
        %v6346 = vld [vmem:[%s6342 + $0x18] sm:$0xff]
        %v6347 = vld [vmem:[%s6342 + $0x20] sm:$0xff]
        %v6348 = vld [vmem:[%s6342 + $0x28] sm:$0xff]
        %v6349 = vld [vmem:[%s6342 + $0x30] sm:$0x11]
        %v6350 = vpack.c.bf16 %v6338, %v6338
        %v6351 = vpack.c.bf16 %v6339, %v6339
        %v6352 = vpack.c.bf16 %v6340, %v6340
        %v6353 = vpack.c.bf16 %v6341, %v6341
        %v6358 = vunpack.c.l.b16 %v6350
        %v6359 = vunpack.c.l.b16 %v6351
        %v6360 = vunpack.c.l.b16 %v6352
        %v6361 = vunpack.c.l.b16 %v6353
        %v6362 = vrot.slane %v6359, 7
        %v6363 = vsel %vm5318, %v6362, %v6358
        %v6364 = vrot.slane %v6360, 6
        %v6365 = vsel %vm5321, %v6364, %v6363
        %v6366 = vrot.slane %v6361, 5
        %v6367 = vsel %vm5324, %v6366, %v6365
        %v6368 = vpack.c.b16 %v6367, %v6367
        %v6376 = vunpack.c.l.b16 %v6343
        %v6377 = vunpack.c.h.b16 %v6343
        %v6378 = vunpack.c.l.b16 %v6344
        %v6379 = vunpack.c.h.b16 %v6344
        %v6380 = vunpack.c.l.b16 %v6345
        %v6381 = vunpack.c.h.b16 %v6345
        %v6382 = vunpack.c.l.b16 %v6346
        %v6383 = vunpack.c.h.b16 %v6346
        %v6384 = vunpack.c.l.b16 %v6347
        %v6385 = vunpack.c.h.b16 %v6347
        %v6386 = vunpack.c.l.b16 %v6348
        %v6387 = vunpack.c.h.b16 %v6348
        %v6388 = vunpack.c.l.b16 %v6349
        %v6389 = vunpack.c.h.b16 %v6349
        %v6390 = vpack.c.b16 %v6378, %v6376
        %v6391 = vpack.c.b16 %v6379, %v6377
        %v6392 = vpack.c.b16 %v6382, %v6380
        %v6393 = vpack.c.b16 %v6383, %v6381
        %v6394 = vpack.c.b16 %v6386, %v6384
        %v6395 = vpack.c.b16 %v6387, %v6385
        %v6396 = vpack.c.b16 %v6388, %v6388
        %v6397 = vpack.c.b16 %v6389, %v6389
        %v6405 = vsel %vm362, %v6368, 0
        %v6408 = vsel %vm493, %v6396, 0
        %v6411 = vsel %vm493, %v6397, 0
        %6413 = vmatprep.subr.bf16.mxu0 0
        %6414 = vmatpush1.bf16.msra.mxu0 0
        %6415 = vmatprep.subr.bf16.mxu0 0
        %6416 = vmatpush1.bf16.msra.mxu0 0
        %6417 = vmatprep.subr.bf16.mxu0 0
        %6418 = vmatpush1.bf16.msra.mxu0 0
        %6419 = vmatprep.subr.bf16.mxu0 0
        %6420 = vmatpush1.bf16.msra.mxu0 0
        %6421 = vmatprep.subr.bf16.mxu0 %v6411
        %6422 = vmatpush1.bf16.msra.mxu0 %v6408
        %6423 = vmatprep.subr.bf16.mxu0 %v6395
        %6424 = vmatpush1.bf16.msra.mxu0 %v6394
        %6425 = vmatprep.subr.bf16.mxu0 %v6393
        %6426 = vmatpush1.bf16.msra.mxu0 %v6392
        %6427 = vmatprep.subr.bf16.mxu0 %v6391
        %6428 = vmatpush1.bf16.msra.mxu0 %v6390
        %6429 = vmatprep.subr.bf16.mxu0 0
        %6430 = vmatpush2.bf16.msra.mxu0 0
        %6431 = vmatprep.subr.bf16.mxu0 0
        %6432 = vmatpush2.bf16.msra.mxu0 0
        %6433 = vmatprep.subr.bf16.mxu0 0
        %6434 = vmatpush2.bf16.msra.mxu0 0
        %6435 = vmatprep.subr.bf16.mxu0 0
        %6436 = vmatpush2.bf16.msra.mxu0 0
        %6437 = vmatprep.subr.bf16.mxu0 0
        %6438 = vmatpush2.bf16.msra.mxu0 0
        %6439 = vmatprep.subr.bf16.mxu0 0
        %6440 = vmatpush2.bf16.msra.mxu0 0
        %6441 = vmatprep.subr.bf16.mxu0 0
        %6442 = vmatpush2.bf16.msra.mxu0 0
        %6443 = vmatprep.subr.bf16.mxu0 0
        %6444 = vmatpush2.bf16.msra.mxu0 0
        %6445 = vmatprep.mubr.bf16.mxu0 0
        %6446 = vmatmul.mubr.bf16.gmra.mxu0 %v6405
        %v6447 = vpop.f32.mrf.mxu0
        %v6448 = vadd.f32 0.0, %v6447
        %v6449 = vpop.f32.mrf.mxu0
        %v6450 = vadd.f32 0.0, %v6449
        %v6451 = vpop.f32.mrf.mxu0
        %v6452 = vpop.f32.mrf.mxu0
        %6453 = vdwg.mxu0
        %v6454 = vadd.f32 %v6336, %v6448
        %v6455 = vadd.f32 %v6337, %v6450
        %v6456 = vld [vmem:[#allocation4 + $0xa] sm:$0x1]
        %v6457 = vld [vmem:[#allocation4 + $0x1a] sm:$0x1]
        %v6458 = vld [vmem:[#allocation4 + $0x2a] sm:$0x1]
        %v6459 = vld [vmem:[#allocation4 + $0x3a] sm:$0x1]
        %s6460 = scalar_lea.vmem %s5, 560
        %v6461 = vld [vmem:[%s6460] sm:$0xff]
        %v6462 = vld [vmem:[%s6460 + $0x8] sm:$0xff]
        %v6463 = vld [vmem:[%s6460 + $0x10] sm:$0xff]
        %v6464 = vld [vmem:[%s6460 + $0x18] sm:$0xff]
        %v6465 = vld [vmem:[%s6460 + $0x20] sm:$0xff]
        %v6466 = vld [vmem:[%s6460 + $0x28] sm:$0xff]
        %v6467 = vld [vmem:[%s6460 + $0x30] sm:$0x11]
        %v6468 = vpack.c.bf16 %v6456, %v6456
        %v6469 = vpack.c.bf16 %v6457, %v6457
        %v6470 = vpack.c.bf16 %v6458, %v6458
        %v6471 = vpack.c.bf16 %v6459, %v6459
        %v6476 = vunpack.c.l.b16 %v6468
        %v6477 = vunpack.c.l.b16 %v6469
        %v6478 = vunpack.c.l.b16 %v6470
        %v6479 = vunpack.c.l.b16 %v6471
        %v6480 = vrot.slane %v6477, 7
        %v6481 = vsel %vm5318, %v6480, %v6476
        %v6482 = vrot.slane %v6478, 6
        %v6483 = vsel %vm5321, %v6482, %v6481
        %v6484 = vrot.slane %v6479, 5
        %v6485 = vsel %vm5324, %v6484, %v6483
        %v6486 = vpack.c.b16 %v6485, %v6485
        %v6494 = vunpack.c.l.b16 %v6461
        %v6495 = vunpack.c.h.b16 %v6461
        %v6496 = vunpack.c.l.b16 %v6462
        %v6497 = vunpack.c.h.b16 %v6462
        %v6498 = vunpack.c.l.b16 %v6463
        %v6499 = vunpack.c.h.b16 %v6463
        %v6500 = vunpack.c.l.b16 %v6464
        %v6501 = vunpack.c.h.b16 %v6464
        %v6502 = vunpack.c.l.b16 %v6465
        %v6503 = vunpack.c.h.b16 %v6465
        %v6504 = vunpack.c.l.b16 %v6466
        %v6505 = vunpack.c.h.b16 %v6466
        %v6506 = vunpack.c.l.b16 %v6467
        %v6507 = vunpack.c.h.b16 %v6467
        %v6508 = vpack.c.b16 %v6496, %v6494
        %v6509 = vpack.c.b16 %v6497, %v6495
        %v6510 = vpack.c.b16 %v6500, %v6498
        %v6511 = vpack.c.b16 %v6501, %v6499
        %v6512 = vpack.c.b16 %v6504, %v6502
        %v6513 = vpack.c.b16 %v6505, %v6503
        %v6514 = vpack.c.b16 %v6506, %v6506
        %v6515 = vpack.c.b16 %v6507, %v6507
        %v6523 = vsel %vm362, %v6486, 0
        %v6526 = vsel %vm493, %v6514, 0
        %v6529 = vsel %vm493, %v6515, 0
        %6531 = vmatprep.subr.bf16.mxu0 0
        %6532 = vmatpush1.bf16.msra.mxu0 0
        %6533 = vmatprep.subr.bf16.mxu0 0
        %6534 = vmatpush1.bf16.msra.mxu0 0
        %6535 = vmatprep.subr.bf16.mxu0 0
        %6536 = vmatpush1.bf16.msra.mxu0 0
        %6537 = vmatprep.subr.bf16.mxu0 0
        %6538 = vmatpush1.bf16.msra.mxu0 0
        %6539 = vmatprep.subr.bf16.mxu0 %v6529
        %6540 = vmatpush1.bf16.msra.mxu0 %v6526
        %6541 = vmatprep.subr.bf16.mxu0 %v6513
        %6542 = vmatpush1.bf16.msra.mxu0 %v6512
        %6543 = vmatprep.subr.bf16.mxu0 %v6511
        %6544 = vmatpush1.bf16.msra.mxu0 %v6510
        %6545 = vmatprep.subr.bf16.mxu0 %v6509
        %6546 = vmatpush1.bf16.msra.mxu0 %v6508
        %6547 = vmatprep.subr.bf16.mxu0 0
        %6548 = vmatpush2.bf16.msra.mxu0 0
        %6549 = vmatprep.subr.bf16.mxu0 0
        %6550 = vmatpush2.bf16.msra.mxu0 0
        %6551 = vmatprep.subr.bf16.mxu0 0
        %6552 = vmatpush2.bf16.msra.mxu0 0
        %6553 = vmatprep.subr.bf16.mxu0 0
        %6554 = vmatpush2.bf16.msra.mxu0 0
        %6555 = vmatprep.subr.bf16.mxu0 0
        %6556 = vmatpush2.bf16.msra.mxu0 0
        %6557 = vmatprep.subr.bf16.mxu0 0
        %6558 = vmatpush2.bf16.msra.mxu0 0
        %6559 = vmatprep.subr.bf16.mxu0 0
        %6560 = vmatpush2.bf16.msra.mxu0 0
        %6561 = vmatprep.subr.bf16.mxu0 0
        %6562 = vmatpush2.bf16.msra.mxu0 0
        %6563 = vmatprep.mubr.bf16.mxu0 0
        %6564 = vmatmul.mubr.bf16.gmra.mxu0 %v6523
        %v6565 = vpop.f32.mrf.mxu0
        %v6566 = vadd.f32 0.0, %v6565
        %v6567 = vpop.f32.mrf.mxu0
        %v6568 = vadd.f32 0.0, %v6567
        %v6569 = vpop.f32.mrf.mxu0
        %v6570 = vpop.f32.mrf.mxu0
        %6571 = vdwg.mxu0
        %v6572 = vadd.f32 %v6454, %v6566
        %v6573 = vadd.f32 %v6455, %v6568
        %v6574 = vld [vmem:[%s6] sm:$0x3]
        %v6576 = vlaneseq
        %v6577 = vshrl.u32 %v6576, 7
        %v6578 = vsub.s32 0, %v6577
        %v6579 = vrot.slane %v6574, %v6578
        %v6580 = vlaneseq
        %v6581 = vshrl.u32 %v6580, 7
        %v6582 = vsub.s32 1, %v6581
        %v6583 = vrot.slane %v6574, %v6582
        %v6586 = vadd.f32 %v6572, %v6579
        %v6587 = vadd.f32 %v6573, %v6583
        %v6588 = vld [vmem:[%s7] sm:$0xf]
        %v6589 = vld [vmem:[%s7 + $0x4] sm:$0xf]
        %v6590 = vld [vmem:[%s7 + $0x8] sm:$0xf]
        %v6591 = vld [vmem:[%s7 + $0xc] sm:$0xf]
        %v6592 = vld [vmem:[%s7 + $0x10] sm:$0xf]
        %v6593 = vld [vmem:[%s7 + $0x14] sm:$0xf]
        %v6594 = vld [vmem:[%s7 + $0x18] sm:$0xf]
        %v6595 = vld [vmem:[%s7 + $0x1c] sm:$0xf]
        %v6596 = vld [vmem:[%s7 + $0x20] sm:$0xf]
        %v6597 = vld [vmem:[%s7 + $0x24] sm:$0xf]
        %v6598 = vld [vmem:[%s7 + $0x28] sm:$0xf]
        %v6599 = vld [vmem:[%s7 + $0x2c] sm:$0xf]
        %v6600 = vld [vmem:[%s7 + $0x30] sm:$0xf]
        %v6601 = vld [vmem:[%s7 + $0x34] sm:$0xf]
        %v6602 = vld [vmem:[%s7 + $0x38] sm:$0xf]
        %v6603 = vld [vmem:[%s7 + $0x3c] sm:$0xf]
        %v6604 = vld [vmem:[%s7 + $0x40] sm:$0xf]
        %v6605 = vld [vmem:[%s7 + $0x44] sm:$0xf]
        %v6606 = vld [vmem:[%s7 + $0x48] sm:$0xf]
        %v6607 = vld [vmem:[%s7 + $0x4c] sm:$0xf]
        %v6608 = vld [vmem:[%s7 + $0x50] sm:$0xf]
        %v6609 = vld [vmem:[%s7 + $0x54] sm:$0xf]
        %v6610 = vld [vmem:[%s7 + $0x58] sm:$0xf]
        %v6611 = vld [vmem:[%s7 + $0x5c] sm:$0xf]
        %v6612 = vld [vmem:[%s7 + $0x60] sm:$0xf]
        %v6613 = vld [vmem:[%s7 + $0x64] sm:$0xf]
        %v6614 = vld [vmem:[%s7 + $0x68] sm:$0xf]
        %v6615 = vld [vmem:[%s7 + $0x6c] sm:$0xf]
        %v6616 = vld [vmem:[%s7 + $0x70] sm:$0xf]
        %v6617 = vld [vmem:[%s7 + $0x74] sm:$0xf]
        %v6618 = vld [vmem:[%s7 + $0x78] sm:$0xf]
        %v6619 = vld [vmem:[%s7 + $0x7c] sm:$0xf]
        %v6620 = vpack.c.bf16 %v6586, %v6586
        %v6621 = vpack.c.bf16 %v6587, %v6587
        %v6622 = vld [vmem:[%s8] sm:$0x1]
        %v6624 = vlaneseq
        %v6625 = vshrl.u32 %v6624, 7
        %v6626 = vsub.s32 0, %v6625
        %v6627 = vrot.slane %v6622, %v6626
        %v6661 = vunpack.c.l.b16 %v6588
        %v6662 = vunpack.c.l.b16 %v6589
        %v6663 = vunpack.c.l.b16 %v6590
        %v6664 = vunpack.c.l.b16 %v6591
        %v6665 = vunpack.c.l.b16 %v6592
        %v6666 = vunpack.c.l.b16 %v6593
        %v6667 = vunpack.c.l.b16 %v6594
        %v6668 = vunpack.c.l.b16 %v6595
        %v6669 = vunpack.c.l.b16 %v6596
        %v6670 = vunpack.c.l.b16 %v6597
        %v6671 = vunpack.c.l.b16 %v6598
        %v6672 = vunpack.c.l.b16 %v6599
        %v6673 = vunpack.c.l.b16 %v6600
        %v6674 = vunpack.c.l.b16 %v6601
        %v6675 = vunpack.c.l.b16 %v6602
        %v6676 = vunpack.c.l.b16 %v6603
        %v6677 = vunpack.c.l.b16 %v6604
        %v6678 = vunpack.c.l.b16 %v6605
        %v6679 = vunpack.c.l.b16 %v6606
        %v6680 = vunpack.c.l.b16 %v6607
        %v6681 = vunpack.c.l.b16 %v6608
        %v6682 = vunpack.c.l.b16 %v6609
        %v6683 = vunpack.c.l.b16 %v6610
        %v6684 = vunpack.c.l.b16 %v6611
        %v6685 = vunpack.c.l.b16 %v6612
        %v6686 = vunpack.c.l.b16 %v6613
        %v6687 = vunpack.c.l.b16 %v6614
        %v6688 = vunpack.c.l.b16 %v6615
        %v6689 = vunpack.c.l.b16 %v6616
        %v6690 = vunpack.c.l.b16 %v6617
        %v6691 = vunpack.c.l.b16 %v6618
        %v6692 = vunpack.c.l.b16 %v6619
        %v6693 = vpack.c.b16 %v6662, %v6661
        %v6694 = vpack.c.b16 %v6664, %v6663
        %v6695 = vpack.c.b16 %v6666, %v6665
        %v6696 = vpack.c.b16 %v6668, %v6667
        %v6697 = vpack.c.b16 %v6670, %v6669
        %v6698 = vpack.c.b16 %v6672, %v6671
        %v6699 = vpack.c.b16 %v6674, %v6673
        %v6700 = vpack.c.b16 %v6676, %v6675
        %v6701 = vpack.c.b16 %v6678, %v6677
        %v6702 = vpack.c.b16 %v6680, %v6679
        %v6703 = vpack.c.b16 %v6682, %v6681
        %v6704 = vpack.c.b16 %v6684, %v6683
        %v6705 = vpack.c.b16 %v6686, %v6685
        %v6706 = vpack.c.b16 %v6688, %v6687
        %v6707 = vpack.c.b16 %v6690, %v6689
        %v6708 = vpack.c.b16 %v6692, %v6691
        %6725 = vmatprep.subr.bf16.mxu0 0
        %6726 = vmatpush1.bf16.msra.mxu0 %v6700
        %6727 = vmatprep.subr.bf16.mxu0 0
        %6728 = vmatpush1.bf16.msra.mxu0 %v6699
        %6729 = vmatprep.subr.bf16.mxu0 0
        %6730 = vmatpush1.bf16.msra.mxu0 %v6698
        %6731 = vmatprep.subr.bf16.mxu0 0
        %6732 = vmatpush1.bf16.msra.mxu0 %v6697
        %6733 = vmatprep.subr.bf16.mxu0 0
        %6734 = vmatpush1.bf16.msra.mxu0 %v6696
        %6735 = vmatprep.subr.bf16.mxu0 0
        %6736 = vmatpush1.bf16.msra.mxu0 %v6695
        %6737 = vmatprep.subr.bf16.mxu0 0
        %6738 = vmatpush1.bf16.msra.mxu0 %v6694
        %6739 = vmatprep.subr.bf16.mxu0 0
        %6740 = vmatpush1.bf16.msra.mxu0 %v6693
        %6741 = vmatprep.subr.bf16.mxu0 0
        %6742 = vmatpush2.bf16.msra.mxu0 %v6708
        %6743 = vmatprep.subr.bf16.mxu0 0
        %6744 = vmatpush2.bf16.msra.mxu0 %v6707
        %6745 = vmatprep.subr.bf16.mxu0 0
        %6746 = vmatpush2.bf16.msra.mxu0 %v6706
        %6747 = vmatprep.subr.bf16.mxu0 0
        %6748 = vmatpush2.bf16.msra.mxu0 %v6705
        %6749 = vmatprep.subr.bf16.mxu0 0
        %6750 = vmatpush2.bf16.msra.mxu0 %v6704
        %6751 = vmatprep.subr.bf16.mxu0 0
        %6752 = vmatpush2.bf16.msra.mxu0 %v6703
        %6753 = vmatprep.subr.bf16.mxu0 0
        %6754 = vmatpush2.bf16.msra.mxu0 %v6702
        %6755 = vmatprep.subr.bf16.mxu0 0
        %6756 = vmatpush2.bf16.msra.mxu0 %v6701
        %6757 = vmatprep.mubr.bf16.mxu0 %v6621
        %6758 = vmatmul.mubr.bf16.gmra.mxu0 %v6620
        %v6759 = vpop.f32.mrf.mxu0
        %v6760 = vadd.f32 %v6627, %v6759
        %v6761 = vpop.f32.mrf.mxu0
        %v6762 = vpop.f32.mrf.mxu0
        %v6763 = vpop.f32.mrf.mxu0
        %6764 = vdwg.mxu0
        %vm6765 = vcmask 76800
        %v6766 = vsel %vm6765, %v6760, -inf
        %6767 = vmax.xlane.f32.xlu0 %v6766
        %v6768 = vpop.xlane.xlu0 %6767
        %v6769 = vsub.f32 %v6760, %v6768
        %v6770 = vmul.f32 %v6769, 1.442695
        %v6771 = vpow.pop %v6770
        %v6772 = vsel %vm6765, %v6771, 0.0
        %6773 = vadd.xlane.f32.xlu0 %v6772
        %v6774 = vpop.xlane.xlu0 %6773
        %v6775 = vrcp.pop %v6774
        %v6776 = vmul.f32 %v6771, %v6775
        %6777 = vst.msk [vmem:[%s328] sm:$0xf] %vm6765, %v6776
        %s6778 = sand.u32 %s225, 1
        %s6779 = scalar_lea.sflag [#allocation6], %s6778
        %s6780 = sand.u32 %s225, 1
        %s6781 = smul.addr %s6780, 4
        %s6782 = scalar_lea.vmem [#allocation5], %s6781
        // Predicated region
        $region57: #{recruitment2_forward.1} parent=55 // pred_check
          %p6783 = pneg %p235
        $region58: #{recruitment2_forward.1} parent=55 // pred_check_branch
          %6785 = sbr.rel (%p6783) target = $region60
        $region59: #{recruitment2_forward.1} parent=55 // pred_region
          %s6787 = ssub.s32 64, 64
          %6788 = vsyncadd %s6779, %s6787
          %s6789 = smul.addr %s23, 64
          %s6790 = scalar_lea.hbm %s9, %s6789
          %s6792 = sshll.u32 %s6782, 4
          %s6793 = int_to_ptr.vmem [resolvable:$true] %s6792
          %6795 = dma.vmem_to_hbm [thread:$0]  %s6793, 64, %s6790, %s6779
        $region60: #{recruitment2_forward.1} parent=55 // pred_fallthru
          _
      $region56: #{recruitment2_forward.1} parent=5 // pred_fallthru
        _
      %p6796 = scmp.le.s32.totalorder 2, %s18
      // Predicated region
      $region61: #{recruitment2_forward.1} parent=5 // pred_check
        %p6797 = pneg %p6796
      $region62: #{recruitment2_forward.1} parent=5 // pred_check_branch
        %6799 = sbr.rel (%p6797) target = $region64
      $region63: #{recruitment2_forward.1} parent=5 // pred_region
        %s6800 = ssub.s32 %s18, 2
        // Predicated region
        $region65: #{recruitment2_forward.1} parent=63 // pred_check
          %p6801 = pneg %p241
        $region66: #{recruitment2_forward.1} parent=63 // pred_check_branch
          %6803 = sbr.rel (%p6801) target = $region68
        $region67: #{recruitment2_forward.1} parent=63 // pred_region
          %s6804 = sand.u32 %s226, 1
          %s6805 = scalar_lea.sflag [#allocation6], %s6804
          %s6806 = sand.u32 %s226, 1
          %s6807 = smul.addr %s6806, 4
          %s6808 = scalar_lea.vmem [#allocation5], %s6807
          %6809 = dma.done %s6805, 64
        $region68: #{recruitment2_forward.1} parent=63 // pred_fallthru
          _
      $region64: #{recruitment2_forward.1} parent=5 // pred_fallthru
        _
    $region6: #{recruitment2_forward.1} parent=1 // loop_footer
      %s22 = sadd.s32 1, %s18
    $region7: #{recruitment2_forward.1} parent=1 // loop_footer_branch
      %17 = sbr.rel target = $region3
    $region8: #{recruitment2_forward.1} parent=1 // loop_exit
      _
    %6810 = vsyncpa [#allocation6], 1
    %s6811 = scalar_lea.sflag [#allocation6], 1
    %6812 = vsyncpa %s6811, 1

</llo_original>
